<compile_context>
chip_gen: v6e
topology: v6e:2x2x1
jax: 0.10.0
libtpu: 0.0.40
codegen_flags: <defaults>
</compile_context>

<pallas_src>
import numpy as np

import jax
import jax.numpy as jnp
from jax.experimental import pallas as pl
from jax.experimental.pallas import tpu as pltpu


# ----------------------------------------------------------------------------
# Constant 0/1 selection matrices (built once, on the host, with numpy)
# ----------------------------------------------------------------------------
def _pool_selectors(H, W):
    """(4, H*W, (H//2)*(W//2)) selectors: out o=di*2+dj picks element
    (2*ph+di, 2*pw+dj) of the flattened HxW map for pooled position (ph, pw)."""
    Ho, Wo = H // 2, W // 2
    s = np.zeros((4, H * W, Ho * Wo), np.float32)
    for di in range(2):
        for dj in range(2):
            o = di * 2 + dj
            for ph in range(Ho):
                for pw in range(Wo):
                    s[o, (2 * ph + di) * W + (2 * pw + dj), ph * Wo + pw] = 1.0
    return jnp.asarray(s)


def _shift_selectors(Hin, K, Hout):
    """(K*K, Hin*Hin, Hout*Hout) selectors: slab k=i*K+j maps flattened input
    position (oh+i, ow+j) to flattened output position (oh, ow)."""
    s = np.zeros((K * K, Hin * Hin, Hout * Hout), np.float32)
    for i in range(K):
        for j in range(K):
            k = i * K + j
            for oh in range(Hout):
                for ow in range(Hout):
                    s[k, (oh + i) * Hin + (ow + j), oh * Hout + ow] = 1.0
    return jnp.asarray(s)


# ----------------------------------------------------------------------------
# Fused Pallas kernel: conv1 -> pool -> conv2 -> pool -> fc1 -> fc2 -> quantum head
# ----------------------------------------------------------------------------
def fused_net_kernel(p1t_ref, w1_ref, pool1_ref, t2_ref, w2_ref, b2_ref,
                     pool2_ref, fc1w_ref, fc1b_ref, fc2w_ref, fc2b_ref, o_ref):
    f32 = jnp.float32

    # ---- conv1 (1->6, k=5) + bias (folded via ones-row of p1t) + ReLU ----
    # (8, 32) @ (32, 576) -> (8, 576): channels on sublanes, 24x24 spatial on lanes.
    y1 = jnp.maximum(
        jnp.dot(w1_ref[...], p1t_ref[...], preferred_element_type=f32), 0.0)

    # ---- 2x2 max-pool: (8, 576) -> (8, 144) via 4 selection matmuls ----
    p1 = jnp.dot(y1, pool1_ref[0], preferred_element_type=f32)
    for o in range(1, 4):
        p1 = jnp.maximum(p1, jnp.dot(y1, pool1_ref[o], preferred_element_type=f32))

    # ---- conv2 (6->16, k=5): 25 x (window-shift select, channel matmul) ----
    acc2 = jnp.zeros((16, 64), f32)
    for k in range(25):
        shifted = jnp.dot(p1, t2_ref[k], preferred_element_type=f32)        # (8, 64)
        acc2 = acc2 + jnp.dot(w2_ref[k], shifted, preferred_element_type=f32)  # (16, 64)
    y2 = jnp.maximum(acc2 + b2_ref[...], 0.0)                               # (16, 64)

    # ---- 2x2 max-pool: (16, 64) -> (16, 16) ----
    p2 = jnp.dot(y2, pool2_ref[0], preferred_element_type=f32)
    for o in range(1, 4):
        p2 = jnp.maximum(p2, jnp.dot(y2, pool2_ref[o], preferred_element_type=f32))

    # Dropout2d: identity in eval mode.
    # TODO(synk): training-mode channel dropout (stochastic) is not reproduced.

    # ---- fc1 (256 -> 64) + ReLU, accumulated per channel row (no in-kernel flatten) ----
    h = fc1b_ref[...]                                                       # (1, 64)
    for c in range(16):
        h = h + jnp.dot(p2[c:c + 1, :], fc1w_ref[c], preferred_element_type=f32)
    h = jnp.maximum(h, 0.0)

    # ---- fc2 (64 -> 1) as VPU multiply + lane reduction (MXU stays free) ----
    theta = jnp.sum(h * fc2w_ref[...], axis=1, keepdims=True) + fc2b_ref[...]  # (1, 1)

    # ---- quantum head: H; RY(theta); measure  =>  P(|1>) = (1 + sin(theta)) / 2 ----
    # TODO(synk): the reference samples 100 shots on aer_simulator; we use the
    #             exact (shot-free) expectation value instead.
    e = 0.5 * (1.0 + jnp.sin(theta))                                        # (1, 1)
    col = jax.lax.broadcasted_iota(jnp.int32, (1, 2), 1)
    o_ref[...] = jnp.where(col == 0, e, 1.0 - e).astype(o_ref.dtype)        # cat((e, 1-e))


def _full_spec(shape):
    nd = len(shape)
    return pl.BlockSpec(shape, lambda i, _nd=nd: (0,) * _nd)


# ----------------------------------------------------------------------------
# Host-side preparation (done once) + thin per-forward glue
# ----------------------------------------------------------------------------
def init_params(key):
    """Deterministic parameter init (PyTorch-like uniform(-1/sqrt(fan_in), ...))."""
    ks = jax.random.split(key, 8)

    def u(k, shape, fan_in):
        bound = 1.0 / jnp.sqrt(float(fan_in))
        return jax.random.uniform(k, shape, jnp.float32, -bound, bound)

    return {
        "conv1_w": u(ks[0], (6, 1, 5, 5), 1 * 5 * 5),
        "conv1_b": u(ks[1], (6,), 1 * 5 * 5),
        "conv2_w": u(ks[2], (16, 6, 5, 5), 6 * 5 * 5),
        "conv2_b": u(ks[3], (16,), 6 * 5 * 5),
        "fc1_w": u(ks[4], (64, 256), 256),
        "fc1_b": u(ks[5], (64,), 256),
        "fc2_w": u(ks[6], (1, 64), 64),
        "fc2_b": u(ks[7], (1,), 64),
    }


def prepare_params(params):
    """One-time weight padding / rearrangement + constant selector matrices."""
    # conv1: (8, 32); rows 0..5 = weights, column 25 = bias (ones-row trick), rest zero.
    w1 = jnp.zeros((8, 32), jnp.float32)
    w1 = w1.at[:6, :25].set(params["conv1_w"].reshape(6, 25))
    w1 = w1.at[:6, 25].set(params["conv1_b"])

    # conv2: (25, 16, 8); [i*5+j, out_ch, in_ch] with in_ch zero-padded 6 -> 8.
    w2 = jnp.zeros((25, 16, 8), jnp.float32)
    w2 = w2.at[:, :, :6].set(
        jnp.transpose(params["conv2_w"].reshape(16, 6, 25), (2, 0, 1)))
    b2 = params["conv2_b"].reshape(16, 1)

    # fc1: (16, 16, 64); [c, p, n] = fc1_w[n, c*16 + p]  (PyTorch view(1,-1) order).
    fc1_wr = jnp.transpose(params["fc1_w"].reshape(64, 16, 16), (1, 2, 0))
    fc1_b = params["fc1_b"].reshape(1, 64)
    fc2_w = params["fc2_w"].reshape(1, 64)
    fc2_b = params["fc2_b"].reshape(1, 1)

    return {
        "w1": w1, "w2": w2, "b2": b2,
        "fc1_wr": fc1_wr, "fc1_b": fc1_b, "fc2_w": fc2_w, "fc2_b": fc2_b,
        "pool1": _pool_selectors(24, 24),   # (4, 576, 144)
        "t2": _shift_selectors(12, 5, 8),   # (25, 144, 64)
        "pool2": _pool_selectors(8, 8),     # (4, 64, 16)
    }


def _conv1_patches(x_img):
    """(28, 28) image -> (32, 576) transposed im2col (k=5, valid, row-major (kh, kw)).
    Row 25 is all-ones (folds conv1 bias into the matmul); rows 26..31 zero K-pad."""
    rows = [x_img[i:i + 24, j:j + 24].reshape(1, 576)
            for i in range(5) for j in range(5)]
    rows.append(jnp.ones((1, 576), x_img.dtype))
    rows.append(jnp.zeros((6, 576), x_img.dtype))
    return jnp.concatenate(rows, axis=0)


def net_forward(x, prep):
    # x: (1, 1, 28, 28) NCHW
    p1t = _conv1_patches(x[0, 0])                               # (32, 576)

    operands = (
        p1t, prep["w1"], prep["pool1"], prep["t2"], prep["w2"], prep["b2"],
        prep["pool2"], prep["fc1_wr"], prep["fc1_b"], prep["fc2_w"], prep["fc2_b"],
    )

    return pl.pallas_call(
        fused_net_kernel,
        out_shape=jax.ShapeDtypeStruct((1, 2), jnp.float32),
        grid=(1,),
        in_specs=[_full_spec(op.shape) for op in operands],
        out_specs=pl.BlockSpec((1, 2), lambda i: (0, 0)),
        compiler_params=pltpu.CompilerParams(dimension_semantics=("arbitrary",)),
    )(*operands)


if __name__ == "__main__":
    key = jax.random.PRNGKey(0)
    k_params, k_x = jax.random.split(key)
    params = init_params(k_params)
    prep = prepare_params(params)
    x = jax.random.normal(k_x, (1, 1, 28, 28), jnp.float32)

    out = jax.jit(net_forward)(x, prep)
    out = jax.block_until_ready(out)
    assert out.shape == (1, 2)
    assert bool(jnp.all(jnp.isfinite(out)))
    print("KERNEL_OK")
</pallas_src>

<mosaic_0001>
module attributes {stable_mosaic.version = 11 : i64} {
  func.func @fused_net_kernel(%arg0: i32, %arg1: memref<32x576xf32, #tpu.memory_space<vmem>>, %arg2: memref<8x32xf32, #tpu.memory_space<vmem>>, %arg3: memref<4x576x144xf32, #tpu.memory_space<vmem>>, %arg4: memref<25x144x64xf32, #tpu.memory_space<vmem>>, %arg5: memref<25x16x8xf32, #tpu.memory_space<vmem>>, %arg6: memref<16x1xf32, #tpu.memory_space<vmem>>, %arg7: memref<4x64x16xf32, #tpu.memory_space<vmem>>, %arg8: memref<16x16x64xf32, #tpu.memory_space<vmem>>, %arg9: memref<1x64xf32, #tpu.memory_space<vmem>>, %arg10: memref<1x64xf32, #tpu.memory_space<vmem>>, %arg11: memref<1x1xf32, #tpu.memory_space<vmem>>, %arg12: memref<1x2xf32, #tpu.memory_space<vmem>>) attributes {dimension_semantics = [#tpu.dimension_semantics<arbitrary>], iteration_bounds = array<i64: 1>, scalar_prefetch = 0 : i64, scratch_operands = 0 : i64, tpu.core_type = #tpu.core_type<tc>, window_params = [{pipeline_mode = #tpu.pipeline_mode<synchronous>, transform_indices = @transform_0, window_bounds = array<i64: 32, 576>}, {pipeline_mode = #tpu.pipeline_mode<synchronous>, transform_indices = @transform_1, window_bounds = array<i64: 8, 32>}, {pipeline_mode = #tpu.pipeline_mode<synchronous>, transform_indices = @transform_2, window_bounds = array<i64: 4, 576, 144>}, {pipeline_mode = #tpu.pipeline_mode<synchronous>, transform_indices = @transform_3, window_bounds = array<i64: 25, 144, 64>}, {pipeline_mode = #tpu.pipeline_mode<synchronous>, transform_indices = @transform_4, window_bounds = array<i64: 25, 16, 8>}, {pipeline_mode = #tpu.pipeline_mode<synchronous>, transform_indices = @transform_5, window_bounds = array<i64: 16, 1>}, {pipeline_mode = #tpu.pipeline_mode<synchronous>, transform_indices = @transform_6, window_bounds = array<i64: 4, 64, 16>}, {pipeline_mode = #tpu.pipeline_mode<synchronous>, transform_indices = @transform_7, window_bounds = array<i64: 16, 16, 64>}, {pipeline_mode = #tpu.pipeline_mode<synchronous>, transform_indices = @transform_8, window_bounds = array<i64: 1, 64>}, {pipeline_mode = #tpu.pipeline_mode<synchronous>, transform_indices = @transform_9, window_bounds = array<i64: 1, 64>}, {pipeline_mode = #tpu.pipeline_mode<synchronous>, transform_indices = @transform_10, window_bounds = array<i64: 1, 1>}, {pipeline_mode = #tpu.pipeline_mode<synchronous>, transform_indices = @transform_11, window_bounds = array<i64: 1, 2>}]} {
    %c0 = arith.constant 0 : index
    %c0_0 = arith.constant 0 : index
    %0 = vector.load %arg2[%c0, %c0_0] : memref<8x32xf32, #tpu.memory_space<vmem>>, vector<8x32xf32>
    %c0_1 = arith.constant 0 : index
    %c0_2 = arith.constant 0 : index
    %1 = vector.load %arg1[%c0_1, %c0_2] : memref<32x576xf32, #tpu.memory_space<vmem>>, vector<32x576xf32>
    %cst = arith.constant dense<0.000000e+00> : vector<8x576xf32>
    %2 = tpu.matmul %0, %1, %cst {dimension_numbers = #tpu.dot_dimension_numbers<[1], [0], [0], [1], [0, 0, 1, 1], [], []>} : vector<8x32xf32>, vector<32x576xf32>, vector<8x576xf32> -> vector<8x576xf32>
    %cst_3 = arith.constant 0.000000e+00 : f32
    %3 = vector.broadcast %cst_3 : f32 to vector<8x576xf32>
    %4 = arith.maximumf %2, %3 : vector<8x576xf32>
    %c0_4 = arith.constant 0 : index
    %c0_5 = arith.constant 0 : index
    %c0_6 = arith.constant 0 : index
    %5 = vector.load %arg3[%c0_4, %c0_5, %c0_6] : memref<4x576x144xf32, #tpu.memory_space<vmem>>, vector<1x576x144xf32>
    %6 = vector.shape_cast %5 : vector<1x576x144xf32> to vector<576x144xf32>
    %cst_7 = arith.constant dense<0.000000e+00> : vector<8x144xf32>
    %7 = tpu.matmul %4, %6, %cst_7 {dimension_numbers = #tpu.dot_dimension_numbers<[1], [0], [0], [1], [0, 0, 1, 1], [], []>} : vector<8x576xf32>, vector<576x144xf32>, vector<8x144xf32> -> vector<8x144xf32>
    %c1 = arith.constant 1 : index
    %c0_8 = arith.constant 0 : index
    %c0_9 = arith.constant 0 : index
    %8 = vector.load %arg3[%c1, %c0_8, %c0_9] : memref<4x576x144xf32, #tpu.memory_space<vmem>>, vector<1x576x144xf32>
    %9 = vector.shape_cast %8 : vector<1x576x144xf32> to vector<576x144xf32>
    %cst_10 = arith.constant dense<0.000000e+00> : vector<8x144xf32>
    %10 = tpu.matmul %4, %9, %cst_10 {dimension_numbers = #tpu.dot_dimension_numbers<[1], [0], [0], [1], [0, 0, 1, 1], [], []>} : vector<8x576xf32>, vector<576x144xf32>, vector<8x144xf32> -> vector<8x144xf32>
    %11 = arith.maximumf %7, %10 : vector<8x144xf32>
    %c2 = arith.constant 2 : index
    %c0_11 = arith.constant 0 : index
    %c0_12 = arith.constant 0 : index
    %12 = vector.load %arg3[%c2, %c0_11, %c0_12] : memref<4x576x144xf32, #tpu.memory_space<vmem>>, vector<1x576x144xf32>
    %13 = vector.shape_cast %12 : vector<1x576x144xf32> to vector<576x144xf32>
    %cst_13 = arith.constant dense<0.000000e+00> : vector<8x144xf32>
    %14 = tpu.matmul %4, %13, %cst_13 {dimension_numbers = #tpu.dot_dimension_numbers<[1], [0], [0], [1], [0, 0, 1, 1], [], []>} : vector<8x576xf32>, vector<576x144xf32>, vector<8x144xf32> -> vector<8x144xf32>
    %15 = arith.maximumf %11, %14 : vector<8x144xf32>
    %c3 = arith.constant 3 : index
    %c0_14 = arith.constant 0 : index
    %c0_15 = arith.constant 0 : index
    %16 = vector.load %arg3[%c3, %c0_14, %c0_15] : memref<4x576x144xf32, #tpu.memory_space<vmem>>, vector<1x576x144xf32>
    %17 = vector.shape_cast %16 : vector<1x576x144xf32> to vector<576x144xf32>
    %cst_16 = arith.constant dense<0.000000e+00> : vector<8x144xf32>
    %18 = tpu.matmul %4, %17, %cst_16 {dimension_numbers = #tpu.dot_dimension_numbers<[1], [0], [0], [1], [0, 0, 1, 1], [], []>} : vector<8x576xf32>, vector<576x144xf32>, vector<8x144xf32> -> vector<8x144xf32>
    %19 = arith.maximumf %15, %18 : vector<8x144xf32>
    %cst_17 = arith.constant 0.000000e+00 : f32
    %20 = vector.broadcast %cst_17 : f32 to vector<16x64xf32>
    %c0_18 = arith.constant 0 : index
    %c0_19 = arith.constant 0 : index
    %c0_20 = arith.constant 0 : index
    %21 = vector.load %arg4[%c0_18, %c0_19, %c0_20] : memref<25x144x64xf32, #tpu.memory_space<vmem>>, vector<1x144x64xf32>
    %22 = vector.shape_cast %21 : vector<1x144x64xf32> to vector<144x64xf32>
    %cst_21 = arith.constant dense<0.000000e+00> : vector<8x64xf32>
    %23 = tpu.matmul %19, %22, %cst_21 {dimension_numbers = #tpu.dot_dimension_numbers<[1], [0], [0], [1], [0, 0, 1, 1], [], []>} : vector<8x144xf32>, vector<144x64xf32>, vector<8x64xf32> -> vector<8x64xf32>
    %c0_22 = arith.constant 0 : index
    %c0_23 = arith.constant 0 : index
    %c0_24 = arith.constant 0 : index
    %24 = vector.load %arg5[%c0_22, %c0_23, %c0_24] : memref<25x16x8xf32, #tpu.memory_space<vmem>>, vector<1x16x8xf32>
    %25 = vector.shape_cast %24 : vector<1x16x8xf32> to vector<16x8xf32>
    %cst_25 = arith.constant dense<0.000000e+00> : vector<16x64xf32>
    %26 = tpu.matmul %25, %23, %cst_25 {dimension_numbers = #tpu.dot_dimension_numbers<[1], [0], [0], [1], [0, 0, 1, 1], [], []>} : vector<16x8xf32>, vector<8x64xf32>, vector<16x64xf32> -> vector<16x64xf32>
    %27 = arith.addf %20, %26 : vector<16x64xf32>
    %c1_26 = arith.constant 1 : index
    %c0_27 = arith.constant 0 : index
    %c0_28 = arith.constant 0 : index
    %28 = vector.load %arg4[%c1_26, %c0_27, %c0_28] : memref<25x144x64xf32, #tpu.memory_space<vmem>>, vector<1x144x64xf32>
    %29 = vector.shape_cast %28 : vector<1x144x64xf32> to vector<144x64xf32>
    %cst_29 = arith.constant dense<0.000000e+00> : vector<8x64xf32>
    %30 = tpu.matmul %19, %29, %cst_29 {dimension_numbers = #tpu.dot_dimension_numbers<[1], [0], [0], [1], [0, 0, 1, 1], [], []>} : vector<8x144xf32>, vector<144x64xf32>, vector<8x64xf32> -> vector<8x64xf32>
    %c1_30 = arith.constant 1 : index
    %c0_31 = arith.constant 0 : index
    %c0_32 = arith.constant 0 : index
    %31 = vector.load %arg5[%c1_30, %c0_31, %c0_32] : memref<25x16x8xf32, #tpu.memory_space<vmem>>, vector<1x16x8xf32>
    %32 = vector.shape_cast %31 : vector<1x16x8xf32> to vector<16x8xf32>
    %cst_33 = arith.constant dense<0.000000e+00> : vector<16x64xf32>
    %33 = tpu.matmul %32, %30, %cst_33 {dimension_numbers = #tpu.dot_dimension_numbers<[1], [0], [0], [1], [0, 0, 1, 1], [], []>} : vector<16x8xf32>, vector<8x64xf32>, vector<16x64xf32> -> vector<16x64xf32>
    %34 = arith.addf %27, %33 : vector<16x64xf32>
    %c2_34 = arith.constant 2 : index
    %c0_35 = arith.constant 0 : index
    %c0_36 = arith.constant 0 : index
    %35 = vector.load %arg4[%c2_34, %c0_35, %c0_36] : memref<25x144x64xf32, #tpu.memory_space<vmem>>, vector<1x144x64xf32>
    %36 = vector.shape_cast %35 : vector<1x144x64xf32> to vector<144x64xf32>
    %cst_37 = arith.constant dense<0.000000e+00> : vector<8x64xf32>
    %37 = tpu.matmul %19, %36, %cst_37 {dimension_numbers = #tpu.dot_dimension_numbers<[1], [0], [0], [1], [0, 0, 1, 1], [], []>} : vector<8x144xf32>, vector<144x64xf32>, vector<8x64xf32> -> vector<8x64xf32>
    %c2_38 = arith.constant 2 : index
    %c0_39 = arith.constant 0 : index
    %c0_40 = arith.constant 0 : index
    %38 = vector.load %arg5[%c2_38, %c0_39, %c0_40] : memref<25x16x8xf32, #tpu.memory_space<vmem>>, vector<1x16x8xf32>
    %39 = vector.shape_cast %38 : vector<1x16x8xf32> to vector<16x8xf32>
    %cst_41 = arith.constant dense<0.000000e+00> : vector<16x64xf32>
    %40 = tpu.matmul %39, %37, %cst_41 {dimension_numbers = #tpu.dot_dimension_numbers<[1], [0], [0], [1], [0, 0, 1, 1], [], []>} : vector<16x8xf32>, vector<8x64xf32>, vector<16x64xf32> -> vector<16x64xf32>
    %41 = arith.addf %34, %40 : vector<16x64xf32>
    %c3_42 = arith.constant 3 : index
    %c0_43 = arith.constant 0 : index
    %c0_44 = arith.constant 0 : index
    %42 = vector.load %arg4[%c3_42, %c0_43, %c0_44] : memref<25x144x64xf32, #tpu.memory_space<vmem>>, vector<1x144x64xf32>
    %43 = vector.shape_cast %42 : vector<1x144x64xf32> to vector<144x64xf32>
    %cst_45 = arith.constant dense<0.000000e+00> : vector<8x64xf32>
    %44 = tpu.matmul %19, %43, %cst_45 {dimension_numbers = #tpu.dot_dimension_numbers<[1], [0], [0], [1], [0, 0, 1, 1], [], []>} : vector<8x144xf32>, vector<144x64xf32>, vector<8x64xf32> -> vector<8x64xf32>
    %c3_46 = arith.constant 3 : index
    %c0_47 = arith.constant 0 : index
    %c0_48 = arith.constant 0 : index
    %45 = vector.load %arg5[%c3_46, %c0_47, %c0_48] : memref<25x16x8xf32, #tpu.memory_space<vmem>>, vector<1x16x8xf32>
    %46 = vector.shape_cast %45 : vector<1x16x8xf32> to vector<16x8xf32>
    %cst_49 = arith.constant dense<0.000000e+00> : vector<16x64xf32>
    %47 = tpu.matmul %46, %44, %cst_49 {dimension_numbers = #tpu.dot_dimension_numbers<[1], [0], [0], [1], [0, 0, 1, 1], [], []>} : vector<16x8xf32>, vector<8x64xf32>, vector<16x64xf32> -> vector<16x64xf32>
    %48 = arith.addf %41, %47 : vector<16x64xf32>
    %c4 = arith.constant 4 : index
    %c0_50 = arith.constant 0 : index
    %c0_51 = arith.constant 0 : index
    %49 = vector.load %arg4[%c4, %c0_50, %c0_51] : memref<25x144x64xf32, #tpu.memory_space<vmem>>, vector<1x144x64xf32>
    %50 = vector.shape_cast %49 : vector<1x144x64xf32> to vector<144x64xf32>
    %cst_52 = arith.constant dense<0.000000e+00> : vector<8x64xf32>
    %51 = tpu.matmul %19, %50, %cst_52 {dimension_numbers = #tpu.dot_dimension_numbers<[1], [0], [0], [1], [0, 0, 1, 1], [], []>} : vector<8x144xf32>, vector<144x64xf32>, vector<8x64xf32> -> vector<8x64xf32>
    %c4_53 = arith.constant 4 : index
    %c0_54 = arith.constant 0 : index
    %c0_55 = arith.constant 0 : index
    %52 = vector.load %arg5[%c4_53, %c0_54, %c0_55] : memref<25x16x8xf32, #tpu.memory_space<vmem>>, vector<1x16x8xf32>
    %53 = vector.shape_cast %52 : vector<1x16x8xf32> to vector<16x8xf32>
    %cst_56 = arith.constant dense<0.000000e+00> : vector<16x64xf32>
    %54 = tpu.matmul %53, %51, %cst_56 {dimension_numbers = #tpu.dot_dimension_numbers<[1], [0], [0], [1], [0, 0, 1, 1], [], []>} : vector<16x8xf32>, vector<8x64xf32>, vector<16x64xf32> -> vector<16x64xf32>
    %55 = arith.addf %48, %54 : vector<16x64xf32>
    %c5 = arith.constant 5 : index
    %c0_57 = arith.constant 0 : index
    %c0_58 = arith.constant 0 : index
    %56 = vector.load %arg4[%c5, %c0_57, %c0_58] : memref<25x144x64xf32, #tpu.memory_space<vmem>>, vector<1x144x64xf32>
    %57 = vector.shape_cast %56 : vector<1x144x64xf32> to vector<144x64xf32>
    %cst_59 = arith.constant dense<0.000000e+00> : vector<8x64xf32>
    %58 = tpu.matmul %19, %57, %cst_59 {dimension_numbers = #tpu.dot_dimension_numbers<[1], [0], [0], [1], [0, 0, 1, 1], [], []>} : vector<8x144xf32>, vector<144x64xf32>, vector<8x64xf32> -> vector<8x64xf32>
    %c5_60 = arith.constant 5 : index
    %c0_61 = arith.constant 0 : index
    %c0_62 = arith.constant 0 : index
    %59 = vector.load %arg5[%c5_60, %c0_61, %c0_62] : memref<25x16x8xf32, #tpu.memory_space<vmem>>, vector<1x16x8xf32>
    %60 = vector.shape_cast %59 : vector<1x16x8xf32> to vector<16x8xf32>
    %cst_63 = arith.constant dense<0.000000e+00> : vector<16x64xf32>
    %61 = tpu.matmul %60, %58, %cst_63 {dimension_numbers = #tpu.dot_dimension_numbers<[1], [0], [0], [1], [0, 0, 1, 1], [], []>} : vector<16x8xf32>, vector<8x64xf32>, vector<16x64xf32> -> vector<16x64xf32>
    %62 = arith.addf %55, %61 : vector<16x64xf32>
    %c6 = arith.constant 6 : index
    %c0_64 = arith.constant 0 : index
    %c0_65 = arith.constant 0 : index
    %63 = vector.load %arg4[%c6, %c0_64, %c0_65] : memref<25x144x64xf32, #tpu.memory_space<vmem>>, vector<1x144x64xf32>
    %64 = vector.shape_cast %63 : vector<1x144x64xf32> to vector<144x64xf32>
    %cst_66 = arith.constant dense<0.000000e+00> : vector<8x64xf32>
    %65 = tpu.matmul %19, %64, %cst_66 {dimension_numbers = #tpu.dot_dimension_numbers<[1], [0], [0], [1], [0, 0, 1, 1], [], []>} : vector<8x144xf32>, vector<144x64xf32>, vector<8x64xf32> -> vector<8x64xf32>
    %c6_67 = arith.constant 6 : index
    %c0_68 = arith.constant 0 : index
    %c0_69 = arith.constant 0 : index
    %66 = vector.load %arg5[%c6_67, %c0_68, %c0_69] : memref<25x16x8xf32, #tpu.memory_space<vmem>>, vector<1x16x8xf32>
    %67 = vector.shape_cast %66 : vector<1x16x8xf32> to vector<16x8xf32>
    %cst_70 = arith.constant dense<0.000000e+00> : vector<16x64xf32>
    %68 = tpu.matmul %67, %65, %cst_70 {dimension_numbers = #tpu.dot_dimension_numbers<[1], [0], [0], [1], [0, 0, 1, 1], [], []>} : vector<16x8xf32>, vector<8x64xf32>, vector<16x64xf32> -> vector<16x64xf32>
    %69 = arith.addf %62, %68 : vector<16x64xf32>
    %c7 = arith.constant 7 : index
    %c0_71 = arith.constant 0 : index
    %c0_72 = arith.constant 0 : index
    %70 = vector.load %arg4[%c7, %c0_71, %c0_72] : memref<25x144x64xf32, #tpu.memory_space<vmem>>, vector<1x144x64xf32>
    %71 = vector.shape_cast %70 : vector<1x144x64xf32> to vector<144x64xf32>
    %cst_73 = arith.constant dense<0.000000e+00> : vector<8x64xf32>
    %72 = tpu.matmul %19, %71, %cst_73 {dimension_numbers = #tpu.dot_dimension_numbers<[1], [0], [0], [1], [0, 0, 1, 1], [], []>} : vector<8x144xf32>, vector<144x64xf32>, vector<8x64xf32> -> vector<8x64xf32>
    %c7_74 = arith.constant 7 : index
    %c0_75 = arith.constant 0 : index
    %c0_76 = arith.constant 0 : index
    %73 = vector.load %arg5[%c7_74, %c0_75, %c0_76] : memref<25x16x8xf32, #tpu.memory_space<vmem>>, vector<1x16x8xf32>
    %74 = vector.shape_cast %73 : vector<1x16x8xf32> to vector<16x8xf32>
    %cst_77 = arith.constant dense<0.000000e+00> : vector<16x64xf32>
    %75 = tpu.matmul %74, %72, %cst_77 {dimension_numbers = #tpu.dot_dimension_numbers<[1], [0], [0], [1], [0, 0, 1, 1], [], []>} : vector<16x8xf32>, vector<8x64xf32>, vector<16x64xf32> -> vector<16x64xf32>
    %76 = arith.addf %69, %75 : vector<16x64xf32>
    %c8 = arith.constant 8 : index
    %c0_78 = arith.constant 0 : index
    %c0_79 = arith.constant 0 : index
    %77 = vector.load %arg4[%c8, %c0_78, %c0_79] : memref<25x144x64xf32, #tpu.memory_space<vmem>>, vector<1x144x64xf32>
    %78 = vector.shape_cast %77 : vector<1x144x64xf32> to vector<144x64xf32>
    %cst_80 = arith.constant dense<0.000000e+00> : vector<8x64xf32>
    %79 = tpu.matmul %19, %78, %cst_80 {dimension_numbers = #tpu.dot_dimension_numbers<[1], [0], [0], [1], [0, 0, 1, 1], [], []>} : vector<8x144xf32>, vector<144x64xf32>, vector<8x64xf32> -> vector<8x64xf32>
    %c8_81 = arith.constant 8 : index
    %c0_82 = arith.constant 0 : index
    %c0_83 = arith.constant 0 : index
    %80 = vector.load %arg5[%c8_81, %c0_82, %c0_83] : memref<25x16x8xf32, #tpu.memory_space<vmem>>, vector<1x16x8xf32>
    %81 = vector.shape_cast %80 : vector<1x16x8xf32> to vector<16x8xf32>
    %cst_84 = arith.constant dense<0.000000e+00> : vector<16x64xf32>
    %82 = tpu.matmul %81, %79, %cst_84 {dimension_numbers = #tpu.dot_dimension_numbers<[1], [0], [0], [1], [0, 0, 1, 1], [], []>} : vector<16x8xf32>, vector<8x64xf32>, vector<16x64xf32> -> vector<16x64xf32>
    %83 = arith.addf %76, %82 : vector<16x64xf32>
    %c9 = arith.constant 9 : index
    %c0_85 = arith.constant 0 : index
    %c0_86 = arith.constant 0 : index
    %84 = vector.load %arg4[%c9, %c0_85, %c0_86] : memref<25x144x64xf32, #tpu.memory_space<vmem>>, vector<1x144x64xf32>
    %85 = vector.shape_cast %84 : vector<1x144x64xf32> to vector<144x64xf32>
    %cst_87 = arith.constant dense<0.000000e+00> : vector<8x64xf32>
    %86 = tpu.matmul %19, %85, %cst_87 {dimension_numbers = #tpu.dot_dimension_numbers<[1], [0], [0], [1], [0, 0, 1, 1], [], []>} : vector<8x144xf32>, vector<144x64xf32>, vector<8x64xf32> -> vector<8x64xf32>
    %c9_88 = arith.constant 9 : index
    %c0_89 = arith.constant 0 : index
    %c0_90 = arith.constant 0 : index
    %87 = vector.load %arg5[%c9_88, %c0_89, %c0_90] : memref<25x16x8xf32, #tpu.memory_space<vmem>>, vector<1x16x8xf32>
    %88 = vector.shape_cast %87 : vector<1x16x8xf32> to vector<16x8xf32>
    %cst_91 = arith.constant dense<0.000000e+00> : vector<16x64xf32>
    %89 = tpu.matmul %88, %86, %cst_91 {dimension_numbers = #tpu.dot_dimension_numbers<[1], [0], [0], [1], [0, 0, 1, 1], [], []>} : vector<16x8xf32>, vector<8x64xf32>, vector<16x64xf32> -> vector<16x64xf32>
    %90 = arith.addf %83, %89 : vector<16x64xf32>
    %c10 = arith.constant 10 : index
    %c0_92 = arith.constant 0 : index
    %c0_93 = arith.constant 0 : index
    %91 = vector.load %arg4[%c10, %c0_92, %c0_93] : memref<25x144x64xf32, #tpu.memory_space<vmem>>, vector<1x144x64xf32>
    %92 = vector.shape_cast %91 : vector<1x144x64xf32> to vector<144x64xf32>
    %cst_94 = arith.constant dense<0.000000e+00> : vector<8x64xf32>
    %93 = tpu.matmul %19, %92, %cst_94 {dimension_numbers = #tpu.dot_dimension_numbers<[1], [0], [0], [1], [0, 0, 1, 1], [], []>} : vector<8x144xf32>, vector<144x64xf32>, vector<8x64xf32> -> vector<8x64xf32>
    %c10_95 = arith.constant 10 : index
    %c0_96 = arith.constant 0 : index
    %c0_97 = arith.constant 0 : index
    %94 = vector.load %arg5[%c10_95, %c0_96, %c0_97] : memref<25x16x8xf32, #tpu.memory_space<vmem>>, vector<1x16x8xf32>
    %95 = vector.shape_cast %94 : vector<1x16x8xf32> to vector<16x8xf32>
    %cst_98 = arith.constant dense<0.000000e+00> : vector<16x64xf32>
    %96 = tpu.matmul %95, %93, %cst_98 {dimension_numbers = #tpu.dot_dimension_numbers<[1], [0], [0], [1], [0, 0, 1, 1], [], []>} : vector<16x8xf32>, vector<8x64xf32>, vector<16x64xf32> -> vector<16x64xf32>
    %97 = arith.addf %90, %96 : vector<16x64xf32>
    %c11 = arith.constant 11 : index
    %c0_99 = arith.constant 0 : index
    %c0_100 = arith.constant 0 : index
    %98 = vector.load %arg4[%c11, %c0_99, %c0_100] : memref<25x144x64xf32, #tpu.memory_space<vmem>>, vector<1x144x64xf32>
    %99 = vector.shape_cast %98 : vector<1x144x64xf32> to vector<144x64xf32>
    %cst_101 = arith.constant dense<0.000000e+00> : vector<8x64xf32>
    %100 = tpu.matmul %19, %99, %cst_101 {dimension_numbers = #tpu.dot_dimension_numbers<[1], [0], [0], [1], [0, 0, 1, 1], [], []>} : vector<8x144xf32>, vector<144x64xf32>, vector<8x64xf32> -> vector<8x64xf32>
    %c11_102 = arith.constant 11 : index
    %c0_103 = arith.constant 0 : index
    %c0_104 = arith.constant 0 : index
    %101 = vector.load %arg5[%c11_102, %c0_103, %c0_104] : memref<25x16x8xf32, #tpu.memory_space<vmem>>, vector<1x16x8xf32>
    %102 = vector.shape_cast %101 : vector<1x16x8xf32> to vector<16x8xf32>
    %cst_105 = arith.constant dense<0.000000e+00> : vector<16x64xf32>
    %103 = tpu.matmul %102, %100, %cst_105 {dimension_numbers = #tpu.dot_dimension_numbers<[1], [0], [0], [1], [0, 0, 1, 1], [], []>} : vector<16x8xf32>, vector<8x64xf32>, vector<16x64xf32> -> vector<16x64xf32>
    %104 = arith.addf %97, %103 : vector<16x64xf32>
    %c12 = arith.constant 12 : index
    %c0_106 = arith.constant 0 : index
    %c0_107 = arith.constant 0 : index
    %105 = vector.load %arg4[%c12, %c0_106, %c0_107] : memref<25x144x64xf32, #tpu.memory_space<vmem>>, vector<1x144x64xf32>
    %106 = vector.shape_cast %105 : vector<1x144x64xf32> to vector<144x64xf32>
    %cst_108 = arith.constant dense<0.000000e+00> : vector<8x64xf32>
    %107 = tpu.matmul %19, %106, %cst_108 {dimension_numbers = #tpu.dot_dimension_numbers<[1], [0], [0], [1], [0, 0, 1, 1], [], []>} : vector<8x144xf32>, vector<144x64xf32>, vector<8x64xf32> -> vector<8x64xf32>
    %c12_109 = arith.constant 12 : index
    %c0_110 = arith.constant 0 : index
    %c0_111 = arith.constant 0 : index
    %108 = vector.load %arg5[%c12_109, %c0_110, %c0_111] : memref<25x16x8xf32, #tpu.memory_space<vmem>>, vector<1x16x8xf32>
    %109 = vector.shape_cast %108 : vector<1x16x8xf32> to vector<16x8xf32>
    %cst_112 = arith.constant dense<0.000000e+00> : vector<16x64xf32>
    %110 = tpu.matmul %109, %107, %cst_112 {dimension_numbers = #tpu.dot_dimension_numbers<[1], [0], [0], [1], [0, 0, 1, 1], [], []>} : vector<16x8xf32>, vector<8x64xf32>, vector<16x64xf32> -> vector<16x64xf32>
    %111 = arith.addf %104, %110 : vector<16x64xf32>
    %c13 = arith.constant 13 : index
    %c0_113 = arith.constant 0 : index
    %c0_114 = arith.constant 0 : index
    %112 = vector.load %arg4[%c13, %c0_113, %c0_114] : memref<25x144x64xf32, #tpu.memory_space<vmem>>, vector<1x144x64xf32>
    %113 = vector.shape_cast %112 : vector<1x144x64xf32> to vector<144x64xf32>
    %cst_115 = arith.constant dense<0.000000e+00> : vector<8x64xf32>
    %114 = tpu.matmul %19, %113, %cst_115 {dimension_numbers = #tpu.dot_dimension_numbers<[1], [0], [0], [1], [0, 0, 1, 1], [], []>} : vector<8x144xf32>, vector<144x64xf32>, vector<8x64xf32> -> vector<8x64xf32>
    %c13_116 = arith.constant 13 : index
    %c0_117 = arith.constant 0 : index
    %c0_118 = arith.constant 0 : index
    %115 = vector.load %arg5[%c13_116, %c0_117, %c0_118] : memref<25x16x8xf32, #tpu.memory_space<vmem>>, vector<1x16x8xf32>
    %116 = vector.shape_cast %115 : vector<1x16x8xf32> to vector<16x8xf32>
    %cst_119 = arith.constant dense<0.000000e+00> : vector<16x64xf32>
    %117 = tpu.matmul %116, %114, %cst_119 {dimension_numbers = #tpu.dot_dimension_numbers<[1], [0], [0], [1], [0, 0, 1, 1], [], []>} : vector<16x8xf32>, vector<8x64xf32>, vector<16x64xf32> -> vector<16x64xf32>
    %118 = arith.addf %111, %117 : vector<16x64xf32>
    %c14 = arith.constant 14 : index
    %c0_120 = arith.constant 0 : index
    %c0_121 = arith.constant 0 : index
    %119 = vector.load %arg4[%c14, %c0_120, %c0_121] : memref<25x144x64xf32, #tpu.memory_space<vmem>>, vector<1x144x64xf32>
    %120 = vector.shape_cast %119 : vector<1x144x64xf32> to vector<144x64xf32>
    %cst_122 = arith.constant dense<0.000000e+00> : vector<8x64xf32>
    %121 = tpu.matmul %19, %120, %cst_122 {dimension_numbers = #tpu.dot_dimension_numbers<[1], [0], [0], [1], [0, 0, 1, 1], [], []>} : vector<8x144xf32>, vector<144x64xf32>, vector<8x64xf32> -> vector<8x64xf32>
    %c14_123 = arith.constant 14 : index
    %c0_124 = arith.constant 0 : index
    %c0_125 = arith.constant 0 : index
    %122 = vector.load %arg5[%c14_123, %c0_124, %c0_125] : memref<25x16x8xf32, #tpu.memory_space<vmem>>, vector<1x16x8xf32>
    %123 = vector.shape_cast %122 : vector<1x16x8xf32> to vector<16x8xf32>
    %cst_126 = arith.constant dense<0.000000e+00> : vector<16x64xf32>
    %124 = tpu.matmul %123, %121, %cst_126 {dimension_numbers = #tpu.dot_dimension_numbers<[1], [0], [0], [1], [0, 0, 1, 1], [], []>} : vector<16x8xf32>, vector<8x64xf32>, vector<16x64xf32> -> vector<16x64xf32>
    %125 = arith.addf %118, %124 : vector<16x64xf32>
    %c15 = arith.constant 15 : index
    %c0_127 = arith.constant 0 : index
    %c0_128 = arith.constant 0 : index
    %126 = vector.load %arg4[%c15, %c0_127, %c0_128] : memref<25x144x64xf32, #tpu.memory_space<vmem>>, vector<1x144x64xf32>
    %127 = vector.shape_cast %126 : vector<1x144x64xf32> to vector<144x64xf32>
    %cst_129 = arith.constant dense<0.000000e+00> : vector<8x64xf32>
    %128 = tpu.matmul %19, %127, %cst_129 {dimension_numbers = #tpu.dot_dimension_numbers<[1], [0], [0], [1], [0, 0, 1, 1], [], []>} : vector<8x144xf32>, vector<144x64xf32>, vector<8x64xf32> -> vector<8x64xf32>
    %c15_130 = arith.constant 15 : index
    %c0_131 = arith.constant 0 : index
    %c0_132 = arith.constant 0 : index
    %129 = vector.load %arg5[%c15_130, %c0_131, %c0_132] : memref<25x16x8xf32, #tpu.memory_space<vmem>>, vector<1x16x8xf32>
    %130 = vector.shape_cast %129 : vector<1x16x8xf32> to vector<16x8xf32>
    %cst_133 = arith.constant dense<0.000000e+00> : vector<16x64xf32>
    %131 = tpu.matmul %130, %128, %cst_133 {dimension_numbers = #tpu.dot_dimension_numbers<[1], [0], [0], [1], [0, 0, 1, 1], [], []>} : vector<16x8xf32>, vector<8x64xf32>, vector<16x64xf32> -> vector<16x64xf32>
    %132 = arith.addf %125, %131 : vector<16x64xf32>
    %c16 = arith.constant 16 : index
    %c0_134 = arith.constant 0 : index
    %c0_135 = arith.constant 0 : index
    %133 = vector.load %arg4[%c16, %c0_134, %c0_135] : memref<25x144x64xf32, #tpu.memory_space<vmem>>, vector<1x144x64xf32>
    %134 = vector.shape_cast %133 : vector<1x144x64xf32> to vector<144x64xf32>
    %cst_136 = arith.constant dense<0.000000e+00> : vector<8x64xf32>
    %135 = tpu.matmul %19, %134, %cst_136 {dimension_numbers = #tpu.dot_dimension_numbers<[1], [0], [0], [1], [0, 0, 1, 1], [], []>} : vector<8x144xf32>, vector<144x64xf32>, vector<8x64xf32> -> vector<8x64xf32>
    %c16_137 = arith.constant 16 : index
    %c0_138 = arith.constant 0 : index
    %c0_139 = arith.constant 0 : index
    %136 = vector.load %arg5[%c16_137, %c0_138, %c0_139] : memref<25x16x8xf32, #tpu.memory_space<vmem>>, vector<1x16x8xf32>
    %137 = vector.shape_cast %136 : vector<1x16x8xf32> to vector<16x8xf32>
    %cst_140 = arith.constant dense<0.000000e+00> : vector<16x64xf32>
    %138 = tpu.matmul %137, %135, %cst_140 {dimension_numbers = #tpu.dot_dimension_numbers<[1], [0], [0], [1], [0, 0, 1, 1], [], []>} : vector<16x8xf32>, vector<8x64xf32>, vector<16x64xf32> -> vector<16x64xf32>
    %139 = arith.addf %132, %138 : vector<16x64xf32>
    %c17 = arith.constant 17 : index
    %c0_141 = arith.constant 0 : index
    %c0_142 = arith.constant 0 : index
    %140 = vector.load %arg4[%c17, %c0_141, %c0_142] : memref<25x144x64xf32, #tpu.memory_space<vmem>>, vector<1x144x64xf32>
    %141 = vector.shape_cast %140 : vector<1x144x64xf32> to vector<144x64xf32>
    %cst_143 = arith.constant dense<0.000000e+00> : vector<8x64xf32>
    %142 = tpu.matmul %19, %141, %cst_143 {dimension_numbers = #tpu.dot_dimension_numbers<[1], [0], [0], [1], [0, 0, 1, 1], [], []>} : vector<8x144xf32>, vector<144x64xf32>, vector<8x64xf32> -> vector<8x64xf32>
    %c17_144 = arith.constant 17 : index
    %c0_145 = arith.constant 0 : index
    %c0_146 = arith.constant 0 : index
    %143 = vector.load %arg5[%c17_144, %c0_145, %c0_146] : memref<25x16x8xf32, #tpu.memory_space<vmem>>, vector<1x16x8xf32>
    %144 = vector.shape_cast %143 : vector<1x16x8xf32> to vector<16x8xf32>
    %cst_147 = arith.constant dense<0.000000e+00> : vector<16x64xf32>
    %145 = tpu.matmul %144, %142, %cst_147 {dimension_numbers = #tpu.dot_dimension_numbers<[1], [0], [0], [1], [0, 0, 1, 1], [], []>} : vector<16x8xf32>, vector<8x64xf32>, vector<16x64xf32> -> vector<16x64xf32>
    %146 = arith.addf %139, %145 : vector<16x64xf32>
    %c18 = arith.constant 18 : index
    %c0_148 = arith.constant 0 : index
    %c0_149 = arith.constant 0 : index
    %147 = vector.load %arg4[%c18, %c0_148, %c0_149] : memref<25x144x64xf32, #tpu.memory_space<vmem>>, vector<1x144x64xf32>
    %148 = vector.shape_cast %147 : vector<1x144x64xf32> to vector<144x64xf32>
    %cst_150 = arith.constant dense<0.000000e+00> : vector<8x64xf32>
    %149 = tpu.matmul %19, %148, %cst_150 {dimension_numbers = #tpu.dot_dimension_numbers<[1], [0], [0], [1], [0, 0, 1, 1], [], []>} : vector<8x144xf32>, vector<144x64xf32>, vector<8x64xf32> -> vector<8x64xf32>
    %c18_151 = arith.constant 18 : index
    %c0_152 = arith.constant 0 : index
    %c0_153 = arith.constant 0 : index
    %150 = vector.load %arg5[%c18_151, %c0_152, %c0_153] : memref<25x16x8xf32, #tpu.memory_space<vmem>>, vector<1x16x8xf32>
    %151 = vector.shape_cast %150 : vector<1x16x8xf32> to vector<16x8xf32>
    %cst_154 = arith.constant dense<0.000000e+00> : vector<16x64xf32>
    %152 = tpu.matmul %151, %149, %cst_154 {dimension_numbers = #tpu.dot_dimension_numbers<[1], [0], [0], [1], [0, 0, 1, 1], [], []>} : vector<16x8xf32>, vector<8x64xf32>, vector<16x64xf32> -> vector<16x64xf32>
    %153 = arith.addf %146, %152 : vector<16x64xf32>
    %c19 = arith.constant 19 : index
    %c0_155 = arith.constant 0 : index
    %c0_156 = arith.constant 0 : index
    %154 = vector.load %arg4[%c19, %c0_155, %c0_156] : memref<25x144x64xf32, #tpu.memory_space<vmem>>, vector<1x144x64xf32>
    %155 = vector.shape_cast %154 : vector<1x144x64xf32> to vector<144x64xf32>
    %cst_157 = arith.constant dense<0.000000e+00> : vector<8x64xf32>
    %156 = tpu.matmul %19, %155, %cst_157 {dimension_numbers = #tpu.dot_dimension_numbers<[1], [0], [0], [1], [0, 0, 1, 1], [], []>} : vector<8x144xf32>, vector<144x64xf32>, vector<8x64xf32> -> vector<8x64xf32>
    %c19_158 = arith.constant 19 : index
    %c0_159 = arith.constant 0 : index
    %c0_160 = arith.constant 0 : index
    %157 = vector.load %arg5[%c19_158, %c0_159, %c0_160] : memref<25x16x8xf32, #tpu.memory_space<vmem>>, vector<1x16x8xf32>
    %158 = vector.shape_cast %157 : vector<1x16x8xf32> to vector<16x8xf32>
    %cst_161 = arith.constant dense<0.000000e+00> : vector<16x64xf32>
    %159 = tpu.matmul %158, %156, %cst_161 {dimension_numbers = #tpu.dot_dimension_numbers<[1], [0], [0], [1], [0, 0, 1, 1], [], []>} : vector<16x8xf32>, vector<8x64xf32>, vector<16x64xf32> -> vector<16x64xf32>
    %160 = arith.addf %153, %159 : vector<16x64xf32>
    %c20 = arith.constant 20 : index
    %c0_162 = arith.constant 0 : index
    %c0_163 = arith.constant 0 : index
    %161 = vector.load %arg4[%c20, %c0_162, %c0_163] : memref<25x144x64xf32, #tpu.memory_space<vmem>>, vector<1x144x64xf32>
    %162 = vector.shape_cast %161 : vector<1x144x64xf32> to vector<144x64xf32>
    %cst_164 = arith.constant dense<0.000000e+00> : vector<8x64xf32>
    %163 = tpu.matmul %19, %162, %cst_164 {dimension_numbers = #tpu.dot_dimension_numbers<[1], [0], [0], [1], [0, 0, 1, 1], [], []>} : vector<8x144xf32>, vector<144x64xf32>, vector<8x64xf32> -> vector<8x64xf32>
    %c20_165 = arith.constant 20 : index
    %c0_166 = arith.constant 0 : index
    %c0_167 = arith.constant 0 : index
    %164 = vector.load %arg5[%c20_165, %c0_166, %c0_167] : memref<25x16x8xf32, #tpu.memory_space<vmem>>, vector<1x16x8xf32>
    %165 = vector.shape_cast %164 : vector<1x16x8xf32> to vector<16x8xf32>
    %cst_168 = arith.constant dense<0.000000e+00> : vector<16x64xf32>
    %166 = tpu.matmul %165, %163, %cst_168 {dimension_numbers = #tpu.dot_dimension_numbers<[1], [0], [0], [1], [0, 0, 1, 1], [], []>} : vector<16x8xf32>, vector<8x64xf32>, vector<16x64xf32> -> vector<16x64xf32>
    %167 = arith.addf %160, %166 : vector<16x64xf32>
    %c21 = arith.constant 21 : index
    %c0_169 = arith.constant 0 : index
    %c0_170 = arith.constant 0 : index
    %168 = vector.load %arg4[%c21, %c0_169, %c0_170] : memref<25x144x64xf32, #tpu.memory_space<vmem>>, vector<1x144x64xf32>
    %169 = vector.shape_cast %168 : vector<1x144x64xf32> to vector<144x64xf32>
    %cst_171 = arith.constant dense<0.000000e+00> : vector<8x64xf32>
    %170 = tpu.matmul %19, %169, %cst_171 {dimension_numbers = #tpu.dot_dimension_numbers<[1], [0], [0], [1], [0, 0, 1, 1], [], []>} : vector<8x144xf32>, vector<144x64xf32>, vector<8x64xf32> -> vector<8x64xf32>
    %c21_172 = arith.constant 21 : index
    %c0_173 = arith.constant 0 : index
    %c0_174 = arith.constant 0 : index
    %171 = vector.load %arg5[%c21_172, %c0_173, %c0_174] : memref<25x16x8xf32, #tpu.memory_space<vmem>>, vector<1x16x8xf32>
    %172 = vector.shape_cast %171 : vector<1x16x8xf32> to vector<16x8xf32>
    %cst_175 = arith.constant dense<0.000000e+00> : vector<16x64xf32>
    %173 = tpu.matmul %172, %170, %cst_175 {dimension_numbers = #tpu.dot_dimension_numbers<[1], [0], [0], [1], [0, 0, 1, 1], [], []>} : vector<16x8xf32>, vector<8x64xf32>, vector<16x64xf32> -> vector<16x64xf32>
    %174 = arith.addf %167, %173 : vector<16x64xf32>
    %c22 = arith.constant 22 : index
    %c0_176 = arith.constant 0 : index
    %c0_177 = arith.constant 0 : index
    %175 = vector.load %arg4[%c22, %c0_176, %c0_177] : memref<25x144x64xf32, #tpu.memory_space<vmem>>, vector<1x144x64xf32>
    %176 = vector.shape_cast %175 : vector<1x144x64xf32> to vector<144x64xf32>
    %cst_178 = arith.constant dense<0.000000e+00> : vector<8x64xf32>
    %177 = tpu.matmul %19, %176, %cst_178 {dimension_numbers = #tpu.dot_dimension_numbers<[1], [0], [0], [1], [0, 0, 1, 1], [], []>} : vector<8x144xf32>, vector<144x64xf32>, vector<8x64xf32> -> vector<8x64xf32>
    %c22_179 = arith.constant 22 : index
    %c0_180 = arith.constant 0 : index
    %c0_181 = arith.constant 0 : index
    %178 = vector.load %arg5[%c22_179, %c0_180, %c0_181] : memref<25x16x8xf32, #tpu.memory_space<vmem>>, vector<1x16x8xf32>
    %179 = vector.shape_cast %178 : vector<1x16x8xf32> to vector<16x8xf32>
    %cst_182 = arith.constant dense<0.000000e+00> : vector<16x64xf32>
    %180 = tpu.matmul %179, %177, %cst_182 {dimension_numbers = #tpu.dot_dimension_numbers<[1], [0], [0], [1], [0, 0, 1, 1], [], []>} : vector<16x8xf32>, vector<8x64xf32>, vector<16x64xf32> -> vector<16x64xf32>
    %181 = arith.addf %174, %180 : vector<16x64xf32>
    %c23 = arith.constant 23 : index
    %c0_183 = arith.constant 0 : index
    %c0_184 = arith.constant 0 : index
    %182 = vector.load %arg4[%c23, %c0_183, %c0_184] : memref<25x144x64xf32, #tpu.memory_space<vmem>>, vector<1x144x64xf32>
    %183 = vector.shape_cast %182 : vector<1x144x64xf32> to vector<144x64xf32>
    %cst_185 = arith.constant dense<0.000000e+00> : vector<8x64xf32>
    %184 = tpu.matmul %19, %183, %cst_185 {dimension_numbers = #tpu.dot_dimension_numbers<[1], [0], [0], [1], [0, 0, 1, 1], [], []>} : vector<8x144xf32>, vector<144x64xf32>, vector<8x64xf32> -> vector<8x64xf32>
    %c23_186 = arith.constant 23 : index
    %c0_187 = arith.constant 0 : index
    %c0_188 = arith.constant 0 : index
    %185 = vector.load %arg5[%c23_186, %c0_187, %c0_188] : memref<25x16x8xf32, #tpu.memory_space<vmem>>, vector<1x16x8xf32>
    %186 = vector.shape_cast %185 : vector<1x16x8xf32> to vector<16x8xf32>
    %cst_189 = arith.constant dense<0.000000e+00> : vector<16x64xf32>
    %187 = tpu.matmul %186, %184, %cst_189 {dimension_numbers = #tpu.dot_dimension_numbers<[1], [0], [0], [1], [0, 0, 1, 1], [], []>} : vector<16x8xf32>, vector<8x64xf32>, vector<16x64xf32> -> vector<16x64xf32>
    %188 = arith.addf %181, %187 : vector<16x64xf32>
    %c24 = arith.constant 24 : index
    %c0_190 = arith.constant 0 : index
    %c0_191 = arith.constant 0 : index
    %189 = vector.load %arg4[%c24, %c0_190, %c0_191] : memref<25x144x64xf32, #tpu.memory_space<vmem>>, vector<1x144x64xf32>
    %190 = vector.shape_cast %189 : vector<1x144x64xf32> to vector<144x64xf32>
    %cst_192 = arith.constant dense<0.000000e+00> : vector<8x64xf32>
    %191 = tpu.matmul %19, %190, %cst_192 {dimension_numbers = #tpu.dot_dimension_numbers<[1], [0], [0], [1], [0, 0, 1, 1], [], []>} : vector<8x144xf32>, vector<144x64xf32>, vector<8x64xf32> -> vector<8x64xf32>
    %c24_193 = arith.constant 24 : index
    %c0_194 = arith.constant 0 : index
    %c0_195 = arith.constant 0 : index
    %192 = vector.load %arg5[%c24_193, %c0_194, %c0_195] : memref<25x16x8xf32, #tpu.memory_space<vmem>>, vector<1x16x8xf32>
    %193 = vector.shape_cast %192 : vector<1x16x8xf32> to vector<16x8xf32>
    %cst_196 = arith.constant dense<0.000000e+00> : vector<16x64xf32>
    %194 = tpu.matmul %193, %191, %cst_196 {dimension_numbers = #tpu.dot_dimension_numbers<[1], [0], [0], [1], [0, 0, 1, 1], [], []>} : vector<16x8xf32>, vector<8x64xf32>, vector<16x64xf32> -> vector<16x64xf32>
    %195 = arith.addf %188, %194 : vector<16x64xf32>
    %c0_197 = arith.constant 0 : index
    %c0_198 = arith.constant 0 : index
    %196 = vector.load %arg6[%c0_197, %c0_198] : memref<16x1xf32, #tpu.memory_space<vmem>>, vector<16x1xf32>
    %197 = vector.broadcast %196 : vector<16x1xf32> to vector<16x64xf32>
    %198 = arith.addf %195, %197 : vector<16x64xf32>
    %cst_199 = arith.constant 0.000000e+00 : f32
    %199 = vector.broadcast %cst_199 : f32 to vector<16x64xf32>
    %200 = arith.maximumf %198, %199 : vector<16x64xf32>
    %c0_200 = arith.constant 0 : index
    %c0_201 = arith.constant 0 : index
    %c0_202 = arith.constant 0 : index
    %201 = vector.load %arg7[%c0_200, %c0_201, %c0_202] : memref<4x64x16xf32, #tpu.memory_space<vmem>>, vector<1x64x16xf32>
    %202 = vector.shape_cast %201 : vector<1x64x16xf32> to vector<64x16xf32>
    %cst_203 = arith.constant dense<0.000000e+00> : vector<16x16xf32>
    %203 = tpu.matmul %200, %202, %cst_203 {dimension_numbers = #tpu.dot_dimension_numbers<[1], [0], [0], [1], [0, 0, 1, 1], [], []>} : vector<16x64xf32>, vector<64x16xf32>, vector<16x16xf32> -> vector<16x16xf32>
    %c1_204 = arith.constant 1 : index
    %c0_205 = arith.constant 0 : index
    %c0_206 = arith.constant 0 : index
    %204 = vector.load %arg7[%c1_204, %c0_205, %c0_206] : memref<4x64x16xf32, #tpu.memory_space<vmem>>, vector<1x64x16xf32>
    %205 = vector.shape_cast %204 : vector<1x64x16xf32> to vector<64x16xf32>
    %cst_207 = arith.constant dense<0.000000e+00> : vector<16x16xf32>
    %206 = tpu.matmul %200, %205, %cst_207 {dimension_numbers = #tpu.dot_dimension_numbers<[1], [0], [0], [1], [0, 0, 1, 1], [], []>} : vector<16x64xf32>, vector<64x16xf32>, vector<16x16xf32> -> vector<16x16xf32>
    %207 = arith.maximumf %203, %206 : vector<16x16xf32>
    %c2_208 = arith.constant 2 : index
    %c0_209 = arith.constant 0 : index
    %c0_210 = arith.constant 0 : index
    %208 = vector.load %arg7[%c2_208, %c0_209, %c0_210] : memref<4x64x16xf32, #tpu.memory_space<vmem>>, vector<1x64x16xf32>
    %209 = vector.shape_cast %208 : vector<1x64x16xf32> to vector<64x16xf32>
    %cst_211 = arith.constant dense<0.000000e+00> : vector<16x16xf32>
    %210 = tpu.matmul %200, %209, %cst_211 {dimension_numbers = #tpu.dot_dimension_numbers<[1], [0], [0], [1], [0, 0, 1, 1], [], []>} : vector<16x64xf32>, vector<64x16xf32>, vector<16x16xf32> -> vector<16x16xf32>
    %211 = arith.maximumf %207, %210 : vector<16x16xf32>
    %c3_212 = arith.constant 3 : index
    %c0_213 = arith.constant 0 : index
    %c0_214 = arith.constant 0 : index
    %212 = vector.load %arg7[%c3_212, %c0_213, %c0_214] : memref<4x64x16xf32, #tpu.memory_space<vmem>>, vector<1x64x16xf32>
    %213 = vector.shape_cast %212 : vector<1x64x16xf32> to vector<64x16xf32>
    %cst_215 = arith.constant dense<0.000000e+00> : vector<16x16xf32>
    %214 = tpu.matmul %200, %213, %cst_215 {dimension_numbers = #tpu.dot_dimension_numbers<[1], [0], [0], [1], [0, 0, 1, 1], [], []>} : vector<16x64xf32>, vector<64x16xf32>, vector<16x16xf32> -> vector<16x16xf32>
    %215 = arith.maximumf %211, %214 : vector<16x16xf32>
    %c0_216 = arith.constant 0 : index
    %c0_217 = arith.constant 0 : index
    %216 = vector.load %arg9[%c0_216, %c0_217] : memref<1x64xf32, #tpu.memory_space<vmem>>, vector<1x64xf32>
    %217 = vector.extract_strided_slice %215 {offsets = [0, 0], sizes = [1, 16], strides = [1, 1]} : vector<16x16xf32> to vector<1x16xf32>
    %c0_218 = arith.constant 0 : index
    %c0_219 = arith.constant 0 : index
    %c0_220 = arith.constant 0 : index
    %218 = vector.load %arg8[%c0_218, %c0_219, %c0_220] : memref<16x16x64xf32, #tpu.memory_space<vmem>>, vector<1x16x64xf32>
    %219 = vector.shape_cast %218 : vector<1x16x64xf32> to vector<16x64xf32>
    %cst_221 = arith.constant dense<0.000000e+00> : vector<1x64xf32>
    %220 = tpu.matmul %217, %219, %cst_221 {dimension_numbers = #tpu.dot_dimension_numbers<[1], [0], [0], [1], [0, 0, 1, 1], [], []>} : vector<1x16xf32>, vector<16x64xf32>, vector<1x64xf32> -> vector<1x64xf32>
    %221 = arith.addf %216, %220 : vector<1x64xf32>
    %222 = vector.extract_strided_slice %215 {offsets = [1, 0], sizes = [1, 16], strides = [1, 1]} : vector<16x16xf32> to vector<1x16xf32>
    %c1_222 = arith.constant 1 : index
    %c0_223 = arith.constant 0 : index
    %c0_224 = arith.constant 0 : index
    %223 = vector.load %arg8[%c1_222, %c0_223, %c0_224] : memref<16x16x64xf32, #tpu.memory_space<vmem>>, vector<1x16x64xf32>
    %224 = vector.shape_cast %223 : vector<1x16x64xf32> to vector<16x64xf32>
    %cst_225 = arith.constant dense<0.000000e+00> : vector<1x64xf32>
    %225 = tpu.matmul %222, %224, %cst_225 {dimension_numbers = #tpu.dot_dimension_numbers<[1], [0], [0], [1], [0, 0, 1, 1], [], []>} : vector<1x16xf32>, vector<16x64xf32>, vector<1x64xf32> -> vector<1x64xf32>
    %226 = arith.addf %221, %225 : vector<1x64xf32>
    %227 = vector.extract_strided_slice %215 {offsets = [2, 0], sizes = [1, 16], strides = [1, 1]} : vector<16x16xf32> to vector<1x16xf32>
    %c2_226 = arith.constant 2 : index
    %c0_227 = arith.constant 0 : index
    %c0_228 = arith.constant 0 : index
    %228 = vector.load %arg8[%c2_226, %c0_227, %c0_228] : memref<16x16x64xf32, #tpu.memory_space<vmem>>, vector<1x16x64xf32>
    %229 = vector.shape_cast %228 : vector<1x16x64xf32> to vector<16x64xf32>
    %cst_229 = arith.constant dense<0.000000e+00> : vector<1x64xf32>
    %230 = tpu.matmul %227, %229, %cst_229 {dimension_numbers = #tpu.dot_dimension_numbers<[1], [0], [0], [1], [0, 0, 1, 1], [], []>} : vector<1x16xf32>, vector<16x64xf32>, vector<1x64xf32> -> vector<1x64xf32>
    %231 = arith.addf %226, %230 : vector<1x64xf32>
    %232 = vector.extract_strided_slice %215 {offsets = [3, 0], sizes = [1, 16], strides = [1, 1]} : vector<16x16xf32> to vector<1x16xf32>
    %c3_230 = arith.constant 3 : index
    %c0_231 = arith.constant 0 : index
    %c0_232 = arith.constant 0 : index
    %233 = vector.load %arg8[%c3_230, %c0_231, %c0_232] : memref<16x16x64xf32, #tpu.memory_space<vmem>>, vector<1x16x64xf32>
    %234 = vector.shape_cast %233 : vector<1x16x64xf32> to vector<16x64xf32>
    %cst_233 = arith.constant dense<0.000000e+00> : vector<1x64xf32>
    %235 = tpu.matmul %232, %234, %cst_233 {dimension_numbers = #tpu.dot_dimension_numbers<[1], [0], [0], [1], [0, 0, 1, 1], [], []>} : vector<1x16xf32>, vector<16x64xf32>, vector<1x64xf32> -> vector<1x64xf32>
    %236 = arith.addf %231, %235 : vector<1x64xf32>
    %237 = vector.extract_strided_slice %215 {offsets = [4, 0], sizes = [1, 16], strides = [1, 1]} : vector<16x16xf32> to vector<1x16xf32>
    %c4_234 = arith.constant 4 : index
    %c0_235 = arith.constant 0 : index
    %c0_236 = arith.constant 0 : index
    %238 = vector.load %arg8[%c4_234, %c0_235, %c0_236] : memref<16x16x64xf32, #tpu.memory_space<vmem>>, vector<1x16x64xf32>
    %239 = vector.shape_cast %238 : vector<1x16x64xf32> to vector<16x64xf32>
    %cst_237 = arith.constant dense<0.000000e+00> : vector<1x64xf32>
    %240 = tpu.matmul %237, %239, %cst_237 {dimension_numbers = #tpu.dot_dimension_numbers<[1], [0], [0], [1], [0, 0, 1, 1], [], []>} : vector<1x16xf32>, vector<16x64xf32>, vector<1x64xf32> -> vector<1x64xf32>
    %241 = arith.addf %236, %240 : vector<1x64xf32>
    %242 = vector.extract_strided_slice %215 {offsets = [5, 0], sizes = [1, 16], strides = [1, 1]} : vector<16x16xf32> to vector<1x16xf32>
    %c5_238 = arith.constant 5 : index
    %c0_239 = arith.constant 0 : index
    %c0_240 = arith.constant 0 : index
    %243 = vector.load %arg8[%c5_238, %c0_239, %c0_240] : memref<16x16x64xf32, #tpu.memory_space<vmem>>, vector<1x16x64xf32>
    %244 = vector.shape_cast %243 : vector<1x16x64xf32> to vector<16x64xf32>
    %cst_241 = arith.constant dense<0.000000e+00> : vector<1x64xf32>
    %245 = tpu.matmul %242, %244, %cst_241 {dimension_numbers = #tpu.dot_dimension_numbers<[1], [0], [0], [1], [0, 0, 1, 1], [], []>} : vector<1x16xf32>, vector<16x64xf32>, vector<1x64xf32> -> vector<1x64xf32>
    %246 = arith.addf %241, %245 : vector<1x64xf32>
    %247 = vector.extract_strided_slice %215 {offsets = [6, 0], sizes = [1, 16], strides = [1, 1]} : vector<16x16xf32> to vector<1x16xf32>
    %c6_242 = arith.constant 6 : index
    %c0_243 = arith.constant 0 : index
    %c0_244 = arith.constant 0 : index
    %248 = vector.load %arg8[%c6_242, %c0_243, %c0_244] : memref<16x16x64xf32, #tpu.memory_space<vmem>>, vector<1x16x64xf32>
    %249 = vector.shape_cast %248 : vector<1x16x64xf32> to vector<16x64xf32>
    %cst_245 = arith.constant dense<0.000000e+00> : vector<1x64xf32>
    %250 = tpu.matmul %247, %249, %cst_245 {dimension_numbers = #tpu.dot_dimension_numbers<[1], [0], [0], [1], [0, 0, 1, 1], [], []>} : vector<1x16xf32>, vector<16x64xf32>, vector<1x64xf32> -> vector<1x64xf32>
    %251 = arith.addf %246, %250 : vector<1x64xf32>
    %252 = vector.extract_strided_slice %215 {offsets = [7, 0], sizes = [1, 16], strides = [1, 1]} : vector<16x16xf32> to vector<1x16xf32>
    %c7_246 = arith.constant 7 : index
    %c0_247 = arith.constant 0 : index
    %c0_248 = arith.constant 0 : index
    %253 = vector.load %arg8[%c7_246, %c0_247, %c0_248] : memref<16x16x64xf32, #tpu.memory_space<vmem>>, vector<1x16x64xf32>
    %254 = vector.shape_cast %253 : vector<1x16x64xf32> to vector<16x64xf32>
    %cst_249 = arith.constant dense<0.000000e+00> : vector<1x64xf32>
    %255 = tpu.matmul %252, %254, %cst_249 {dimension_numbers = #tpu.dot_dimension_numbers<[1], [0], [0], [1], [0, 0, 1, 1], [], []>} : vector<1x16xf32>, vector<16x64xf32>, vector<1x64xf32> -> vector<1x64xf32>
    %256 = arith.addf %251, %255 : vector<1x64xf32>
    %257 = vector.extract_strided_slice %215 {offsets = [8, 0], sizes = [1, 16], strides = [1, 1]} : vector<16x16xf32> to vector<1x16xf32>
    %c8_250 = arith.constant 8 : index
    %c0_251 = arith.constant 0 : index
    %c0_252 = arith.constant 0 : index
    %258 = vector.load %arg8[%c8_250, %c0_251, %c0_252] : memref<16x16x64xf32, #tpu.memory_space<vmem>>, vector<1x16x64xf32>
    %259 = vector.shape_cast %258 : vector<1x16x64xf32> to vector<16x64xf32>
    %cst_253 = arith.constant dense<0.000000e+00> : vector<1x64xf32>
    %260 = tpu.matmul %257, %259, %cst_253 {dimension_numbers = #tpu.dot_dimension_numbers<[1], [0], [0], [1], [0, 0, 1, 1], [], []>} : vector<1x16xf32>, vector<16x64xf32>, vector<1x64xf32> -> vector<1x64xf32>
    %261 = arith.addf %256, %260 : vector<1x64xf32>
    %262 = vector.extract_strided_slice %215 {offsets = [9, 0], sizes = [1, 16], strides = [1, 1]} : vector<16x16xf32> to vector<1x16xf32>
    %c9_254 = arith.constant 9 : index
    %c0_255 = arith.constant 0 : index
    %c0_256 = arith.constant 0 : index
    %263 = vector.load %arg8[%c9_254, %c0_255, %c0_256] : memref<16x16x64xf32, #tpu.memory_space<vmem>>, vector<1x16x64xf32>
    %264 = vector.shape_cast %263 : vector<1x16x64xf32> to vector<16x64xf32>
    %cst_257 = arith.constant dense<0.000000e+00> : vector<1x64xf32>
    %265 = tpu.matmul %262, %264, %cst_257 {dimension_numbers = #tpu.dot_dimension_numbers<[1], [0], [0], [1], [0, 0, 1, 1], [], []>} : vector<1x16xf32>, vector<16x64xf32>, vector<1x64xf32> -> vector<1x64xf32>
    %266 = arith.addf %261, %265 : vector<1x64xf32>
    %267 = vector.extract_strided_slice %215 {offsets = [10, 0], sizes = [1, 16], strides = [1, 1]} : vector<16x16xf32> to vector<1x16xf32>
    %c10_258 = arith.constant 10 : index
    %c0_259 = arith.constant 0 : index
    %c0_260 = arith.constant 0 : index
    %268 = vector.load %arg8[%c10_258, %c0_259, %c0_260] : memref<16x16x64xf32, #tpu.memory_space<vmem>>, vector<1x16x64xf32>
    %269 = vector.shape_cast %268 : vector<1x16x64xf32> to vector<16x64xf32>
    %cst_261 = arith.constant dense<0.000000e+00> : vector<1x64xf32>
    %270 = tpu.matmul %267, %269, %cst_261 {dimension_numbers = #tpu.dot_dimension_numbers<[1], [0], [0], [1], [0, 0, 1, 1], [], []>} : vector<1x16xf32>, vector<16x64xf32>, vector<1x64xf32> -> vector<1x64xf32>
    %271 = arith.addf %266, %270 : vector<1x64xf32>
    %272 = vector.extract_strided_slice %215 {offsets = [11, 0], sizes = [1, 16], strides = [1, 1]} : vector<16x16xf32> to vector<1x16xf32>
    %c11_262 = arith.constant 11 : index
    %c0_263 = arith.constant 0 : index
    %c0_264 = arith.constant 0 : index
    %273 = vector.load %arg8[%c11_262, %c0_263, %c0_264] : memref<16x16x64xf32, #tpu.memory_space<vmem>>, vector<1x16x64xf32>
    %274 = vector.shape_cast %273 : vector<1x16x64xf32> to vector<16x64xf32>
    %cst_265 = arith.constant dense<0.000000e+00> : vector<1x64xf32>
    %275 = tpu.matmul %272, %274, %cst_265 {dimension_numbers = #tpu.dot_dimension_numbers<[1], [0], [0], [1], [0, 0, 1, 1], [], []>} : vector<1x16xf32>, vector<16x64xf32>, vector<1x64xf32> -> vector<1x64xf32>
    %276 = arith.addf %271, %275 : vector<1x64xf32>
    %277 = vector.extract_strided_slice %215 {offsets = [12, 0], sizes = [1, 16], strides = [1, 1]} : vector<16x16xf32> to vector<1x16xf32>
    %c12_266 = arith.constant 12 : index
    %c0_267 = arith.constant 0 : index
    %c0_268 = arith.constant 0 : index
    %278 = vector.load %arg8[%c12_266, %c0_267, %c0_268] : memref<16x16x64xf32, #tpu.memory_space<vmem>>, vector<1x16x64xf32>
    %279 = vector.shape_cast %278 : vector<1x16x64xf32> to vector<16x64xf32>
    %cst_269 = arith.constant dense<0.000000e+00> : vector<1x64xf32>
    %280 = tpu.matmul %277, %279, %cst_269 {dimension_numbers = #tpu.dot_dimension_numbers<[1], [0], [0], [1], [0, 0, 1, 1], [], []>} : vector<1x16xf32>, vector<16x64xf32>, vector<1x64xf32> -> vector<1x64xf32>
    %281 = arith.addf %276, %280 : vector<1x64xf32>
    %282 = vector.extract_strided_slice %215 {offsets = [13, 0], sizes = [1, 16], strides = [1, 1]} : vector<16x16xf32> to vector<1x16xf32>
    %c13_270 = arith.constant 13 : index
    %c0_271 = arith.constant 0 : index
    %c0_272 = arith.constant 0 : index
    %283 = vector.load %arg8[%c13_270, %c0_271, %c0_272] : memref<16x16x64xf32, #tpu.memory_space<vmem>>, vector<1x16x64xf32>
    %284 = vector.shape_cast %283 : vector<1x16x64xf32> to vector<16x64xf32>
    %cst_273 = arith.constant dense<0.000000e+00> : vector<1x64xf32>
    %285 = tpu.matmul %282, %284, %cst_273 {dimension_numbers = #tpu.dot_dimension_numbers<[1], [0], [0], [1], [0, 0, 1, 1], [], []>} : vector<1x16xf32>, vector<16x64xf32>, vector<1x64xf32> -> vector<1x64xf32>
    %286 = arith.addf %281, %285 : vector<1x64xf32>
    %287 = vector.extract_strided_slice %215 {offsets = [14, 0], sizes = [1, 16], strides = [1, 1]} : vector<16x16xf32> to vector<1x16xf32>
    %c14_274 = arith.constant 14 : index
    %c0_275 = arith.constant 0 : index
    %c0_276 = arith.constant 0 : index
    %288 = vector.load %arg8[%c14_274, %c0_275, %c0_276] : memref<16x16x64xf32, #tpu.memory_space<vmem>>, vector<1x16x64xf32>
    %289 = vector.shape_cast %288 : vector<1x16x64xf32> to vector<16x64xf32>
    %cst_277 = arith.constant dense<0.000000e+00> : vector<1x64xf32>
    %290 = tpu.matmul %287, %289, %cst_277 {dimension_numbers = #tpu.dot_dimension_numbers<[1], [0], [0], [1], [0, 0, 1, 1], [], []>} : vector<1x16xf32>, vector<16x64xf32>, vector<1x64xf32> -> vector<1x64xf32>
    %291 = arith.addf %286, %290 : vector<1x64xf32>
    %292 = vector.extract_strided_slice %215 {offsets = [15, 0], sizes = [1, 16], strides = [1, 1]} : vector<16x16xf32> to vector<1x16xf32>
    %c15_278 = arith.constant 15 : index
    %c0_279 = arith.constant 0 : index
    %c0_280 = arith.constant 0 : index
    %293 = vector.load %arg8[%c15_278, %c0_279, %c0_280] : memref<16x16x64xf32, #tpu.memory_space<vmem>>, vector<1x16x64xf32>
    %294 = vector.shape_cast %293 : vector<1x16x64xf32> to vector<16x64xf32>
    %cst_281 = arith.constant dense<0.000000e+00> : vector<1x64xf32>
    %295 = tpu.matmul %292, %294, %cst_281 {dimension_numbers = #tpu.dot_dimension_numbers<[1], [0], [0], [1], [0, 0, 1, 1], [], []>} : vector<1x16xf32>, vector<16x64xf32>, vector<1x64xf32> -> vector<1x64xf32>
    %296 = arith.addf %291, %295 : vector<1x64xf32>
    %cst_282 = arith.constant 0.000000e+00 : f32
    %297 = vector.broadcast %cst_282 : f32 to vector<1x64xf32>
    %298 = arith.maximumf %296, %297 : vector<1x64xf32>
    %c0_283 = arith.constant 0 : index
    %c0_284 = arith.constant 0 : index
    %299 = vector.load %arg10[%c0_283, %c0_284] : memref<1x64xf32, #tpu.memory_space<vmem>>, vector<1x64xf32>
    %300 = arith.mulf %298, %299 : vector<1x64xf32>
    %cst_285 = arith.constant dense<0.000000e+00> : vector<1xf32>
    %301 = vector.multi_reduction <add>, %300, %cst_285 [1] : vector<1x64xf32> to vector<1xf32>
    %302 = vector.shape_cast %301 : vector<1xf32> to vector<1x1xf32>
    %c0_286 = arith.constant 0 : index
    %c0_287 = arith.constant 0 : index
    %303 = vector.load %arg11[%c0_286, %c0_287] : memref<1x1xf32, #tpu.memory_space<vmem>>, vector<1x1xf32>
    %304 = arith.addf %302, %303 : vector<1x1xf32>
    %305 = math.sin %304 : vector<1x1xf32>
    %cst_288 = arith.constant 1.000000e+00 : f32
    %306 = vector.broadcast %cst_288 : f32 to vector<1x1xf32>
    %307 = arith.addf %306, %305 : vector<1x1xf32>
    %cst_289 = arith.constant 5.000000e-01 : f32
    %308 = vector.broadcast %cst_289 : f32 to vector<1x1xf32>
    %309 = arith.mulf %308, %307 : vector<1x1xf32>
    %310 = tpu.iota {dimensions = array<i32: 1>} : vector<1x2xi32>
    %c0_i32 = arith.constant 0 : i32
    %311 = vector.broadcast %c0_i32 : i32 to vector<1x2xi32>
    %312 = arith.cmpi eq, %310, %311 : vector<1x2xi32>
    %cst_290 = arith.constant 1.000000e+00 : f32
    %313 = vector.broadcast %cst_290 : f32 to vector<1x1xf32>
    %314 = arith.subf %313, %309 : vector<1x1xf32>
    %315 = vector.shape_cast %309 : vector<1x1xf32> to vector<1x1xf32>
    %316 = vector.broadcast %315 : vector<1x1xf32> to vector<1x2xf32>
    %317 = vector.shape_cast %314 : vector<1x1xf32> to vector<1x1xf32>
    %318 = vector.broadcast %317 : vector<1x1xf32> to vector<1x2xf32>
    %319 = arith.select %312, %316, %318 : vector<1x2xi1>, vector<1x2xf32>
    %c0_291 = arith.constant 0 : index
    %c0_292 = arith.constant 0 : index
    %320 = vector.load %arg12[%c0_291, %c0_292] : memref<1x2xf32, #tpu.memory_space<vmem>>, vector<1x2xf32>
    tpu.vector_store %arg12[%c0_291, %c0_292], %319 {strides = array<i32>} : memref<1x2xf32, #tpu.memory_space<vmem>>, vector<1x2xf32>,
    return
  }
  func.func @transform_0(%arg0: i32) -> (i32, i32) {
    %c0_i32 = arith.constant 0 : i32
    %c0_i32_0 = arith.constant 0 : i32
    %c0_i32_1 = arith.constant 0 : i32
    return %c0_i32, %c0_i32_0 : i32, i32
  }
  func.func @transform_1(%arg0: i32) -> (i32, i32) {
    %c0_i32 = arith.constant 0 : i32
    %c0_i32_0 = arith.constant 0 : i32
    %c0_i32_1 = arith.constant 0 : i32
    return %c0_i32, %c0_i32_0 : i32, i32
  }
  func.func @transform_2(%arg0: i32) -> (i32, i32, i32) {
    %c0_i32 = arith.constant 0 : i32
    %c0_i32_0 = arith.constant 0 : i32
    %c0_i32_1 = arith.constant 0 : i32
    %c0_i32_2 = arith.constant 0 : i32
    return %c0_i32, %c0_i32_0, %c0_i32_1 : i32, i32, i32
  }
  func.func @transform_3(%arg0: i32) -> (i32, i32, i32) {
    %c0_i32 = arith.constant 0 : i32
    %c0_i32_0 = arith.constant 0 : i32
    %c0_i32_1 = arith.constant 0 : i32
    %c0_i32_2 = arith.constant 0 : i32
    return %c0_i32, %c0_i32_0, %c0_i32_1 : i32, i32, i32
  }
  func.func @transform_4(%arg0: i32) -> (i32, i32, i32) {
    %c0_i32 = arith.constant 0 : i32
    %c0_i32_0 = arith.constant 0 : i32
    %c0_i32_1 = arith.constant 0 : i32
    %c0_i32_2 = arith.constant 0 : i32
    return %c0_i32, %c0_i32_0, %c0_i32_1 : i32, i32, i32
  }
  func.func @transform_5(%arg0: i32) -> (i32, i32) {
    %c0_i32 = arith.constant 0 : i32
    %c0_i32_0 = arith.constant 0 : i32
    %c0_i32_1 = arith.constant 0 : i32
    return %c0_i32, %c0_i32_0 : i32, i32
  }
  func.func @transform_6(%arg0: i32) -> (i32, i32, i32) {
    %c0_i32 = arith.constant 0 : i32
    %c0_i32_0 = arith.constant 0 : i32
    %c0_i32_1 = arith.constant 0 : i32
    %c0_i32_2 = arith.constant 0 : i32
    return %c0_i32, %c0_i32_0, %c0_i32_1 : i32, i32, i32
  }
  func.func @transform_7(%arg0: i32) -> (i32, i32, i32) {
    %c0_i32 = arith.constant 0 : i32
    %c0_i32_0 = arith.constant 0 : i32
    %c0_i32_1 = arith.constant 0 : i32
    %c0_i32_2 = arith.constant 0 : i32
    return %c0_i32, %c0_i32_0, %c0_i32_1 : i32, i32, i32
  }
  func.func @transform_8(%arg0: i32) -> (i32, i32) {
    %c0_i32 = arith.constant 0 : i32
    %c0_i32_0 = arith.constant 0 : i32
    %c0_i32_1 = arith.constant 0 : i32
    return %c0_i32, %c0_i32_0 : i32, i32
  }
  func.func @transform_9(%arg0: i32) -> (i32, i32) {
    %c0_i32 = arith.constant 0 : i32
    %c0_i32_0 = arith.constant 0 : i32
    %c0_i32_1 = arith.constant 0 : i32
    return %c0_i32, %c0_i32_0 : i32, i32
  }
  func.func @transform_10(%arg0: i32) -> (i32, i32) {
    %c0_i32 = arith.constant 0 : i32
    %c0_i32_0 = arith.constant 0 : i32
    %c0_i32_1 = arith.constant 0 : i32
    return %c0_i32, %c0_i32_0 : i32, i32
  }
  func.func @transform_11(%arg0: i32) -> (i32, i32) {
    %c0_i32 = arith.constant 0 : i32
    %c0_i32_0 = arith.constant 0 : i32
    %c0_i32_1 = arith.constant 0 : i32
    return %c0_i32, %c0_i32_0 : i32, i32
  }
}

</mosaic_0001>

<llo_original>
// kernel: net_forward.1
$region0: #{net_forward.1}
  #allocation0 [shape = 'u32[]', space=smem, size = 0x4, offset = 0x4, fixed_abs, tag = 'smem constant byte address 0x4 - core index']
  #allocation1 [shape = 'u32[144,128]{1,0:T(1,128)}', space=vmem, size = 0x12000, scoped, tag = 'internal scratch']
  #allocation2 [shape = 'f32[1,1]{1,0:T(1,128)S(1)}', space=vmem, size = 0x200, scoped, tag = 'scoped memory for net_forward.1']
  %s0 = inlined_call_operand.vmem [shape: f32[32,576], index: 0, kind: input, shape index: {}]
  %s1 = inlined_call_operand.vmem [shape: f32[8,32], index: 1, kind: input, shape index: {}]
  %s2 = inlined_call_operand.vmem [shape: f32[4,576,144], index: 2, kind: input, shape index: {}]
  %s3 = inlined_call_operand.vmem [shape: f32[25,144,64], index: 3, kind: input, shape index: {}]
  %s4 = inlined_call_operand.vmem [shape: f32[25,16,8], index: 4, kind: input, shape index: {}]
  %s5 = inlined_call_operand.vmem [shape: f32[16,1], index: 5, kind: input, shape index: {}]
  %s6 = inlined_call_operand.vmem [shape: f32[4,64,16], index: 6, kind: input, shape index: {}]
  %s7 = inlined_call_operand.vmem [shape: f32[16,16,64], index: 7, kind: input, shape index: {}]
  %s8 = inlined_call_operand.vmem [shape: f32[1,64], index: 8, kind: input, shape index: {}]
  %s9 = inlined_call_operand.vmem [shape: f32[1,64], index: 9, kind: input, shape index: {}]
  %s10 = inlined_call_operand.<no memory space> [shape: f32[1,1], index: 10, kind: input, shape index: {}]
  %s11 = inlined_call_operand.hbm [shape: f32[1,2], index: 11, kind: output, shape index: {}]
  %s12 = sld [smem:[#allocation0]]
  $region54: #{net_forward.1} parent=0
    _
  %s14 = ssub.s32 1, %s12
  %s15 = scalar_select 0, %s14, %s12
  %v16 = vstv %s10
  %17 = vst [vmem:[#allocation2] sm:$0x1] %v16
  $region1: #{net_forward.1} parent=0
    #allocation3 [shape = 'u8[512]{0}', space=vmem, size = 0x400, scoped, tag = 'output window, operand 0, single buffered']
    #allocation4 [shape = 's32[1]{0}', space=sflag, size = 0x4, scoped, tag = 'scoped memory for net_forward.1']
    %18 = vsyncpa [#allocation4], 0
    // Predicated region
    $region2: #{net_forward.1} parent=1 // pred_check
      _
    $region3: #{net_forward.1} parent=1 // pred_check_branch
      %20 = sbr.rel (0) target = $region5
    $region4: #{net_forward.1} parent=1 // pred_region
      _
    $region5: #{net_forward.1} parent=1 // pred_fallthru
      _
    // Predicated region
    $region6: #{net_forward.1} parent=1 // pred_check
      _
    $region7: #{net_forward.1} parent=1 // pred_check_branch
      %22 = sbr.rel (0) target = $region9
    $region8: #{net_forward.1} parent=1 // pred_region
      _
    $region9: #{net_forward.1} parent=1 // pred_fallthru
      _
    // Predicated region
    $region10: #{net_forward.1} parent=1 // pred_check
      _
    $region11: #{net_forward.1} parent=1 // pred_check_branch
      %24 = sbr.rel (0) target = $region13
    $region12: #{net_forward.1} parent=1 // pred_region
      _
    $region13: #{net_forward.1} parent=1 // pred_fallthru
      _
    // Predicated region
    $region14: #{net_forward.1} parent=1 // pred_check
      _
    $region15: #{net_forward.1} parent=1 // pred_check_branch
      %26 = sbr.rel (0) target = $region17
    $region16: #{net_forward.1} parent=1 // pred_region
      _
    $region17: #{net_forward.1} parent=1 // pred_fallthru
      _
    // Predicated region
    $region18: #{net_forward.1} parent=1 // pred_check
      _
    $region19: #{net_forward.1} parent=1 // pred_check_branch
      %28 = sbr.rel (0) target = $region21
    $region20: #{net_forward.1} parent=1 // pred_region
      _
    $region21: #{net_forward.1} parent=1 // pred_fallthru
      _
    // Predicated region
    $region22: #{net_forward.1} parent=1 // pred_check
      _
    $region23: #{net_forward.1} parent=1 // pred_check_branch
      %30 = sbr.rel (0) target = $region25
    $region24: #{net_forward.1} parent=1 // pred_region
      _
    $region25: #{net_forward.1} parent=1 // pred_fallthru
      _
    // Predicated region
    $region26: #{net_forward.1} parent=1 // pred_check
      _
    $region27: #{net_forward.1} parent=1 // pred_check_branch
      %32 = sbr.rel (0) target = $region29
    $region28: #{net_forward.1} parent=1 // pred_region
      _
    $region29: #{net_forward.1} parent=1 // pred_fallthru
      _
    // Predicated region
    $region30: #{net_forward.1} parent=1 // pred_check
      _
    $region31: #{net_forward.1} parent=1 // pred_check_branch
      %34 = sbr.rel (0) target = $region33
    $region32: #{net_forward.1} parent=1 // pred_region
      _
    $region33: #{net_forward.1} parent=1 // pred_fallthru
      _
    // Predicated region
    $region34: #{net_forward.1} parent=1 // pred_check
      _
    $region35: #{net_forward.1} parent=1 // pred_check_branch
      %36 = sbr.rel (0) target = $region37
    $region36: #{net_forward.1} parent=1 // pred_region
      _
    $region37: #{net_forward.1} parent=1 // pred_fallthru
      _
    // Predicated region
    $region38: #{net_forward.1} parent=1 // pred_check
      _
    $region39: #{net_forward.1} parent=1 // pred_check_branch
      %38 = sbr.rel (0) target = $region41
    $region40: #{net_forward.1} parent=1 // pred_region
      _
    $region41: #{net_forward.1} parent=1 // pred_fallthru
      _
    // Predicated region
    $region42: #{net_forward.1} parent=1 // pred_check
      _
    $region43: #{net_forward.1} parent=1 // pred_check_branch
      %40 = sbr.rel (0) target = $region45
    $region44: #{net_forward.1} parent=1 // pred_region
      _
    $region45: #{net_forward.1} parent=1 // pred_fallthru
      _
    %v41 = vld [vmem:[%s1] sm:$0xff]
    %v42 = vld [vmem:[%s0] sm:$0xff]
    %v43 = vld [vmem:[%s0 + $0x8] sm:$0xff]
    %v44 = vld [vmem:[%s0 + $0x10] sm:$0xff]
    %v45 = vld [vmem:[%s0 + $0x18] sm:$0xff]
    %v46 = vld [vmem:[%s0 + $0x20] sm:$0xff]
    %v47 = vld [vmem:[%s0 + $0x28] sm:$0xff]
    %v48 = vld [vmem:[%s0 + $0x30] sm:$0xff]
    %v49 = vld [vmem:[%s0 + $0x38] sm:$0xff]
    %v50 = vld [vmem:[%s0 + $0x40] sm:$0xff]
    %v51 = vld [vmem:[%s0 + $0x48] sm:$0xff]
    %v52 = vld [vmem:[%s0 + $0x50] sm:$0xff]
    %v53 = vld [vmem:[%s0 + $0x58] sm:$0xff]
    %v54 = vld [vmem:[%s0 + $0x60] sm:$0xff]
    %v55 = vld [vmem:[%s0 + $0x68] sm:$0xff]
    %v56 = vld [vmem:[%s0 + $0x70] sm:$0xff]
    %v57 = vld [vmem:[%s0 + $0x78] sm:$0xff]
    %v58 = vld [vmem:[%s0 + $0x80] sm:$0xff]
    %v59 = vld [vmem:[%s0 + $0x88] sm:$0xff]
    %v60 = vld [vmem:[%s0 + $0x90] sm:$0xff]
    %v61 = vld [vmem:[%s0 + $0x98] sm:$0xff]
    %vm62 = vcmask 261120
    %v64 = vsel %vm62, %v41, 0
    %66 = vmatprep.subr.mxu0 0.0
    %67 = vmatpush1.msra.mxu0 0.0
    %68 = vmatprep.subr.mxu0 0.0
    %69 = vmatpush1.msra.mxu0 0.0
    %70 = vmatprep.subr.mxu0 0.0
    %71 = vmatpush1.msra.mxu0 0.0
    %72 = vmatprep.subr.mxu0 0.0
    %73 = vmatpush1.msra.mxu0 0.0
    %74 = vmatprep.subr.mxu0 0.0
    %75 = vmatpush1.msra.mxu0 0.0
    %76 = vmatprep.subr.mxu0 0.0
    %77 = vmatpush1.msra.mxu0 0.0
    %78 = vmatprep.subr.mxu0 0.0
    %79 = vmatpush1.msra.mxu0 0.0
    %80 = vmatprep.subr.mxu0 0.0
    %81 = vmatpush1.msra.mxu0 0.0
    %82 = vmatprep.subr.mxu0 0.0
    %83 = vmatpush1.msra.mxu0 0.0
    %84 = vmatprep.subr.mxu0 0.0
    %85 = vmatpush1.msra.mxu0 0.0
    %86 = vmatprep.subr.mxu0 0.0
    %87 = vmatpush1.msra.mxu0 0.0
    %88 = vmatprep.subr.mxu0 0.0
    %89 = vmatpush1.msra.mxu0 0.0
    %90 = vmatprep.subr.mxu0 %v58
    %91 = vmatpush1.msra.mxu0 %v57
    %92 = vmatprep.subr.mxu0 %v53
    %93 = vmatpush1.msra.mxu0 %v52
    %94 = vmatprep.subr.mxu0 %v48
    %95 = vmatpush1.msra.mxu0 %v47
    %96 = vmatprep.subr.mxu0 %v43
    %97 = vmatpush1.msra.mxu0 %v42
    %98 = vmatprep.subr.mxu0 0.0
    %99 = vmatpush2.msra.mxu0 0.0
    %100 = vmatprep.subr.mxu0 0.0
    %101 = vmatpush2.msra.mxu0 0.0
    %102 = vmatprep.subr.mxu0 0.0
    %103 = vmatpush2.msra.mxu0 0.0
    %104 = vmatprep.subr.mxu0 0.0
    %105 = vmatpush2.msra.mxu0 0.0
    %106 = vmatprep.subr.mxu0 0.0
    %107 = vmatpush2.msra.mxu0 0.0
    %108 = vmatprep.subr.mxu0 0.0
    %109 = vmatpush2.msra.mxu0 0.0
    %110 = vmatprep.subr.mxu0 0.0
    %111 = vmatpush2.msra.mxu0 0.0
    %112 = vmatprep.subr.mxu0 0.0
    %113 = vmatpush2.msra.mxu0 0.0
    %114 = vmatprep.subr.mxu0 0.0
    %115 = vmatpush2.msra.mxu0 0.0
    %116 = vmatprep.subr.mxu0 0.0
    %117 = vmatpush2.msra.mxu0 0.0
    %118 = vmatprep.subr.mxu0 0.0
    %119 = vmatpush2.msra.mxu0 0.0
    %120 = vmatprep.subr.mxu0 0.0
    %121 = vmatpush2.msra.mxu0 0.0
    %122 = vmatprep.subr.mxu0 0.0
    %123 = vmatpush2.msra.mxu0 0.0
    %124 = vmatprep.subr.mxu0 0.0
    %125 = vmatpush2.msra.mxu0 0.0
    %126 = vmatprep.subr.mxu0 0.0
    %127 = vmatpush2.msra.mxu0 0.0
    %128 = vmatprep.subr.mxu0 0.0
    %129 = vmatpush2.msra.mxu0 0.0
    %130 = vmatprep.mubr.f32.mxu0 0.0
    %131 = vmatmul.mubr.f32.gmra.mxu0 %v64
    %v132 = vpop.f32.mrf.mxu0
    %v133 = vadd.f32 0.0, %v132
    %v134 = vpop.f32.mrf.mxu0
    %v135 = vadd.f32 0.0, %v134
    %136 = vdwg.mxu0
    %137 = vmatprep.subr.mxu0 0.0
    %138 = vmatpush1.msra.mxu0 0.0
    %139 = vmatprep.subr.mxu0 0.0
    %140 = vmatpush1.msra.mxu0 0.0
    %141 = vmatprep.subr.mxu0 0.0
    %142 = vmatpush1.msra.mxu0 0.0
    %143 = vmatprep.subr.mxu0 0.0
    %144 = vmatpush1.msra.mxu0 0.0
    %145 = vmatprep.subr.mxu0 0.0
    %146 = vmatpush1.msra.mxu0 0.0
    %147 = vmatprep.subr.mxu0 0.0
    %148 = vmatpush1.msra.mxu0 0.0
    %149 = vmatprep.subr.mxu0 0.0
    %150 = vmatpush1.msra.mxu0 0.0
    %151 = vmatprep.subr.mxu0 0.0
    %152 = vmatpush1.msra.mxu0 0.0
    %153 = vmatprep.subr.mxu0 0.0
    %154 = vmatpush1.msra.mxu0 0.0
    %155 = vmatprep.subr.mxu0 0.0
    %156 = vmatpush1.msra.mxu0 0.0
    %157 = vmatprep.subr.mxu0 0.0
    %158 = vmatpush1.msra.mxu0 0.0
    %159 = vmatprep.subr.mxu0 0.0
    %160 = vmatpush1.msra.mxu0 0.0
    %161 = vmatprep.subr.mxu0 %v60
    %162 = vmatpush1.msra.mxu0 %v59
    %163 = vmatprep.subr.mxu0 %v55
    %164 = vmatpush1.msra.mxu0 %v54
    %165 = vmatprep.subr.mxu0 %v50
    %166 = vmatpush1.msra.mxu0 %v49
    %167 = vmatprep.subr.mxu0 %v45
    %168 = vmatpush1.msra.mxu0 %v44
    %169 = vmatprep.subr.mxu0 0.0
    %170 = vmatpush2.msra.mxu0 0.0
    %171 = vmatprep.subr.mxu0 0.0
    %172 = vmatpush2.msra.mxu0 0.0
    %173 = vmatprep.subr.mxu0 0.0
    %174 = vmatpush2.msra.mxu0 0.0
    %175 = vmatprep.subr.mxu0 0.0
    %176 = vmatpush2.msra.mxu0 0.0
    %177 = vmatprep.subr.mxu0 0.0
    %178 = vmatpush2.msra.mxu0 0.0
    %179 = vmatprep.subr.mxu0 0.0
    %180 = vmatpush2.msra.mxu0 0.0
    %181 = vmatprep.subr.mxu0 0.0
    %182 = vmatpush2.msra.mxu0 0.0
    %183 = vmatprep.subr.mxu0 0.0
    %184 = vmatpush2.msra.mxu0 0.0
    %185 = vmatprep.subr.mxu0 0.0
    %186 = vmatpush2.msra.mxu0 0.0
    %187 = vmatprep.subr.mxu0 0.0
    %188 = vmatpush2.msra.mxu0 0.0
    %189 = vmatprep.subr.mxu0 0.0
    %190 = vmatpush2.msra.mxu0 0.0
    %191 = vmatprep.subr.mxu0 0.0
    %192 = vmatpush2.msra.mxu0 0.0
    %193 = vmatprep.subr.mxu0 0.0
    %194 = vmatpush2.msra.mxu0 0.0
    %195 = vmatprep.subr.mxu0 0.0
    %196 = vmatpush2.msra.mxu0 0.0
    %197 = vmatprep.subr.mxu0 0.0
    %198 = vmatpush2.msra.mxu0 0.0
    %199 = vmatprep.subr.mxu0 0.0
    %200 = vmatpush2.msra.mxu0 0.0
    %201 = vmatprep.mubr.f32.mxu0 0.0
    %202 = vmatmul.mubr.f32.gmra.mxu0 %v64
    %v203 = vpop.f32.mrf.mxu0
    %v204 = vadd.f32 0.0, %v203
    %v205 = vpop.f32.mrf.mxu0
    %v206 = vadd.f32 0.0, %v205
    %207 = vdwg.mxu0
    %208 = vmatprep.subr.mxu0 0.0
    %209 = vmatpush1.msra.mxu0 0.0
    %210 = vmatprep.subr.mxu0 0.0
    %211 = vmatpush1.msra.mxu0 0.0
    %212 = vmatprep.subr.mxu0 0.0
    %213 = vmatpush1.msra.mxu0 0.0
    %214 = vmatprep.subr.mxu0 0.0
    %215 = vmatpush1.msra.mxu0 0.0
    %216 = vmatprep.subr.mxu0 0.0
    %217 = vmatpush1.msra.mxu0 0.0
    %218 = vmatprep.subr.mxu0 0.0
    %219 = vmatpush1.msra.mxu0 0.0
    %220 = vmatprep.subr.mxu0 0.0
    %221 = vmatpush1.msra.mxu0 0.0
    %222 = vmatprep.subr.mxu0 0.0
    %223 = vmatpush1.msra.mxu0 0.0
    %224 = vmatprep.subr.mxu0 0.0
    %225 = vmatpush1.msra.mxu0 0.0
    %226 = vmatprep.subr.mxu0 0.0
    %227 = vmatpush1.msra.mxu0 0.0
    %228 = vmatprep.subr.mxu0 0.0
    %229 = vmatpush1.msra.mxu0 0.0
    %230 = vmatprep.subr.mxu0 0.0
    %231 = vmatpush1.msra.mxu0 0.0
    %232 = vmatprep.subr.mxu0 0.0
    %233 = vmatpush1.msra.mxu0 %v61
    %234 = vmatprep.subr.mxu0 0.0
    %235 = vmatpush1.msra.mxu0 %v56
    %236 = vmatprep.subr.mxu0 0.0
    %237 = vmatpush1.msra.mxu0 %v51
    %238 = vmatprep.subr.mxu0 0.0
    %239 = vmatpush1.msra.mxu0 %v46
    %240 = vmatprep.subr.mxu0 0.0
    %241 = vmatpush2.msra.mxu0 0.0
    %242 = vmatprep.subr.mxu0 0.0
    %243 = vmatpush2.msra.mxu0 0.0
    %244 = vmatprep.subr.mxu0 0.0
    %245 = vmatpush2.msra.mxu0 0.0
    %246 = vmatprep.subr.mxu0 0.0
    %247 = vmatpush2.msra.mxu0 0.0
    %248 = vmatprep.subr.mxu0 0.0
    %249 = vmatpush2.msra.mxu0 0.0
    %250 = vmatprep.subr.mxu0 0.0
    %251 = vmatpush2.msra.mxu0 0.0
    %252 = vmatprep.subr.mxu0 0.0
    %253 = vmatpush2.msra.mxu0 0.0
    %254 = vmatprep.subr.mxu0 0.0
    %255 = vmatpush2.msra.mxu0 0.0
    %256 = vmatprep.subr.mxu0 0.0
    %257 = vmatpush2.msra.mxu0 0.0
    %258 = vmatprep.subr.mxu0 0.0
    %259 = vmatpush2.msra.mxu0 0.0
    %260 = vmatprep.subr.mxu0 0.0
    %261 = vmatpush2.msra.mxu0 0.0
    %262 = vmatprep.subr.mxu0 0.0
    %263 = vmatpush2.msra.mxu0 0.0
    %264 = vmatprep.subr.mxu0 0.0
    %265 = vmatpush2.msra.mxu0 0.0
    %266 = vmatprep.subr.mxu0 0.0
    %267 = vmatpush2.msra.mxu0 0.0
    %268 = vmatprep.subr.mxu0 0.0
    %269 = vmatpush2.msra.mxu0 0.0
    %270 = vmatprep.subr.mxu0 0.0
    %271 = vmatpush2.msra.mxu0 0.0
    %272 = vmatprep.mubr.f32.mxu0 0.0
    %273 = vmatmul.mubr.f32.gmra.mxu0 %v64
    %v274 = vpop.f32.mrf.mxu0
    %v275 = vadd.f32 0.0, %v274
    %v276 = vpop.f32.mrf.mxu0
    %277 = vdwg.mxu0
    %v278 = vmax.f32 %v133, 0.0
    %v279 = vmax.f32 %v135, 0.0
    %v280 = vmax.f32 %v204, 0.0
    %v281 = vmax.f32 %v206, 0.0
    %v282 = vmax.f32 %v275, 0.0
    %v283 = vld [vmem:[%s2] sm:$0xff]
    %v284 = vld [vmem:[%s2 + $0x8] sm:$0xff]
    %v285 = vld [vmem:[%s2 + $0x10] sm:$0xff]
    %v286 = vld [vmem:[%s2 + $0x18] sm:$0xff]
    %v287 = vld [vmem:[%s2 + $0x20] sm:$0xff]
    %v288 = vld [vmem:[%s2 + $0x28] sm:$0xff]
    %v289 = vld [vmem:[%s2 + $0x30] sm:$0xff]
    %v290 = vld [vmem:[%s2 + $0x38] sm:$0xff]
    %v291 = vld [vmem:[%s2 + $0x40] sm:$0xff]
    %v292 = vld [vmem:[%s2 + $0x48] sm:$0xff]
    %v293 = vld [vmem:[%s2 + $0x50] sm:$0xff]
    %v294 = vld [vmem:[%s2 + $0x58] sm:$0xff]
    %v295 = vld [vmem:[%s2 + $0x60] sm:$0xff]
    %v296 = vld [vmem:[%s2 + $0x68] sm:$0xff]
    %v297 = vld [vmem:[%s2 + $0x70] sm:$0xff]
    %v298 = vld [vmem:[%s2 + $0x78] sm:$0xff]
    %v299 = vld [vmem:[%s2 + $0x80] sm:$0xff]
    %v300 = vld [vmem:[%s2 + $0x88] sm:$0xff]
    %v301 = vld [vmem:[%s2 + $0x90] sm:$0xff]
    %v302 = vld [vmem:[%s2 + $0x98] sm:$0xff]
    %v303 = vld [vmem:[%s2 + $0xa0] sm:$0xff]
    %v304 = vld [vmem:[%s2 + $0xa8] sm:$0xff]
    %v305 = vld [vmem:[%s2 + $0xb0] sm:$0xff]
    %v306 = vld [vmem:[%s2 + $0xb8] sm:$0xff]
    %v307 = vld [vmem:[%s2 + $0xc0] sm:$0xff]
    %v308 = vld [vmem:[%s2 + $0xc8] sm:$0xff]
    %v309 = vld [vmem:[%s2 + $0xd0] sm:$0xff]
    %v310 = vld [vmem:[%s2 + $0xd8] sm:$0xff]
    %v311 = vld [vmem:[%s2 + $0xe0] sm:$0xff]
    %v312 = vld [vmem:[%s2 + $0xe8] sm:$0xff]
    %v313 = vld [vmem:[%s2 + $0xf0] sm:$0xff]
    %v314 = vld [vmem:[%s2 + $0xf8] sm:$0xff]
    %v315 = vld [vmem:[%s2 + $0x100] sm:$0xff]
    %v316 = vld [vmem:[%s2 + $0x108] sm:$0xff]
    %v317 = vld [vmem:[%s2 + $0x110] sm:$0xff]
    %v318 = vld [vmem:[%s2 + $0x118] sm:$0xff]
    %v319 = vld [vmem:[%s2 + $0x120] sm:$0xff]
    %v320 = vld [vmem:[%s2 + $0x128] sm:$0xff]
    %v321 = vld [vmem:[%s2 + $0x130] sm:$0xff]
    %v322 = vld [vmem:[%s2 + $0x138] sm:$0xff]
    %v323 = vld [vmem:[%s2 + $0x140] sm:$0xff]
    %v324 = vld [vmem:[%s2 + $0x148] sm:$0xff]
    %v325 = vld [vmem:[%s2 + $0x150] sm:$0xff]
    %v326 = vld [vmem:[%s2 + $0x158] sm:$0xff]
    %v327 = vld [vmem:[%s2 + $0x160] sm:$0xff]
    %v328 = vld [vmem:[%s2 + $0x168] sm:$0xff]
    %v329 = vld [vmem:[%s2 + $0x170] sm:$0xff]
    %v330 = vld [vmem:[%s2 + $0x178] sm:$0xff]
    %v331 = vld [vmem:[%s2 + $0x180] sm:$0xff]
    %v332 = vld [vmem:[%s2 + $0x188] sm:$0xff]
    %v333 = vld [vmem:[%s2 + $0x190] sm:$0xff]
    %v334 = vld [vmem:[%s2 + $0x198] sm:$0xff]
    %v335 = vld [vmem:[%s2 + $0x1a0] sm:$0xff]
    %v336 = vld [vmem:[%s2 + $0x1a8] sm:$0xff]
    %v337 = vld [vmem:[%s2 + $0x1b0] sm:$0xff]
    %v338 = vld [vmem:[%s2 + $0x1b8] sm:$0xff]
    %v339 = vld [vmem:[%s2 + $0x1c0] sm:$0xff]
    %v340 = vld [vmem:[%s2 + $0x1c8] sm:$0xff]
    %v341 = vld [vmem:[%s2 + $0x1d0] sm:$0xff]
    %v342 = vld [vmem:[%s2 + $0x1d8] sm:$0xff]
    %v343 = vld [vmem:[%s2 + $0x1e0] sm:$0xff]
    %v344 = vld [vmem:[%s2 + $0x1e8] sm:$0xff]
    %v345 = vld [vmem:[%s2 + $0x1f0] sm:$0xff]
    %v346 = vld [vmem:[%s2 + $0x1f8] sm:$0xff]
    %v347 = vld [vmem:[%s2 + $0x200] sm:$0xff]
    %v348 = vld [vmem:[%s2 + $0x208] sm:$0xff]
    %v349 = vld [vmem:[%s2 + $0x210] sm:$0xff]
    %v350 = vld [vmem:[%s2 + $0x218] sm:$0xff]
    %v351 = vld [vmem:[%s2 + $0x220] sm:$0xff]
    %v352 = vld [vmem:[%s2 + $0x228] sm:$0xff]
    %v353 = vld [vmem:[%s2 + $0x230] sm:$0xff]
    %v354 = vld [vmem:[%s2 + $0x238] sm:$0xff]
    %v355 = vld [vmem:[%s2 + $0x240] sm:$0xff]
    %v356 = vld [vmem:[%s2 + $0x248] sm:$0xff]
    %v357 = vld [vmem:[%s2 + $0x250] sm:$0xff]
    %v358 = vld [vmem:[%s2 + $0x258] sm:$0xff]
    %v359 = vld [vmem:[%s2 + $0x260] sm:$0xff]
    %v360 = vld [vmem:[%s2 + $0x268] sm:$0xff]
    %v361 = vld [vmem:[%s2 + $0x270] sm:$0xff]
    %v362 = vld [vmem:[%s2 + $0x278] sm:$0xff]
    %v363 = vld [vmem:[%s2 + $0x280] sm:$0xff]
    %v364 = vld [vmem:[%s2 + $0x288] sm:$0xff]
    %v365 = vld [vmem:[%s2 + $0x290] sm:$0xff]
    %v366 = vld [vmem:[%s2 + $0x298] sm:$0xff]
    %v367 = vld [vmem:[%s2 + $0x2a0] sm:$0xff]
    %v368 = vld [vmem:[%s2 + $0x2a8] sm:$0xff]
    %v369 = vld [vmem:[%s2 + $0x2b0] sm:$0xff]
    %v370 = vld [vmem:[%s2 + $0x2b8] sm:$0xff]
    %v371 = vld [vmem:[%s2 + $0x2c0] sm:$0xff]
    %v372 = vld [vmem:[%s2 + $0x2c8] sm:$0xff]
    %v373 = vld [vmem:[%s2 + $0x2d0] sm:$0xff]
    %v374 = vld [vmem:[%s2 + $0x2d8] sm:$0xff]
    %v375 = vld [vmem:[%s2 + $0x2e0] sm:$0xff]
    %v376 = vld [vmem:[%s2 + $0x2e8] sm:$0xff]
    %v377 = vld [vmem:[%s2 + $0x2f0] sm:$0xff]
    %v378 = vld [vmem:[%s2 + $0x2f8] sm:$0xff]
    %v379 = vld [vmem:[%s2 + $0x300] sm:$0xff]
    %v380 = vld [vmem:[%s2 + $0x308] sm:$0xff]
    %v381 = vld [vmem:[%s2 + $0x310] sm:$0xff]
    %v382 = vld [vmem:[%s2 + $0x318] sm:$0xff]
    %v383 = vld [vmem:[%s2 + $0x320] sm:$0xff]
    %v384 = vld [vmem:[%s2 + $0x328] sm:$0xff]
    %v385 = vld [vmem:[%s2 + $0x330] sm:$0xff]
    %v386 = vld [vmem:[%s2 + $0x338] sm:$0xff]
    %v387 = vld [vmem:[%s2 + $0x340] sm:$0xff]
    %v388 = vld [vmem:[%s2 + $0x348] sm:$0xff]
    %v389 = vld [vmem:[%s2 + $0x350] sm:$0xff]
    %v390 = vld [vmem:[%s2 + $0x358] sm:$0xff]
    %v391 = vld [vmem:[%s2 + $0x360] sm:$0xff]
    %v392 = vld [vmem:[%s2 + $0x368] sm:$0xff]
    %v393 = vld [vmem:[%s2 + $0x370] sm:$0xff]
    %v394 = vld [vmem:[%s2 + $0x378] sm:$0xff]
    %v395 = vld [vmem:[%s2 + $0x380] sm:$0xff]
    %v396 = vld [vmem:[%s2 + $0x388] sm:$0xff]
    %v397 = vld [vmem:[%s2 + $0x390] sm:$0xff]
    %v398 = vld [vmem:[%s2 + $0x398] sm:$0xff]
    %v399 = vld [vmem:[%s2 + $0x3a0] sm:$0xff]
    %v400 = vld [vmem:[%s2 + $0x3a8] sm:$0xff]
    %v401 = vld [vmem:[%s2 + $0x3b0] sm:$0xff]
    %v402 = vld [vmem:[%s2 + $0x3b8] sm:$0xff]
    %v403 = vld [vmem:[%s2 + $0x3c0] sm:$0xff]
    %v404 = vld [vmem:[%s2 + $0x3c8] sm:$0xff]
    %v405 = vld [vmem:[%s2 + $0x3d0] sm:$0xff]
    %v406 = vld [vmem:[%s2 + $0x3d8] sm:$0xff]
    %v407 = vld [vmem:[%s2 + $0x3e0] sm:$0xff]
    %v408 = vld [vmem:[%s2 + $0x3e8] sm:$0xff]
    %v409 = vld [vmem:[%s2 + $0x3f0] sm:$0xff]
    %v410 = vld [vmem:[%s2 + $0x3f8] sm:$0xff]
    %v411 = vld [vmem:[%s2 + $0x400] sm:$0xff]
    %v412 = vld [vmem:[%s2 + $0x408] sm:$0xff]
    %v413 = vld [vmem:[%s2 + $0x410] sm:$0xff]
    %v414 = vld [vmem:[%s2 + $0x418] sm:$0xff]
    %v415 = vld [vmem:[%s2 + $0x420] sm:$0xff]
    %v416 = vld [vmem:[%s2 + $0x428] sm:$0xff]
    %v417 = vld [vmem:[%s2 + $0x430] sm:$0xff]
    %v418 = vld [vmem:[%s2 + $0x438] sm:$0xff]
    %v419 = vld [vmem:[%s2 + $0x440] sm:$0xff]
    %v420 = vld [vmem:[%s2 + $0x448] sm:$0xff]
    %v421 = vld [vmem:[%s2 + $0x450] sm:$0xff]
    %v422 = vld [vmem:[%s2 + $0x458] sm:$0xff]
    %v423 = vld [vmem:[%s2 + $0x460] sm:$0xff]
    %v424 = vld [vmem:[%s2 + $0x468] sm:$0xff]
    %v425 = vld [vmem:[%s2 + $0x470] sm:$0xff]
    %v426 = vld [vmem:[%s2 + $0x478] sm:$0xff]
    %vm427 = vcmask 523264
    %v429 = vsel %vm427, %v282, 0
    %431 = vmatprep.subr.mxu0 %v314
    %432 = vmatpush1.msra.mxu0 %v313
    %433 = vmatprep.subr.mxu0 %v312
    %434 = vmatpush1.msra.mxu0 %v311
    %435 = vmatprep.subr.mxu0 %v310
    %436 = vmatpush1.msra.mxu0 %v309
    %437 = vmatprep.subr.mxu0 %v308
    %438 = vmatpush1.msra.mxu0 %v307
    %439 = vmatprep.subr.mxu0 %v306
    %440 = vmatpush1.msra.mxu0 %v305
    %441 = vmatprep.subr.mxu0 %v304
    %442 = vmatpush1.msra.mxu0 %v303
    %443 = vmatprep.subr.mxu0 %v302
    %444 = vmatpush1.msra.mxu0 %v301
    %445 = vmatprep.subr.mxu0 %v300
    %446 = vmatpush1.msra.mxu0 %v299
    %447 = vmatprep.subr.mxu0 %v298
    %448 = vmatpush1.msra.mxu0 %v297
    %449 = vmatprep.subr.mxu0 %v296
    %450 = vmatpush1.msra.mxu0 %v295
    %451 = vmatprep.subr.mxu0 %v294
    %452 = vmatpush1.msra.mxu0 %v293
    %453 = vmatprep.subr.mxu0 %v292
    %454 = vmatpush1.msra.mxu0 %v291
    %455 = vmatprep.subr.mxu0 %v290
    %456 = vmatpush1.msra.mxu0 %v289
    %457 = vmatprep.subr.mxu0 %v288
    %458 = vmatpush1.msra.mxu0 %v287
    %459 = vmatprep.subr.mxu0 %v286
    %460 = vmatpush1.msra.mxu0 %v285
    %461 = vmatprep.subr.mxu0 %v284
    %462 = vmatpush1.msra.mxu0 %v283
    %463 = vmatprep.subr.mxu0 %v346
    %464 = vmatpush2.msra.mxu0 %v345
    %465 = vmatprep.subr.mxu0 %v344
    %466 = vmatpush2.msra.mxu0 %v343
    %467 = vmatprep.subr.mxu0 %v342
    %468 = vmatpush2.msra.mxu0 %v341
    %469 = vmatprep.subr.mxu0 %v340
    %470 = vmatpush2.msra.mxu0 %v339
    %471 = vmatprep.subr.mxu0 %v338
    %472 = vmatpush2.msra.mxu0 %v337
    %473 = vmatprep.subr.mxu0 %v336
    %474 = vmatpush2.msra.mxu0 %v335
    %475 = vmatprep.subr.mxu0 %v334
    %476 = vmatpush2.msra.mxu0 %v333
    %477 = vmatprep.subr.mxu0 %v332
    %478 = vmatpush2.msra.mxu0 %v331
    %479 = vmatprep.subr.mxu0 %v330
    %480 = vmatpush2.msra.mxu0 %v329
    %481 = vmatprep.subr.mxu0 %v328
    %482 = vmatpush2.msra.mxu0 %v327
    %483 = vmatprep.subr.mxu0 %v326
    %484 = vmatpush2.msra.mxu0 %v325
    %485 = vmatprep.subr.mxu0 %v324
    %486 = vmatpush2.msra.mxu0 %v323
    %487 = vmatprep.subr.mxu0 %v322
    %488 = vmatpush2.msra.mxu0 %v321
    %489 = vmatprep.subr.mxu0 %v320
    %490 = vmatpush2.msra.mxu0 %v319
    %491 = vmatprep.subr.mxu0 %v318
    %492 = vmatpush2.msra.mxu0 %v317
    %493 = vmatprep.subr.mxu0 %v316
    %494 = vmatpush2.msra.mxu0 %v315
    %495 = vmatprep.mubr.f32.mxu0 %v279
    %496 = vmatmul.mubr.f32.gmra.mxu0 %v278
    %v497 = vpop.f32.mrf.mxu0
    %v498 = vadd.f32 0.0, %v497
    %v499 = vpop.f32.mrf.mxu0
    %v500 = vadd.f32 0.0, %v499
    %501 = vdwg.mxu0
    %502 = vmatprep.subr.mxu0 %v378
    %503 = vmatpush1.msra.mxu0 %v377
    %504 = vmatprep.subr.mxu0 %v376
    %505 = vmatpush1.msra.mxu0 %v375
    %506 = vmatprep.subr.mxu0 %v374
    %507 = vmatpush1.msra.mxu0 %v373
    %508 = vmatprep.subr.mxu0 %v372
    %509 = vmatpush1.msra.mxu0 %v371
    %510 = vmatprep.subr.mxu0 %v370
    %511 = vmatpush1.msra.mxu0 %v369
    %512 = vmatprep.subr.mxu0 %v368
    %513 = vmatpush1.msra.mxu0 %v367
    %514 = vmatprep.subr.mxu0 %v366
    %515 = vmatpush1.msra.mxu0 %v365
    %516 = vmatprep.subr.mxu0 %v364
    %517 = vmatpush1.msra.mxu0 %v363
    %518 = vmatprep.subr.mxu0 %v362
    %519 = vmatpush1.msra.mxu0 %v361
    %520 = vmatprep.subr.mxu0 %v360
    %521 = vmatpush1.msra.mxu0 %v359
    %522 = vmatprep.subr.mxu0 %v358
    %523 = vmatpush1.msra.mxu0 %v357
    %524 = vmatprep.subr.mxu0 %v356
    %525 = vmatpush1.msra.mxu0 %v355
    %526 = vmatprep.subr.mxu0 %v354
    %527 = vmatpush1.msra.mxu0 %v353
    %528 = vmatprep.subr.mxu0 %v352
    %529 = vmatpush1.msra.mxu0 %v351
    %530 = vmatprep.subr.mxu0 %v350
    %531 = vmatpush1.msra.mxu0 %v349
    %532 = vmatprep.subr.mxu0 %v348
    %533 = vmatpush1.msra.mxu0 %v347
    %534 = vmatprep.subr.mxu0 %v410
    %535 = vmatpush2.msra.mxu0 %v409
    %536 = vmatprep.subr.mxu0 %v408
    %537 = vmatpush2.msra.mxu0 %v407
    %538 = vmatprep.subr.mxu0 %v406
    %539 = vmatpush2.msra.mxu0 %v405
    %540 = vmatprep.subr.mxu0 %v404
    %541 = vmatpush2.msra.mxu0 %v403
    %542 = vmatprep.subr.mxu0 %v402
    %543 = vmatpush2.msra.mxu0 %v401
    %544 = vmatprep.subr.mxu0 %v400
    %545 = vmatpush2.msra.mxu0 %v399
    %546 = vmatprep.subr.mxu0 %v398
    %547 = vmatpush2.msra.mxu0 %v397
    %548 = vmatprep.subr.mxu0 %v396
    %549 = vmatpush2.msra.mxu0 %v395
    %550 = vmatprep.subr.mxu0 %v394
    %551 = vmatpush2.msra.mxu0 %v393
    %552 = vmatprep.subr.mxu0 %v392
    %553 = vmatpush2.msra.mxu0 %v391
    %554 = vmatprep.subr.mxu0 %v390
    %555 = vmatpush2.msra.mxu0 %v389
    %556 = vmatprep.subr.mxu0 %v388
    %557 = vmatpush2.msra.mxu0 %v387
    %558 = vmatprep.subr.mxu0 %v386
    %559 = vmatpush2.msra.mxu0 %v385
    %560 = vmatprep.subr.mxu0 %v384
    %561 = vmatpush2.msra.mxu0 %v383
    %562 = vmatprep.subr.mxu0 %v382
    %563 = vmatpush2.msra.mxu0 %v381
    %564 = vmatprep.subr.mxu0 %v380
    %565 = vmatpush2.msra.mxu0 %v379
    %566 = vmatprep.mubr.f32.mxu0 %v281
    %567 = vmatmul.mubr.f32.gmra.mxu0 %v280
    %v568 = vpop.f32.mrf.mxu0
    %v569 = vadd.f32 %v498, %v568
    %v570 = vpop.f32.mrf.mxu0
    %v571 = vadd.f32 %v500, %v570
    %572 = vdwg.mxu0
    %573 = vmatprep.subr.mxu0 0.0
    %574 = vmatpush1.msra.mxu0 0.0
    %575 = vmatprep.subr.mxu0 0.0
    %576 = vmatpush1.msra.mxu0 0.0
    %577 = vmatprep.subr.mxu0 0.0
    %578 = vmatpush1.msra.mxu0 0.0
    %579 = vmatprep.subr.mxu0 0.0
    %580 = vmatpush1.msra.mxu0 0.0
    %581 = vmatprep.subr.mxu0 0.0
    %582 = vmatpush1.msra.mxu0 0.0
    %583 = vmatprep.subr.mxu0 0.0
    %584 = vmatpush1.msra.mxu0 0.0
    %585 = vmatprep.subr.mxu0 0.0
    %586 = vmatpush1.msra.mxu0 0.0
    %587 = vmatprep.subr.mxu0 0.0
    %588 = vmatpush1.msra.mxu0 0.0
    %589 = vmatprep.subr.mxu0 %v426
    %590 = vmatpush1.msra.mxu0 %v425
    %591 = vmatprep.subr.mxu0 %v424
    %592 = vmatpush1.msra.mxu0 %v423
    %593 = vmatprep.subr.mxu0 %v422
    %594 = vmatpush1.msra.mxu0 %v421
    %595 = vmatprep.subr.mxu0 %v420
    %596 = vmatpush1.msra.mxu0 %v419
    %597 = vmatprep.subr.mxu0 %v418
    %598 = vmatpush1.msra.mxu0 %v417
    %599 = vmatprep.subr.mxu0 %v416
    %600 = vmatpush1.msra.mxu0 %v415
    %601 = vmatprep.subr.mxu0 %v414
    %602 = vmatpush1.msra.mxu0 %v413
    %603 = vmatprep.subr.mxu0 %v412
    %604 = vmatpush1.msra.mxu0 %v411
    %605 = vmatprep.subr.mxu0 0.0
    %606 = vmatpush2.msra.mxu0 0.0
    %607 = vmatprep.subr.mxu0 0.0
    %608 = vmatpush2.msra.mxu0 0.0
    %609 = vmatprep.subr.mxu0 0.0
    %610 = vmatpush2.msra.mxu0 0.0
    %611 = vmatprep.subr.mxu0 0.0
    %612 = vmatpush2.msra.mxu0 0.0
    %613 = vmatprep.subr.mxu0 0.0
    %614 = vmatpush2.msra.mxu0 0.0
    %615 = vmatprep.subr.mxu0 0.0
    %616 = vmatpush2.msra.mxu0 0.0
    %617 = vmatprep.subr.mxu0 0.0
    %618 = vmatpush2.msra.mxu0 0.0
    %619 = vmatprep.subr.mxu0 0.0
    %620 = vmatpush2.msra.mxu0 0.0
    %621 = vmatprep.subr.mxu0 0.0
    %622 = vmatpush2.msra.mxu0 0.0
    %623 = vmatprep.subr.mxu0 0.0
    %624 = vmatpush2.msra.mxu0 0.0
    %625 = vmatprep.subr.mxu0 0.0
    %626 = vmatpush2.msra.mxu0 0.0
    %627 = vmatprep.subr.mxu0 0.0
    %628 = vmatpush2.msra.mxu0 0.0
    %629 = vmatprep.subr.mxu0 0.0
    %630 = vmatpush2.msra.mxu0 0.0
    %631 = vmatprep.subr.mxu0 0.0
    %632 = vmatpush2.msra.mxu0 0.0
    %633 = vmatprep.subr.mxu0 0.0
    %634 = vmatpush2.msra.mxu0 0.0
    %635 = vmatprep.subr.mxu0 0.0
    %636 = vmatpush2.msra.mxu0 0.0
    %637 = vmatprep.mubr.f32.mxu0 0.0
    %638 = vmatmul.mubr.f32.gmra.mxu0 %v429
    %v639 = vpop.f32.mrf.mxu0
    %v640 = vadd.f32 %v569, %v639
    %v641 = vpop.f32.mrf.mxu0
    %v642 = vadd.f32 %v571, %v641
    %643 = vdwg.mxu0
    %s644 = scalar_lea.vmem %s2, 1152
    %v645 = vld [vmem:[%s644] sm:$0xff]
    %v646 = vld [vmem:[%s644 + $0x8] sm:$0xff]
    %v647 = vld [vmem:[%s644 + $0x10] sm:$0xff]
    %v648 = vld [vmem:[%s644 + $0x18] sm:$0xff]
    %v649 = vld [vmem:[%s644 + $0x20] sm:$0xff]
    %v650 = vld [vmem:[%s644 + $0x28] sm:$0xff]
    %v651 = vld [vmem:[%s644 + $0x30] sm:$0xff]
    %v652 = vld [vmem:[%s644 + $0x38] sm:$0xff]
    %v653 = vld [vmem:[%s644 + $0x40] sm:$0xff]
    %v654 = vld [vmem:[%s644 + $0x48] sm:$0xff]
    %v655 = vld [vmem:[%s644 + $0x50] sm:$0xff]
    %v656 = vld [vmem:[%s644 + $0x58] sm:$0xff]
    %v657 = vld [vmem:[%s644 + $0x60] sm:$0xff]
    %v658 = vld [vmem:[%s644 + $0x68] sm:$0xff]
    %v659 = vld [vmem:[%s644 + $0x70] sm:$0xff]
    %v660 = vld [vmem:[%s644 + $0x78] sm:$0xff]
    %v661 = vld [vmem:[%s644 + $0x80] sm:$0xff]
    %v662 = vld [vmem:[%s644 + $0x88] sm:$0xff]
    %v663 = vld [vmem:[%s644 + $0x90] sm:$0xff]
    %v664 = vld [vmem:[%s644 + $0x98] sm:$0xff]
    %v665 = vld [vmem:[%s644 + $0xa0] sm:$0xff]
    %v666 = vld [vmem:[%s644 + $0xa8] sm:$0xff]
    %v667 = vld [vmem:[%s644 + $0xb0] sm:$0xff]
    %v668 = vld [vmem:[%s644 + $0xb8] sm:$0xff]
    %v669 = vld [vmem:[%s644 + $0xc0] sm:$0xff]
    %v670 = vld [vmem:[%s644 + $0xc8] sm:$0xff]
    %v671 = vld [vmem:[%s644 + $0xd0] sm:$0xff]
    %v672 = vld [vmem:[%s644 + $0xd8] sm:$0xff]
    %v673 = vld [vmem:[%s644 + $0xe0] sm:$0xff]
    %v674 = vld [vmem:[%s644 + $0xe8] sm:$0xff]
    %v675 = vld [vmem:[%s644 + $0xf0] sm:$0xff]
    %v676 = vld [vmem:[%s644 + $0xf8] sm:$0xff]
    %v677 = vld [vmem:[%s644 + $0x100] sm:$0xff]
    %v678 = vld [vmem:[%s644 + $0x108] sm:$0xff]
    %v679 = vld [vmem:[%s644 + $0x110] sm:$0xff]
    %v680 = vld [vmem:[%s644 + $0x118] sm:$0xff]
    %v681 = vld [vmem:[%s644 + $0x120] sm:$0xff]
    %v682 = vld [vmem:[%s644 + $0x128] sm:$0xff]
    %v683 = vld [vmem:[%s644 + $0x130] sm:$0xff]
    %v684 = vld [vmem:[%s644 + $0x138] sm:$0xff]
    %v685 = vld [vmem:[%s644 + $0x140] sm:$0xff]
    %v686 = vld [vmem:[%s644 + $0x148] sm:$0xff]
    %v687 = vld [vmem:[%s644 + $0x150] sm:$0xff]
    %v688 = vld [vmem:[%s644 + $0x158] sm:$0xff]
    %v689 = vld [vmem:[%s644 + $0x160] sm:$0xff]
    %v690 = vld [vmem:[%s644 + $0x168] sm:$0xff]
    %v691 = vld [vmem:[%s644 + $0x170] sm:$0xff]
    %v692 = vld [vmem:[%s644 + $0x178] sm:$0xff]
    %v693 = vld [vmem:[%s644 + $0x180] sm:$0xff]
    %v694 = vld [vmem:[%s644 + $0x188] sm:$0xff]
    %v695 = vld [vmem:[%s644 + $0x190] sm:$0xff]
    %v696 = vld [vmem:[%s644 + $0x198] sm:$0xff]
    %v697 = vld [vmem:[%s644 + $0x1a0] sm:$0xff]
    %v698 = vld [vmem:[%s644 + $0x1a8] sm:$0xff]
    %v699 = vld [vmem:[%s644 + $0x1b0] sm:$0xff]
    %v700 = vld [vmem:[%s644 + $0x1b8] sm:$0xff]
    %v701 = vld [vmem:[%s644 + $0x1c0] sm:$0xff]
    %v702 = vld [vmem:[%s644 + $0x1c8] sm:$0xff]
    %v703 = vld [vmem:[%s644 + $0x1d0] sm:$0xff]
    %v704 = vld [vmem:[%s644 + $0x1d8] sm:$0xff]
    %v705 = vld [vmem:[%s644 + $0x1e0] sm:$0xff]
    %v706 = vld [vmem:[%s644 + $0x1e8] sm:$0xff]
    %v707 = vld [vmem:[%s644 + $0x1f0] sm:$0xff]
    %v708 = vld [vmem:[%s644 + $0x1f8] sm:$0xff]
    %v709 = vld [vmem:[%s644 + $0x200] sm:$0xff]
    %v710 = vld [vmem:[%s644 + $0x208] sm:$0xff]
    %v711 = vld [vmem:[%s644 + $0x210] sm:$0xff]
    %v712 = vld [vmem:[%s644 + $0x218] sm:$0xff]
    %v713 = vld [vmem:[%s644 + $0x220] sm:$0xff]
    %v714 = vld [vmem:[%s644 + $0x228] sm:$0xff]
    %v715 = vld [vmem:[%s644 + $0x230] sm:$0xff]
    %v716 = vld [vmem:[%s644 + $0x238] sm:$0xff]
    %v717 = vld [vmem:[%s644 + $0x240] sm:$0xff]
    %v718 = vld [vmem:[%s644 + $0x248] sm:$0xff]
    %v719 = vld [vmem:[%s644 + $0x250] sm:$0xff]
    %v720 = vld [vmem:[%s644 + $0x258] sm:$0xff]
    %v721 = vld [vmem:[%s644 + $0x260] sm:$0xff]
    %v722 = vld [vmem:[%s644 + $0x268] sm:$0xff]
    %v723 = vld [vmem:[%s644 + $0x270] sm:$0xff]
    %v724 = vld [vmem:[%s644 + $0x278] sm:$0xff]
    %v725 = vld [vmem:[%s644 + $0x280] sm:$0xff]
    %v726 = vld [vmem:[%s644 + $0x288] sm:$0xff]
    %v727 = vld [vmem:[%s644 + $0x290] sm:$0xff]
    %v728 = vld [vmem:[%s644 + $0x298] sm:$0xff]
    %v729 = vld [vmem:[%s644 + $0x2a0] sm:$0xff]
    %v730 = vld [vmem:[%s644 + $0x2a8] sm:$0xff]
    %v731 = vld [vmem:[%s644 + $0x2b0] sm:$0xff]
    %v732 = vld [vmem:[%s644 + $0x2b8] sm:$0xff]
    %v733 = vld [vmem:[%s644 + $0x2c0] sm:$0xff]
    %v734 = vld [vmem:[%s644 + $0x2c8] sm:$0xff]
    %v735 = vld [vmem:[%s644 + $0x2d0] sm:$0xff]
    %v736 = vld [vmem:[%s644 + $0x2d8] sm:$0xff]
    %v737 = vld [vmem:[%s644 + $0x2e0] sm:$0xff]
    %v738 = vld [vmem:[%s644 + $0x2e8] sm:$0xff]
    %v739 = vld [vmem:[%s644 + $0x2f0] sm:$0xff]
    %v740 = vld [vmem:[%s644 + $0x2f8] sm:$0xff]
    %v741 = vld [vmem:[%s644 + $0x300] sm:$0xff]
    %v742 = vld [vmem:[%s644 + $0x308] sm:$0xff]
    %v743 = vld [vmem:[%s644 + $0x310] sm:$0xff]
    %v744 = vld [vmem:[%s644 + $0x318] sm:$0xff]
    %v745 = vld [vmem:[%s644 + $0x320] sm:$0xff]
    %v746 = vld [vmem:[%s644 + $0x328] sm:$0xff]
    %v747 = vld [vmem:[%s644 + $0x330] sm:$0xff]
    %v748 = vld [vmem:[%s644 + $0x338] sm:$0xff]
    %v749 = vld [vmem:[%s644 + $0x340] sm:$0xff]
    %v750 = vld [vmem:[%s644 + $0x348] sm:$0xff]
    %v751 = vld [vmem:[%s644 + $0x350] sm:$0xff]
    %v752 = vld [vmem:[%s644 + $0x358] sm:$0xff]
    %v753 = vld [vmem:[%s644 + $0x360] sm:$0xff]
    %v754 = vld [vmem:[%s644 + $0x368] sm:$0xff]
    %v755 = vld [vmem:[%s644 + $0x370] sm:$0xff]
    %v756 = vld [vmem:[%s644 + $0x378] sm:$0xff]
    %v757 = vld [vmem:[%s644 + $0x380] sm:$0xff]
    %v758 = vld [vmem:[%s644 + $0x388] sm:$0xff]
    %v759 = vld [vmem:[%s644 + $0x390] sm:$0xff]
    %v760 = vld [vmem:[%s644 + $0x398] sm:$0xff]
    %v761 = vld [vmem:[%s644 + $0x3a0] sm:$0xff]
    %v762 = vld [vmem:[%s644 + $0x3a8] sm:$0xff]
    %v763 = vld [vmem:[%s644 + $0x3b0] sm:$0xff]
    %v764 = vld [vmem:[%s644 + $0x3b8] sm:$0xff]
    %v765 = vld [vmem:[%s644 + $0x3c0] sm:$0xff]
    %v766 = vld [vmem:[%s644 + $0x3c8] sm:$0xff]
    %v767 = vld [vmem:[%s644 + $0x3d0] sm:$0xff]
    %v768 = vld [vmem:[%s644 + $0x3d8] sm:$0xff]
    %v769 = vld [vmem:[%s644 + $0x3e0] sm:$0xff]
    %v770 = vld [vmem:[%s644 + $0x3e8] sm:$0xff]
    %v771 = vld [vmem:[%s644 + $0x3f0] sm:$0xff]
    %v772 = vld [vmem:[%s644 + $0x3f8] sm:$0xff]
    %v773 = vld [vmem:[%s644 + $0x400] sm:$0xff]
    %v774 = vld [vmem:[%s644 + $0x408] sm:$0xff]
    %v775 = vld [vmem:[%s644 + $0x410] sm:$0xff]
    %v776 = vld [vmem:[%s644 + $0x418] sm:$0xff]
    %v777 = vld [vmem:[%s644 + $0x420] sm:$0xff]
    %v778 = vld [vmem:[%s644 + $0x428] sm:$0xff]
    %v779 = vld [vmem:[%s644 + $0x430] sm:$0xff]
    %v780 = vld [vmem:[%s644 + $0x438] sm:$0xff]
    %v781 = vld [vmem:[%s644 + $0x440] sm:$0xff]
    %v782 = vld [vmem:[%s644 + $0x448] sm:$0xff]
    %v783 = vld [vmem:[%s644 + $0x450] sm:$0xff]
    %v784 = vld [vmem:[%s644 + $0x458] sm:$0xff]
    %v785 = vld [vmem:[%s644 + $0x460] sm:$0xff]
    %v786 = vld [vmem:[%s644 + $0x468] sm:$0xff]
    %v787 = vld [vmem:[%s644 + $0x470] sm:$0xff]
    %v788 = vld [vmem:[%s644 + $0x478] sm:$0xff]
    %789 = vmatprep.subr.mxu0 %v676
    %790 = vmatpush1.msra.mxu0 %v675
    %791 = vmatprep.subr.mxu0 %v674
    %792 = vmatpush1.msra.mxu0 %v673
    %793 = vmatprep.subr.mxu0 %v672
    %794 = vmatpush1.msra.mxu0 %v671
    %795 = vmatprep.subr.mxu0 %v670
    %796 = vmatpush1.msra.mxu0 %v669
    %797 = vmatprep.subr.mxu0 %v668
    %798 = vmatpush1.msra.mxu0 %v667
    %799 = vmatprep.subr.mxu0 %v666
    %800 = vmatpush1.msra.mxu0 %v665
    %801 = vmatprep.subr.mxu0 %v664
    %802 = vmatpush1.msra.mxu0 %v663
    %803 = vmatprep.subr.mxu0 %v662
    %804 = vmatpush1.msra.mxu0 %v661
    %805 = vmatprep.subr.mxu0 %v660
    %806 = vmatpush1.msra.mxu0 %v659
    %807 = vmatprep.subr.mxu0 %v658
    %808 = vmatpush1.msra.mxu0 %v657
    %809 = vmatprep.subr.mxu0 %v656
    %810 = vmatpush1.msra.mxu0 %v655
    %811 = vmatprep.subr.mxu0 %v654
    %812 = vmatpush1.msra.mxu0 %v653
    %813 = vmatprep.subr.mxu0 %v652
    %814 = vmatpush1.msra.mxu0 %v651
    %815 = vmatprep.subr.mxu0 %v650
    %816 = vmatpush1.msra.mxu0 %v649
    %817 = vmatprep.subr.mxu0 %v648
    %818 = vmatpush1.msra.mxu0 %v647
    %819 = vmatprep.subr.mxu0 %v646
    %820 = vmatpush1.msra.mxu0 %v645
    %821 = vmatprep.subr.mxu0 %v708
    %822 = vmatpush2.msra.mxu0 %v707
    %823 = vmatprep.subr.mxu0 %v706
    %824 = vmatpush2.msra.mxu0 %v705
    %825 = vmatprep.subr.mxu0 %v704
    %826 = vmatpush2.msra.mxu0 %v703
    %827 = vmatprep.subr.mxu0 %v702
    %828 = vmatpush2.msra.mxu0 %v701
    %829 = vmatprep.subr.mxu0 %v700
    %830 = vmatpush2.msra.mxu0 %v699
    %831 = vmatprep.subr.mxu0 %v698
    %832 = vmatpush2.msra.mxu0 %v697
    %833 = vmatprep.subr.mxu0 %v696
    %834 = vmatpush2.msra.mxu0 %v695
    %835 = vmatprep.subr.mxu0 %v694
    %836 = vmatpush2.msra.mxu0 %v693
    %837 = vmatprep.subr.mxu0 %v692
    %838 = vmatpush2.msra.mxu0 %v691
    %839 = vmatprep.subr.mxu0 %v690
    %840 = vmatpush2.msra.mxu0 %v689
    %841 = vmatprep.subr.mxu0 %v688
    %842 = vmatpush2.msra.mxu0 %v687
    %843 = vmatprep.subr.mxu0 %v686
    %844 = vmatpush2.msra.mxu0 %v685
    %845 = vmatprep.subr.mxu0 %v684
    %846 = vmatpush2.msra.mxu0 %v683
    %847 = vmatprep.subr.mxu0 %v682
    %848 = vmatpush2.msra.mxu0 %v681
    %849 = vmatprep.subr.mxu0 %v680
    %850 = vmatpush2.msra.mxu0 %v679
    %851 = vmatprep.subr.mxu0 %v678
    %852 = vmatpush2.msra.mxu0 %v677
    %853 = vmatprep.mubr.f32.mxu0 %v279
    %854 = vmatmul.mubr.f32.gmra.mxu0 %v278
    %v855 = vpop.f32.mrf.mxu0
    %v856 = vadd.f32 0.0, %v855
    %v857 = vpop.f32.mrf.mxu0
    %v858 = vadd.f32 0.0, %v857
    %859 = vdwg.mxu0
    %860 = vmatprep.subr.mxu0 %v740
    %861 = vmatpush1.msra.mxu0 %v739
    %862 = vmatprep.subr.mxu0 %v738
    %863 = vmatpush1.msra.mxu0 %v737
    %864 = vmatprep.subr.mxu0 %v736
    %865 = vmatpush1.msra.mxu0 %v735
    %866 = vmatprep.subr.mxu0 %v734
    %867 = vmatpush1.msra.mxu0 %v733
    %868 = vmatprep.subr.mxu0 %v732
    %869 = vmatpush1.msra.mxu0 %v731
    %870 = vmatprep.subr.mxu0 %v730
    %871 = vmatpush1.msra.mxu0 %v729
    %872 = vmatprep.subr.mxu0 %v728
    %873 = vmatpush1.msra.mxu0 %v727
    %874 = vmatprep.subr.mxu0 %v726
    %875 = vmatpush1.msra.mxu0 %v725
    %876 = vmatprep.subr.mxu0 %v724
    %877 = vmatpush1.msra.mxu0 %v723
    %878 = vmatprep.subr.mxu0 %v722
    %879 = vmatpush1.msra.mxu0 %v721
    %880 = vmatprep.subr.mxu0 %v720
    %881 = vmatpush1.msra.mxu0 %v719
    %882 = vmatprep.subr.mxu0 %v718
    %883 = vmatpush1.msra.mxu0 %v717
    %884 = vmatprep.subr.mxu0 %v716
    %885 = vmatpush1.msra.mxu0 %v715
    %886 = vmatprep.subr.mxu0 %v714
    %887 = vmatpush1.msra.mxu0 %v713
    %888 = vmatprep.subr.mxu0 %v712
    %889 = vmatpush1.msra.mxu0 %v711
    %890 = vmatprep.subr.mxu0 %v710
    %891 = vmatpush1.msra.mxu0 %v709
    %892 = vmatprep.subr.mxu0 %v772
    %893 = vmatpush2.msra.mxu0 %v771
    %894 = vmatprep.subr.mxu0 %v770
    %895 = vmatpush2.msra.mxu0 %v769
    %896 = vmatprep.subr.mxu0 %v768
    %897 = vmatpush2.msra.mxu0 %v767
    %898 = vmatprep.subr.mxu0 %v766
    %899 = vmatpush2.msra.mxu0 %v765
    %900 = vmatprep.subr.mxu0 %v764
    %901 = vmatpush2.msra.mxu0 %v763
    %902 = vmatprep.subr.mxu0 %v762
    %903 = vmatpush2.msra.mxu0 %v761
    %904 = vmatprep.subr.mxu0 %v760
    %905 = vmatpush2.msra.mxu0 %v759
    %906 = vmatprep.subr.mxu0 %v758
    %907 = vmatpush2.msra.mxu0 %v757
    %908 = vmatprep.subr.mxu0 %v756
    %909 = vmatpush2.msra.mxu0 %v755
    %910 = vmatprep.subr.mxu0 %v754
    %911 = vmatpush2.msra.mxu0 %v753
    %912 = vmatprep.subr.mxu0 %v752
    %913 = vmatpush2.msra.mxu0 %v751
    %914 = vmatprep.subr.mxu0 %v750
    %915 = vmatpush2.msra.mxu0 %v749
    %916 = vmatprep.subr.mxu0 %v748
    %917 = vmatpush2.msra.mxu0 %v747
    %918 = vmatprep.subr.mxu0 %v746
    %919 = vmatpush2.msra.mxu0 %v745
    %920 = vmatprep.subr.mxu0 %v744
    %921 = vmatpush2.msra.mxu0 %v743
    %922 = vmatprep.subr.mxu0 %v742
    %923 = vmatpush2.msra.mxu0 %v741
    %924 = vmatprep.mubr.f32.mxu0 %v281
    %925 = vmatmul.mubr.f32.gmra.mxu0 %v280
    %v926 = vpop.f32.mrf.mxu0
    %v927 = vadd.f32 %v856, %v926
    %v928 = vpop.f32.mrf.mxu0
    %v929 = vadd.f32 %v858, %v928
    %930 = vdwg.mxu0
    %931 = vmatprep.subr.mxu0 0.0
    %932 = vmatpush1.msra.mxu0 0.0
    %933 = vmatprep.subr.mxu0 0.0
    %934 = vmatpush1.msra.mxu0 0.0
    %935 = vmatprep.subr.mxu0 0.0
    %936 = vmatpush1.msra.mxu0 0.0
    %937 = vmatprep.subr.mxu0 0.0
    %938 = vmatpush1.msra.mxu0 0.0
    %939 = vmatprep.subr.mxu0 0.0
    %940 = vmatpush1.msra.mxu0 0.0
    %941 = vmatprep.subr.mxu0 0.0
    %942 = vmatpush1.msra.mxu0 0.0
    %943 = vmatprep.subr.mxu0 0.0
    %944 = vmatpush1.msra.mxu0 0.0
    %945 = vmatprep.subr.mxu0 0.0
    %946 = vmatpush1.msra.mxu0 0.0
    %947 = vmatprep.subr.mxu0 %v788
    %948 = vmatpush1.msra.mxu0 %v787
    %949 = vmatprep.subr.mxu0 %v786
    %950 = vmatpush1.msra.mxu0 %v785
    %951 = vmatprep.subr.mxu0 %v784
    %952 = vmatpush1.msra.mxu0 %v783
    %953 = vmatprep.subr.mxu0 %v782
    %954 = vmatpush1.msra.mxu0 %v781
    %955 = vmatprep.subr.mxu0 %v780
    %956 = vmatpush1.msra.mxu0 %v779
    %957 = vmatprep.subr.mxu0 %v778
    %958 = vmatpush1.msra.mxu0 %v777
    %959 = vmatprep.subr.mxu0 %v776
    %960 = vmatpush1.msra.mxu0 %v775
    %961 = vmatprep.subr.mxu0 %v774
    %962 = vmatpush1.msra.mxu0 %v773
    %963 = vmatprep.subr.mxu0 0.0
    %964 = vmatpush2.msra.mxu0 0.0
    %965 = vmatprep.subr.mxu0 0.0
    %966 = vmatpush2.msra.mxu0 0.0
    %967 = vmatprep.subr.mxu0 0.0
    %968 = vmatpush2.msra.mxu0 0.0
    %969 = vmatprep.subr.mxu0 0.0
    %970 = vmatpush2.msra.mxu0 0.0
    %971 = vmatprep.subr.mxu0 0.0
    %972 = vmatpush2.msra.mxu0 0.0
    %973 = vmatprep.subr.mxu0 0.0
    %974 = vmatpush2.msra.mxu0 0.0
    %975 = vmatprep.subr.mxu0 0.0
    %976 = vmatpush2.msra.mxu0 0.0
    %977 = vmatprep.subr.mxu0 0.0
    %978 = vmatpush2.msra.mxu0 0.0
    %979 = vmatprep.subr.mxu0 0.0
    %980 = vmatpush2.msra.mxu0 0.0
    %981 = vmatprep.subr.mxu0 0.0
    %982 = vmatpush2.msra.mxu0 0.0
    %983 = vmatprep.subr.mxu0 0.0
    %984 = vmatpush2.msra.mxu0 0.0
    %985 = vmatprep.subr.mxu0 0.0
    %986 = vmatpush2.msra.mxu0 0.0
    %987 = vmatprep.subr.mxu0 0.0
    %988 = vmatpush2.msra.mxu0 0.0
    %989 = vmatprep.subr.mxu0 0.0
    %990 = vmatpush2.msra.mxu0 0.0
    %991 = vmatprep.subr.mxu0 0.0
    %992 = vmatpush2.msra.mxu0 0.0
    %993 = vmatprep.subr.mxu0 0.0
    %994 = vmatpush2.msra.mxu0 0.0
    %995 = vmatprep.mubr.f32.mxu0 0.0
    %996 = vmatmul.mubr.f32.gmra.mxu0 %v429
    %v997 = vpop.f32.mrf.mxu0
    %v998 = vadd.f32 %v927, %v997
    %v999 = vpop.f32.mrf.mxu0
    %v1000 = vadd.f32 %v929, %v999
    %1001 = vdwg.mxu0
    %v1002 = vmax.f32 %v640, %v998
    %v1003 = vmax.f32 %v642, %v1000
    %s1004 = scalar_lea.vmem %s2, 2304
    %v1005 = vld [vmem:[%s1004] sm:$0xff]
    %v1006 = vld [vmem:[%s1004 + $0x8] sm:$0xff]
    %v1007 = vld [vmem:[%s1004 + $0x10] sm:$0xff]
    %v1008 = vld [vmem:[%s1004 + $0x18] sm:$0xff]
    %v1009 = vld [vmem:[%s1004 + $0x20] sm:$0xff]
    %v1010 = vld [vmem:[%s1004 + $0x28] sm:$0xff]
    %v1011 = vld [vmem:[%s1004 + $0x30] sm:$0xff]
    %v1012 = vld [vmem:[%s1004 + $0x38] sm:$0xff]
    %v1013 = vld [vmem:[%s1004 + $0x40] sm:$0xff]
    %v1014 = vld [vmem:[%s1004 + $0x48] sm:$0xff]
    %v1015 = vld [vmem:[%s1004 + $0x50] sm:$0xff]
    %v1016 = vld [vmem:[%s1004 + $0x58] sm:$0xff]
    %v1017 = vld [vmem:[%s1004 + $0x60] sm:$0xff]
    %v1018 = vld [vmem:[%s1004 + $0x68] sm:$0xff]
    %v1019 = vld [vmem:[%s1004 + $0x70] sm:$0xff]
    %v1020 = vld [vmem:[%s1004 + $0x78] sm:$0xff]
    %v1021 = vld [vmem:[%s1004 + $0x80] sm:$0xff]
    %v1022 = vld [vmem:[%s1004 + $0x88] sm:$0xff]
    %v1023 = vld [vmem:[%s1004 + $0x90] sm:$0xff]
    %v1024 = vld [vmem:[%s1004 + $0x98] sm:$0xff]
    %v1025 = vld [vmem:[%s1004 + $0xa0] sm:$0xff]
    %v1026 = vld [vmem:[%s1004 + $0xa8] sm:$0xff]
    %v1027 = vld [vmem:[%s1004 + $0xb0] sm:$0xff]
    %v1028 = vld [vmem:[%s1004 + $0xb8] sm:$0xff]
    %v1029 = vld [vmem:[%s1004 + $0xc0] sm:$0xff]
    %v1030 = vld [vmem:[%s1004 + $0xc8] sm:$0xff]
    %v1031 = vld [vmem:[%s1004 + $0xd0] sm:$0xff]
    %v1032 = vld [vmem:[%s1004 + $0xd8] sm:$0xff]
    %v1033 = vld [vmem:[%s1004 + $0xe0] sm:$0xff]
    %v1034 = vld [vmem:[%s1004 + $0xe8] sm:$0xff]
    %v1035 = vld [vmem:[%s1004 + $0xf0] sm:$0xff]
    %v1036 = vld [vmem:[%s1004 + $0xf8] sm:$0xff]
    %v1037 = vld [vmem:[%s1004 + $0x100] sm:$0xff]
    %v1038 = vld [vmem:[%s1004 + $0x108] sm:$0xff]
    %v1039 = vld [vmem:[%s1004 + $0x110] sm:$0xff]
    %v1040 = vld [vmem:[%s1004 + $0x118] sm:$0xff]
    %v1041 = vld [vmem:[%s1004 + $0x120] sm:$0xff]
    %v1042 = vld [vmem:[%s1004 + $0x128] sm:$0xff]
    %v1043 = vld [vmem:[%s1004 + $0x130] sm:$0xff]
    %v1044 = vld [vmem:[%s1004 + $0x138] sm:$0xff]
    %v1045 = vld [vmem:[%s1004 + $0x140] sm:$0xff]
    %v1046 = vld [vmem:[%s1004 + $0x148] sm:$0xff]
    %v1047 = vld [vmem:[%s1004 + $0x150] sm:$0xff]
    %v1048 = vld [vmem:[%s1004 + $0x158] sm:$0xff]
    %v1049 = vld [vmem:[%s1004 + $0x160] sm:$0xff]
    %v1050 = vld [vmem:[%s1004 + $0x168] sm:$0xff]
    %v1051 = vld [vmem:[%s1004 + $0x170] sm:$0xff]
    %v1052 = vld [vmem:[%s1004 + $0x178] sm:$0xff]
    %v1053 = vld [vmem:[%s1004 + $0x180] sm:$0xff]
    %v1054 = vld [vmem:[%s1004 + $0x188] sm:$0xff]
    %v1055 = vld [vmem:[%s1004 + $0x190] sm:$0xff]
    %v1056 = vld [vmem:[%s1004 + $0x198] sm:$0xff]
    %v1057 = vld [vmem:[%s1004 + $0x1a0] sm:$0xff]
    %v1058 = vld [vmem:[%s1004 + $0x1a8] sm:$0xff]
    %v1059 = vld [vmem:[%s1004 + $0x1b0] sm:$0xff]
    %v1060 = vld [vmem:[%s1004 + $0x1b8] sm:$0xff]
    %v1061 = vld [vmem:[%s1004 + $0x1c0] sm:$0xff]
    %v1062 = vld [vmem:[%s1004 + $0x1c8] sm:$0xff]
    %v1063 = vld [vmem:[%s1004 + $0x1d0] sm:$0xff]
    %v1064 = vld [vmem:[%s1004 + $0x1d8] sm:$0xff]
    %v1065 = vld [vmem:[%s1004 + $0x1e0] sm:$0xff]
    %v1066 = vld [vmem:[%s1004 + $0x1e8] sm:$0xff]
    %v1067 = vld [vmem:[%s1004 + $0x1f0] sm:$0xff]
    %v1068 = vld [vmem:[%s1004 + $0x1f8] sm:$0xff]
    %v1069 = vld [vmem:[%s1004 + $0x200] sm:$0xff]
    %v1070 = vld [vmem:[%s1004 + $0x208] sm:$0xff]
    %v1071 = vld [vmem:[%s1004 + $0x210] sm:$0xff]
    %v1072 = vld [vmem:[%s1004 + $0x218] sm:$0xff]
    %v1073 = vld [vmem:[%s1004 + $0x220] sm:$0xff]
    %v1074 = vld [vmem:[%s1004 + $0x228] sm:$0xff]
    %v1075 = vld [vmem:[%s1004 + $0x230] sm:$0xff]
    %v1076 = vld [vmem:[%s1004 + $0x238] sm:$0xff]
    %v1077 = vld [vmem:[%s1004 + $0x240] sm:$0xff]
    %v1078 = vld [vmem:[%s1004 + $0x248] sm:$0xff]
    %v1079 = vld [vmem:[%s1004 + $0x250] sm:$0xff]
    %v1080 = vld [vmem:[%s1004 + $0x258] sm:$0xff]
    %v1081 = vld [vmem:[%s1004 + $0x260] sm:$0xff]
    %v1082 = vld [vmem:[%s1004 + $0x268] sm:$0xff]
    %v1083 = vld [vmem:[%s1004 + $0x270] sm:$0xff]
    %v1084 = vld [vmem:[%s1004 + $0x278] sm:$0xff]
    %v1085 = vld [vmem:[%s1004 + $0x280] sm:$0xff]
    %v1086 = vld [vmem:[%s1004 + $0x288] sm:$0xff]
    %v1087 = vld [vmem:[%s1004 + $0x290] sm:$0xff]
    %v1088 = vld [vmem:[%s1004 + $0x298] sm:$0xff]
    %v1089 = vld [vmem:[%s1004 + $0x2a0] sm:$0xff]
    %v1090 = vld [vmem:[%s1004 + $0x2a8] sm:$0xff]
    %v1091 = vld [vmem:[%s1004 + $0x2b0] sm:$0xff]
    %v1092 = vld [vmem:[%s1004 + $0x2b8] sm:$0xff]
    %v1093 = vld [vmem:[%s1004 + $0x2c0] sm:$0xff]
    %v1094 = vld [vmem:[%s1004 + $0x2c8] sm:$0xff]
    %v1095 = vld [vmem:[%s1004 + $0x2d0] sm:$0xff]
    %v1096 = vld [vmem:[%s1004 + $0x2d8] sm:$0xff]
    %v1097 = vld [vmem:[%s1004 + $0x2e0] sm:$0xff]
    %v1098 = vld [vmem:[%s1004 + $0x2e8] sm:$0xff]
    %v1099 = vld [vmem:[%s1004 + $0x2f0] sm:$0xff]
    %v1100 = vld [vmem:[%s1004 + $0x2f8] sm:$0xff]
    %v1101 = vld [vmem:[%s1004 + $0x300] sm:$0xff]
    %v1102 = vld [vmem:[%s1004 + $0x308] sm:$0xff]
    %v1103 = vld [vmem:[%s1004 + $0x310] sm:$0xff]
    %v1104 = vld [vmem:[%s1004 + $0x318] sm:$0xff]
    %v1105 = vld [vmem:[%s1004 + $0x320] sm:$0xff]
    %v1106 = vld [vmem:[%s1004 + $0x328] sm:$0xff]
    %v1107 = vld [vmem:[%s1004 + $0x330] sm:$0xff]
    %v1108 = vld [vmem:[%s1004 + $0x338] sm:$0xff]
    %v1109 = vld [vmem:[%s1004 + $0x340] sm:$0xff]
    %v1110 = vld [vmem:[%s1004 + $0x348] sm:$0xff]
    %v1111 = vld [vmem:[%s1004 + $0x350] sm:$0xff]
    %v1112 = vld [vmem:[%s1004 + $0x358] sm:$0xff]
    %v1113 = vld [vmem:[%s1004 + $0x360] sm:$0xff]
    %v1114 = vld [vmem:[%s1004 + $0x368] sm:$0xff]
    %v1115 = vld [vmem:[%s1004 + $0x370] sm:$0xff]
    %v1116 = vld [vmem:[%s1004 + $0x378] sm:$0xff]
    %v1117 = vld [vmem:[%s1004 + $0x380] sm:$0xff]
    %v1118 = vld [vmem:[%s1004 + $0x388] sm:$0xff]
    %v1119 = vld [vmem:[%s1004 + $0x390] sm:$0xff]
    %v1120 = vld [vmem:[%s1004 + $0x398] sm:$0xff]
    %v1121 = vld [vmem:[%s1004 + $0x3a0] sm:$0xff]
    %v1122 = vld [vmem:[%s1004 + $0x3a8] sm:$0xff]
    %v1123 = vld [vmem:[%s1004 + $0x3b0] sm:$0xff]
    %v1124 = vld [vmem:[%s1004 + $0x3b8] sm:$0xff]
    %v1125 = vld [vmem:[%s1004 + $0x3c0] sm:$0xff]
    %v1126 = vld [vmem:[%s1004 + $0x3c8] sm:$0xff]
    %v1127 = vld [vmem:[%s1004 + $0x3d0] sm:$0xff]
    %v1128 = vld [vmem:[%s1004 + $0x3d8] sm:$0xff]
    %v1129 = vld [vmem:[%s1004 + $0x3e0] sm:$0xff]
    %v1130 = vld [vmem:[%s1004 + $0x3e8] sm:$0xff]
    %v1131 = vld [vmem:[%s1004 + $0x3f0] sm:$0xff]
    %v1132 = vld [vmem:[%s1004 + $0x3f8] sm:$0xff]
    %v1133 = vld [vmem:[%s1004 + $0x400] sm:$0xff]
    %v1134 = vld [vmem:[%s1004 + $0x408] sm:$0xff]
    %v1135 = vld [vmem:[%s1004 + $0x410] sm:$0xff]
    %v1136 = vld [vmem:[%s1004 + $0x418] sm:$0xff]
    %v1137 = vld [vmem:[%s1004 + $0x420] sm:$0xff]
    %v1138 = vld [vmem:[%s1004 + $0x428] sm:$0xff]
    %v1139 = vld [vmem:[%s1004 + $0x430] sm:$0xff]
    %v1140 = vld [vmem:[%s1004 + $0x438] sm:$0xff]
    %v1141 = vld [vmem:[%s1004 + $0x440] sm:$0xff]
    %v1142 = vld [vmem:[%s1004 + $0x448] sm:$0xff]
    %v1143 = vld [vmem:[%s1004 + $0x450] sm:$0xff]
    %v1144 = vld [vmem:[%s1004 + $0x458] sm:$0xff]
    %v1145 = vld [vmem:[%s1004 + $0x460] sm:$0xff]
    %v1146 = vld [vmem:[%s1004 + $0x468] sm:$0xff]
    %v1147 = vld [vmem:[%s1004 + $0x470] sm:$0xff]
    %v1148 = vld [vmem:[%s1004 + $0x478] sm:$0xff]
    %1149 = vmatprep.subr.mxu0 %v1036
    %1150 = vmatpush1.msra.mxu0 %v1035
    %1151 = vmatprep.subr.mxu0 %v1034
    %1152 = vmatpush1.msra.mxu0 %v1033
    %1153 = vmatprep.subr.mxu0 %v1032
    %1154 = vmatpush1.msra.mxu0 %v1031
    %1155 = vmatprep.subr.mxu0 %v1030
    %1156 = vmatpush1.msra.mxu0 %v1029
    %1157 = vmatprep.subr.mxu0 %v1028
    %1158 = vmatpush1.msra.mxu0 %v1027
    %1159 = vmatprep.subr.mxu0 %v1026
    %1160 = vmatpush1.msra.mxu0 %v1025
    %1161 = vmatprep.subr.mxu0 %v1024
    %1162 = vmatpush1.msra.mxu0 %v1023
    %1163 = vmatprep.subr.mxu0 %v1022
    %1164 = vmatpush1.msra.mxu0 %v1021
    %1165 = vmatprep.subr.mxu0 %v1020
    %1166 = vmatpush1.msra.mxu0 %v1019
    %1167 = vmatprep.subr.mxu0 %v1018
    %1168 = vmatpush1.msra.mxu0 %v1017
    %1169 = vmatprep.subr.mxu0 %v1016
    %1170 = vmatpush1.msra.mxu0 %v1015
    %1171 = vmatprep.subr.mxu0 %v1014
    %1172 = vmatpush1.msra.mxu0 %v1013
    %1173 = vmatprep.subr.mxu0 %v1012
    %1174 = vmatpush1.msra.mxu0 %v1011
    %1175 = vmatprep.subr.mxu0 %v1010
    %1176 = vmatpush1.msra.mxu0 %v1009
    %1177 = vmatprep.subr.mxu0 %v1008
    %1178 = vmatpush1.msra.mxu0 %v1007
    %1179 = vmatprep.subr.mxu0 %v1006
    %1180 = vmatpush1.msra.mxu0 %v1005
    %1181 = vmatprep.subr.mxu0 %v1068
    %1182 = vmatpush2.msra.mxu0 %v1067
    %1183 = vmatprep.subr.mxu0 %v1066
    %1184 = vmatpush2.msra.mxu0 %v1065
    %1185 = vmatprep.subr.mxu0 %v1064
    %1186 = vmatpush2.msra.mxu0 %v1063
    %1187 = vmatprep.subr.mxu0 %v1062
    %1188 = vmatpush2.msra.mxu0 %v1061
    %1189 = vmatprep.subr.mxu0 %v1060
    %1190 = vmatpush2.msra.mxu0 %v1059
    %1191 = vmatprep.subr.mxu0 %v1058
    %1192 = vmatpush2.msra.mxu0 %v1057
    %1193 = vmatprep.subr.mxu0 %v1056
    %1194 = vmatpush2.msra.mxu0 %v1055
    %1195 = vmatprep.subr.mxu0 %v1054
    %1196 = vmatpush2.msra.mxu0 %v1053
    %1197 = vmatprep.subr.mxu0 %v1052
    %1198 = vmatpush2.msra.mxu0 %v1051
    %1199 = vmatprep.subr.mxu0 %v1050
    %1200 = vmatpush2.msra.mxu0 %v1049
    %1201 = vmatprep.subr.mxu0 %v1048
    %1202 = vmatpush2.msra.mxu0 %v1047
    %1203 = vmatprep.subr.mxu0 %v1046
    %1204 = vmatpush2.msra.mxu0 %v1045
    %1205 = vmatprep.subr.mxu0 %v1044
    %1206 = vmatpush2.msra.mxu0 %v1043
    %1207 = vmatprep.subr.mxu0 %v1042
    %1208 = vmatpush2.msra.mxu0 %v1041
    %1209 = vmatprep.subr.mxu0 %v1040
    %1210 = vmatpush2.msra.mxu0 %v1039
    %1211 = vmatprep.subr.mxu0 %v1038
    %1212 = vmatpush2.msra.mxu0 %v1037
    %1213 = vmatprep.mubr.f32.mxu0 %v279
    %1214 = vmatmul.mubr.f32.gmra.mxu0 %v278
    %v1215 = vpop.f32.mrf.mxu0
    %v1216 = vadd.f32 0.0, %v1215
    %v1217 = vpop.f32.mrf.mxu0
    %v1218 = vadd.f32 0.0, %v1217
    %1219 = vdwg.mxu0
    %1220 = vmatprep.subr.mxu0 %v1100
    %1221 = vmatpush1.msra.mxu0 %v1099
    %1222 = vmatprep.subr.mxu0 %v1098
    %1223 = vmatpush1.msra.mxu0 %v1097
    %1224 = vmatprep.subr.mxu0 %v1096
    %1225 = vmatpush1.msra.mxu0 %v1095
    %1226 = vmatprep.subr.mxu0 %v1094
    %1227 = vmatpush1.msra.mxu0 %v1093
    %1228 = vmatprep.subr.mxu0 %v1092
    %1229 = vmatpush1.msra.mxu0 %v1091
    %1230 = vmatprep.subr.mxu0 %v1090
    %1231 = vmatpush1.msra.mxu0 %v1089
    %1232 = vmatprep.subr.mxu0 %v1088
    %1233 = vmatpush1.msra.mxu0 %v1087
    %1234 = vmatprep.subr.mxu0 %v1086
    %1235 = vmatpush1.msra.mxu0 %v1085
    %1236 = vmatprep.subr.mxu0 %v1084
    %1237 = vmatpush1.msra.mxu0 %v1083
    %1238 = vmatprep.subr.mxu0 %v1082
    %1239 = vmatpush1.msra.mxu0 %v1081
    %1240 = vmatprep.subr.mxu0 %v1080
    %1241 = vmatpush1.msra.mxu0 %v1079
    %1242 = vmatprep.subr.mxu0 %v1078
    %1243 = vmatpush1.msra.mxu0 %v1077
    %1244 = vmatprep.subr.mxu0 %v1076
    %1245 = vmatpush1.msra.mxu0 %v1075
    %1246 = vmatprep.subr.mxu0 %v1074
    %1247 = vmatpush1.msra.mxu0 %v1073
    %1248 = vmatprep.subr.mxu0 %v1072
    %1249 = vmatpush1.msra.mxu0 %v1071
    %1250 = vmatprep.subr.mxu0 %v1070
    %1251 = vmatpush1.msra.mxu0 %v1069
    %1252 = vmatprep.subr.mxu0 %v1132
    %1253 = vmatpush2.msra.mxu0 %v1131
    %1254 = vmatprep.subr.mxu0 %v1130
    %1255 = vmatpush2.msra.mxu0 %v1129
    %1256 = vmatprep.subr.mxu0 %v1128
    %1257 = vmatpush2.msra.mxu0 %v1127
    %1258 = vmatprep.subr.mxu0 %v1126
    %1259 = vmatpush2.msra.mxu0 %v1125
    %1260 = vmatprep.subr.mxu0 %v1124
    %1261 = vmatpush2.msra.mxu0 %v1123
    %1262 = vmatprep.subr.mxu0 %v1122
    %1263 = vmatpush2.msra.mxu0 %v1121
    %1264 = vmatprep.subr.mxu0 %v1120
    %1265 = vmatpush2.msra.mxu0 %v1119
    %1266 = vmatprep.subr.mxu0 %v1118
    %1267 = vmatpush2.msra.mxu0 %v1117
    %1268 = vmatprep.subr.mxu0 %v1116
    %1269 = vmatpush2.msra.mxu0 %v1115
    %1270 = vmatprep.subr.mxu0 %v1114
    %1271 = vmatpush2.msra.mxu0 %v1113
    %1272 = vmatprep.subr.mxu0 %v1112
    %1273 = vmatpush2.msra.mxu0 %v1111
    %1274 = vmatprep.subr.mxu0 %v1110
    %1275 = vmatpush2.msra.mxu0 %v1109
    %1276 = vmatprep.subr.mxu0 %v1108
    %1277 = vmatpush2.msra.mxu0 %v1107
    %1278 = vmatprep.subr.mxu0 %v1106
    %1279 = vmatpush2.msra.mxu0 %v1105
    %1280 = vmatprep.subr.mxu0 %v1104
    %1281 = vmatpush2.msra.mxu0 %v1103
    %1282 = vmatprep.subr.mxu0 %v1102
    %1283 = vmatpush2.msra.mxu0 %v1101
    %1284 = vmatprep.mubr.f32.mxu0 %v281
    %1285 = vmatmul.mubr.f32.gmra.mxu0 %v280
    %v1286 = vpop.f32.mrf.mxu0
    %v1287 = vadd.f32 %v1216, %v1286
    %v1288 = vpop.f32.mrf.mxu0
    %v1289 = vadd.f32 %v1218, %v1288
    %1290 = vdwg.mxu0
    %1291 = vmatprep.subr.mxu0 0.0
    %1292 = vmatpush1.msra.mxu0 0.0
    %1293 = vmatprep.subr.mxu0 0.0
    %1294 = vmatpush1.msra.mxu0 0.0
    %1295 = vmatprep.subr.mxu0 0.0
    %1296 = vmatpush1.msra.mxu0 0.0
    %1297 = vmatprep.subr.mxu0 0.0
    %1298 = vmatpush1.msra.mxu0 0.0
    %1299 = vmatprep.subr.mxu0 0.0
    %1300 = vmatpush1.msra.mxu0 0.0
    %1301 = vmatprep.subr.mxu0 0.0
    %1302 = vmatpush1.msra.mxu0 0.0
    %1303 = vmatprep.subr.mxu0 0.0
    %1304 = vmatpush1.msra.mxu0 0.0
    %1305 = vmatprep.subr.mxu0 0.0
    %1306 = vmatpush1.msra.mxu0 0.0
    %1307 = vmatprep.subr.mxu0 %v1148
    %1308 = vmatpush1.msra.mxu0 %v1147
    %1309 = vmatprep.subr.mxu0 %v1146
    %1310 = vmatpush1.msra.mxu0 %v1145
    %1311 = vmatprep.subr.mxu0 %v1144
    %1312 = vmatpush1.msra.mxu0 %v1143
    %1313 = vmatprep.subr.mxu0 %v1142
    %1314 = vmatpush1.msra.mxu0 %v1141
    %1315 = vmatprep.subr.mxu0 %v1140
    %1316 = vmatpush1.msra.mxu0 %v1139
    %1317 = vmatprep.subr.mxu0 %v1138
    %1318 = vmatpush1.msra.mxu0 %v1137
    %1319 = vmatprep.subr.mxu0 %v1136
    %1320 = vmatpush1.msra.mxu0 %v1135
    %1321 = vmatprep.subr.mxu0 %v1134
    %1322 = vmatpush1.msra.mxu0 %v1133
    %1323 = vmatprep.subr.mxu0 0.0
    %1324 = vmatpush2.msra.mxu0 0.0
    %1325 = vmatprep.subr.mxu0 0.0
    %1326 = vmatpush2.msra.mxu0 0.0
    %1327 = vmatprep.subr.mxu0 0.0
    %1328 = vmatpush2.msra.mxu0 0.0
    %1329 = vmatprep.subr.mxu0 0.0
    %1330 = vmatpush2.msra.mxu0 0.0
    %1331 = vmatprep.subr.mxu0 0.0
    %1332 = vmatpush2.msra.mxu0 0.0
    %1333 = vmatprep.subr.mxu0 0.0
    %1334 = vmatpush2.msra.mxu0 0.0
    %1335 = vmatprep.subr.mxu0 0.0
    %1336 = vmatpush2.msra.mxu0 0.0
    %1337 = vmatprep.subr.mxu0 0.0
    %1338 = vmatpush2.msra.mxu0 0.0
    %1339 = vmatprep.subr.mxu0 0.0
    %1340 = vmatpush2.msra.mxu0 0.0
    %1341 = vmatprep.subr.mxu0 0.0
    %1342 = vmatpush2.msra.mxu0 0.0
    %1343 = vmatprep.subr.mxu0 0.0
    %1344 = vmatpush2.msra.mxu0 0.0
    %1345 = vmatprep.subr.mxu0 0.0
    %1346 = vmatpush2.msra.mxu0 0.0
    %1347 = vmatprep.subr.mxu0 0.0
    %1348 = vmatpush2.msra.mxu0 0.0
    %1349 = vmatprep.subr.mxu0 0.0
    %1350 = vmatpush2.msra.mxu0 0.0
    %1351 = vmatprep.subr.mxu0 0.0
    %1352 = vmatpush2.msra.mxu0 0.0
    %1353 = vmatprep.subr.mxu0 0.0
    %1354 = vmatpush2.msra.mxu0 0.0
    %1355 = vmatprep.mubr.f32.mxu0 0.0
    %1356 = vmatmul.mubr.f32.gmra.mxu0 %v429
    %v1357 = vpop.f32.mrf.mxu0
    %v1358 = vadd.f32 %v1287, %v1357
    %v1359 = vpop.f32.mrf.mxu0
    %v1360 = vadd.f32 %v1289, %v1359
    %1361 = vdwg.mxu0
    %v1362 = vmax.f32 %v1002, %v1358
    %v1363 = vmax.f32 %v1003, %v1360
    %s1364 = scalar_lea.vmem %s2, 3456
    %v1365 = vld [vmem:[%s1364] sm:$0xff]
    %v1366 = vld [vmem:[%s1364 + $0x8] sm:$0xff]
    %v1367 = vld [vmem:[%s1364 + $0x10] sm:$0xff]
    %v1368 = vld [vmem:[%s1364 + $0x18] sm:$0xff]
    %v1369 = vld [vmem:[%s1364 + $0x20] sm:$0xff]
    %v1370 = vld [vmem:[%s1364 + $0x28] sm:$0xff]
    %v1371 = vld [vmem:[%s1364 + $0x30] sm:$0xff]
    %v1372 = vld [vmem:[%s1364 + $0x38] sm:$0xff]
    %v1373 = vld [vmem:[%s1364 + $0x40] sm:$0xff]
    %v1374 = vld [vmem:[%s1364 + $0x48] sm:$0xff]
    %v1375 = vld [vmem:[%s1364 + $0x50] sm:$0xff]
    %v1376 = vld [vmem:[%s1364 + $0x58] sm:$0xff]
    %v1377 = vld [vmem:[%s1364 + $0x60] sm:$0xff]
    %v1378 = vld [vmem:[%s1364 + $0x68] sm:$0xff]
    %v1379 = vld [vmem:[%s1364 + $0x70] sm:$0xff]
    %v1380 = vld [vmem:[%s1364 + $0x78] sm:$0xff]
    %v1381 = vld [vmem:[%s1364 + $0x80] sm:$0xff]
    %v1382 = vld [vmem:[%s1364 + $0x88] sm:$0xff]
    %v1383 = vld [vmem:[%s1364 + $0x90] sm:$0xff]
    %v1384 = vld [vmem:[%s1364 + $0x98] sm:$0xff]
    %v1385 = vld [vmem:[%s1364 + $0xa0] sm:$0xff]
    %v1386 = vld [vmem:[%s1364 + $0xa8] sm:$0xff]
    %v1387 = vld [vmem:[%s1364 + $0xb0] sm:$0xff]
    %v1388 = vld [vmem:[%s1364 + $0xb8] sm:$0xff]
    %v1389 = vld [vmem:[%s1364 + $0xc0] sm:$0xff]
    %v1390 = vld [vmem:[%s1364 + $0xc8] sm:$0xff]
    %v1391 = vld [vmem:[%s1364 + $0xd0] sm:$0xff]
    %v1392 = vld [vmem:[%s1364 + $0xd8] sm:$0xff]
    %v1393 = vld [vmem:[%s1364 + $0xe0] sm:$0xff]
    %v1394 = vld [vmem:[%s1364 + $0xe8] sm:$0xff]
    %v1395 = vld [vmem:[%s1364 + $0xf0] sm:$0xff]
    %v1396 = vld [vmem:[%s1364 + $0xf8] sm:$0xff]
    %v1397 = vld [vmem:[%s1364 + $0x100] sm:$0xff]
    %v1398 = vld [vmem:[%s1364 + $0x108] sm:$0xff]
    %v1399 = vld [vmem:[%s1364 + $0x110] sm:$0xff]
    %v1400 = vld [vmem:[%s1364 + $0x118] sm:$0xff]
    %v1401 = vld [vmem:[%s1364 + $0x120] sm:$0xff]
    %v1402 = vld [vmem:[%s1364 + $0x128] sm:$0xff]
    %v1403 = vld [vmem:[%s1364 + $0x130] sm:$0xff]
    %v1404 = vld [vmem:[%s1364 + $0x138] sm:$0xff]
    %v1405 = vld [vmem:[%s1364 + $0x140] sm:$0xff]
    %v1406 = vld [vmem:[%s1364 + $0x148] sm:$0xff]
    %v1407 = vld [vmem:[%s1364 + $0x150] sm:$0xff]
    %v1408 = vld [vmem:[%s1364 + $0x158] sm:$0xff]
    %v1409 = vld [vmem:[%s1364 + $0x160] sm:$0xff]
    %v1410 = vld [vmem:[%s1364 + $0x168] sm:$0xff]
    %v1411 = vld [vmem:[%s1364 + $0x170] sm:$0xff]
    %v1412 = vld [vmem:[%s1364 + $0x178] sm:$0xff]
    %v1413 = vld [vmem:[%s1364 + $0x180] sm:$0xff]
    %v1414 = vld [vmem:[%s1364 + $0x188] sm:$0xff]
    %v1415 = vld [vmem:[%s1364 + $0x190] sm:$0xff]
    %v1416 = vld [vmem:[%s1364 + $0x198] sm:$0xff]
    %v1417 = vld [vmem:[%s1364 + $0x1a0] sm:$0xff]
    %v1418 = vld [vmem:[%s1364 + $0x1a8] sm:$0xff]
    %v1419 = vld [vmem:[%s1364 + $0x1b0] sm:$0xff]
    %v1420 = vld [vmem:[%s1364 + $0x1b8] sm:$0xff]
    %v1421 = vld [vmem:[%s1364 + $0x1c0] sm:$0xff]
    %v1422 = vld [vmem:[%s1364 + $0x1c8] sm:$0xff]
    %v1423 = vld [vmem:[%s1364 + $0x1d0] sm:$0xff]
    %v1424 = vld [vmem:[%s1364 + $0x1d8] sm:$0xff]
    %v1425 = vld [vmem:[%s1364 + $0x1e0] sm:$0xff]
    %v1426 = vld [vmem:[%s1364 + $0x1e8] sm:$0xff]
    %v1427 = vld [vmem:[%s1364 + $0x1f0] sm:$0xff]
    %v1428 = vld [vmem:[%s1364 + $0x1f8] sm:$0xff]
    %v1429 = vld [vmem:[%s1364 + $0x200] sm:$0xff]
    %v1430 = vld [vmem:[%s1364 + $0x208] sm:$0xff]
    %v1431 = vld [vmem:[%s1364 + $0x210] sm:$0xff]
    %v1432 = vld [vmem:[%s1364 + $0x218] sm:$0xff]
    %v1433 = vld [vmem:[%s1364 + $0x220] sm:$0xff]
    %v1434 = vld [vmem:[%s1364 + $0x228] sm:$0xff]
    %v1435 = vld [vmem:[%s1364 + $0x230] sm:$0xff]
    %v1436 = vld [vmem:[%s1364 + $0x238] sm:$0xff]
    %v1437 = vld [vmem:[%s1364 + $0x240] sm:$0xff]
    %v1438 = vld [vmem:[%s1364 + $0x248] sm:$0xff]
    %v1439 = vld [vmem:[%s1364 + $0x250] sm:$0xff]
    %v1440 = vld [vmem:[%s1364 + $0x258] sm:$0xff]
    %v1441 = vld [vmem:[%s1364 + $0x260] sm:$0xff]
    %v1442 = vld [vmem:[%s1364 + $0x268] sm:$0xff]
    %v1443 = vld [vmem:[%s1364 + $0x270] sm:$0xff]
    %v1444 = vld [vmem:[%s1364 + $0x278] sm:$0xff]
    %v1445 = vld [vmem:[%s1364 + $0x280] sm:$0xff]
    %v1446 = vld [vmem:[%s1364 + $0x288] sm:$0xff]
    %v1447 = vld [vmem:[%s1364 + $0x290] sm:$0xff]
    %v1448 = vld [vmem:[%s1364 + $0x298] sm:$0xff]
    %v1449 = vld [vmem:[%s1364 + $0x2a0] sm:$0xff]
    %v1450 = vld [vmem:[%s1364 + $0x2a8] sm:$0xff]
    %v1451 = vld [vmem:[%s1364 + $0x2b0] sm:$0xff]
    %v1452 = vld [vmem:[%s1364 + $0x2b8] sm:$0xff]
    %v1453 = vld [vmem:[%s1364 + $0x2c0] sm:$0xff]
    %v1454 = vld [vmem:[%s1364 + $0x2c8] sm:$0xff]
    %v1455 = vld [vmem:[%s1364 + $0x2d0] sm:$0xff]
    %v1456 = vld [vmem:[%s1364 + $0x2d8] sm:$0xff]
    %v1457 = vld [vmem:[%s1364 + $0x2e0] sm:$0xff]
    %v1458 = vld [vmem:[%s1364 + $0x2e8] sm:$0xff]
    %v1459 = vld [vmem:[%s1364 + $0x2f0] sm:$0xff]
    %v1460 = vld [vmem:[%s1364 + $0x2f8] sm:$0xff]
    %v1461 = vld [vmem:[%s1364 + $0x300] sm:$0xff]
    %v1462 = vld [vmem:[%s1364 + $0x308] sm:$0xff]
    %v1463 = vld [vmem:[%s1364 + $0x310] sm:$0xff]
    %v1464 = vld [vmem:[%s1364 + $0x318] sm:$0xff]
    %v1465 = vld [vmem:[%s1364 + $0x320] sm:$0xff]
    %v1466 = vld [vmem:[%s1364 + $0x328] sm:$0xff]
    %v1467 = vld [vmem:[%s1364 + $0x330] sm:$0xff]
    %v1468 = vld [vmem:[%s1364 + $0x338] sm:$0xff]
    %v1469 = vld [vmem:[%s1364 + $0x340] sm:$0xff]
    %v1470 = vld [vmem:[%s1364 + $0x348] sm:$0xff]
    %v1471 = vld [vmem:[%s1364 + $0x350] sm:$0xff]
    %v1472 = vld [vmem:[%s1364 + $0x358] sm:$0xff]
    %v1473 = vld [vmem:[%s1364 + $0x360] sm:$0xff]
    %v1474 = vld [vmem:[%s1364 + $0x368] sm:$0xff]
    %v1475 = vld [vmem:[%s1364 + $0x370] sm:$0xff]
    %v1476 = vld [vmem:[%s1364 + $0x378] sm:$0xff]
    %v1477 = vld [vmem:[%s1364 + $0x380] sm:$0xff]
    %v1478 = vld [vmem:[%s1364 + $0x388] sm:$0xff]
    %v1479 = vld [vmem:[%s1364 + $0x390] sm:$0xff]
    %v1480 = vld [vmem:[%s1364 + $0x398] sm:$0xff]
    %v1481 = vld [vmem:[%s1364 + $0x3a0] sm:$0xff]
    %v1482 = vld [vmem:[%s1364 + $0x3a8] sm:$0xff]
    %v1483 = vld [vmem:[%s1364 + $0x3b0] sm:$0xff]
    %v1484 = vld [vmem:[%s1364 + $0x3b8] sm:$0xff]
    %v1485 = vld [vmem:[%s1364 + $0x3c0] sm:$0xff]
    %v1486 = vld [vmem:[%s1364 + $0x3c8] sm:$0xff]
    %v1487 = vld [vmem:[%s1364 + $0x3d0] sm:$0xff]
    %v1488 = vld [vmem:[%s1364 + $0x3d8] sm:$0xff]
    %v1489 = vld [vmem:[%s1364 + $0x3e0] sm:$0xff]
    %v1490 = vld [vmem:[%s1364 + $0x3e8] sm:$0xff]
    %v1491 = vld [vmem:[%s1364 + $0x3f0] sm:$0xff]
    %v1492 = vld [vmem:[%s1364 + $0x3f8] sm:$0xff]
    %v1493 = vld [vmem:[%s1364 + $0x400] sm:$0xff]
    %v1494 = vld [vmem:[%s1364 + $0x408] sm:$0xff]
    %v1495 = vld [vmem:[%s1364 + $0x410] sm:$0xff]
    %v1496 = vld [vmem:[%s1364 + $0x418] sm:$0xff]
    %v1497 = vld [vmem:[%s1364 + $0x420] sm:$0xff]
    %v1498 = vld [vmem:[%s1364 + $0x428] sm:$0xff]
    %v1499 = vld [vmem:[%s1364 + $0x430] sm:$0xff]
    %v1500 = vld [vmem:[%s1364 + $0x438] sm:$0xff]
    %v1501 = vld [vmem:[%s1364 + $0x440] sm:$0xff]
    %v1502 = vld [vmem:[%s1364 + $0x448] sm:$0xff]
    %v1503 = vld [vmem:[%s1364 + $0x450] sm:$0xff]
    %v1504 = vld [vmem:[%s1364 + $0x458] sm:$0xff]
    %v1505 = vld [vmem:[%s1364 + $0x460] sm:$0xff]
    %v1506 = vld [vmem:[%s1364 + $0x468] sm:$0xff]
    %v1507 = vld [vmem:[%s1364 + $0x470] sm:$0xff]
    %v1508 = vld [vmem:[%s1364 + $0x478] sm:$0xff]
    %1509 = vmatprep.subr.mxu0 %v1396
    %1510 = vmatpush1.msra.mxu0 %v1395
    %1511 = vmatprep.subr.mxu0 %v1394
    %1512 = vmatpush1.msra.mxu0 %v1393
    %1513 = vmatprep.subr.mxu0 %v1392
    %1514 = vmatpush1.msra.mxu0 %v1391
    %1515 = vmatprep.subr.mxu0 %v1390
    %1516 = vmatpush1.msra.mxu0 %v1389
    %1517 = vmatprep.subr.mxu0 %v1388
    %1518 = vmatpush1.msra.mxu0 %v1387
    %1519 = vmatprep.subr.mxu0 %v1386
    %1520 = vmatpush1.msra.mxu0 %v1385
    %1521 = vmatprep.subr.mxu0 %v1384
    %1522 = vmatpush1.msra.mxu0 %v1383
    %1523 = vmatprep.subr.mxu0 %v1382
    %1524 = vmatpush1.msra.mxu0 %v1381
    %1525 = vmatprep.subr.mxu0 %v1380
    %1526 = vmatpush1.msra.mxu0 %v1379
    %1527 = vmatprep.subr.mxu0 %v1378
    %1528 = vmatpush1.msra.mxu0 %v1377
    %1529 = vmatprep.subr.mxu0 %v1376
    %1530 = vmatpush1.msra.mxu0 %v1375
    %1531 = vmatprep.subr.mxu0 %v1374
    %1532 = vmatpush1.msra.mxu0 %v1373
    %1533 = vmatprep.subr.mxu0 %v1372
    %1534 = vmatpush1.msra.mxu0 %v1371
    %1535 = vmatprep.subr.mxu0 %v1370
    %1536 = vmatpush1.msra.mxu0 %v1369
    %1537 = vmatprep.subr.mxu0 %v1368
    %1538 = vmatpush1.msra.mxu0 %v1367
    %1539 = vmatprep.subr.mxu0 %v1366
    %1540 = vmatpush1.msra.mxu0 %v1365
    %1541 = vmatprep.subr.mxu0 %v1428
    %1542 = vmatpush2.msra.mxu0 %v1427
    %1543 = vmatprep.subr.mxu0 %v1426
    %1544 = vmatpush2.msra.mxu0 %v1425
    %1545 = vmatprep.subr.mxu0 %v1424
    %1546 = vmatpush2.msra.mxu0 %v1423
    %1547 = vmatprep.subr.mxu0 %v1422
    %1548 = vmatpush2.msra.mxu0 %v1421
    %1549 = vmatprep.subr.mxu0 %v1420
    %1550 = vmatpush2.msra.mxu0 %v1419
    %1551 = vmatprep.subr.mxu0 %v1418
    %1552 = vmatpush2.msra.mxu0 %v1417
    %1553 = vmatprep.subr.mxu0 %v1416
    %1554 = vmatpush2.msra.mxu0 %v1415
    %1555 = vmatprep.subr.mxu0 %v1414
    %1556 = vmatpush2.msra.mxu0 %v1413
    %1557 = vmatprep.subr.mxu0 %v1412
    %1558 = vmatpush2.msra.mxu0 %v1411
    %1559 = vmatprep.subr.mxu0 %v1410
    %1560 = vmatpush2.msra.mxu0 %v1409
    %1561 = vmatprep.subr.mxu0 %v1408
    %1562 = vmatpush2.msra.mxu0 %v1407
    %1563 = vmatprep.subr.mxu0 %v1406
    %1564 = vmatpush2.msra.mxu0 %v1405
    %1565 = vmatprep.subr.mxu0 %v1404
    %1566 = vmatpush2.msra.mxu0 %v1403
    %1567 = vmatprep.subr.mxu0 %v1402
    %1568 = vmatpush2.msra.mxu0 %v1401
    %1569 = vmatprep.subr.mxu0 %v1400
    %1570 = vmatpush2.msra.mxu0 %v1399
    %1571 = vmatprep.subr.mxu0 %v1398
    %1572 = vmatpush2.msra.mxu0 %v1397
    %1573 = vmatprep.mubr.f32.mxu0 %v279
    %1574 = vmatmul.mubr.f32.gmra.mxu0 %v278
    %v1575 = vpop.f32.mrf.mxu0
    %v1576 = vadd.f32 0.0, %v1575
    %v1577 = vpop.f32.mrf.mxu0
    %v1578 = vadd.f32 0.0, %v1577
    %1579 = vdwg.mxu0
    %1580 = vmatprep.subr.mxu0 %v1460
    %1581 = vmatpush1.msra.mxu0 %v1459
    %1582 = vmatprep.subr.mxu0 %v1458
    %1583 = vmatpush1.msra.mxu0 %v1457
    %1584 = vmatprep.subr.mxu0 %v1456
    %1585 = vmatpush1.msra.mxu0 %v1455
    %1586 = vmatprep.subr.mxu0 %v1454
    %1587 = vmatpush1.msra.mxu0 %v1453
    %1588 = vmatprep.subr.mxu0 %v1452
    %1589 = vmatpush1.msra.mxu0 %v1451
    %1590 = vmatprep.subr.mxu0 %v1450
    %1591 = vmatpush1.msra.mxu0 %v1449
    %1592 = vmatprep.subr.mxu0 %v1448
    %1593 = vmatpush1.msra.mxu0 %v1447
    %1594 = vmatprep.subr.mxu0 %v1446
    %1595 = vmatpush1.msra.mxu0 %v1445
    %1596 = vmatprep.subr.mxu0 %v1444
    %1597 = vmatpush1.msra.mxu0 %v1443
    %1598 = vmatprep.subr.mxu0 %v1442
    %1599 = vmatpush1.msra.mxu0 %v1441
    %1600 = vmatprep.subr.mxu0 %v1440
    %1601 = vmatpush1.msra.mxu0 %v1439
    %1602 = vmatprep.subr.mxu0 %v1438
    %1603 = vmatpush1.msra.mxu0 %v1437
    %1604 = vmatprep.subr.mxu0 %v1436
    %1605 = vmatpush1.msra.mxu0 %v1435
    %1606 = vmatprep.subr.mxu0 %v1434
    %1607 = vmatpush1.msra.mxu0 %v1433
    %1608 = vmatprep.subr.mxu0 %v1432
    %1609 = vmatpush1.msra.mxu0 %v1431
    %1610 = vmatprep.subr.mxu0 %v1430
    %1611 = vmatpush1.msra.mxu0 %v1429
    %1612 = vmatprep.subr.mxu0 %v1492
    %1613 = vmatpush2.msra.mxu0 %v1491
    %1614 = vmatprep.subr.mxu0 %v1490
    %1615 = vmatpush2.msra.mxu0 %v1489
    %1616 = vmatprep.subr.mxu0 %v1488
    %1617 = vmatpush2.msra.mxu0 %v1487
    %1618 = vmatprep.subr.mxu0 %v1486
    %1619 = vmatpush2.msra.mxu0 %v1485
    %1620 = vmatprep.subr.mxu0 %v1484
    %1621 = vmatpush2.msra.mxu0 %v1483
    %1622 = vmatprep.subr.mxu0 %v1482
    %1623 = vmatpush2.msra.mxu0 %v1481
    %1624 = vmatprep.subr.mxu0 %v1480
    %1625 = vmatpush2.msra.mxu0 %v1479
    %1626 = vmatprep.subr.mxu0 %v1478
    %1627 = vmatpush2.msra.mxu0 %v1477
    %1628 = vmatprep.subr.mxu0 %v1476
    %1629 = vmatpush2.msra.mxu0 %v1475
    %1630 = vmatprep.subr.mxu0 %v1474
    %1631 = vmatpush2.msra.mxu0 %v1473
    %1632 = vmatprep.subr.mxu0 %v1472
    %1633 = vmatpush2.msra.mxu0 %v1471
    %1634 = vmatprep.subr.mxu0 %v1470
    %1635 = vmatpush2.msra.mxu0 %v1469
    %1636 = vmatprep.subr.mxu0 %v1468
    %1637 = vmatpush2.msra.mxu0 %v1467
    %1638 = vmatprep.subr.mxu0 %v1466
    %1639 = vmatpush2.msra.mxu0 %v1465
    %1640 = vmatprep.subr.mxu0 %v1464
    %1641 = vmatpush2.msra.mxu0 %v1463
    %1642 = vmatprep.subr.mxu0 %v1462
    %1643 = vmatpush2.msra.mxu0 %v1461
    %1644 = vmatprep.mubr.f32.mxu0 %v281
    %1645 = vmatmul.mubr.f32.gmra.mxu0 %v280
    %v1646 = vpop.f32.mrf.mxu0
    %v1647 = vadd.f32 %v1576, %v1646
    %v1648 = vpop.f32.mrf.mxu0
    %v1649 = vadd.f32 %v1578, %v1648
    %1650 = vdwg.mxu0
    %1651 = vmatprep.subr.mxu0 0.0
    %1652 = vmatpush1.msra.mxu0 0.0
    %1653 = vmatprep.subr.mxu0 0.0
    %1654 = vmatpush1.msra.mxu0 0.0
    %1655 = vmatprep.subr.mxu0 0.0
    %1656 = vmatpush1.msra.mxu0 0.0
    %1657 = vmatprep.subr.mxu0 0.0
    %1658 = vmatpush1.msra.mxu0 0.0
    %1659 = vmatprep.subr.mxu0 0.0
    %1660 = vmatpush1.msra.mxu0 0.0
    %1661 = vmatprep.subr.mxu0 0.0
    %1662 = vmatpush1.msra.mxu0 0.0
    %1663 = vmatprep.subr.mxu0 0.0
    %1664 = vmatpush1.msra.mxu0 0.0
    %1665 = vmatprep.subr.mxu0 0.0
    %1666 = vmatpush1.msra.mxu0 0.0
    %1667 = vmatprep.subr.mxu0 %v1508
    %1668 = vmatpush1.msra.mxu0 %v1507
    %1669 = vmatprep.subr.mxu0 %v1506
    %1670 = vmatpush1.msra.mxu0 %v1505
    %1671 = vmatprep.subr.mxu0 %v1504
    %1672 = vmatpush1.msra.mxu0 %v1503
    %1673 = vmatprep.subr.mxu0 %v1502
    %1674 = vmatpush1.msra.mxu0 %v1501
    %1675 = vmatprep.subr.mxu0 %v1500
    %1676 = vmatpush1.msra.mxu0 %v1499
    %1677 = vmatprep.subr.mxu0 %v1498
    %1678 = vmatpush1.msra.mxu0 %v1497
    %1679 = vmatprep.subr.mxu0 %v1496
    %1680 = vmatpush1.msra.mxu0 %v1495
    %1681 = vmatprep.subr.mxu0 %v1494
    %1682 = vmatpush1.msra.mxu0 %v1493
    %1683 = vmatprep.subr.mxu0 0.0
    %1684 = vmatpush2.msra.mxu0 0.0
    %1685 = vmatprep.subr.mxu0 0.0
    %1686 = vmatpush2.msra.mxu0 0.0
    %1687 = vmatprep.subr.mxu0 0.0
    %1688 = vmatpush2.msra.mxu0 0.0
    %1689 = vmatprep.subr.mxu0 0.0
    %1690 = vmatpush2.msra.mxu0 0.0
    %1691 = vmatprep.subr.mxu0 0.0
    %1692 = vmatpush2.msra.mxu0 0.0
    %1693 = vmatprep.subr.mxu0 0.0
    %1694 = vmatpush2.msra.mxu0 0.0
    %1695 = vmatprep.subr.mxu0 0.0
    %1696 = vmatpush2.msra.mxu0 0.0
    %1697 = vmatprep.subr.mxu0 0.0
    %1698 = vmatpush2.msra.mxu0 0.0
    %1699 = vmatprep.subr.mxu0 0.0
    %1700 = vmatpush2.msra.mxu0 0.0
    %1701 = vmatprep.subr.mxu0 0.0
    %1702 = vmatpush2.msra.mxu0 0.0
    %1703 = vmatprep.subr.mxu0 0.0
    %1704 = vmatpush2.msra.mxu0 0.0
    %1705 = vmatprep.subr.mxu0 0.0
    %1706 = vmatpush2.msra.mxu0 0.0
    %1707 = vmatprep.subr.mxu0 0.0
    %1708 = vmatpush2.msra.mxu0 0.0
    %1709 = vmatprep.subr.mxu0 0.0
    %1710 = vmatpush2.msra.mxu0 0.0
    %1711 = vmatprep.subr.mxu0 0.0
    %1712 = vmatpush2.msra.mxu0 0.0
    %1713 = vmatprep.subr.mxu0 0.0
    %1714 = vmatpush2.msra.mxu0 0.0
    %1715 = vmatprep.mubr.f32.mxu0 0.0
    %1716 = vmatmul.mubr.f32.gmra.mxu0 %v429
    %v1717 = vpop.f32.mrf.mxu0
    %v1718 = vadd.f32 %v1647, %v1717
    %v1719 = vpop.f32.mrf.mxu0
    %v1720 = vadd.f32 %v1649, %v1719
    %1721 = vdwg.mxu0
    %v1722 = vmax.f32 %v1362, %v1718
    %v1723 = vmax.f32 %v1363, %v1720
    %v1724 = vld [vmem:[%s3] sm:$0xff]
    %v1725 = vld [vmem:[%s3 + $0x8] sm:$0xff]
    %v1726 = vld [vmem:[%s3 + $0x10] sm:$0xff]
    %v1727 = vld [vmem:[%s3 + $0x18] sm:$0xff]
    %v1728 = vld [vmem:[%s3 + $0x20] sm:$0xff]
    %v1729 = vld [vmem:[%s3 + $0x28] sm:$0xff]
    %v1730 = vld [vmem:[%s3 + $0x30] sm:$0xff]
    %v1731 = vld [vmem:[%s3 + $0x38] sm:$0xff]
    %v1732 = vld [vmem:[%s3 + $0x40] sm:$0xff]
    %v1733 = vld [vmem:[%s3 + $0x48] sm:$0xff]
    %v1734 = vld [vmem:[%s3 + $0x50] sm:$0xff]
    %v1735 = vld [vmem:[%s3 + $0x58] sm:$0xff]
    %v1736 = vld [vmem:[%s3 + $0x60] sm:$0xff]
    %v1737 = vld [vmem:[%s3 + $0x68] sm:$0xff]
    %v1738 = vld [vmem:[%s3 + $0x70] sm:$0xff]
    %v1739 = vld [vmem:[%s3 + $0x78] sm:$0xff]
    %v1740 = vld [vmem:[%s3 + $0x80] sm:$0xff]
    %v1741 = vld [vmem:[%s3 + $0x88] sm:$0xff]
    %vm1742 = vcmask 130048
    %v1744 = vsel %vm1742, %v1723, 0
    %1746 = vmatprep.subr.mxu0 0.0
    %1747 = vmatpush1.msra.mxu0 %v1739
    %1748 = vmatprep.subr.mxu0 0.0
    %1749 = vmatpush1.msra.mxu0 %v1738
    %1750 = vmatprep.subr.mxu0 0.0
    %1751 = vmatpush1.msra.mxu0 %v1737
    %1752 = vmatprep.subr.mxu0 0.0
    %1753 = vmatpush1.msra.mxu0 %v1736
    %1754 = vmatprep.subr.mxu0 0.0
    %1755 = vmatpush1.msra.mxu0 %v1735
    %1756 = vmatprep.subr.mxu0 0.0
    %1757 = vmatpush1.msra.mxu0 %v1734
    %1758 = vmatprep.subr.mxu0 0.0
    %1759 = vmatpush1.msra.mxu0 %v1733
    %1760 = vmatprep.subr.mxu0 0.0
    %1761 = vmatpush1.msra.mxu0 %v1732
    %1762 = vmatprep.subr.mxu0 0.0
    %1763 = vmatpush1.msra.mxu0 %v1731
    %1764 = vmatprep.subr.mxu0 0.0
    %1765 = vmatpush1.msra.mxu0 %v1730
    %1766 = vmatprep.subr.mxu0 0.0
    %1767 = vmatpush1.msra.mxu0 %v1729
    %1768 = vmatprep.subr.mxu0 0.0
    %1769 = vmatpush1.msra.mxu0 %v1728
    %1770 = vmatprep.subr.mxu0 0.0
    %1771 = vmatpush1.msra.mxu0 %v1727
    %1772 = vmatprep.subr.mxu0 0.0
    %1773 = vmatpush1.msra.mxu0 %v1726
    %1774 = vmatprep.subr.mxu0 0.0
    %1775 = vmatpush1.msra.mxu0 %v1725
    %1776 = vmatprep.subr.mxu0 0.0
    %1777 = vmatpush1.msra.mxu0 %v1724
    %1778 = vmatprep.subr.mxu0 0.0
    %1779 = vmatpush2.msra.mxu0 0.0
    %1780 = vmatprep.subr.mxu0 0.0
    %1781 = vmatpush2.msra.mxu0 0.0
    %1782 = vmatprep.subr.mxu0 0.0
    %1783 = vmatpush2.msra.mxu0 0.0
    %1784 = vmatprep.subr.mxu0 0.0
    %1785 = vmatpush2.msra.mxu0 0.0
    %1786 = vmatprep.subr.mxu0 0.0
    %1787 = vmatpush2.msra.mxu0 0.0
    %1788 = vmatprep.subr.mxu0 0.0
    %1789 = vmatpush2.msra.mxu0 0.0
    %1790 = vmatprep.subr.mxu0 0.0
    %1791 = vmatpush2.msra.mxu0 0.0
    %1792 = vmatprep.subr.mxu0 0.0
    %1793 = vmatpush2.msra.mxu0 0.0
    %1794 = vmatprep.subr.mxu0 0.0
    %1795 = vmatpush2.msra.mxu0 0.0
    %1796 = vmatprep.subr.mxu0 0.0
    %1797 = vmatpush2.msra.mxu0 0.0
    %1798 = vmatprep.subr.mxu0 0.0
    %1799 = vmatpush2.msra.mxu0 0.0
    %1800 = vmatprep.subr.mxu0 0.0
    %1801 = vmatpush2.msra.mxu0 0.0
    %1802 = vmatprep.subr.mxu0 0.0
    %1803 = vmatpush2.msra.mxu0 0.0
    %1804 = vmatprep.subr.mxu0 0.0
    %1805 = vmatpush2.msra.mxu0 0.0
    %1806 = vmatprep.subr.mxu0 0.0
    %1807 = vmatpush2.msra.mxu0 %v1741
    %1808 = vmatprep.subr.mxu0 0.0
    %1809 = vmatpush2.msra.mxu0 %v1740
    %1810 = vmatprep.mubr.f32.mxu0 %v1744
    %1811 = vmatmul.mubr.f32.gmra.mxu0 %v1722
    %v1812 = vpop.f32.mrf.mxu0
    %v1813 = vadd.f32 0.0, %v1812
    %v1814 = vpop.f32.mrf.mxu0
    %1815 = vdwg.mxu0
    %v1816 = vld [vmem:[%s4] sm:$0xff]
    %v1817 = vld [vmem:[%s4 + $0x8] sm:$0xff]
    %s1818 = scalar_lea.vmem %s3, 144
    %v1819 = vld [vmem:[%s1818] sm:$0xff]
    %v1820 = vld [vmem:[%s1818 + $0x8] sm:$0xff]
    %v1821 = vld [vmem:[%s1818 + $0x10] sm:$0xff]
    %v1822 = vld [vmem:[%s1818 + $0x18] sm:$0xff]
    %v1823 = vld [vmem:[%s1818 + $0x20] sm:$0xff]
    %v1824 = vld [vmem:[%s1818 + $0x28] sm:$0xff]
    %v1825 = vld [vmem:[%s1818 + $0x30] sm:$0xff]
    %v1826 = vld [vmem:[%s1818 + $0x38] sm:$0xff]
    %v1827 = vld [vmem:[%s1818 + $0x40] sm:$0xff]
    %v1828 = vld [vmem:[%s1818 + $0x48] sm:$0xff]
    %v1829 = vld [vmem:[%s1818 + $0x50] sm:$0xff]
    %v1830 = vld [vmem:[%s1818 + $0x58] sm:$0xff]
    %v1831 = vld [vmem:[%s1818 + $0x60] sm:$0xff]
    %v1832 = vld [vmem:[%s1818 + $0x68] sm:$0xff]
    %v1833 = vld [vmem:[%s1818 + $0x70] sm:$0xff]
    %v1834 = vld [vmem:[%s1818 + $0x78] sm:$0xff]
    %v1835 = vld [vmem:[%s1818 + $0x80] sm:$0xff]
    %v1836 = vld [vmem:[%s1818 + $0x88] sm:$0xff]
    %1837 = vmatprep.subr.mxu0 0.0
    %1838 = vmatpush1.msra.mxu0 %v1834
    %1839 = vmatprep.subr.mxu0 0.0
    %1840 = vmatpush1.msra.mxu0 %v1833
    %1841 = vmatprep.subr.mxu0 0.0
    %1842 = vmatpush1.msra.mxu0 %v1832
    %1843 = vmatprep.subr.mxu0 0.0
    %1844 = vmatpush1.msra.mxu0 %v1831
    %1845 = vmatprep.subr.mxu0 0.0
    %1846 = vmatpush1.msra.mxu0 %v1830
    %1847 = vmatprep.subr.mxu0 0.0
    %1848 = vmatpush1.msra.mxu0 %v1829
    %1849 = vmatprep.subr.mxu0 0.0
    %1850 = vmatpush1.msra.mxu0 %v1828
    %1851 = vmatprep.subr.mxu0 0.0
    %1852 = vmatpush1.msra.mxu0 %v1827
    %1853 = vmatprep.subr.mxu0 0.0
    %1854 = vmatpush1.msra.mxu0 %v1826
    %1855 = vmatprep.subr.mxu0 0.0
    %1856 = vmatpush1.msra.mxu0 %v1825
    %1857 = vmatprep.subr.mxu0 0.0
    %1858 = vmatpush1.msra.mxu0 %v1824
    %1859 = vmatprep.subr.mxu0 0.0
    %1860 = vmatpush1.msra.mxu0 %v1823
    %1861 = vmatprep.subr.mxu0 0.0
    %1862 = vmatpush1.msra.mxu0 %v1822
    %1863 = vmatprep.subr.mxu0 0.0
    %1864 = vmatpush1.msra.mxu0 %v1821
    %1865 = vmatprep.subr.mxu0 0.0
    %1866 = vmatpush1.msra.mxu0 %v1820
    %1867 = vmatprep.subr.mxu0 0.0
    %1868 = vmatpush1.msra.mxu0 %v1819
    %1869 = vmatprep.subr.mxu0 0.0
    %1870 = vmatpush2.msra.mxu0 0.0
    %1871 = vmatprep.subr.mxu0 0.0
    %1872 = vmatpush2.msra.mxu0 0.0
    %1873 = vmatprep.subr.mxu0 0.0
    %1874 = vmatpush2.msra.mxu0 0.0
    %1875 = vmatprep.subr.mxu0 0.0
    %1876 = vmatpush2.msra.mxu0 0.0
    %1877 = vmatprep.subr.mxu0 0.0
    %1878 = vmatpush2.msra.mxu0 0.0
    %1879 = vmatprep.subr.mxu0 0.0
    %1880 = vmatpush2.msra.mxu0 0.0
    %1881 = vmatprep.subr.mxu0 0.0
    %1882 = vmatpush2.msra.mxu0 0.0
    %1883 = vmatprep.subr.mxu0 0.0
    %1884 = vmatpush2.msra.mxu0 0.0
    %1885 = vmatprep.subr.mxu0 0.0
    %1886 = vmatpush2.msra.mxu0 0.0
    %1887 = vmatprep.subr.mxu0 0.0
    %1888 = vmatpush2.msra.mxu0 0.0
    %1889 = vmatprep.subr.mxu0 0.0
    %1890 = vmatpush2.msra.mxu0 0.0
    %1891 = vmatprep.subr.mxu0 0.0
    %1892 = vmatpush2.msra.mxu0 0.0
    %1893 = vmatprep.subr.mxu0 0.0
    %1894 = vmatpush2.msra.mxu0 0.0
    %1895 = vmatprep.subr.mxu0 0.0
    %1896 = vmatpush2.msra.mxu0 0.0
    %1897 = vmatprep.subr.mxu0 0.0
    %1898 = vmatpush2.msra.mxu0 %v1836
    %1899 = vmatprep.subr.mxu0 0.0
    %1900 = vmatpush2.msra.mxu0 %v1835
    %1901 = vmatprep.mubr.f32.mxu0 %v1744
    %1902 = vmatmul.mubr.f32.gmra.mxu0 %v1722
    %v1903 = vpop.f32.mrf.mxu0
    %v1904 = vadd.f32 0.0, %v1903
    %v1905 = vpop.f32.mrf.mxu0
    %1906 = vdwg.mxu0
    %s1907 = scalar_lea.vmem %s4, 16
    %v1908 = vld [vmem:[%s1907] sm:$0xff]
    %v1909 = vld [vmem:[%s1907 + $0x8] sm:$0xff]
    %vm1910 = vcmask 64512
    %v1912 = vsel %vm1910, %v1908, 0
    %v1915 = vsel %vm1910, %v1909, 0
    %1917 = vmatprep.subr.mxu0 0.0
    %1918 = vmatpush1.msra.mxu0 0.0
    %1919 = vmatprep.subr.mxu0 0.0
    %1920 = vmatpush1.msra.mxu0 0.0
    %1921 = vmatprep.subr.mxu0 0.0
    %1922 = vmatpush1.msra.mxu0 0.0
    %1923 = vmatprep.subr.mxu0 0.0
    %1924 = vmatpush1.msra.mxu0 0.0
    %1925 = vmatprep.subr.mxu0 0.0
    %1926 = vmatpush1.msra.mxu0 0.0
    %1927 = vmatprep.subr.mxu0 0.0
    %1928 = vmatpush1.msra.mxu0 0.0
    %1929 = vmatprep.subr.mxu0 0.0
    %1930 = vmatpush1.msra.mxu0 0.0
    %1931 = vmatprep.subr.mxu0 0.0
    %1932 = vmatpush1.msra.mxu0 0.0
    %1933 = vmatprep.subr.mxu0 0.0
    %1934 = vmatpush1.msra.mxu0 0.0
    %1935 = vmatprep.subr.mxu0 0.0
    %1936 = vmatpush1.msra.mxu0 0.0
    %1937 = vmatprep.subr.mxu0 0.0
    %1938 = vmatpush1.msra.mxu0 0.0
    %1939 = vmatprep.subr.mxu0 0.0
    %1940 = vmatpush1.msra.mxu0 0.0
    %1941 = vmatprep.subr.mxu0 0.0
    %1942 = vmatpush1.msra.mxu0 0.0
    %1943 = vmatprep.subr.mxu0 0.0
    %1944 = vmatpush1.msra.mxu0 0.0
    %1945 = vmatprep.subr.mxu0 0.0
    %1946 = vmatpush1.msra.mxu0 0.0
    %1947 = vmatprep.subr.mxu0 0.0
    %1948 = vmatpush1.msra.mxu0 %v1904
    %1949 = vmatprep.subr.mxu0 0.0
    %1950 = vmatpush2.msra.mxu0 0.0
    %1951 = vmatprep.subr.mxu0 0.0
    %1952 = vmatpush2.msra.mxu0 0.0
    %1953 = vmatprep.subr.mxu0 0.0
    %1954 = vmatpush2.msra.mxu0 0.0
    %1955 = vmatprep.subr.mxu0 0.0
    %1956 = vmatpush2.msra.mxu0 0.0
    %1957 = vmatprep.subr.mxu0 0.0
    %1958 = vmatpush2.msra.mxu0 0.0
    %1959 = vmatprep.subr.mxu0 0.0
    %1960 = vmatpush2.msra.mxu0 0.0
    %1961 = vmatprep.subr.mxu0 0.0
    %1962 = vmatpush2.msra.mxu0 0.0
    %1963 = vmatprep.subr.mxu0 0.0
    %1964 = vmatpush2.msra.mxu0 0.0
    %1965 = vmatprep.subr.mxu0 0.0
    %1966 = vmatpush2.msra.mxu0 0.0
    %1967 = vmatprep.subr.mxu0 0.0
    %1968 = vmatpush2.msra.mxu0 0.0
    %1969 = vmatprep.subr.mxu0 0.0
    %1970 = vmatpush2.msra.mxu0 0.0
    %1971 = vmatprep.subr.mxu0 0.0
    %1972 = vmatpush2.msra.mxu0 0.0
    %1973 = vmatprep.subr.mxu0 0.0
    %1974 = vmatpush2.msra.mxu0 0.0
    %1975 = vmatprep.subr.mxu0 0.0
    %1976 = vmatpush2.msra.mxu0 0.0
    %1977 = vmatprep.subr.mxu0 0.0
    %1978 = vmatpush2.msra.mxu0 0.0
    %1979 = vmatprep.subr.mxu0 0.0
    %1980 = vmatpush2.msra.mxu0 0.0
    %1981 = vmatprep.mubr.f32.mxu0 0.0
    %1982 = vmatmul.mubr.f32.gmra.mxu0 %v1912
    %v1983 = vpop.f32.mrf.mxu0
    %v1984 = vadd.f32 0.0, %v1983
    %v1985 = vpop.f32.mrf.mxu0
    %1986 = vmatprep.mubr.f32.mxu0 0.0
    %1987 = vmatmul.mubr.f32.gmra.mxu0 %v1915
    %v1988 = vpop.f32.mrf.mxu0
    %v1989 = vadd.f32 0.0, %v1988
    %v1990 = vpop.f32.mrf.mxu0
    %1991 = vdwg.mxu0
    %v1993 = vsel %vm1910, %v1816, 0
    %v1996 = vsel %vm1910, %v1817, 0
    %1998 = vmatprep.subr.mxu0 0.0
    %1999 = vmatpush1.msra.mxu0 0.0
    %2000 = vmatprep.subr.mxu0 0.0
    %2001 = vmatpush1.msra.mxu0 0.0
    %2002 = vmatprep.subr.mxu0 0.0
    %2003 = vmatpush1.msra.mxu0 0.0
    %2004 = vmatprep.subr.mxu0 0.0
    %2005 = vmatpush1.msra.mxu0 0.0
    %2006 = vmatprep.subr.mxu0 0.0
    %2007 = vmatpush1.msra.mxu0 0.0
    %2008 = vmatprep.subr.mxu0 0.0
    %2009 = vmatpush1.msra.mxu0 0.0
    %2010 = vmatprep.subr.mxu0 0.0
    %2011 = vmatpush1.msra.mxu0 0.0
    %2012 = vmatprep.subr.mxu0 0.0
    %2013 = vmatpush1.msra.mxu0 0.0
    %2014 = vmatprep.subr.mxu0 0.0
    %2015 = vmatpush1.msra.mxu0 0.0
    %2016 = vmatprep.subr.mxu0 0.0
    %2017 = vmatpush1.msra.mxu0 0.0
    %2018 = vmatprep.subr.mxu0 0.0
    %2019 = vmatpush1.msra.mxu0 0.0
    %2020 = vmatprep.subr.mxu0 0.0
    %2021 = vmatpush1.msra.mxu0 0.0
    %2022 = vmatprep.subr.mxu0 0.0
    %2023 = vmatpush1.msra.mxu0 0.0
    %2024 = vmatprep.subr.mxu0 0.0
    %2025 = vmatpush1.msra.mxu0 0.0
    %2026 = vmatprep.subr.mxu0 0.0
    %2027 = vmatpush1.msra.mxu0 0.0
    %2028 = vmatprep.subr.mxu0 0.0
    %2029 = vmatpush1.msra.mxu0 %v1813
    %2030 = vmatprep.subr.mxu0 0.0
    %2031 = vmatpush2.msra.mxu0 0.0
    %2032 = vmatprep.subr.mxu0 0.0
    %2033 = vmatpush2.msra.mxu0 0.0
    %2034 = vmatprep.subr.mxu0 0.0
    %2035 = vmatpush2.msra.mxu0 0.0
    %2036 = vmatprep.subr.mxu0 0.0
    %2037 = vmatpush2.msra.mxu0 0.0
    %2038 = vmatprep.subr.mxu0 0.0
    %2039 = vmatpush2.msra.mxu0 0.0
    %2040 = vmatprep.subr.mxu0 0.0
    %2041 = vmatpush2.msra.mxu0 0.0
    %2042 = vmatprep.subr.mxu0 0.0
    %2043 = vmatpush2.msra.mxu0 0.0
    %2044 = vmatprep.subr.mxu0 0.0
    %2045 = vmatpush2.msra.mxu0 0.0
    %2046 = vmatprep.subr.mxu0 0.0
    %2047 = vmatpush2.msra.mxu0 0.0
    %2048 = vmatprep.subr.mxu0 0.0
    %2049 = vmatpush2.msra.mxu0 0.0
    %2050 = vmatprep.subr.mxu0 0.0
    %2051 = vmatpush2.msra.mxu0 0.0
    %2052 = vmatprep.subr.mxu0 0.0
    %2053 = vmatpush2.msra.mxu0 0.0
    %2054 = vmatprep.subr.mxu0 0.0
    %2055 = vmatpush2.msra.mxu0 0.0
    %2056 = vmatprep.subr.mxu0 0.0
    %2057 = vmatpush2.msra.mxu0 0.0
    %2058 = vmatprep.subr.mxu0 0.0
    %2059 = vmatpush2.msra.mxu0 0.0
    %2060 = vmatprep.subr.mxu0 0.0
    %2061 = vmatpush2.msra.mxu0 0.0
    %2062 = vmatprep.mubr.f32.mxu0 0.0
    %2063 = vmatmul.mubr.f32.gmra.mxu0 %v1993
    %v2064 = vpop.f32.mrf.mxu0
    %v2065 = vadd.f32 %v1984, %v2064
    %v2066 = vpop.f32.mrf.mxu0
    %2067 = vmatprep.mubr.f32.mxu0 0.0
    %2068 = vmatmul.mubr.f32.gmra.mxu0 %v1996
    %v2069 = vpop.f32.mrf.mxu0
    %v2070 = vadd.f32 %v1989, %v2069
    %v2071 = vpop.f32.mrf.mxu0
    %2072 = vdwg.mxu0
    %s2073 = scalar_lea.vmem %s3, 288
    %v2074 = vld [vmem:[%s2073] sm:$0xff]
    %v2075 = vld [vmem:[%s2073 + $0x8] sm:$0xff]
    %v2076 = vld [vmem:[%s2073 + $0x10] sm:$0xff]
    %v2077 = vld [vmem:[%s2073 + $0x18] sm:$0xff]
    %v2078 = vld [vmem:[%s2073 + $0x20] sm:$0xff]
    %v2079 = vld [vmem:[%s2073 + $0x28] sm:$0xff]
    %v2080 = vld [vmem:[%s2073 + $0x30] sm:$0xff]
    %v2081 = vld [vmem:[%s2073 + $0x38] sm:$0xff]
    %v2082 = vld [vmem:[%s2073 + $0x40] sm:$0xff]
    %v2083 = vld [vmem:[%s2073 + $0x48] sm:$0xff]
    %v2084 = vld [vmem:[%s2073 + $0x50] sm:$0xff]
    %v2085 = vld [vmem:[%s2073 + $0x58] sm:$0xff]
    %v2086 = vld [vmem:[%s2073 + $0x60] sm:$0xff]
    %v2087 = vld [vmem:[%s2073 + $0x68] sm:$0xff]
    %v2088 = vld [vmem:[%s2073 + $0x70] sm:$0xff]
    %v2089 = vld [vmem:[%s2073 + $0x78] sm:$0xff]
    %v2090 = vld [vmem:[%s2073 + $0x80] sm:$0xff]
    %v2091 = vld [vmem:[%s2073 + $0x88] sm:$0xff]
    %2092 = vmatprep.subr.mxu0 0.0
    %2093 = vmatpush1.msra.mxu0 %v2089
    %2094 = vmatprep.subr.mxu0 0.0
    %2095 = vmatpush1.msra.mxu0 %v2088
    %2096 = vmatprep.subr.mxu0 0.0
    %2097 = vmatpush1.msra.mxu0 %v2087
    %2098 = vmatprep.subr.mxu0 0.0
    %2099 = vmatpush1.msra.mxu0 %v2086
    %2100 = vmatprep.subr.mxu0 0.0
    %2101 = vmatpush1.msra.mxu0 %v2085
    %2102 = vmatprep.subr.mxu0 0.0
    %2103 = vmatpush1.msra.mxu0 %v2084
    %2104 = vmatprep.subr.mxu0 0.0
    %2105 = vmatpush1.msra.mxu0 %v2083
    %2106 = vmatprep.subr.mxu0 0.0
    %2107 = vmatpush1.msra.mxu0 %v2082
    %2108 = vmatprep.subr.mxu0 0.0
    %2109 = vmatpush1.msra.mxu0 %v2081
    %2110 = vmatprep.subr.mxu0 0.0
    %2111 = vmatpush1.msra.mxu0 %v2080
    %2112 = vmatprep.subr.mxu0 0.0
    %2113 = vmatpush1.msra.mxu0 %v2079
    %2114 = vmatprep.subr.mxu0 0.0
    %2115 = vmatpush1.msra.mxu0 %v2078
    %2116 = vmatprep.subr.mxu0 0.0
    %2117 = vmatpush1.msra.mxu0 %v2077
    %2118 = vmatprep.subr.mxu0 0.0
    %2119 = vmatpush1.msra.mxu0 %v2076
    %2120 = vmatprep.subr.mxu0 0.0
    %2121 = vmatpush1.msra.mxu0 %v2075
    %2122 = vmatprep.subr.mxu0 0.0
    %2123 = vmatpush1.msra.mxu0 %v2074
    %2124 = vmatprep.subr.mxu0 0.0
    %2125 = vmatpush2.msra.mxu0 0.0
    %2126 = vmatprep.subr.mxu0 0.0
    %2127 = vmatpush2.msra.mxu0 0.0
    %2128 = vmatprep.subr.mxu0 0.0
    %2129 = vmatpush2.msra.mxu0 0.0
    %2130 = vmatprep.subr.mxu0 0.0
    %2131 = vmatpush2.msra.mxu0 0.0
    %2132 = vmatprep.subr.mxu0 0.0
    %2133 = vmatpush2.msra.mxu0 0.0
    %2134 = vmatprep.subr.mxu0 0.0
    %2135 = vmatpush2.msra.mxu0 0.0
    %2136 = vmatprep.subr.mxu0 0.0
    %2137 = vmatpush2.msra.mxu0 0.0
    %2138 = vmatprep.subr.mxu0 0.0
    %2139 = vmatpush2.msra.mxu0 0.0
    %2140 = vmatprep.subr.mxu0 0.0
    %2141 = vmatpush2.msra.mxu0 0.0
    %2142 = vmatprep.subr.mxu0 0.0
    %2143 = vmatpush2.msra.mxu0 0.0
    %2144 = vmatprep.subr.mxu0 0.0
    %2145 = vmatpush2.msra.mxu0 0.0
    %2146 = vmatprep.subr.mxu0 0.0
    %2147 = vmatpush2.msra.mxu0 0.0
    %2148 = vmatprep.subr.mxu0 0.0
    %2149 = vmatpush2.msra.mxu0 0.0
    %2150 = vmatprep.subr.mxu0 0.0
    %2151 = vmatpush2.msra.mxu0 0.0
    %2152 = vmatprep.subr.mxu0 0.0
    %2153 = vmatpush2.msra.mxu0 %v2091
    %2154 = vmatprep.subr.mxu0 0.0
    %2155 = vmatpush2.msra.mxu0 %v2090
    %2156 = vmatprep.mubr.f32.mxu0 %v1744
    %2157 = vmatmul.mubr.f32.gmra.mxu0 %v1722
    %v2158 = vpop.f32.mrf.mxu0
    %v2159 = vadd.f32 0.0, %v2158
    %v2160 = vpop.f32.mrf.mxu0
    %2161 = vdwg.mxu0
    %s2162 = scalar_lea.vmem %s4, 32
    %v2163 = vld [vmem:[%s2162] sm:$0xff]
    %v2164 = vld [vmem:[%s2162 + $0x8] sm:$0xff]
    %v2166 = vsel %vm1910, %v2163, 0
    %v2169 = vsel %vm1910, %v2164, 0
    %2171 = vmatprep.subr.mxu0 0.0
    %2172 = vmatpush1.msra.mxu0 0.0
    %2173 = vmatprep.subr.mxu0 0.0
    %2174 = vmatpush1.msra.mxu0 0.0
    %2175 = vmatprep.subr.mxu0 0.0
    %2176 = vmatpush1.msra.mxu0 0.0
    %2177 = vmatprep.subr.mxu0 0.0
    %2178 = vmatpush1.msra.mxu0 0.0
    %2179 = vmatprep.subr.mxu0 0.0
    %2180 = vmatpush1.msra.mxu0 0.0
    %2181 = vmatprep.subr.mxu0 0.0
    %2182 = vmatpush1.msra.mxu0 0.0
    %2183 = vmatprep.subr.mxu0 0.0
    %2184 = vmatpush1.msra.mxu0 0.0
    %2185 = vmatprep.subr.mxu0 0.0
    %2186 = vmatpush1.msra.mxu0 0.0
    %2187 = vmatprep.subr.mxu0 0.0
    %2188 = vmatpush1.msra.mxu0 0.0
    %2189 = vmatprep.subr.mxu0 0.0
    %2190 = vmatpush1.msra.mxu0 0.0
    %2191 = vmatprep.subr.mxu0 0.0
    %2192 = vmatpush1.msra.mxu0 0.0
    %2193 = vmatprep.subr.mxu0 0.0
    %2194 = vmatpush1.msra.mxu0 0.0
    %2195 = vmatprep.subr.mxu0 0.0
    %2196 = vmatpush1.msra.mxu0 0.0
    %2197 = vmatprep.subr.mxu0 0.0
    %2198 = vmatpush1.msra.mxu0 0.0
    %2199 = vmatprep.subr.mxu0 0.0
    %2200 = vmatpush1.msra.mxu0 0.0
    %2201 = vmatprep.subr.mxu0 0.0
    %2202 = vmatpush1.msra.mxu0 %v2159
    %2203 = vmatprep.subr.mxu0 0.0
    %2204 = vmatpush2.msra.mxu0 0.0
    %2205 = vmatprep.subr.mxu0 0.0
    %2206 = vmatpush2.msra.mxu0 0.0
    %2207 = vmatprep.subr.mxu0 0.0
    %2208 = vmatpush2.msra.mxu0 0.0
    %2209 = vmatprep.subr.mxu0 0.0
    %2210 = vmatpush2.msra.mxu0 0.0
    %2211 = vmatprep.subr.mxu0 0.0
    %2212 = vmatpush2.msra.mxu0 0.0
    %2213 = vmatprep.subr.mxu0 0.0
    %2214 = vmatpush2.msra.mxu0 0.0
    %2215 = vmatprep.subr.mxu0 0.0
    %2216 = vmatpush2.msra.mxu0 0.0
    %2217 = vmatprep.subr.mxu0 0.0
    %2218 = vmatpush2.msra.mxu0 0.0
    %2219 = vmatprep.subr.mxu0 0.0
    %2220 = vmatpush2.msra.mxu0 0.0
    %2221 = vmatprep.subr.mxu0 0.0
    %2222 = vmatpush2.msra.mxu0 0.0
    %2223 = vmatprep.subr.mxu0 0.0
    %2224 = vmatpush2.msra.mxu0 0.0
    %2225 = vmatprep.subr.mxu0 0.0
    %2226 = vmatpush2.msra.mxu0 0.0
    %2227 = vmatprep.subr.mxu0 0.0
    %2228 = vmatpush2.msra.mxu0 0.0
    %2229 = vmatprep.subr.mxu0 0.0
    %2230 = vmatpush2.msra.mxu0 0.0
    %2231 = vmatprep.subr.mxu0 0.0
    %2232 = vmatpush2.msra.mxu0 0.0
    %2233 = vmatprep.subr.mxu0 0.0
    %2234 = vmatpush2.msra.mxu0 0.0
    %2235 = vmatprep.mubr.f32.mxu0 0.0
    %2236 = vmatmul.mubr.f32.gmra.mxu0 %v2166
    %v2237 = vpop.f32.mrf.mxu0
    %v2238 = vadd.f32 0.0, %v2237
    %v2239 = vpop.f32.mrf.mxu0
    %2240 = vmatprep.mubr.f32.mxu0 0.0
    %2241 = vmatmul.mubr.f32.gmra.mxu0 %v2169
    %v2242 = vpop.f32.mrf.mxu0
    %v2243 = vadd.f32 0.0, %v2242
    %v2244 = vpop.f32.mrf.mxu0
    %2245 = vdwg.mxu0
    %v2246 = vadd.f32 %v2065, %v2238
    %v2247 = vadd.f32 %v2070, %v2243
    %s2248 = scalar_lea.vmem %s3, 432
    %v2249 = vld [vmem:[%s2248] sm:$0xff]
    %v2250 = vld [vmem:[%s2248 + $0x8] sm:$0xff]
    %v2251 = vld [vmem:[%s2248 + $0x10] sm:$0xff]
    %v2252 = vld [vmem:[%s2248 + $0x18] sm:$0xff]
    %v2253 = vld [vmem:[%s2248 + $0x20] sm:$0xff]
    %v2254 = vld [vmem:[%s2248 + $0x28] sm:$0xff]
    %v2255 = vld [vmem:[%s2248 + $0x30] sm:$0xff]
    %v2256 = vld [vmem:[%s2248 + $0x38] sm:$0xff]
    %v2257 = vld [vmem:[%s2248 + $0x40] sm:$0xff]
    %v2258 = vld [vmem:[%s2248 + $0x48] sm:$0xff]
    %v2259 = vld [vmem:[%s2248 + $0x50] sm:$0xff]
    %v2260 = vld [vmem:[%s2248 + $0x58] sm:$0xff]
    %v2261 = vld [vmem:[%s2248 + $0x60] sm:$0xff]
    %v2262 = vld [vmem:[%s2248 + $0x68] sm:$0xff]
    %v2263 = vld [vmem:[%s2248 + $0x70] sm:$0xff]
    %v2264 = vld [vmem:[%s2248 + $0x78] sm:$0xff]
    %v2265 = vld [vmem:[%s2248 + $0x80] sm:$0xff]
    %v2266 = vld [vmem:[%s2248 + $0x88] sm:$0xff]
    %2267 = vmatprep.subr.mxu0 0.0
    %2268 = vmatpush1.msra.mxu0 %v2264
    %2269 = vmatprep.subr.mxu0 0.0
    %2270 = vmatpush1.msra.mxu0 %v2263
    %2271 = vmatprep.subr.mxu0 0.0
    %2272 = vmatpush1.msra.mxu0 %v2262
    %2273 = vmatprep.subr.mxu0 0.0
    %2274 = vmatpush1.msra.mxu0 %v2261
    %2275 = vmatprep.subr.mxu0 0.0
    %2276 = vmatpush1.msra.mxu0 %v2260
    %2277 = vmatprep.subr.mxu0 0.0
    %2278 = vmatpush1.msra.mxu0 %v2259
    %2279 = vmatprep.subr.mxu0 0.0
    %2280 = vmatpush1.msra.mxu0 %v2258
    %2281 = vmatprep.subr.mxu0 0.0
    %2282 = vmatpush1.msra.mxu0 %v2257
    %2283 = vmatprep.subr.mxu0 0.0
    %2284 = vmatpush1.msra.mxu0 %v2256
    %2285 = vmatprep.subr.mxu0 0.0
    %2286 = vmatpush1.msra.mxu0 %v2255
    %2287 = vmatprep.subr.mxu0 0.0
    %2288 = vmatpush1.msra.mxu0 %v2254
    %2289 = vmatprep.subr.mxu0 0.0
    %2290 = vmatpush1.msra.mxu0 %v2253
    %2291 = vmatprep.subr.mxu0 0.0
    %2292 = vmatpush1.msra.mxu0 %v2252
    %2293 = vmatprep.subr.mxu0 0.0
    %2294 = vmatpush1.msra.mxu0 %v2251
    %2295 = vmatprep.subr.mxu0 0.0
    %2296 = vmatpush1.msra.mxu0 %v2250
    %2297 = vmatprep.subr.mxu0 0.0
    %2298 = vmatpush1.msra.mxu0 %v2249
    %2299 = vmatprep.subr.mxu0 0.0
    %2300 = vmatpush2.msra.mxu0 0.0
    %2301 = vmatprep.subr.mxu0 0.0
    %2302 = vmatpush2.msra.mxu0 0.0
    %2303 = vmatprep.subr.mxu0 0.0
    %2304 = vmatpush2.msra.mxu0 0.0
    %2305 = vmatprep.subr.mxu0 0.0
    %2306 = vmatpush2.msra.mxu0 0.0
    %2307 = vmatprep.subr.mxu0 0.0
    %2308 = vmatpush2.msra.mxu0 0.0
    %2309 = vmatprep.subr.mxu0 0.0
    %2310 = vmatpush2.msra.mxu0 0.0
    %2311 = vmatprep.subr.mxu0 0.0
    %2312 = vmatpush2.msra.mxu0 0.0
    %2313 = vmatprep.subr.mxu0 0.0
    %2314 = vmatpush2.msra.mxu0 0.0
    %2315 = vmatprep.subr.mxu0 0.0
    %2316 = vmatpush2.msra.mxu0 0.0
    %2317 = vmatprep.subr.mxu0 0.0
    %2318 = vmatpush2.msra.mxu0 0.0
    %2319 = vmatprep.subr.mxu0 0.0
    %2320 = vmatpush2.msra.mxu0 0.0
    %2321 = vmatprep.subr.mxu0 0.0
    %2322 = vmatpush2.msra.mxu0 0.0
    %2323 = vmatprep.subr.mxu0 0.0
    %2324 = vmatpush2.msra.mxu0 0.0
    %2325 = vmatprep.subr.mxu0 0.0
    %2326 = vmatpush2.msra.mxu0 0.0
    %2327 = vmatprep.subr.mxu0 0.0
    %2328 = vmatpush2.msra.mxu0 %v2266
    %2329 = vmatprep.subr.mxu0 0.0
    %2330 = vmatpush2.msra.mxu0 %v2265
    %2331 = vmatprep.mubr.f32.mxu0 %v1744
    %2332 = vmatmul.mubr.f32.gmra.mxu0 %v1722
    %v2333 = vpop.f32.mrf.mxu0
    %v2334 = vadd.f32 0.0, %v2333
    %v2335 = vpop.f32.mrf.mxu0
    %2336 = vdwg.mxu0
    %s2337 = scalar_lea.vmem %s4, 48
    %v2338 = vld [vmem:[%s2337] sm:$0xff]
    %v2339 = vld [vmem:[%s2337 + $0x8] sm:$0xff]
    %v2341 = vsel %vm1910, %v2338, 0
    %v2344 = vsel %vm1910, %v2339, 0
    %2346 = vmatprep.subr.mxu0 0.0
    %2347 = vmatpush1.msra.mxu0 0.0
    %2348 = vmatprep.subr.mxu0 0.0
    %2349 = vmatpush1.msra.mxu0 0.0
    %2350 = vmatprep.subr.mxu0 0.0
    %2351 = vmatpush1.msra.mxu0 0.0
    %2352 = vmatprep.subr.mxu0 0.0
    %2353 = vmatpush1.msra.mxu0 0.0
    %2354 = vmatprep.subr.mxu0 0.0
    %2355 = vmatpush1.msra.mxu0 0.0
    %2356 = vmatprep.subr.mxu0 0.0
    %2357 = vmatpush1.msra.mxu0 0.0
    %2358 = vmatprep.subr.mxu0 0.0
    %2359 = vmatpush1.msra.mxu0 0.0
    %2360 = vmatprep.subr.mxu0 0.0
    %2361 = vmatpush1.msra.mxu0 0.0
    %2362 = vmatprep.subr.mxu0 0.0
    %2363 = vmatpush1.msra.mxu0 0.0
    %2364 = vmatprep.subr.mxu0 0.0
    %2365 = vmatpush1.msra.mxu0 0.0
    %2366 = vmatprep.subr.mxu0 0.0
    %2367 = vmatpush1.msra.mxu0 0.0
    %2368 = vmatprep.subr.mxu0 0.0
    %2369 = vmatpush1.msra.mxu0 0.0
    %2370 = vmatprep.subr.mxu0 0.0
    %2371 = vmatpush1.msra.mxu0 0.0
    %2372 = vmatprep.subr.mxu0 0.0
    %2373 = vmatpush1.msra.mxu0 0.0
    %2374 = vmatprep.subr.mxu0 0.0
    %2375 = vmatpush1.msra.mxu0 0.0
    %2376 = vmatprep.subr.mxu0 0.0
    %2377 = vmatpush1.msra.mxu0 %v2334
    %2378 = vmatprep.subr.mxu0 0.0
    %2379 = vmatpush2.msra.mxu0 0.0
    %2380 = vmatprep.subr.mxu0 0.0
    %2381 = vmatpush2.msra.mxu0 0.0
    %2382 = vmatprep.subr.mxu0 0.0
    %2383 = vmatpush2.msra.mxu0 0.0
    %2384 = vmatprep.subr.mxu0 0.0
    %2385 = vmatpush2.msra.mxu0 0.0
    %2386 = vmatprep.subr.mxu0 0.0
    %2387 = vmatpush2.msra.mxu0 0.0
    %2388 = vmatprep.subr.mxu0 0.0
    %2389 = vmatpush2.msra.mxu0 0.0
    %2390 = vmatprep.subr.mxu0 0.0
    %2391 = vmatpush2.msra.mxu0 0.0
    %2392 = vmatprep.subr.mxu0 0.0
    %2393 = vmatpush2.msra.mxu0 0.0
    %2394 = vmatprep.subr.mxu0 0.0
    %2395 = vmatpush2.msra.mxu0 0.0
    %2396 = vmatprep.subr.mxu0 0.0
    %2397 = vmatpush2.msra.mxu0 0.0
    %2398 = vmatprep.subr.mxu0 0.0
    %2399 = vmatpush2.msra.mxu0 0.0
    %2400 = vmatprep.subr.mxu0 0.0
    %2401 = vmatpush2.msra.mxu0 0.0
    %2402 = vmatprep.subr.mxu0 0.0
    %2403 = vmatpush2.msra.mxu0 0.0
    %2404 = vmatprep.subr.mxu0 0.0
    %2405 = vmatpush2.msra.mxu0 0.0
    %2406 = vmatprep.subr.mxu0 0.0
    %2407 = vmatpush2.msra.mxu0 0.0
    %2408 = vmatprep.subr.mxu0 0.0
    %2409 = vmatpush2.msra.mxu0 0.0
    %2410 = vmatprep.mubr.f32.mxu0 0.0
    %2411 = vmatmul.mubr.f32.gmra.mxu0 %v2341
    %v2412 = vpop.f32.mrf.mxu0
    %v2413 = vadd.f32 0.0, %v2412
    %v2414 = vpop.f32.mrf.mxu0
    %2415 = vmatprep.mubr.f32.mxu0 0.0
    %2416 = vmatmul.mubr.f32.gmra.mxu0 %v2344
    %v2417 = vpop.f32.mrf.mxu0
    %v2418 = vadd.f32 0.0, %v2417
    %v2419 = vpop.f32.mrf.mxu0
    %2420 = vdwg.mxu0
    %v2421 = vadd.f32 %v2246, %v2413
    %v2422 = vadd.f32 %v2247, %v2418
    %s2423 = scalar_lea.vmem %s3, 576
    %v2424 = vld [vmem:[%s2423] sm:$0xff]
    %v2425 = vld [vmem:[%s2423 + $0x8] sm:$0xff]
    %v2426 = vld [vmem:[%s2423 + $0x10] sm:$0xff]
    %v2427 = vld [vmem:[%s2423 + $0x18] sm:$0xff]
    %v2428 = vld [vmem:[%s2423 + $0x20] sm:$0xff]
    %v2429 = vld [vmem:[%s2423 + $0x28] sm:$0xff]
    %v2430 = vld [vmem:[%s2423 + $0x30] sm:$0xff]
    %v2431 = vld [vmem:[%s2423 + $0x38] sm:$0xff]
    %v2432 = vld [vmem:[%s2423 + $0x40] sm:$0xff]
    %v2433 = vld [vmem:[%s2423 + $0x48] sm:$0xff]
    %v2434 = vld [vmem:[%s2423 + $0x50] sm:$0xff]
    %v2435 = vld [vmem:[%s2423 + $0x58] sm:$0xff]
    %v2436 = vld [vmem:[%s2423 + $0x60] sm:$0xff]
    %v2437 = vld [vmem:[%s2423 + $0x68] sm:$0xff]
    %v2438 = vld [vmem:[%s2423 + $0x70] sm:$0xff]
    %v2439 = vld [vmem:[%s2423 + $0x78] sm:$0xff]
    %v2440 = vld [vmem:[%s2423 + $0x80] sm:$0xff]
    %v2441 = vld [vmem:[%s2423 + $0x88] sm:$0xff]
    %2442 = vmatprep.subr.mxu0 0.0
    %2443 = vmatpush1.msra.mxu0 %v2439
    %2444 = vmatprep.subr.mxu0 0.0
    %2445 = vmatpush1.msra.mxu0 %v2438
    %2446 = vmatprep.subr.mxu0 0.0
    %2447 = vmatpush1.msra.mxu0 %v2437
    %2448 = vmatprep.subr.mxu0 0.0
    %2449 = vmatpush1.msra.mxu0 %v2436
    %2450 = vmatprep.subr.mxu0 0.0
    %2451 = vmatpush1.msra.mxu0 %v2435
    %2452 = vmatprep.subr.mxu0 0.0
    %2453 = vmatpush1.msra.mxu0 %v2434
    %2454 = vmatprep.subr.mxu0 0.0
    %2455 = vmatpush1.msra.mxu0 %v2433
    %2456 = vmatprep.subr.mxu0 0.0
    %2457 = vmatpush1.msra.mxu0 %v2432
    %2458 = vmatprep.subr.mxu0 0.0
    %2459 = vmatpush1.msra.mxu0 %v2431
    %2460 = vmatprep.subr.mxu0 0.0
    %2461 = vmatpush1.msra.mxu0 %v2430
    %2462 = vmatprep.subr.mxu0 0.0
    %2463 = vmatpush1.msra.mxu0 %v2429
    %2464 = vmatprep.subr.mxu0 0.0
    %2465 = vmatpush1.msra.mxu0 %v2428
    %2466 = vmatprep.subr.mxu0 0.0
    %2467 = vmatpush1.msra.mxu0 %v2427
    %2468 = vmatprep.subr.mxu0 0.0
    %2469 = vmatpush1.msra.mxu0 %v2426
    %2470 = vmatprep.subr.mxu0 0.0
    %2471 = vmatpush1.msra.mxu0 %v2425
    %2472 = vmatprep.subr.mxu0 0.0
    %2473 = vmatpush1.msra.mxu0 %v2424
    %2474 = vmatprep.subr.mxu0 0.0
    %2475 = vmatpush2.msra.mxu0 0.0
    %2476 = vmatprep.subr.mxu0 0.0
    %2477 = vmatpush2.msra.mxu0 0.0
    %2478 = vmatprep.subr.mxu0 0.0
    %2479 = vmatpush2.msra.mxu0 0.0
    %2480 = vmatprep.subr.mxu0 0.0
    %2481 = vmatpush2.msra.mxu0 0.0
    %2482 = vmatprep.subr.mxu0 0.0
    %2483 = vmatpush2.msra.mxu0 0.0
    %2484 = vmatprep.subr.mxu0 0.0
    %2485 = vmatpush2.msra.mxu0 0.0
    %2486 = vmatprep.subr.mxu0 0.0
    %2487 = vmatpush2.msra.mxu0 0.0
    %2488 = vmatprep.subr.mxu0 0.0
    %2489 = vmatpush2.msra.mxu0 0.0
    %2490 = vmatprep.subr.mxu0 0.0
    %2491 = vmatpush2.msra.mxu0 0.0
    %2492 = vmatprep.subr.mxu0 0.0
    %2493 = vmatpush2.msra.mxu0 0.0
    %2494 = vmatprep.subr.mxu0 0.0
    %2495 = vmatpush2.msra.mxu0 0.0
    %2496 = vmatprep.subr.mxu0 0.0
    %2497 = vmatpush2.msra.mxu0 0.0
    %2498 = vmatprep.subr.mxu0 0.0
    %2499 = vmatpush2.msra.mxu0 0.0
    %2500 = vmatprep.subr.mxu0 0.0
    %2501 = vmatpush2.msra.mxu0 0.0
    %2502 = vmatprep.subr.mxu0 0.0
    %2503 = vmatpush2.msra.mxu0 %v2441
    %2504 = vmatprep.subr.mxu0 0.0
    %2505 = vmatpush2.msra.mxu0 %v2440
    %2506 = vmatprep.mubr.f32.mxu0 %v1744
    %2507 = vmatmul.mubr.f32.gmra.mxu0 %v1722
    %v2508 = vpop.f32.mrf.mxu0
    %v2509 = vadd.f32 0.0, %v2508
    %v2510 = vpop.f32.mrf.mxu0
    %2511 = vdwg.mxu0
    %s2512 = scalar_lea.vmem %s4, 64
    %v2513 = vld [vmem:[%s2512] sm:$0xff]
    %v2514 = vld [vmem:[%s2512 + $0x8] sm:$0xff]
    %v2516 = vsel %vm1910, %v2513, 0
    %v2519 = vsel %vm1910, %v2514, 0
    %2521 = vmatprep.subr.mxu0 0.0
    %2522 = vmatpush1.msra.mxu0 0.0
    %2523 = vmatprep.subr.mxu0 0.0
    %2524 = vmatpush1.msra.mxu0 0.0
    %2525 = vmatprep.subr.mxu0 0.0
    %2526 = vmatpush1.msra.mxu0 0.0
    %2527 = vmatprep.subr.mxu0 0.0
    %2528 = vmatpush1.msra.mxu0 0.0
    %2529 = vmatprep.subr.mxu0 0.0
    %2530 = vmatpush1.msra.mxu0 0.0
    %2531 = vmatprep.subr.mxu0 0.0
    %2532 = vmatpush1.msra.mxu0 0.0
    %2533 = vmatprep.subr.mxu0 0.0
    %2534 = vmatpush1.msra.mxu0 0.0
    %2535 = vmatprep.subr.mxu0 0.0
    %2536 = vmatpush1.msra.mxu0 0.0
    %2537 = vmatprep.subr.mxu0 0.0
    %2538 = vmatpush1.msra.mxu0 0.0
    %2539 = vmatprep.subr.mxu0 0.0
    %2540 = vmatpush1.msra.mxu0 0.0
    %2541 = vmatprep.subr.mxu0 0.0
    %2542 = vmatpush1.msra.mxu0 0.0
    %2543 = vmatprep.subr.mxu0 0.0
    %2544 = vmatpush1.msra.mxu0 0.0
    %2545 = vmatprep.subr.mxu0 0.0
    %2546 = vmatpush1.msra.mxu0 0.0
    %2547 = vmatprep.subr.mxu0 0.0
    %2548 = vmatpush1.msra.mxu0 0.0
    %2549 = vmatprep.subr.mxu0 0.0
    %2550 = vmatpush1.msra.mxu0 0.0
    %2551 = vmatprep.subr.mxu0 0.0
    %2552 = vmatpush1.msra.mxu0 %v2509
    %2553 = vmatprep.subr.mxu0 0.0
    %2554 = vmatpush2.msra.mxu0 0.0
    %2555 = vmatprep.subr.mxu0 0.0
    %2556 = vmatpush2.msra.mxu0 0.0
    %2557 = vmatprep.subr.mxu0 0.0
    %2558 = vmatpush2.msra.mxu0 0.0
    %2559 = vmatprep.subr.mxu0 0.0
    %2560 = vmatpush2.msra.mxu0 0.0
    %2561 = vmatprep.subr.mxu0 0.0
    %2562 = vmatpush2.msra.mxu0 0.0
    %2563 = vmatprep.subr.mxu0 0.0
    %2564 = vmatpush2.msra.mxu0 0.0
    %2565 = vmatprep.subr.mxu0 0.0
    %2566 = vmatpush2.msra.mxu0 0.0
    %2567 = vmatprep.subr.mxu0 0.0
    %2568 = vmatpush2.msra.mxu0 0.0
    %2569 = vmatprep.subr.mxu0 0.0
    %2570 = vmatpush2.msra.mxu0 0.0
    %2571 = vmatprep.subr.mxu0 0.0
    %2572 = vmatpush2.msra.mxu0 0.0
    %2573 = vmatprep.subr.mxu0 0.0
    %2574 = vmatpush2.msra.mxu0 0.0
    %2575 = vmatprep.subr.mxu0 0.0
    %2576 = vmatpush2.msra.mxu0 0.0
    %2577 = vmatprep.subr.mxu0 0.0
    %2578 = vmatpush2.msra.mxu0 0.0
    %2579 = vmatprep.subr.mxu0 0.0
    %2580 = vmatpush2.msra.mxu0 0.0
    %2581 = vmatprep.subr.mxu0 0.0
    %2582 = vmatpush2.msra.mxu0 0.0
    %2583 = vmatprep.subr.mxu0 0.0
    %2584 = vmatpush2.msra.mxu0 0.0
    %2585 = vmatprep.mubr.f32.mxu0 0.0
    %2586 = vmatmul.mubr.f32.gmra.mxu0 %v2516
    %v2587 = vpop.f32.mrf.mxu0
    %v2588 = vadd.f32 0.0, %v2587
    %v2589 = vpop.f32.mrf.mxu0
    %2590 = vmatprep.mubr.f32.mxu0 0.0
    %2591 = vmatmul.mubr.f32.gmra.mxu0 %v2519
    %v2592 = vpop.f32.mrf.mxu0
    %v2593 = vadd.f32 0.0, %v2592
    %v2594 = vpop.f32.mrf.mxu0
    %2595 = vdwg.mxu0
    %v2596 = vadd.f32 %v2421, %v2588
    %v2597 = vadd.f32 %v2422, %v2593
    %s2598 = scalar_lea.vmem %s3, 720
    %v2599 = vld [vmem:[%s2598] sm:$0xff]
    %v2600 = vld [vmem:[%s2598 + $0x8] sm:$0xff]
    %v2601 = vld [vmem:[%s2598 + $0x10] sm:$0xff]
    %v2602 = vld [vmem:[%s2598 + $0x18] sm:$0xff]
    %v2603 = vld [vmem:[%s2598 + $0x20] sm:$0xff]
    %v2604 = vld [vmem:[%s2598 + $0x28] sm:$0xff]
    %v2605 = vld [vmem:[%s2598 + $0x30] sm:$0xff]
    %v2606 = vld [vmem:[%s2598 + $0x38] sm:$0xff]
    %v2607 = vld [vmem:[%s2598 + $0x40] sm:$0xff]
    %v2608 = vld [vmem:[%s2598 + $0x48] sm:$0xff]
    %v2609 = vld [vmem:[%s2598 + $0x50] sm:$0xff]
    %v2610 = vld [vmem:[%s2598 + $0x58] sm:$0xff]
    %v2611 = vld [vmem:[%s2598 + $0x60] sm:$0xff]
    %v2612 = vld [vmem:[%s2598 + $0x68] sm:$0xff]
    %v2613 = vld [vmem:[%s2598 + $0x70] sm:$0xff]
    %v2614 = vld [vmem:[%s2598 + $0x78] sm:$0xff]
    %v2615 = vld [vmem:[%s2598 + $0x80] sm:$0xff]
    %v2616 = vld [vmem:[%s2598 + $0x88] sm:$0xff]
    %2617 = vmatprep.subr.mxu0 0.0
    %2618 = vmatpush1.msra.mxu0 %v2614
    %2619 = vmatprep.subr.mxu0 0.0
    %2620 = vmatpush1.msra.mxu0 %v2613
    %2621 = vmatprep.subr.mxu0 0.0
    %2622 = vmatpush1.msra.mxu0 %v2612
    %2623 = vmatprep.subr.mxu0 0.0
    %2624 = vmatpush1.msra.mxu0 %v2611
    %2625 = vmatprep.subr.mxu0 0.0
    %2626 = vmatpush1.msra.mxu0 %v2610
    %2627 = vmatprep.subr.mxu0 0.0
    %2628 = vmatpush1.msra.mxu0 %v2609
    %2629 = vmatprep.subr.mxu0 0.0
    %2630 = vmatpush1.msra.mxu0 %v2608
    %2631 = vmatprep.subr.mxu0 0.0
    %2632 = vmatpush1.msra.mxu0 %v2607
    %2633 = vmatprep.subr.mxu0 0.0
    %2634 = vmatpush1.msra.mxu0 %v2606
    %2635 = vmatprep.subr.mxu0 0.0
    %2636 = vmatpush1.msra.mxu0 %v2605
    %2637 = vmatprep.subr.mxu0 0.0
    %2638 = vmatpush1.msra.mxu0 %v2604
    %2639 = vmatprep.subr.mxu0 0.0
    %2640 = vmatpush1.msra.mxu0 %v2603
    %2641 = vmatprep.subr.mxu0 0.0
    %2642 = vmatpush1.msra.mxu0 %v2602
    %2643 = vmatprep.subr.mxu0 0.0
    %2644 = vmatpush1.msra.mxu0 %v2601
    %2645 = vmatprep.subr.mxu0 0.0
    %2646 = vmatpush1.msra.mxu0 %v2600
    %2647 = vmatprep.subr.mxu0 0.0
    %2648 = vmatpush1.msra.mxu0 %v2599
    %2649 = vmatprep.subr.mxu0 0.0
    %2650 = vmatpush2.msra.mxu0 0.0
    %2651 = vmatprep.subr.mxu0 0.0
    %2652 = vmatpush2.msra.mxu0 0.0
    %2653 = vmatprep.subr.mxu0 0.0
    %2654 = vmatpush2.msra.mxu0 0.0
    %2655 = vmatprep.subr.mxu0 0.0
    %2656 = vmatpush2.msra.mxu0 0.0
    %2657 = vmatprep.subr.mxu0 0.0
    %2658 = vmatpush2.msra.mxu0 0.0
    %2659 = vmatprep.subr.mxu0 0.0
    %2660 = vmatpush2.msra.mxu0 0.0
    %2661 = vmatprep.subr.mxu0 0.0
    %2662 = vmatpush2.msra.mxu0 0.0
    %2663 = vmatprep.subr.mxu0 0.0
    %2664 = vmatpush2.msra.mxu0 0.0
    %2665 = vmatprep.subr.mxu0 0.0
    %2666 = vmatpush2.msra.mxu0 0.0
    %2667 = vmatprep.subr.mxu0 0.0
    %2668 = vmatpush2.msra.mxu0 0.0
    %2669 = vmatprep.subr.mxu0 0.0
    %2670 = vmatpush2.msra.mxu0 0.0
    %2671 = vmatprep.subr.mxu0 0.0
    %2672 = vmatpush2.msra.mxu0 0.0
    %2673 = vmatprep.subr.mxu0 0.0
    %2674 = vmatpush2.msra.mxu0 0.0
    %2675 = vmatprep.subr.mxu0 0.0
    %2676 = vmatpush2.msra.mxu0 0.0
    %2677 = vmatprep.subr.mxu0 0.0
    %2678 = vmatpush2.msra.mxu0 %v2616
    %2679 = vmatprep.subr.mxu0 0.0
    %2680 = vmatpush2.msra.mxu0 %v2615
    %2681 = vmatprep.mubr.f32.mxu0 %v1744
    %2682 = vmatmul.mubr.f32.gmra.mxu0 %v1722
    %v2683 = vpop.f32.mrf.mxu0
    %v2684 = vadd.f32 0.0, %v2683
    %v2685 = vpop.f32.mrf.mxu0
    %2686 = vdwg.mxu0
    %s2687 = scalar_lea.vmem %s4, 80
    %v2688 = vld [vmem:[%s2687] sm:$0xff]
    %v2689 = vld [vmem:[%s2687 + $0x8] sm:$0xff]
    %v2691 = vsel %vm1910, %v2688, 0
    %v2694 = vsel %vm1910, %v2689, 0
    %2696 = vmatprep.subr.mxu0 0.0
    %2697 = vmatpush1.msra.mxu0 0.0
    %2698 = vmatprep.subr.mxu0 0.0
    %2699 = vmatpush1.msra.mxu0 0.0
    %2700 = vmatprep.subr.mxu0 0.0
    %2701 = vmatpush1.msra.mxu0 0.0
    %2702 = vmatprep.subr.mxu0 0.0
    %2703 = vmatpush1.msra.mxu0 0.0
    %2704 = vmatprep.subr.mxu0 0.0
    %2705 = vmatpush1.msra.mxu0 0.0
    %2706 = vmatprep.subr.mxu0 0.0
    %2707 = vmatpush1.msra.mxu0 0.0
    %2708 = vmatprep.subr.mxu0 0.0
    %2709 = vmatpush1.msra.mxu0 0.0
    %2710 = vmatprep.subr.mxu0 0.0
    %2711 = vmatpush1.msra.mxu0 0.0
    %2712 = vmatprep.subr.mxu0 0.0
    %2713 = vmatpush1.msra.mxu0 0.0
    %2714 = vmatprep.subr.mxu0 0.0
    %2715 = vmatpush1.msra.mxu0 0.0
    %2716 = vmatprep.subr.mxu0 0.0
    %2717 = vmatpush1.msra.mxu0 0.0
    %2718 = vmatprep.subr.mxu0 0.0
    %2719 = vmatpush1.msra.mxu0 0.0
    %2720 = vmatprep.subr.mxu0 0.0
    %2721 = vmatpush1.msra.mxu0 0.0
    %2722 = vmatprep.subr.mxu0 0.0
    %2723 = vmatpush1.msra.mxu0 0.0
    %2724 = vmatprep.subr.mxu0 0.0
    %2725 = vmatpush1.msra.mxu0 0.0
    %2726 = vmatprep.subr.mxu0 0.0
    %2727 = vmatpush1.msra.mxu0 %v2684
    %2728 = vmatprep.subr.mxu0 0.0
    %2729 = vmatpush2.msra.mxu0 0.0
    %2730 = vmatprep.subr.mxu0 0.0
    %2731 = vmatpush2.msra.mxu0 0.0
    %2732 = vmatprep.subr.mxu0 0.0
    %2733 = vmatpush2.msra.mxu0 0.0
    %2734 = vmatprep.subr.mxu0 0.0
    %2735 = vmatpush2.msra.mxu0 0.0
    %2736 = vmatprep.subr.mxu0 0.0
    %2737 = vmatpush2.msra.mxu0 0.0
    %2738 = vmatprep.subr.mxu0 0.0
    %2739 = vmatpush2.msra.mxu0 0.0
    %2740 = vmatprep.subr.mxu0 0.0
    %2741 = vmatpush2.msra.mxu0 0.0
    %2742 = vmatprep.subr.mxu0 0.0
    %2743 = vmatpush2.msra.mxu0 0.0
    %2744 = vmatprep.subr.mxu0 0.0
    %2745 = vmatpush2.msra.mxu0 0.0
    %2746 = vmatprep.subr.mxu0 0.0
    %2747 = vmatpush2.msra.mxu0 0.0
    %2748 = vmatprep.subr.mxu0 0.0
    %2749 = vmatpush2.msra.mxu0 0.0
    %2750 = vmatprep.subr.mxu0 0.0
    %2751 = vmatpush2.msra.mxu0 0.0
    %2752 = vmatprep.subr.mxu0 0.0
    %2753 = vmatpush2.msra.mxu0 0.0
    %2754 = vmatprep.subr.mxu0 0.0
    %2755 = vmatpush2.msra.mxu0 0.0
    %2756 = vmatprep.subr.mxu0 0.0
    %2757 = vmatpush2.msra.mxu0 0.0
    %2758 = vmatprep.subr.mxu0 0.0
    %2759 = vmatpush2.msra.mxu0 0.0
    %2760 = vmatprep.mubr.f32.mxu0 0.0
    %2761 = vmatmul.mubr.f32.gmra.mxu0 %v2691
    %v2762 = vpop.f32.mrf.mxu0
    %v2763 = vadd.f32 0.0, %v2762
    %v2764 = vpop.f32.mrf.mxu0
    %2765 = vmatprep.mubr.f32.mxu0 0.0
    %2766 = vmatmul.mubr.f32.gmra.mxu0 %v2694
    %v2767 = vpop.f32.mrf.mxu0
    %v2768 = vadd.f32 0.0, %v2767
    %v2769 = vpop.f32.mrf.mxu0
    %2770 = vdwg.mxu0
    %v2771 = vadd.f32 %v2596, %v2763
    %v2772 = vadd.f32 %v2597, %v2768
    %s2773 = scalar_lea.vmem %s3, 864
    %v2774 = vld [vmem:[%s2773] sm:$0xff]
    %v2775 = vld [vmem:[%s2773 + $0x8] sm:$0xff]
    %v2776 = vld [vmem:[%s2773 + $0x10] sm:$0xff]
    %v2777 = vld [vmem:[%s2773 + $0x18] sm:$0xff]
    %v2778 = vld [vmem:[%s2773 + $0x20] sm:$0xff]
    %v2779 = vld [vmem:[%s2773 + $0x28] sm:$0xff]
    %v2780 = vld [vmem:[%s2773 + $0x30] sm:$0xff]
    %v2781 = vld [vmem:[%s2773 + $0x38] sm:$0xff]
    %v2782 = vld [vmem:[%s2773 + $0x40] sm:$0xff]
    %v2783 = vld [vmem:[%s2773 + $0x48] sm:$0xff]
    %v2784 = vld [vmem:[%s2773 + $0x50] sm:$0xff]
    %v2785 = vld [vmem:[%s2773 + $0x58] sm:$0xff]
    %v2786 = vld [vmem:[%s2773 + $0x60] sm:$0xff]
    %v2787 = vld [vmem:[%s2773 + $0x68] sm:$0xff]
    %v2788 = vld [vmem:[%s2773 + $0x70] sm:$0xff]
    %v2789 = vld [vmem:[%s2773 + $0x78] sm:$0xff]
    %v2790 = vld [vmem:[%s2773 + $0x80] sm:$0xff]
    %v2791 = vld [vmem:[%s2773 + $0x88] sm:$0xff]
    %2792 = vmatprep.subr.mxu0 0.0
    %2793 = vmatpush1.msra.mxu0 %v2789
    %2794 = vmatprep.subr.mxu0 0.0
    %2795 = vmatpush1.msra.mxu0 %v2788
    %2796 = vmatprep.subr.mxu0 0.0
    %2797 = vmatpush1.msra.mxu0 %v2787
    %2798 = vmatprep.subr.mxu0 0.0
    %2799 = vmatpush1.msra.mxu0 %v2786
    %2800 = vmatprep.subr.mxu0 0.0
    %2801 = vmatpush1.msra.mxu0 %v2785
    %2802 = vmatprep.subr.mxu0 0.0
    %2803 = vmatpush1.msra.mxu0 %v2784
    %2804 = vmatprep.subr.mxu0 0.0
    %2805 = vmatpush1.msra.mxu0 %v2783
    %2806 = vmatprep.subr.mxu0 0.0
    %2807 = vmatpush1.msra.mxu0 %v2782
    %2808 = vmatprep.subr.mxu0 0.0
    %2809 = vmatpush1.msra.mxu0 %v2781
    %2810 = vmatprep.subr.mxu0 0.0
    %2811 = vmatpush1.msra.mxu0 %v2780
    %2812 = vmatprep.subr.mxu0 0.0
    %2813 = vmatpush1.msra.mxu0 %v2779
    %2814 = vmatprep.subr.mxu0 0.0
    %2815 = vmatpush1.msra.mxu0 %v2778
    %2816 = vmatprep.subr.mxu0 0.0
    %2817 = vmatpush1.msra.mxu0 %v2777
    %2818 = vmatprep.subr.mxu0 0.0
    %2819 = vmatpush1.msra.mxu0 %v2776
    %2820 = vmatprep.subr.mxu0 0.0
    %2821 = vmatpush1.msra.mxu0 %v2775
    %2822 = vmatprep.subr.mxu0 0.0
    %2823 = vmatpush1.msra.mxu0 %v2774
    %2824 = vmatprep.subr.mxu0 0.0
    %2825 = vmatpush2.msra.mxu0 0.0
    %2826 = vmatprep.subr.mxu0 0.0
    %2827 = vmatpush2.msra.mxu0 0.0
    %2828 = vmatprep.subr.mxu0 0.0
    %2829 = vmatpush2.msra.mxu0 0.0
    %2830 = vmatprep.subr.mxu0 0.0
    %2831 = vmatpush2.msra.mxu0 0.0
    %2832 = vmatprep.subr.mxu0 0.0
    %2833 = vmatpush2.msra.mxu0 0.0
    %2834 = vmatprep.subr.mxu0 0.0
    %2835 = vmatpush2.msra.mxu0 0.0
    %2836 = vmatprep.subr.mxu0 0.0
    %2837 = vmatpush2.msra.mxu0 0.0
    %2838 = vmatprep.subr.mxu0 0.0
    %2839 = vmatpush2.msra.mxu0 0.0
    %2840 = vmatprep.subr.mxu0 0.0
    %2841 = vmatpush2.msra.mxu0 0.0
    %2842 = vmatprep.subr.mxu0 0.0
    %2843 = vmatpush2.msra.mxu0 0.0
    %2844 = vmatprep.subr.mxu0 0.0
    %2845 = vmatpush2.msra.mxu0 0.0
    %2846 = vmatprep.subr.mxu0 0.0
    %2847 = vmatpush2.msra.mxu0 0.0
    %2848 = vmatprep.subr.mxu0 0.0
    %2849 = vmatpush2.msra.mxu0 0.0
    %2850 = vmatprep.subr.mxu0 0.0
    %2851 = vmatpush2.msra.mxu0 0.0
    %2852 = vmatprep.subr.mxu0 0.0
    %2853 = vmatpush2.msra.mxu0 %v2791
    %2854 = vmatprep.subr.mxu0 0.0
    %2855 = vmatpush2.msra.mxu0 %v2790
    %2856 = vmatprep.mubr.f32.mxu0 %v1744
    %2857 = vmatmul.mubr.f32.gmra.mxu0 %v1722
    %v2858 = vpop.f32.mrf.mxu0
    %v2859 = vadd.f32 0.0, %v2858
    %v2860 = vpop.f32.mrf.mxu0
    %2861 = vdwg.mxu0
    %s2862 = scalar_lea.vmem %s4, 96
    %v2863 = vld [vmem:[%s2862] sm:$0xff]
    %v2864 = vld [vmem:[%s2862 + $0x8] sm:$0xff]
    %v2866 = vsel %vm1910, %v2863, 0
    %v2869 = vsel %vm1910, %v2864, 0
    %2871 = vmatprep.subr.mxu0 0.0
    %2872 = vmatpush1.msra.mxu0 0.0
    %2873 = vmatprep.subr.mxu0 0.0
    %2874 = vmatpush1.msra.mxu0 0.0
    %2875 = vmatprep.subr.mxu0 0.0
    %2876 = vmatpush1.msra.mxu0 0.0
    %2877 = vmatprep.subr.mxu0 0.0
    %2878 = vmatpush1.msra.mxu0 0.0
    %2879 = vmatprep.subr.mxu0 0.0
    %2880 = vmatpush1.msra.mxu0 0.0
    %2881 = vmatprep.subr.mxu0 0.0
    %2882 = vmatpush1.msra.mxu0 0.0
    %2883 = vmatprep.subr.mxu0 0.0
    %2884 = vmatpush1.msra.mxu0 0.0
    %2885 = vmatprep.subr.mxu0 0.0
    %2886 = vmatpush1.msra.mxu0 0.0
    %2887 = vmatprep.subr.mxu0 0.0
    %2888 = vmatpush1.msra.mxu0 0.0
    %2889 = vmatprep.subr.mxu0 0.0
    %2890 = vmatpush1.msra.mxu0 0.0
    %2891 = vmatprep.subr.mxu0 0.0
    %2892 = vmatpush1.msra.mxu0 0.0
    %2893 = vmatprep.subr.mxu0 0.0
    %2894 = vmatpush1.msra.mxu0 0.0
    %2895 = vmatprep.subr.mxu0 0.0
    %2896 = vmatpush1.msra.mxu0 0.0
    %2897 = vmatprep.subr.mxu0 0.0
    %2898 = vmatpush1.msra.mxu0 0.0
    %2899 = vmatprep.subr.mxu0 0.0
    %2900 = vmatpush1.msra.mxu0 0.0
    %2901 = vmatprep.subr.mxu0 0.0
    %2902 = vmatpush1.msra.mxu0 %v2859
    %2903 = vmatprep.subr.mxu0 0.0
    %2904 = vmatpush2.msra.mxu0 0.0
    %2905 = vmatprep.subr.mxu0 0.0
    %2906 = vmatpush2.msra.mxu0 0.0
    %2907 = vmatprep.subr.mxu0 0.0
    %2908 = vmatpush2.msra.mxu0 0.0
    %2909 = vmatprep.subr.mxu0 0.0
    %2910 = vmatpush2.msra.mxu0 0.0
    %2911 = vmatprep.subr.mxu0 0.0
    %2912 = vmatpush2.msra.mxu0 0.0
    %2913 = vmatprep.subr.mxu0 0.0
    %2914 = vmatpush2.msra.mxu0 0.0
    %2915 = vmatprep.subr.mxu0 0.0
    %2916 = vmatpush2.msra.mxu0 0.0
    %2917 = vmatprep.subr.mxu0 0.0
    %2918 = vmatpush2.msra.mxu0 0.0
    %2919 = vmatprep.subr.mxu0 0.0
    %2920 = vmatpush2.msra.mxu0 0.0
    %2921 = vmatprep.subr.mxu0 0.0
    %2922 = vmatpush2.msra.mxu0 0.0
    %2923 = vmatprep.subr.mxu0 0.0
    %2924 = vmatpush2.msra.mxu0 0.0
    %2925 = vmatprep.subr.mxu0 0.0
    %2926 = vmatpush2.msra.mxu0 0.0
    %2927 = vmatprep.subr.mxu0 0.0
    %2928 = vmatpush2.msra.mxu0 0.0
    %2929 = vmatprep.subr.mxu0 0.0
    %2930 = vmatpush2.msra.mxu0 0.0
    %2931 = vmatprep.subr.mxu0 0.0
    %2932 = vmatpush2.msra.mxu0 0.0
    %2933 = vmatprep.subr.mxu0 0.0
    %2934 = vmatpush2.msra.mxu0 0.0
    %2935 = vmatprep.mubr.f32.mxu0 0.0
    %2936 = vmatmul.mubr.f32.gmra.mxu0 %v2866
    %v2937 = vpop.f32.mrf.mxu0
    %v2938 = vadd.f32 0.0, %v2937
    %v2939 = vpop.f32.mrf.mxu0
    %2940 = vmatprep.mubr.f32.mxu0 0.0
    %2941 = vmatmul.mubr.f32.gmra.mxu0 %v2869
    %v2942 = vpop.f32.mrf.mxu0
    %v2943 = vadd.f32 0.0, %v2942
    %v2944 = vpop.f32.mrf.mxu0
    %2945 = vdwg.mxu0
    %v2946 = vadd.f32 %v2771, %v2938
    %v2947 = vadd.f32 %v2772, %v2943
    %s2948 = scalar_lea.vmem %s3, 1008
    %v2949 = vld [vmem:[%s2948] sm:$0xff]
    %v2950 = vld [vmem:[%s2948 + $0x8] sm:$0xff]
    %v2951 = vld [vmem:[%s2948 + $0x10] sm:$0xff]
    %v2952 = vld [vmem:[%s2948 + $0x18] sm:$0xff]
    %v2953 = vld [vmem:[%s2948 + $0x20] sm:$0xff]
    %v2954 = vld [vmem:[%s2948 + $0x28] sm:$0xff]
    %v2955 = vld [vmem:[%s2948 + $0x30] sm:$0xff]
    %v2956 = vld [vmem:[%s2948 + $0x38] sm:$0xff]
    %v2957 = vld [vmem:[%s2948 + $0x40] sm:$0xff]
    %v2958 = vld [vmem:[%s2948 + $0x48] sm:$0xff]
    %v2959 = vld [vmem:[%s2948 + $0x50] sm:$0xff]
    %v2960 = vld [vmem:[%s2948 + $0x58] sm:$0xff]
    %v2961 = vld [vmem:[%s2948 + $0x60] sm:$0xff]
    %v2962 = vld [vmem:[%s2948 + $0x68] sm:$0xff]
    %v2963 = vld [vmem:[%s2948 + $0x70] sm:$0xff]
    %v2964 = vld [vmem:[%s2948 + $0x78] sm:$0xff]
    %v2965 = vld [vmem:[%s2948 + $0x80] sm:$0xff]
    %v2966 = vld [vmem:[%s2948 + $0x88] sm:$0xff]
    %2967 = vmatprep.subr.mxu0 0.0
    %2968 = vmatpush1.msra.mxu0 %v2964
    %2969 = vmatprep.subr.mxu0 0.0
    %2970 = vmatpush1.msra.mxu0 %v2963
    %2971 = vmatprep.subr.mxu0 0.0
    %2972 = vmatpush1.msra.mxu0 %v2962
    %2973 = vmatprep.subr.mxu0 0.0
    %2974 = vmatpush1.msra.mxu0 %v2961
    %2975 = vmatprep.subr.mxu0 0.0
    %2976 = vmatpush1.msra.mxu0 %v2960
    %2977 = vmatprep.subr.mxu0 0.0
    %2978 = vmatpush1.msra.mxu0 %v2959
    %2979 = vmatprep.subr.mxu0 0.0
    %2980 = vmatpush1.msra.mxu0 %v2958
    %2981 = vmatprep.subr.mxu0 0.0
    %2982 = vmatpush1.msra.mxu0 %v2957
    %2983 = vmatprep.subr.mxu0 0.0
    %2984 = vmatpush1.msra.mxu0 %v2956
    %2985 = vmatprep.subr.mxu0 0.0
    %2986 = vmatpush1.msra.mxu0 %v2955
    %2987 = vmatprep.subr.mxu0 0.0
    %2988 = vmatpush1.msra.mxu0 %v2954
    %2989 = vmatprep.subr.mxu0 0.0
    %2990 = vmatpush1.msra.mxu0 %v2953
    %2991 = vmatprep.subr.mxu0 0.0
    %2992 = vmatpush1.msra.mxu0 %v2952
    %2993 = vmatprep.subr.mxu0 0.0
    %2994 = vmatpush1.msra.mxu0 %v2951
    %2995 = vmatprep.subr.mxu0 0.0
    %2996 = vmatpush1.msra.mxu0 %v2950
    %2997 = vmatprep.subr.mxu0 0.0
    %2998 = vmatpush1.msra.mxu0 %v2949
    %2999 = vmatprep.subr.mxu0 0.0
    %3000 = vmatpush2.msra.mxu0 0.0
    %3001 = vmatprep.subr.mxu0 0.0
    %3002 = vmatpush2.msra.mxu0 0.0
    %3003 = vmatprep.subr.mxu0 0.0
    %3004 = vmatpush2.msra.mxu0 0.0
    %3005 = vmatprep.subr.mxu0 0.0
    %3006 = vmatpush2.msra.mxu0 0.0
    %3007 = vmatprep.subr.mxu0 0.0
    %3008 = vmatpush2.msra.mxu0 0.0
    %3009 = vmatprep.subr.mxu0 0.0
    %3010 = vmatpush2.msra.mxu0 0.0
    %3011 = vmatprep.subr.mxu0 0.0
    %3012 = vmatpush2.msra.mxu0 0.0
    %3013 = vmatprep.subr.mxu0 0.0
    %3014 = vmatpush2.msra.mxu0 0.0
    %3015 = vmatprep.subr.mxu0 0.0
    %3016 = vmatpush2.msra.mxu0 0.0
    %3017 = vmatprep.subr.mxu0 0.0
    %3018 = vmatpush2.msra.mxu0 0.0
    %3019 = vmatprep.subr.mxu0 0.0
    %3020 = vmatpush2.msra.mxu0 0.0
    %3021 = vmatprep.subr.mxu0 0.0
    %3022 = vmatpush2.msra.mxu0 0.0
    %3023 = vmatprep.subr.mxu0 0.0
    %3024 = vmatpush2.msra.mxu0 0.0
    %3025 = vmatprep.subr.mxu0 0.0
    %3026 = vmatpush2.msra.mxu0 0.0
    %3027 = vmatprep.subr.mxu0 0.0
    %3028 = vmatpush2.msra.mxu0 %v2966
    %3029 = vmatprep.subr.mxu0 0.0
    %3030 = vmatpush2.msra.mxu0 %v2965
    %3031 = vmatprep.mubr.f32.mxu0 %v1744
    %3032 = vmatmul.mubr.f32.gmra.mxu0 %v1722
    %v3033 = vpop.f32.mrf.mxu0
    %v3034 = vadd.f32 0.0, %v3033
    %v3035 = vpop.f32.mrf.mxu0
    %3036 = vdwg.mxu0
    %s3037 = scalar_lea.vmem %s4, 112
    %v3038 = vld [vmem:[%s3037] sm:$0xff]
    %v3039 = vld [vmem:[%s3037 + $0x8] sm:$0xff]
    %v3041 = vsel %vm1910, %v3038, 0
    %v3044 = vsel %vm1910, %v3039, 0
    %3046 = vmatprep.subr.mxu0 0.0
    %3047 = vmatpush1.msra.mxu0 0.0
    %3048 = vmatprep.subr.mxu0 0.0
    %3049 = vmatpush1.msra.mxu0 0.0
    %3050 = vmatprep.subr.mxu0 0.0
    %3051 = vmatpush1.msra.mxu0 0.0
    %3052 = vmatprep.subr.mxu0 0.0
    %3053 = vmatpush1.msra.mxu0 0.0
    %3054 = vmatprep.subr.mxu0 0.0
    %3055 = vmatpush1.msra.mxu0 0.0
    %3056 = vmatprep.subr.mxu0 0.0
    %3057 = vmatpush1.msra.mxu0 0.0
    %3058 = vmatprep.subr.mxu0 0.0
    %3059 = vmatpush1.msra.mxu0 0.0
    %3060 = vmatprep.subr.mxu0 0.0
    %3061 = vmatpush1.msra.mxu0 0.0
    %3062 = vmatprep.subr.mxu0 0.0
    %3063 = vmatpush1.msra.mxu0 0.0
    %3064 = vmatprep.subr.mxu0 0.0
    %3065 = vmatpush1.msra.mxu0 0.0
    %3066 = vmatprep.subr.mxu0 0.0
    %3067 = vmatpush1.msra.mxu0 0.0
    %3068 = vmatprep.subr.mxu0 0.0
    %3069 = vmatpush1.msra.mxu0 0.0
    %3070 = vmatprep.subr.mxu0 0.0
    %3071 = vmatpush1.msra.mxu0 0.0
    %3072 = vmatprep.subr.mxu0 0.0
    %3073 = vmatpush1.msra.mxu0 0.0
    %3074 = vmatprep.subr.mxu0 0.0
    %3075 = vmatpush1.msra.mxu0 0.0
    %3076 = vmatprep.subr.mxu0 0.0
    %3077 = vmatpush1.msra.mxu0 %v3034
    %3078 = vmatprep.subr.mxu0 0.0
    %3079 = vmatpush2.msra.mxu0 0.0
    %3080 = vmatprep.subr.mxu0 0.0
    %3081 = vmatpush2.msra.mxu0 0.0
    %3082 = vmatprep.subr.mxu0 0.0
    %3083 = vmatpush2.msra.mxu0 0.0
    %3084 = vmatprep.subr.mxu0 0.0
    %3085 = vmatpush2.msra.mxu0 0.0
    %3086 = vmatprep.subr.mxu0 0.0
    %3087 = vmatpush2.msra.mxu0 0.0
    %3088 = vmatprep.subr.mxu0 0.0
    %3089 = vmatpush2.msra.mxu0 0.0
    %3090 = vmatprep.subr.mxu0 0.0
    %3091 = vmatpush2.msra.mxu0 0.0
    %3092 = vmatprep.subr.mxu0 0.0
    %3093 = vmatpush2.msra.mxu0 0.0
    %3094 = vmatprep.subr.mxu0 0.0
    %3095 = vmatpush2.msra.mxu0 0.0
    %3096 = vmatprep.subr.mxu0 0.0
    %3097 = vmatpush2.msra.mxu0 0.0
    %3098 = vmatprep.subr.mxu0 0.0
    %3099 = vmatpush2.msra.mxu0 0.0
    %3100 = vmatprep.subr.mxu0 0.0
    %3101 = vmatpush2.msra.mxu0 0.0
    %3102 = vmatprep.subr.mxu0 0.0
    %3103 = vmatpush2.msra.mxu0 0.0
    %3104 = vmatprep.subr.mxu0 0.0
    %3105 = vmatpush2.msra.mxu0 0.0
    %3106 = vmatprep.subr.mxu0 0.0
    %3107 = vmatpush2.msra.mxu0 0.0
    %3108 = vmatprep.subr.mxu0 0.0
    %3109 = vmatpush2.msra.mxu0 0.0
    %3110 = vmatprep.mubr.f32.mxu0 0.0
    %3111 = vmatmul.mubr.f32.gmra.mxu0 %v3041
    %v3112 = vpop.f32.mrf.mxu0
    %v3113 = vadd.f32 0.0, %v3112
    %v3114 = vpop.f32.mrf.mxu0
    %3115 = vmatprep.mubr.f32.mxu0 0.0
    %3116 = vmatmul.mubr.f32.gmra.mxu0 %v3044
    %v3117 = vpop.f32.mrf.mxu0
    %v3118 = vadd.f32 0.0, %v3117
    %v3119 = vpop.f32.mrf.mxu0
    %3120 = vdwg.mxu0
    %v3121 = vadd.f32 %v2946, %v3113
    %v3122 = vadd.f32 %v2947, %v3118
    %s3123 = scalar_lea.vmem %s3, 1152
    %v3124 = vld [vmem:[%s3123] sm:$0xff]
    %v3125 = vld [vmem:[%s3123 + $0x8] sm:$0xff]
    %v3126 = vld [vmem:[%s3123 + $0x10] sm:$0xff]
    %v3127 = vld [vmem:[%s3123 + $0x18] sm:$0xff]
    %v3128 = vld [vmem:[%s3123 + $0x20] sm:$0xff]
    %v3129 = vld [vmem:[%s3123 + $0x28] sm:$0xff]
    %v3130 = vld [vmem:[%s3123 + $0x30] sm:$0xff]
    %v3131 = vld [vmem:[%s3123 + $0x38] sm:$0xff]
    %v3132 = vld [vmem:[%s3123 + $0x40] sm:$0xff]
    %v3133 = vld [vmem:[%s3123 + $0x48] sm:$0xff]
    %v3134 = vld [vmem:[%s3123 + $0x50] sm:$0xff]
    %v3135 = vld [vmem:[%s3123 + $0x58] sm:$0xff]
    %v3136 = vld [vmem:[%s3123 + $0x60] sm:$0xff]
    %v3137 = vld [vmem:[%s3123 + $0x68] sm:$0xff]
    %v3138 = vld [vmem:[%s3123 + $0x70] sm:$0xff]
    %v3139 = vld [vmem:[%s3123 + $0x78] sm:$0xff]
    %v3140 = vld [vmem:[%s3123 + $0x80] sm:$0xff]
    %v3141 = vld [vmem:[%s3123 + $0x88] sm:$0xff]
    %3142 = vmatprep.subr.mxu0 0.0
    %3143 = vmatpush1.msra.mxu0 %v3139
    %3144 = vmatprep.subr.mxu0 0.0
    %3145 = vmatpush1.msra.mxu0 %v3138
    %3146 = vmatprep.subr.mxu0 0.0
    %3147 = vmatpush1.msra.mxu0 %v3137
    %3148 = vmatprep.subr.mxu0 0.0
    %3149 = vmatpush1.msra.mxu0 %v3136
    %3150 = vmatprep.subr.mxu0 0.0
    %3151 = vmatpush1.msra.mxu0 %v3135
    %3152 = vmatprep.subr.mxu0 0.0
    %3153 = vmatpush1.msra.mxu0 %v3134
    %3154 = vmatprep.subr.mxu0 0.0
    %3155 = vmatpush1.msra.mxu0 %v3133
    %3156 = vmatprep.subr.mxu0 0.0
    %3157 = vmatpush1.msra.mxu0 %v3132
    %3158 = vmatprep.subr.mxu0 0.0
    %3159 = vmatpush1.msra.mxu0 %v3131
    %3160 = vmatprep.subr.mxu0 0.0
    %3161 = vmatpush1.msra.mxu0 %v3130
    %3162 = vmatprep.subr.mxu0 0.0
    %3163 = vmatpush1.msra.mxu0 %v3129
    %3164 = vmatprep.subr.mxu0 0.0
    %3165 = vmatpush1.msra.mxu0 %v3128
    %3166 = vmatprep.subr.mxu0 0.0
    %3167 = vmatpush1.msra.mxu0 %v3127
    %3168 = vmatprep.subr.mxu0 0.0
    %3169 = vmatpush1.msra.mxu0 %v3126
    %3170 = vmatprep.subr.mxu0 0.0
    %3171 = vmatpush1.msra.mxu0 %v3125
    %3172 = vmatprep.subr.mxu0 0.0
    %3173 = vmatpush1.msra.mxu0 %v3124
    %3174 = vmatprep.subr.mxu0 0.0
    %3175 = vmatpush2.msra.mxu0 0.0
    %3176 = vmatprep.subr.mxu0 0.0
    %3177 = vmatpush2.msra.mxu0 0.0
    %3178 = vmatprep.subr.mxu0 0.0
    %3179 = vmatpush2.msra.mxu0 0.0
    %3180 = vmatprep.subr.mxu0 0.0
    %3181 = vmatpush2.msra.mxu0 0.0
    %3182 = vmatprep.subr.mxu0 0.0
    %3183 = vmatpush2.msra.mxu0 0.0
    %3184 = vmatprep.subr.mxu0 0.0
    %3185 = vmatpush2.msra.mxu0 0.0
    %3186 = vmatprep.subr.mxu0 0.0
    %3187 = vmatpush2.msra.mxu0 0.0
    %3188 = vmatprep.subr.mxu0 0.0
    %3189 = vmatpush2.msra.mxu0 0.0
    %3190 = vmatprep.subr.mxu0 0.0
    %3191 = vmatpush2.msra.mxu0 0.0
    %3192 = vmatprep.subr.mxu0 0.0
    %3193 = vmatpush2.msra.mxu0 0.0
    %3194 = vmatprep.subr.mxu0 0.0
    %3195 = vmatpush2.msra.mxu0 0.0
    %3196 = vmatprep.subr.mxu0 0.0
    %3197 = vmatpush2.msra.mxu0 0.0
    %3198 = vmatprep.subr.mxu0 0.0
    %3199 = vmatpush2.msra.mxu0 0.0
    %3200 = vmatprep.subr.mxu0 0.0
    %3201 = vmatpush2.msra.mxu0 0.0
    %3202 = vmatprep.subr.mxu0 0.0
    %3203 = vmatpush2.msra.mxu0 %v3141
    %3204 = vmatprep.subr.mxu0 0.0
    %3205 = vmatpush2.msra.mxu0 %v3140
    %3206 = vmatprep.mubr.f32.mxu0 %v1744
    %3207 = vmatmul.mubr.f32.gmra.mxu0 %v1722
    %v3208 = vpop.f32.mrf.mxu0
    %v3209 = vadd.f32 0.0, %v3208
    %v3210 = vpop.f32.mrf.mxu0
    %3211 = vdwg.mxu0
    %s3212 = scalar_lea.vmem %s4, 128
    %v3213 = vld [vmem:[%s3212] sm:$0xff]
    %v3214 = vld [vmem:[%s3212 + $0x8] sm:$0xff]
    %v3216 = vsel %vm1910, %v3213, 0
    %v3219 = vsel %vm1910, %v3214, 0
    %3221 = vmatprep.subr.mxu0 0.0
    %3222 = vmatpush1.msra.mxu0 0.0
    %3223 = vmatprep.subr.mxu0 0.0
    %3224 = vmatpush1.msra.mxu0 0.0
    %3225 = vmatprep.subr.mxu0 0.0
    %3226 = vmatpush1.msra.mxu0 0.0
    %3227 = vmatprep.subr.mxu0 0.0
    %3228 = vmatpush1.msra.mxu0 0.0
    %3229 = vmatprep.subr.mxu0 0.0
    %3230 = vmatpush1.msra.mxu0 0.0
    %3231 = vmatprep.subr.mxu0 0.0
    %3232 = vmatpush1.msra.mxu0 0.0
    %3233 = vmatprep.subr.mxu0 0.0
    %3234 = vmatpush1.msra.mxu0 0.0
    %3235 = vmatprep.subr.mxu0 0.0
    %3236 = vmatpush1.msra.mxu0 0.0
    %3237 = vmatprep.subr.mxu0 0.0
    %3238 = vmatpush1.msra.mxu0 0.0
    %3239 = vmatprep.subr.mxu0 0.0
    %3240 = vmatpush1.msra.mxu0 0.0
    %3241 = vmatprep.subr.mxu0 0.0
    %3242 = vmatpush1.msra.mxu0 0.0
    %3243 = vmatprep.subr.mxu0 0.0
    %3244 = vmatpush1.msra.mxu0 0.0
    %3245 = vmatprep.subr.mxu0 0.0
    %3246 = vmatpush1.msra.mxu0 0.0
    %3247 = vmatprep.subr.mxu0 0.0
    %3248 = vmatpush1.msra.mxu0 0.0
    %3249 = vmatprep.subr.mxu0 0.0
    %3250 = vmatpush1.msra.mxu0 0.0
    %3251 = vmatprep.subr.mxu0 0.0
    %3252 = vmatpush1.msra.mxu0 %v3209
    %3253 = vmatprep.subr.mxu0 0.0
    %3254 = vmatpush2.msra.mxu0 0.0
    %3255 = vmatprep.subr.mxu0 0.0
    %3256 = vmatpush2.msra.mxu0 0.0
    %3257 = vmatprep.subr.mxu0 0.0
    %3258 = vmatpush2.msra.mxu0 0.0
    %3259 = vmatprep.subr.mxu0 0.0
    %3260 = vmatpush2.msra.mxu0 0.0
    %3261 = vmatprep.subr.mxu0 0.0
    %3262 = vmatpush2.msra.mxu0 0.0
    %3263 = vmatprep.subr.mxu0 0.0
    %3264 = vmatpush2.msra.mxu0 0.0
    %3265 = vmatprep.subr.mxu0 0.0
    %3266 = vmatpush2.msra.mxu0 0.0
    %3267 = vmatprep.subr.mxu0 0.0
    %3268 = vmatpush2.msra.mxu0 0.0
    %3269 = vmatprep.subr.mxu0 0.0
    %3270 = vmatpush2.msra.mxu0 0.0
    %3271 = vmatprep.subr.mxu0 0.0
    %3272 = vmatpush2.msra.mxu0 0.0
    %3273 = vmatprep.subr.mxu0 0.0
    %3274 = vmatpush2.msra.mxu0 0.0
    %3275 = vmatprep.subr.mxu0 0.0
    %3276 = vmatpush2.msra.mxu0 0.0
    %3277 = vmatprep.subr.mxu0 0.0
    %3278 = vmatpush2.msra.mxu0 0.0
    %3279 = vmatprep.subr.mxu0 0.0
    %3280 = vmatpush2.msra.mxu0 0.0
    %3281 = vmatprep.subr.mxu0 0.0
    %3282 = vmatpush2.msra.mxu0 0.0
    %3283 = vmatprep.subr.mxu0 0.0
    %3284 = vmatpush2.msra.mxu0 0.0
    %3285 = vmatprep.mubr.f32.mxu0 0.0
    %3286 = vmatmul.mubr.f32.gmra.mxu0 %v3216
    %v3287 = vpop.f32.mrf.mxu0
    %v3288 = vadd.f32 0.0, %v3287
    %v3289 = vpop.f32.mrf.mxu0
    %3290 = vmatprep.mubr.f32.mxu0 0.0
    %3291 = vmatmul.mubr.f32.gmra.mxu0 %v3219
    %v3292 = vpop.f32.mrf.mxu0
    %v3293 = vadd.f32 0.0, %v3292
    %v3294 = vpop.f32.mrf.mxu0
    %3295 = vdwg.mxu0
    %v3296 = vadd.f32 %v3121, %v3288
    %v3297 = vadd.f32 %v3122, %v3293
    %s3298 = scalar_lea.vmem %s3, 1296
    %v3299 = vld [vmem:[%s3298] sm:$0xff]
    %v3300 = vld [vmem:[%s3298 + $0x8] sm:$0xff]
    %v3301 = vld [vmem:[%s3298 + $0x10] sm:$0xff]
    %v3302 = vld [vmem:[%s3298 + $0x18] sm:$0xff]
    %v3303 = vld [vmem:[%s3298 + $0x20] sm:$0xff]
    %v3304 = vld [vmem:[%s3298 + $0x28] sm:$0xff]
    %v3305 = vld [vmem:[%s3298 + $0x30] sm:$0xff]
    %v3306 = vld [vmem:[%s3298 + $0x38] sm:$0xff]
    %v3307 = vld [vmem:[%s3298 + $0x40] sm:$0xff]
    %v3308 = vld [vmem:[%s3298 + $0x48] sm:$0xff]
    %v3309 = vld [vmem:[%s3298 + $0x50] sm:$0xff]
    %v3310 = vld [vmem:[%s3298 + $0x58] sm:$0xff]
    %v3311 = vld [vmem:[%s3298 + $0x60] sm:$0xff]
    %v3312 = vld [vmem:[%s3298 + $0x68] sm:$0xff]
    %v3313 = vld [vmem:[%s3298 + $0x70] sm:$0xff]
    %v3314 = vld [vmem:[%s3298 + $0x78] sm:$0xff]
    %v3315 = vld [vmem:[%s3298 + $0x80] sm:$0xff]
    %v3316 = vld [vmem:[%s3298 + $0x88] sm:$0xff]
    %3317 = vmatprep.subr.mxu0 0.0
    %3318 = vmatpush1.msra.mxu0 %v3314
    %3319 = vmatprep.subr.mxu0 0.0
    %3320 = vmatpush1.msra.mxu0 %v3313
    %3321 = vmatprep.subr.mxu0 0.0
    %3322 = vmatpush1.msra.mxu0 %v3312
    %3323 = vmatprep.subr.mxu0 0.0
    %3324 = vmatpush1.msra.mxu0 %v3311
    %3325 = vmatprep.subr.mxu0 0.0
    %3326 = vmatpush1.msra.mxu0 %v3310
    %3327 = vmatprep.subr.mxu0 0.0
    %3328 = vmatpush1.msra.mxu0 %v3309
    %3329 = vmatprep.subr.mxu0 0.0
    %3330 = vmatpush1.msra.mxu0 %v3308
    %3331 = vmatprep.subr.mxu0 0.0
    %3332 = vmatpush1.msra.mxu0 %v3307
    %3333 = vmatprep.subr.mxu0 0.0
    %3334 = vmatpush1.msra.mxu0 %v3306
    %3335 = vmatprep.subr.mxu0 0.0
    %3336 = vmatpush1.msra.mxu0 %v3305
    %3337 = vmatprep.subr.mxu0 0.0
    %3338 = vmatpush1.msra.mxu0 %v3304
    %3339 = vmatprep.subr.mxu0 0.0
    %3340 = vmatpush1.msra.mxu0 %v3303
    %3341 = vmatprep.subr.mxu0 0.0
    %3342 = vmatpush1.msra.mxu0 %v3302
    %3343 = vmatprep.subr.mxu0 0.0
    %3344 = vmatpush1.msra.mxu0 %v3301
    %3345 = vmatprep.subr.mxu0 0.0
    %3346 = vmatpush1.msra.mxu0 %v3300
    %3347 = vmatprep.subr.mxu0 0.0
    %3348 = vmatpush1.msra.mxu0 %v3299
    %3349 = vmatprep.subr.mxu0 0.0
    %3350 = vmatpush2.msra.mxu0 0.0
    %3351 = vmatprep.subr.mxu0 0.0
    %3352 = vmatpush2.msra.mxu0 0.0
    %3353 = vmatprep.subr.mxu0 0.0
    %3354 = vmatpush2.msra.mxu0 0.0
    %3355 = vmatprep.subr.mxu0 0.0
    %3356 = vmatpush2.msra.mxu0 0.0
    %3357 = vmatprep.subr.mxu0 0.0
    %3358 = vmatpush2.msra.mxu0 0.0
    %3359 = vmatprep.subr.mxu0 0.0
    %3360 = vmatpush2.msra.mxu0 0.0
    %3361 = vmatprep.subr.mxu0 0.0
    %3362 = vmatpush2.msra.mxu0 0.0
    %3363 = vmatprep.subr.mxu0 0.0
    %3364 = vmatpush2.msra.mxu0 0.0
    %3365 = vmatprep.subr.mxu0 0.0
    %3366 = vmatpush2.msra.mxu0 0.0
    %3367 = vmatprep.subr.mxu0 0.0
    %3368 = vmatpush2.msra.mxu0 0.0
    %3369 = vmatprep.subr.mxu0 0.0
    %3370 = vmatpush2.msra.mxu0 0.0
    %3371 = vmatprep.subr.mxu0 0.0
    %3372 = vmatpush2.msra.mxu0 0.0
    %3373 = vmatprep.subr.mxu0 0.0
    %3374 = vmatpush2.msra.mxu0 0.0
    %3375 = vmatprep.subr.mxu0 0.0
    %3376 = vmatpush2.msra.mxu0 0.0
    %3377 = vmatprep.subr.mxu0 0.0
    %3378 = vmatpush2.msra.mxu0 %v3316
    %3379 = vmatprep.subr.mxu0 0.0
    %3380 = vmatpush2.msra.mxu0 %v3315
    %3381 = vmatprep.mubr.f32.mxu0 %v1744
    %3382 = vmatmul.mubr.f32.gmra.mxu0 %v1722
    %v3383 = vpop.f32.mrf.mxu0
    %v3384 = vadd.f32 0.0, %v3383
    %v3385 = vpop.f32.mrf.mxu0
    %3386 = vdwg.mxu0
    %s3387 = scalar_lea.vmem %s4, 144
    %v3388 = vld [vmem:[%s3387] sm:$0xff]
    %v3389 = vld [vmem:[%s3387 + $0x8] sm:$0xff]
    %v3391 = vsel %vm1910, %v3388, 0
    %v3394 = vsel %vm1910, %v3389, 0
    %3396 = vmatprep.subr.mxu0 0.0
    %3397 = vmatpush1.msra.mxu0 0.0
    %3398 = vmatprep.subr.mxu0 0.0
    %3399 = vmatpush1.msra.mxu0 0.0
    %3400 = vmatprep.subr.mxu0 0.0
    %3401 = vmatpush1.msra.mxu0 0.0
    %3402 = vmatprep.subr.mxu0 0.0
    %3403 = vmatpush1.msra.mxu0 0.0
    %3404 = vmatprep.subr.mxu0 0.0
    %3405 = vmatpush1.msra.mxu0 0.0
    %3406 = vmatprep.subr.mxu0 0.0
    %3407 = vmatpush1.msra.mxu0 0.0
    %3408 = vmatprep.subr.mxu0 0.0
    %3409 = vmatpush1.msra.mxu0 0.0
    %3410 = vmatprep.subr.mxu0 0.0
    %3411 = vmatpush1.msra.mxu0 0.0
    %3412 = vmatprep.subr.mxu0 0.0
    %3413 = vmatpush1.msra.mxu0 0.0
    %3414 = vmatprep.subr.mxu0 0.0
    %3415 = vmatpush1.msra.mxu0 0.0
    %3416 = vmatprep.subr.mxu0 0.0
    %3417 = vmatpush1.msra.mxu0 0.0
    %3418 = vmatprep.subr.mxu0 0.0
    %3419 = vmatpush1.msra.mxu0 0.0
    %3420 = vmatprep.subr.mxu0 0.0
    %3421 = vmatpush1.msra.mxu0 0.0
    %3422 = vmatprep.subr.mxu0 0.0
    %3423 = vmatpush1.msra.mxu0 0.0
    %3424 = vmatprep.subr.mxu0 0.0
    %3425 = vmatpush1.msra.mxu0 0.0
    %3426 = vmatprep.subr.mxu0 0.0
    %3427 = vmatpush1.msra.mxu0 %v3384
    %3428 = vmatprep.subr.mxu0 0.0
    %3429 = vmatpush2.msra.mxu0 0.0
    %3430 = vmatprep.subr.mxu0 0.0
    %3431 = vmatpush2.msra.mxu0 0.0
    %3432 = vmatprep.subr.mxu0 0.0
    %3433 = vmatpush2.msra.mxu0 0.0
    %3434 = vmatprep.subr.mxu0 0.0
    %3435 = vmatpush2.msra.mxu0 0.0
    %3436 = vmatprep.subr.mxu0 0.0
    %3437 = vmatpush2.msra.mxu0 0.0
    %3438 = vmatprep.subr.mxu0 0.0
    %3439 = vmatpush2.msra.mxu0 0.0
    %3440 = vmatprep.subr.mxu0 0.0
    %3441 = vmatpush2.msra.mxu0 0.0
    %3442 = vmatprep.subr.mxu0 0.0
    %3443 = vmatpush2.msra.mxu0 0.0
    %3444 = vmatprep.subr.mxu0 0.0
    %3445 = vmatpush2.msra.mxu0 0.0
    %3446 = vmatprep.subr.mxu0 0.0
    %3447 = vmatpush2.msra.mxu0 0.0
    %3448 = vmatprep.subr.mxu0 0.0
    %3449 = vmatpush2.msra.mxu0 0.0
    %3450 = vmatprep.subr.mxu0 0.0
    %3451 = vmatpush2.msra.mxu0 0.0
    %3452 = vmatprep.subr.mxu0 0.0
    %3453 = vmatpush2.msra.mxu0 0.0
    %3454 = vmatprep.subr.mxu0 0.0
    %3455 = vmatpush2.msra.mxu0 0.0
    %3456 = vmatprep.subr.mxu0 0.0
    %3457 = vmatpush2.msra.mxu0 0.0
    %3458 = vmatprep.subr.mxu0 0.0
    %3459 = vmatpush2.msra.mxu0 0.0
    %3460 = vmatprep.mubr.f32.mxu0 0.0
    %3461 = vmatmul.mubr.f32.gmra.mxu0 %v3391
    %v3462 = vpop.f32.mrf.mxu0
    %v3463 = vadd.f32 0.0, %v3462
    %v3464 = vpop.f32.mrf.mxu0
    %3465 = vmatprep.mubr.f32.mxu0 0.0
    %3466 = vmatmul.mubr.f32.gmra.mxu0 %v3394
    %v3467 = vpop.f32.mrf.mxu0
    %v3468 = vadd.f32 0.0, %v3467
    %v3469 = vpop.f32.mrf.mxu0
    %3470 = vdwg.mxu0
    %v3471 = vadd.f32 %v3296, %v3463
    %v3472 = vadd.f32 %v3297, %v3468
    %s3473 = scalar_lea.vmem %s3, 1440
    %v3474 = vld [vmem:[%s3473] sm:$0xff]
    %v3475 = vld [vmem:[%s3473 + $0x8] sm:$0xff]
    %v3476 = vld [vmem:[%s3473 + $0x10] sm:$0xff]
    %v3477 = vld [vmem:[%s3473 + $0x18] sm:$0xff]
    %v3478 = vld [vmem:[%s3473 + $0x20] sm:$0xff]
    %v3479 = vld [vmem:[%s3473 + $0x28] sm:$0xff]
    %v3480 = vld [vmem:[%s3473 + $0x30] sm:$0xff]
    %v3481 = vld [vmem:[%s3473 + $0x38] sm:$0xff]
    %v3482 = vld [vmem:[%s3473 + $0x40] sm:$0xff]
    %v3483 = vld [vmem:[%s3473 + $0x48] sm:$0xff]
    %v3484 = vld [vmem:[%s3473 + $0x50] sm:$0xff]
    %v3485 = vld [vmem:[%s3473 + $0x58] sm:$0xff]
    %v3486 = vld [vmem:[%s3473 + $0x60] sm:$0xff]
    %v3487 = vld [vmem:[%s3473 + $0x68] sm:$0xff]
    %v3488 = vld [vmem:[%s3473 + $0x70] sm:$0xff]
    %v3489 = vld [vmem:[%s3473 + $0x78] sm:$0xff]
    %v3490 = vld [vmem:[%s3473 + $0x80] sm:$0xff]
    %v3491 = vld [vmem:[%s3473 + $0x88] sm:$0xff]
    %3492 = vmatprep.subr.mxu0 0.0
    %3493 = vmatpush1.msra.mxu0 %v3489
    %3494 = vmatprep.subr.mxu0 0.0
    %3495 = vmatpush1.msra.mxu0 %v3488
    %3496 = vmatprep.subr.mxu0 0.0
    %3497 = vmatpush1.msra.mxu0 %v3487
    %3498 = vmatprep.subr.mxu0 0.0
    %3499 = vmatpush1.msra.mxu0 %v3486
    %3500 = vmatprep.subr.mxu0 0.0
    %3501 = vmatpush1.msra.mxu0 %v3485
    %3502 = vmatprep.subr.mxu0 0.0
    %3503 = vmatpush1.msra.mxu0 %v3484
    %3504 = vmatprep.subr.mxu0 0.0
    %3505 = vmatpush1.msra.mxu0 %v3483
    %3506 = vmatprep.subr.mxu0 0.0
    %3507 = vmatpush1.msra.mxu0 %v3482
    %3508 = vmatprep.subr.mxu0 0.0
    %3509 = vmatpush1.msra.mxu0 %v3481
    %3510 = vmatprep.subr.mxu0 0.0
    %3511 = vmatpush1.msra.mxu0 %v3480
    %3512 = vmatprep.subr.mxu0 0.0
    %3513 = vmatpush1.msra.mxu0 %v3479
    %3514 = vmatprep.subr.mxu0 0.0
    %3515 = vmatpush1.msra.mxu0 %v3478
    %3516 = vmatprep.subr.mxu0 0.0
    %3517 = vmatpush1.msra.mxu0 %v3477
    %3518 = vmatprep.subr.mxu0 0.0
    %3519 = vmatpush1.msra.mxu0 %v3476
    %3520 = vmatprep.subr.mxu0 0.0
    %3521 = vmatpush1.msra.mxu0 %v3475
    %3522 = vmatprep.subr.mxu0 0.0
    %3523 = vmatpush1.msra.mxu0 %v3474
    %3524 = vmatprep.subr.mxu0 0.0
    %3525 = vmatpush2.msra.mxu0 0.0
    %3526 = vmatprep.subr.mxu0 0.0
    %3527 = vmatpush2.msra.mxu0 0.0
    %3528 = vmatprep.subr.mxu0 0.0
    %3529 = vmatpush2.msra.mxu0 0.0
    %3530 = vmatprep.subr.mxu0 0.0
    %3531 = vmatpush2.msra.mxu0 0.0
    %3532 = vmatprep.subr.mxu0 0.0
    %3533 = vmatpush2.msra.mxu0 0.0
    %3534 = vmatprep.subr.mxu0 0.0
    %3535 = vmatpush2.msra.mxu0 0.0
    %3536 = vmatprep.subr.mxu0 0.0
    %3537 = vmatpush2.msra.mxu0 0.0
    %3538 = vmatprep.subr.mxu0 0.0
    %3539 = vmatpush2.msra.mxu0 0.0
    %3540 = vmatprep.subr.mxu0 0.0
    %3541 = vmatpush2.msra.mxu0 0.0
    %3542 = vmatprep.subr.mxu0 0.0
    %3543 = vmatpush2.msra.mxu0 0.0
    %3544 = vmatprep.subr.mxu0 0.0
    %3545 = vmatpush2.msra.mxu0 0.0
    %3546 = vmatprep.subr.mxu0 0.0
    %3547 = vmatpush2.msra.mxu0 0.0
    %3548 = vmatprep.subr.mxu0 0.0
    %3549 = vmatpush2.msra.mxu0 0.0
    %3550 = vmatprep.subr.mxu0 0.0
    %3551 = vmatpush2.msra.mxu0 0.0
    %3552 = vmatprep.subr.mxu0 0.0
    %3553 = vmatpush2.msra.mxu0 %v3491
    %3554 = vmatprep.subr.mxu0 0.0
    %3555 = vmatpush2.msra.mxu0 %v3490
    %3556 = vmatprep.mubr.f32.mxu0 %v1744
    %3557 = vmatmul.mubr.f32.gmra.mxu0 %v1722
    %v3558 = vpop.f32.mrf.mxu0
    %v3559 = vadd.f32 0.0, %v3558
    %v3560 = vpop.f32.mrf.mxu0
    %3561 = vdwg.mxu0
    %s3562 = scalar_lea.vmem %s4, 160
    %v3563 = vld [vmem:[%s3562] sm:$0xff]
    %v3564 = vld [vmem:[%s3562 + $0x8] sm:$0xff]
    %v3566 = vsel %vm1910, %v3563, 0
    %v3569 = vsel %vm1910, %v3564, 0
    %3571 = vmatprep.subr.mxu0 0.0
    %3572 = vmatpush1.msra.mxu0 0.0
    %3573 = vmatprep.subr.mxu0 0.0
    %3574 = vmatpush1.msra.mxu0 0.0
    %3575 = vmatprep.subr.mxu0 0.0
    %3576 = vmatpush1.msra.mxu0 0.0
    %3577 = vmatprep.subr.mxu0 0.0
    %3578 = vmatpush1.msra.mxu0 0.0
    %3579 = vmatprep.subr.mxu0 0.0
    %3580 = vmatpush1.msra.mxu0 0.0
    %3581 = vmatprep.subr.mxu0 0.0
    %3582 = vmatpush1.msra.mxu0 0.0
    %3583 = vmatprep.subr.mxu0 0.0
    %3584 = vmatpush1.msra.mxu0 0.0
    %3585 = vmatprep.subr.mxu0 0.0
    %3586 = vmatpush1.msra.mxu0 0.0
    %3587 = vmatprep.subr.mxu0 0.0
    %3588 = vmatpush1.msra.mxu0 0.0
    %3589 = vmatprep.subr.mxu0 0.0
    %3590 = vmatpush1.msra.mxu0 0.0
    %3591 = vmatprep.subr.mxu0 0.0
    %3592 = vmatpush1.msra.mxu0 0.0
    %3593 = vmatprep.subr.mxu0 0.0
    %3594 = vmatpush1.msra.mxu0 0.0
    %3595 = vmatprep.subr.mxu0 0.0
    %3596 = vmatpush1.msra.mxu0 0.0
    %3597 = vmatprep.subr.mxu0 0.0
    %3598 = vmatpush1.msra.mxu0 0.0
    %3599 = vmatprep.subr.mxu0 0.0
    %3600 = vmatpush1.msra.mxu0 0.0
    %3601 = vmatprep.subr.mxu0 0.0
    %3602 = vmatpush1.msra.mxu0 %v3559
    %3603 = vmatprep.subr.mxu0 0.0
    %3604 = vmatpush2.msra.mxu0 0.0
    %3605 = vmatprep.subr.mxu0 0.0
    %3606 = vmatpush2.msra.mxu0 0.0
    %3607 = vmatprep.subr.mxu0 0.0
    %3608 = vmatpush2.msra.mxu0 0.0
    %3609 = vmatprep.subr.mxu0 0.0
    %3610 = vmatpush2.msra.mxu0 0.0
    %3611 = vmatprep.subr.mxu0 0.0
    %3612 = vmatpush2.msra.mxu0 0.0
    %3613 = vmatprep.subr.mxu0 0.0
    %3614 = vmatpush2.msra.mxu0 0.0
    %3615 = vmatprep.subr.mxu0 0.0
    %3616 = vmatpush2.msra.mxu0 0.0
    %3617 = vmatprep.subr.mxu0 0.0
    %3618 = vmatpush2.msra.mxu0 0.0
    %3619 = vmatprep.subr.mxu0 0.0
    %3620 = vmatpush2.msra.mxu0 0.0
    %3621 = vmatprep.subr.mxu0 0.0
    %3622 = vmatpush2.msra.mxu0 0.0
    %3623 = vmatprep.subr.mxu0 0.0
    %3624 = vmatpush2.msra.mxu0 0.0
    %3625 = vmatprep.subr.mxu0 0.0
    %3626 = vmatpush2.msra.mxu0 0.0
    %3627 = vmatprep.subr.mxu0 0.0
    %3628 = vmatpush2.msra.mxu0 0.0
    %3629 = vmatprep.subr.mxu0 0.0
    %3630 = vmatpush2.msra.mxu0 0.0
    %3631 = vmatprep.subr.mxu0 0.0
    %3632 = vmatpush2.msra.mxu0 0.0
    %3633 = vmatprep.subr.mxu0 0.0
    %3634 = vmatpush2.msra.mxu0 0.0
    %3635 = vmatprep.mubr.f32.mxu0 0.0
    %3636 = vmatmul.mubr.f32.gmra.mxu0 %v3566
    %v3637 = vpop.f32.mrf.mxu0
    %v3638 = vadd.f32 0.0, %v3637
    %v3639 = vpop.f32.mrf.mxu0
    %3640 = vmatprep.mubr.f32.mxu0 0.0
    %3641 = vmatmul.mubr.f32.gmra.mxu0 %v3569
    %v3642 = vpop.f32.mrf.mxu0
    %v3643 = vadd.f32 0.0, %v3642
    %v3644 = vpop.f32.mrf.mxu0
    %3645 = vdwg.mxu0
    %v3646 = vadd.f32 %v3471, %v3638
    %v3647 = vadd.f32 %v3472, %v3643
    %s3648 = scalar_lea.vmem %s3, 1584
    %v3649 = vld [vmem:[%s3648] sm:$0xff]
    %v3650 = vld [vmem:[%s3648 + $0x8] sm:$0xff]
    %v3651 = vld [vmem:[%s3648 + $0x10] sm:$0xff]
    %v3652 = vld [vmem:[%s3648 + $0x18] sm:$0xff]
    %v3653 = vld [vmem:[%s3648 + $0x20] sm:$0xff]
    %v3654 = vld [vmem:[%s3648 + $0x28] sm:$0xff]
    %v3655 = vld [vmem:[%s3648 + $0x30] sm:$0xff]
    %v3656 = vld [vmem:[%s3648 + $0x38] sm:$0xff]
    %v3657 = vld [vmem:[%s3648 + $0x40] sm:$0xff]
    %v3658 = vld [vmem:[%s3648 + $0x48] sm:$0xff]
    %v3659 = vld [vmem:[%s3648 + $0x50] sm:$0xff]
    %v3660 = vld [vmem:[%s3648 + $0x58] sm:$0xff]
    %v3661 = vld [vmem:[%s3648 + $0x60] sm:$0xff]
    %v3662 = vld [vmem:[%s3648 + $0x68] sm:$0xff]
    %v3663 = vld [vmem:[%s3648 + $0x70] sm:$0xff]
    %v3664 = vld [vmem:[%s3648 + $0x78] sm:$0xff]
    %v3665 = vld [vmem:[%s3648 + $0x80] sm:$0xff]
    %v3666 = vld [vmem:[%s3648 + $0x88] sm:$0xff]
    %3667 = vmatprep.subr.mxu0 0.0
    %3668 = vmatpush1.msra.mxu0 %v3664
    %3669 = vmatprep.subr.mxu0 0.0
    %3670 = vmatpush1.msra.mxu0 %v3663
    %3671 = vmatprep.subr.mxu0 0.0
    %3672 = vmatpush1.msra.mxu0 %v3662
    %3673 = vmatprep.subr.mxu0 0.0
    %3674 = vmatpush1.msra.mxu0 %v3661
    %3675 = vmatprep.subr.mxu0 0.0
    %3676 = vmatpush1.msra.mxu0 %v3660
    %3677 = vmatprep.subr.mxu0 0.0
    %3678 = vmatpush1.msra.mxu0 %v3659
    %3679 = vmatprep.subr.mxu0 0.0
    %3680 = vmatpush1.msra.mxu0 %v3658
    %3681 = vmatprep.subr.mxu0 0.0
    %3682 = vmatpush1.msra.mxu0 %v3657
    %3683 = vmatprep.subr.mxu0 0.0
    %3684 = vmatpush1.msra.mxu0 %v3656
    %3685 = vmatprep.subr.mxu0 0.0
    %3686 = vmatpush1.msra.mxu0 %v3655
    %3687 = vmatprep.subr.mxu0 0.0
    %3688 = vmatpush1.msra.mxu0 %v3654
    %3689 = vmatprep.subr.mxu0 0.0
    %3690 = vmatpush1.msra.mxu0 %v3653
    %3691 = vmatprep.subr.mxu0 0.0
    %3692 = vmatpush1.msra.mxu0 %v3652
    %3693 = vmatprep.subr.mxu0 0.0
    %3694 = vmatpush1.msra.mxu0 %v3651
    %3695 = vmatprep.subr.mxu0 0.0
    %3696 = vmatpush1.msra.mxu0 %v3650
    %3697 = vmatprep.subr.mxu0 0.0
    %3698 = vmatpush1.msra.mxu0 %v3649
    %3699 = vmatprep.subr.mxu0 0.0
    %3700 = vmatpush2.msra.mxu0 0.0
    %3701 = vmatprep.subr.mxu0 0.0
    %3702 = vmatpush2.msra.mxu0 0.0
    %3703 = vmatprep.subr.mxu0 0.0
    %3704 = vmatpush2.msra.mxu0 0.0
    %3705 = vmatprep.subr.mxu0 0.0
    %3706 = vmatpush2.msra.mxu0 0.0
    %3707 = vmatprep.subr.mxu0 0.0
    %3708 = vmatpush2.msra.mxu0 0.0
    %3709 = vmatprep.subr.mxu0 0.0
    %3710 = vmatpush2.msra.mxu0 0.0
    %3711 = vmatprep.subr.mxu0 0.0
    %3712 = vmatpush2.msra.mxu0 0.0
    %3713 = vmatprep.subr.mxu0 0.0
    %3714 = vmatpush2.msra.mxu0 0.0
    %3715 = vmatprep.subr.mxu0 0.0
    %3716 = vmatpush2.msra.mxu0 0.0
    %3717 = vmatprep.subr.mxu0 0.0
    %3718 = vmatpush2.msra.mxu0 0.0
    %3719 = vmatprep.subr.mxu0 0.0
    %3720 = vmatpush2.msra.mxu0 0.0
    %3721 = vmatprep.subr.mxu0 0.0
    %3722 = vmatpush2.msra.mxu0 0.0
    %3723 = vmatprep.subr.mxu0 0.0
    %3724 = vmatpush2.msra.mxu0 0.0
    %3725 = vmatprep.subr.mxu0 0.0
    %3726 = vmatpush2.msra.mxu0 0.0
    %3727 = vmatprep.subr.mxu0 0.0
    %3728 = vmatpush2.msra.mxu0 %v3666
    %3729 = vmatprep.subr.mxu0 0.0
    %3730 = vmatpush2.msra.mxu0 %v3665
    %3731 = vmatprep.mubr.f32.mxu0 %v1744
    %3732 = vmatmul.mubr.f32.gmra.mxu0 %v1722
    %v3733 = vpop.f32.mrf.mxu0
    %v3734 = vadd.f32 0.0, %v3733
    %v3735 = vpop.f32.mrf.mxu0
    %3736 = vdwg.mxu0
    %s3737 = scalar_lea.vmem %s4, 176
    %v3738 = vld [vmem:[%s3737] sm:$0xff]
    %v3739 = vld [vmem:[%s3737 + $0x8] sm:$0xff]
    %v3741 = vsel %vm1910, %v3738, 0
    %v3744 = vsel %vm1910, %v3739, 0
    %3746 = vmatprep.subr.mxu0 0.0
    %3747 = vmatpush1.msra.mxu0 0.0
    %3748 = vmatprep.subr.mxu0 0.0
    %3749 = vmatpush1.msra.mxu0 0.0
    %3750 = vmatprep.subr.mxu0 0.0
    %3751 = vmatpush1.msra.mxu0 0.0
    %3752 = vmatprep.subr.mxu0 0.0
    %3753 = vmatpush1.msra.mxu0 0.0
    %3754 = vmatprep.subr.mxu0 0.0
    %3755 = vmatpush1.msra.mxu0 0.0
    %3756 = vmatprep.subr.mxu0 0.0
    %3757 = vmatpush1.msra.mxu0 0.0
    %3758 = vmatprep.subr.mxu0 0.0
    %3759 = vmatpush1.msra.mxu0 0.0
    %3760 = vmatprep.subr.mxu0 0.0
    %3761 = vmatpush1.msra.mxu0 0.0
    %3762 = vmatprep.subr.mxu0 0.0
    %3763 = vmatpush1.msra.mxu0 0.0
    %3764 = vmatprep.subr.mxu0 0.0
    %3765 = vmatpush1.msra.mxu0 0.0
    %3766 = vmatprep.subr.mxu0 0.0
    %3767 = vmatpush1.msra.mxu0 0.0
    %3768 = vmatprep.subr.mxu0 0.0
    %3769 = vmatpush1.msra.mxu0 0.0
    %3770 = vmatprep.subr.mxu0 0.0
    %3771 = vmatpush1.msra.mxu0 0.0
    %3772 = vmatprep.subr.mxu0 0.0
    %3773 = vmatpush1.msra.mxu0 0.0
    %3774 = vmatprep.subr.mxu0 0.0
    %3775 = vmatpush1.msra.mxu0 0.0
    %3776 = vmatprep.subr.mxu0 0.0
    %3777 = vmatpush1.msra.mxu0 %v3734
    %3778 = vmatprep.subr.mxu0 0.0
    %3779 = vmatpush2.msra.mxu0 0.0
    %3780 = vmatprep.subr.mxu0 0.0
    %3781 = vmatpush2.msra.mxu0 0.0
    %3782 = vmatprep.subr.mxu0 0.0
    %3783 = vmatpush2.msra.mxu0 0.0
    %3784 = vmatprep.subr.mxu0 0.0
    %3785 = vmatpush2.msra.mxu0 0.0
    %3786 = vmatprep.subr.mxu0 0.0
    %3787 = vmatpush2.msra.mxu0 0.0
    %3788 = vmatprep.subr.mxu0 0.0
    %3789 = vmatpush2.msra.mxu0 0.0
    %3790 = vmatprep.subr.mxu0 0.0
    %3791 = vmatpush2.msra.mxu0 0.0
    %3792 = vmatprep.subr.mxu0 0.0
    %3793 = vmatpush2.msra.mxu0 0.0
    %3794 = vmatprep.subr.mxu0 0.0
    %3795 = vmatpush2.msra.mxu0 0.0
    %3796 = vmatprep.subr.mxu0 0.0
    %3797 = vmatpush2.msra.mxu0 0.0
    %3798 = vmatprep.subr.mxu0 0.0
    %3799 = vmatpush2.msra.mxu0 0.0
    %3800 = vmatprep.subr.mxu0 0.0
    %3801 = vmatpush2.msra.mxu0 0.0
    %3802 = vmatprep.subr.mxu0 0.0
    %3803 = vmatpush2.msra.mxu0 0.0
    %3804 = vmatprep.subr.mxu0 0.0
    %3805 = vmatpush2.msra.mxu0 0.0
    %3806 = vmatprep.subr.mxu0 0.0
    %3807 = vmatpush2.msra.mxu0 0.0
    %3808 = vmatprep.subr.mxu0 0.0
    %3809 = vmatpush2.msra.mxu0 0.0
    %3810 = vmatprep.mubr.f32.mxu0 0.0
    %3811 = vmatmul.mubr.f32.gmra.mxu0 %v3741
    %v3812 = vpop.f32.mrf.mxu0
    %v3813 = vadd.f32 0.0, %v3812
    %v3814 = vpop.f32.mrf.mxu0
    %3815 = vmatprep.mubr.f32.mxu0 0.0
    %3816 = vmatmul.mubr.f32.gmra.mxu0 %v3744
    %v3817 = vpop.f32.mrf.mxu0
    %v3818 = vadd.f32 0.0, %v3817
    %v3819 = vpop.f32.mrf.mxu0
    %3820 = vdwg.mxu0
    %v3821 = vadd.f32 %v3646, %v3813
    %v3822 = vadd.f32 %v3647, %v3818
    %s3823 = scalar_lea.vmem %s3, 1728
    %v3824 = vld [vmem:[%s3823] sm:$0xff]
    %v3825 = vld [vmem:[%s3823 + $0x8] sm:$0xff]
    %v3826 = vld [vmem:[%s3823 + $0x10] sm:$0xff]
    %v3827 = vld [vmem:[%s3823 + $0x18] sm:$0xff]
    %v3828 = vld [vmem:[%s3823 + $0x20] sm:$0xff]
    %v3829 = vld [vmem:[%s3823 + $0x28] sm:$0xff]
    %v3830 = vld [vmem:[%s3823 + $0x30] sm:$0xff]
    %v3831 = vld [vmem:[%s3823 + $0x38] sm:$0xff]
    %v3832 = vld [vmem:[%s3823 + $0x40] sm:$0xff]
    %v3833 = vld [vmem:[%s3823 + $0x48] sm:$0xff]
    %v3834 = vld [vmem:[%s3823 + $0x50] sm:$0xff]
    %v3835 = vld [vmem:[%s3823 + $0x58] sm:$0xff]
    %v3836 = vld [vmem:[%s3823 + $0x60] sm:$0xff]
    %v3837 = vld [vmem:[%s3823 + $0x68] sm:$0xff]
    %v3838 = vld [vmem:[%s3823 + $0x70] sm:$0xff]
    %v3839 = vld [vmem:[%s3823 + $0x78] sm:$0xff]
    %v3840 = vld [vmem:[%s3823 + $0x80] sm:$0xff]
    %v3841 = vld [vmem:[%s3823 + $0x88] sm:$0xff]
    %3842 = vmatprep.subr.mxu0 0.0
    %3843 = vmatpush1.msra.mxu0 %v3839
    %3844 = vmatprep.subr.mxu0 0.0
    %3845 = vmatpush1.msra.mxu0 %v3838
    %3846 = vmatprep.subr.mxu0 0.0
    %3847 = vmatpush1.msra.mxu0 %v3837
    %3848 = vmatprep.subr.mxu0 0.0
    %3849 = vmatpush1.msra.mxu0 %v3836
    %3850 = vmatprep.subr.mxu0 0.0
    %3851 = vmatpush1.msra.mxu0 %v3835
    %3852 = vmatprep.subr.mxu0 0.0
    %3853 = vmatpush1.msra.mxu0 %v3834
    %3854 = vmatprep.subr.mxu0 0.0
    %3855 = vmatpush1.msra.mxu0 %v3833
    %3856 = vmatprep.subr.mxu0 0.0
    %3857 = vmatpush1.msra.mxu0 %v3832
    %3858 = vmatprep.subr.mxu0 0.0
    %3859 = vmatpush1.msra.mxu0 %v3831
    %3860 = vmatprep.subr.mxu0 0.0
    %3861 = vmatpush1.msra.mxu0 %v3830
    %3862 = vmatprep.subr.mxu0 0.0
    %3863 = vmatpush1.msra.mxu0 %v3829
    %3864 = vmatprep.subr.mxu0 0.0
    %3865 = vmatpush1.msra.mxu0 %v3828
    %3866 = vmatprep.subr.mxu0 0.0
    %3867 = vmatpush1.msra.mxu0 %v3827
    %3868 = vmatprep.subr.mxu0 0.0
    %3869 = vmatpush1.msra.mxu0 %v3826
    %3870 = vmatprep.subr.mxu0 0.0
    %3871 = vmatpush1.msra.mxu0 %v3825
    %3872 = vmatprep.subr.mxu0 0.0
    %3873 = vmatpush1.msra.mxu0 %v3824
    %3874 = vmatprep.subr.mxu0 0.0
    %3875 = vmatpush2.msra.mxu0 0.0
    %3876 = vmatprep.subr.mxu0 0.0
    %3877 = vmatpush2.msra.mxu0 0.0
    %3878 = vmatprep.subr.mxu0 0.0
    %3879 = vmatpush2.msra.mxu0 0.0
    %3880 = vmatprep.subr.mxu0 0.0
    %3881 = vmatpush2.msra.mxu0 0.0
    %3882 = vmatprep.subr.mxu0 0.0
    %3883 = vmatpush2.msra.mxu0 0.0
    %3884 = vmatprep.subr.mxu0 0.0
    %3885 = vmatpush2.msra.mxu0 0.0
    %3886 = vmatprep.subr.mxu0 0.0
    %3887 = vmatpush2.msra.mxu0 0.0
    %3888 = vmatprep.subr.mxu0 0.0
    %3889 = vmatpush2.msra.mxu0 0.0
    %3890 = vmatprep.subr.mxu0 0.0
    %3891 = vmatpush2.msra.mxu0 0.0
    %3892 = vmatprep.subr.mxu0 0.0
    %3893 = vmatpush2.msra.mxu0 0.0
    %3894 = vmatprep.subr.mxu0 0.0
    %3895 = vmatpush2.msra.mxu0 0.0
    %3896 = vmatprep.subr.mxu0 0.0
    %3897 = vmatpush2.msra.mxu0 0.0
    %3898 = vmatprep.subr.mxu0 0.0
    %3899 = vmatpush2.msra.mxu0 0.0
    %3900 = vmatprep.subr.mxu0 0.0
    %3901 = vmatpush2.msra.mxu0 0.0
    %3902 = vmatprep.subr.mxu0 0.0
    %3903 = vmatpush2.msra.mxu0 %v3841
    %3904 = vmatprep.subr.mxu0 0.0
    %3905 = vmatpush2.msra.mxu0 %v3840
    %3906 = vmatprep.mubr.f32.mxu0 %v1744
    %3907 = vmatmul.mubr.f32.gmra.mxu0 %v1722
    %v3908 = vpop.f32.mrf.mxu0
    %v3909 = vadd.f32 0.0, %v3908
    %v3910 = vpop.f32.mrf.mxu0
    %3911 = vdwg.mxu0
    %s3912 = scalar_lea.vmem %s4, 192
    %v3913 = vld [vmem:[%s3912] sm:$0xff]
    %v3914 = vld [vmem:[%s3912 + $0x8] sm:$0xff]
    %v3916 = vsel %vm1910, %v3913, 0
    %v3919 = vsel %vm1910, %v3914, 0
    %3921 = vmatprep.subr.mxu0 0.0
    %3922 = vmatpush1.msra.mxu0 0.0
    %3923 = vmatprep.subr.mxu0 0.0
    %3924 = vmatpush1.msra.mxu0 0.0
    %3925 = vmatprep.subr.mxu0 0.0
    %3926 = vmatpush1.msra.mxu0 0.0
    %3927 = vmatprep.subr.mxu0 0.0
    %3928 = vmatpush1.msra.mxu0 0.0
    %3929 = vmatprep.subr.mxu0 0.0
    %3930 = vmatpush1.msra.mxu0 0.0
    %3931 = vmatprep.subr.mxu0 0.0
    %3932 = vmatpush1.msra.mxu0 0.0
    %3933 = vmatprep.subr.mxu0 0.0
    %3934 = vmatpush1.msra.mxu0 0.0
    %3935 = vmatprep.subr.mxu0 0.0
    %3936 = vmatpush1.msra.mxu0 0.0
    %3937 = vmatprep.subr.mxu0 0.0
    %3938 = vmatpush1.msra.mxu0 0.0
    %3939 = vmatprep.subr.mxu0 0.0
    %3940 = vmatpush1.msra.mxu0 0.0
    %3941 = vmatprep.subr.mxu0 0.0
    %3942 = vmatpush1.msra.mxu0 0.0
    %3943 = vmatprep.subr.mxu0 0.0
    %3944 = vmatpush1.msra.mxu0 0.0
    %3945 = vmatprep.subr.mxu0 0.0
    %3946 = vmatpush1.msra.mxu0 0.0
    %3947 = vmatprep.subr.mxu0 0.0
    %3948 = vmatpush1.msra.mxu0 0.0
    %3949 = vmatprep.subr.mxu0 0.0
    %3950 = vmatpush1.msra.mxu0 0.0
    %3951 = vmatprep.subr.mxu0 0.0
    %3952 = vmatpush1.msra.mxu0 %v3909
    %3953 = vmatprep.subr.mxu0 0.0
    %3954 = vmatpush2.msra.mxu0 0.0
    %3955 = vmatprep.subr.mxu0 0.0
    %3956 = vmatpush2.msra.mxu0 0.0
    %3957 = vmatprep.subr.mxu0 0.0
    %3958 = vmatpush2.msra.mxu0 0.0
    %3959 = vmatprep.subr.mxu0 0.0
    %3960 = vmatpush2.msra.mxu0 0.0
    %3961 = vmatprep.subr.mxu0 0.0
    %3962 = vmatpush2.msra.mxu0 0.0
    %3963 = vmatprep.subr.mxu0 0.0
    %3964 = vmatpush2.msra.mxu0 0.0
    %3965 = vmatprep.subr.mxu0 0.0
    %3966 = vmatpush2.msra.mxu0 0.0
    %3967 = vmatprep.subr.mxu0 0.0
    %3968 = vmatpush2.msra.mxu0 0.0
    %3969 = vmatprep.subr.mxu0 0.0
    %3970 = vmatpush2.msra.mxu0 0.0
    %3971 = vmatprep.subr.mxu0 0.0
    %3972 = vmatpush2.msra.mxu0 0.0
    %3973 = vmatprep.subr.mxu0 0.0
    %3974 = vmatpush2.msra.mxu0 0.0
    %3975 = vmatprep.subr.mxu0 0.0
    %3976 = vmatpush2.msra.mxu0 0.0
    %3977 = vmatprep.subr.mxu0 0.0
    %3978 = vmatpush2.msra.mxu0 0.0
    %3979 = vmatprep.subr.mxu0 0.0
    %3980 = vmatpush2.msra.mxu0 0.0
    %3981 = vmatprep.subr.mxu0 0.0
    %3982 = vmatpush2.msra.mxu0 0.0
    %3983 = vmatprep.subr.mxu0 0.0
    %3984 = vmatpush2.msra.mxu0 0.0
    %3985 = vmatprep.mubr.f32.mxu0 0.0
    %3986 = vmatmul.mubr.f32.gmra.mxu0 %v3916
    %v3987 = vpop.f32.mrf.mxu0
    %v3988 = vadd.f32 0.0, %v3987
    %v3989 = vpop.f32.mrf.mxu0
    %3990 = vmatprep.mubr.f32.mxu0 0.0
    %3991 = vmatmul.mubr.f32.gmra.mxu0 %v3919
    %v3992 = vpop.f32.mrf.mxu0
    %v3993 = vadd.f32 0.0, %v3992
    %v3994 = vpop.f32.mrf.mxu0
    %3995 = vdwg.mxu0
    %v3996 = vadd.f32 %v3821, %v3988
    %v3997 = vadd.f32 %v3822, %v3993
    %s3998 = scalar_lea.vmem %s3, 1872
    %v3999 = vld [vmem:[%s3998] sm:$0xff]
    %v4000 = vld [vmem:[%s3998 + $0x8] sm:$0xff]
    %v4001 = vld [vmem:[%s3998 + $0x10] sm:$0xff]
    %v4002 = vld [vmem:[%s3998 + $0x18] sm:$0xff]
    %v4003 = vld [vmem:[%s3998 + $0x20] sm:$0xff]
    %v4004 = vld [vmem:[%s3998 + $0x28] sm:$0xff]
    %v4005 = vld [vmem:[%s3998 + $0x30] sm:$0xff]
    %v4006 = vld [vmem:[%s3998 + $0x38] sm:$0xff]
    %v4007 = vld [vmem:[%s3998 + $0x40] sm:$0xff]
    %v4008 = vld [vmem:[%s3998 + $0x48] sm:$0xff]
    %v4009 = vld [vmem:[%s3998 + $0x50] sm:$0xff]
    %v4010 = vld [vmem:[%s3998 + $0x58] sm:$0xff]
    %v4011 = vld [vmem:[%s3998 + $0x60] sm:$0xff]
    %v4012 = vld [vmem:[%s3998 + $0x68] sm:$0xff]
    %v4013 = vld [vmem:[%s3998 + $0x70] sm:$0xff]
    %v4014 = vld [vmem:[%s3998 + $0x78] sm:$0xff]
    %v4015 = vld [vmem:[%s3998 + $0x80] sm:$0xff]
    %v4016 = vld [vmem:[%s3998 + $0x88] sm:$0xff]
    %4017 = vmatprep.subr.mxu0 0.0
    %4018 = vmatpush1.msra.mxu0 %v4014
    %4019 = vmatprep.subr.mxu0 0.0
    %4020 = vmatpush1.msra.mxu0 %v4013
    %4021 = vmatprep.subr.mxu0 0.0
    %4022 = vmatpush1.msra.mxu0 %v4012
    %4023 = vmatprep.subr.mxu0 0.0
    %4024 = vmatpush1.msra.mxu0 %v4011
    %4025 = vmatprep.subr.mxu0 0.0
    %4026 = vmatpush1.msra.mxu0 %v4010
    %4027 = vmatprep.subr.mxu0 0.0
    %4028 = vmatpush1.msra.mxu0 %v4009
    %4029 = vmatprep.subr.mxu0 0.0
    %4030 = vmatpush1.msra.mxu0 %v4008
    %4031 = vmatprep.subr.mxu0 0.0
    %4032 = vmatpush1.msra.mxu0 %v4007
    %4033 = vmatprep.subr.mxu0 0.0
    %4034 = vmatpush1.msra.mxu0 %v4006
    %4035 = vmatprep.subr.mxu0 0.0
    %4036 = vmatpush1.msra.mxu0 %v4005
    %4037 = vmatprep.subr.mxu0 0.0
    %4038 = vmatpush1.msra.mxu0 %v4004
    %4039 = vmatprep.subr.mxu0 0.0
    %4040 = vmatpush1.msra.mxu0 %v4003
    %4041 = vmatprep.subr.mxu0 0.0
    %4042 = vmatpush1.msra.mxu0 %v4002
    %4043 = vmatprep.subr.mxu0 0.0
    %4044 = vmatpush1.msra.mxu0 %v4001
    %4045 = vmatprep.subr.mxu0 0.0
    %4046 = vmatpush1.msra.mxu0 %v4000
    %4047 = vmatprep.subr.mxu0 0.0
    %4048 = vmatpush1.msra.mxu0 %v3999
    %4049 = vmatprep.subr.mxu0 0.0
    %4050 = vmatpush2.msra.mxu0 0.0
    %4051 = vmatprep.subr.mxu0 0.0
    %4052 = vmatpush2.msra.mxu0 0.0
    %4053 = vmatprep.subr.mxu0 0.0
    %4054 = vmatpush2.msra.mxu0 0.0
    %4055 = vmatprep.subr.mxu0 0.0
    %4056 = vmatpush2.msra.mxu0 0.0
    %4057 = vmatprep.subr.mxu0 0.0
    %4058 = vmatpush2.msra.mxu0 0.0
    %4059 = vmatprep.subr.mxu0 0.0
    %4060 = vmatpush2.msra.mxu0 0.0
    %4061 = vmatprep.subr.mxu0 0.0
    %4062 = vmatpush2.msra.mxu0 0.0
    %4063 = vmatprep.subr.mxu0 0.0
    %4064 = vmatpush2.msra.mxu0 0.0
    %4065 = vmatprep.subr.mxu0 0.0
    %4066 = vmatpush2.msra.mxu0 0.0
    %4067 = vmatprep.subr.mxu0 0.0
    %4068 = vmatpush2.msra.mxu0 0.0
    %4069 = vmatprep.subr.mxu0 0.0
    %4070 = vmatpush2.msra.mxu0 0.0
    %4071 = vmatprep.subr.mxu0 0.0
    %4072 = vmatpush2.msra.mxu0 0.0
    %4073 = vmatprep.subr.mxu0 0.0
    %4074 = vmatpush2.msra.mxu0 0.0
    %4075 = vmatprep.subr.mxu0 0.0
    %4076 = vmatpush2.msra.mxu0 0.0
    %4077 = vmatprep.subr.mxu0 0.0
    %4078 = vmatpush2.msra.mxu0 %v4016
    %4079 = vmatprep.subr.mxu0 0.0
    %4080 = vmatpush2.msra.mxu0 %v4015
    %4081 = vmatprep.mubr.f32.mxu0 %v1744
    %4082 = vmatmul.mubr.f32.gmra.mxu0 %v1722
    %v4083 = vpop.f32.mrf.mxu0
    %v4084 = vadd.f32 0.0, %v4083
    %v4085 = vpop.f32.mrf.mxu0
    %4086 = vdwg.mxu0
    %s4087 = scalar_lea.vmem %s4, 208
    %v4088 = vld [vmem:[%s4087] sm:$0xff]
    %v4089 = vld [vmem:[%s4087 + $0x8] sm:$0xff]
    %v4091 = vsel %vm1910, %v4088, 0
    %v4094 = vsel %vm1910, %v4089, 0
    %4096 = vmatprep.subr.mxu0 0.0
    %4097 = vmatpush1.msra.mxu0 0.0
    %4098 = vmatprep.subr.mxu0 0.0
    %4099 = vmatpush1.msra.mxu0 0.0
    %4100 = vmatprep.subr.mxu0 0.0
    %4101 = vmatpush1.msra.mxu0 0.0
    %4102 = vmatprep.subr.mxu0 0.0
    %4103 = vmatpush1.msra.mxu0 0.0
    %4104 = vmatprep.subr.mxu0 0.0
    %4105 = vmatpush1.msra.mxu0 0.0
    %4106 = vmatprep.subr.mxu0 0.0
    %4107 = vmatpush1.msra.mxu0 0.0
    %4108 = vmatprep.subr.mxu0 0.0
    %4109 = vmatpush1.msra.mxu0 0.0
    %4110 = vmatprep.subr.mxu0 0.0
    %4111 = vmatpush1.msra.mxu0 0.0
    %4112 = vmatprep.subr.mxu0 0.0
    %4113 = vmatpush1.msra.mxu0 0.0
    %4114 = vmatprep.subr.mxu0 0.0
    %4115 = vmatpush1.msra.mxu0 0.0
    %4116 = vmatprep.subr.mxu0 0.0
    %4117 = vmatpush1.msra.mxu0 0.0
    %4118 = vmatprep.subr.mxu0 0.0
    %4119 = vmatpush1.msra.mxu0 0.0
    %4120 = vmatprep.subr.mxu0 0.0
    %4121 = vmatpush1.msra.mxu0 0.0
    %4122 = vmatprep.subr.mxu0 0.0
    %4123 = vmatpush1.msra.mxu0 0.0
    %4124 = vmatprep.subr.mxu0 0.0
    %4125 = vmatpush1.msra.mxu0 0.0
    %4126 = vmatprep.subr.mxu0 0.0
    %4127 = vmatpush1.msra.mxu0 %v4084
    %4128 = vmatprep.subr.mxu0 0.0
    %4129 = vmatpush2.msra.mxu0 0.0
    %4130 = vmatprep.subr.mxu0 0.0
    %4131 = vmatpush2.msra.mxu0 0.0
    %4132 = vmatprep.subr.mxu0 0.0
    %4133 = vmatpush2.msra.mxu0 0.0
    %4134 = vmatprep.subr.mxu0 0.0
    %4135 = vmatpush2.msra.mxu0 0.0
    %4136 = vmatprep.subr.mxu0 0.0
    %4137 = vmatpush2.msra.mxu0 0.0
    %4138 = vmatprep.subr.mxu0 0.0
    %4139 = vmatpush2.msra.mxu0 0.0
    %4140 = vmatprep.subr.mxu0 0.0
    %4141 = vmatpush2.msra.mxu0 0.0
    %4142 = vmatprep.subr.mxu0 0.0
    %4143 = vmatpush2.msra.mxu0 0.0
    %4144 = vmatprep.subr.mxu0 0.0
    %4145 = vmatpush2.msra.mxu0 0.0
    %4146 = vmatprep.subr.mxu0 0.0
    %4147 = vmatpush2.msra.mxu0 0.0
    %4148 = vmatprep.subr.mxu0 0.0
    %4149 = vmatpush2.msra.mxu0 0.0
    %4150 = vmatprep.subr.mxu0 0.0
    %4151 = vmatpush2.msra.mxu0 0.0
    %4152 = vmatprep.subr.mxu0 0.0
    %4153 = vmatpush2.msra.mxu0 0.0
    %4154 = vmatprep.subr.mxu0 0.0
    %4155 = vmatpush2.msra.mxu0 0.0
    %4156 = vmatprep.subr.mxu0 0.0
    %4157 = vmatpush2.msra.mxu0 0.0
    %4158 = vmatprep.subr.mxu0 0.0
    %4159 = vmatpush2.msra.mxu0 0.0
    %4160 = vmatprep.mubr.f32.mxu0 0.0
    %4161 = vmatmul.mubr.f32.gmra.mxu0 %v4091
    %v4162 = vpop.f32.mrf.mxu0
    %v4163 = vadd.f32 0.0, %v4162
    %v4164 = vpop.f32.mrf.mxu0
    %4165 = vmatprep.mubr.f32.mxu0 0.0
    %4166 = vmatmul.mubr.f32.gmra.mxu0 %v4094
    %v4167 = vpop.f32.mrf.mxu0
    %v4168 = vadd.f32 0.0, %v4167
    %v4169 = vpop.f32.mrf.mxu0
    %4170 = vdwg.mxu0
    %v4171 = vadd.f32 %v3996, %v4163
    %v4172 = vadd.f32 %v3997, %v4168
    %s4173 = scalar_lea.vmem %s3, 2016
    %v4174 = vld [vmem:[%s4173] sm:$0xff]
    %v4175 = vld [vmem:[%s4173 + $0x8] sm:$0xff]
    %v4176 = vld [vmem:[%s4173 + $0x10] sm:$0xff]
    %v4177 = vld [vmem:[%s4173 + $0x18] sm:$0xff]
    %v4178 = vld [vmem:[%s4173 + $0x20] sm:$0xff]
    %v4179 = vld [vmem:[%s4173 + $0x28] sm:$0xff]
    %v4180 = vld [vmem:[%s4173 + $0x30] sm:$0xff]
    %v4181 = vld [vmem:[%s4173 + $0x38] sm:$0xff]
    %v4182 = vld [vmem:[%s4173 + $0x40] sm:$0xff]
    %v4183 = vld [vmem:[%s4173 + $0x48] sm:$0xff]
    %v4184 = vld [vmem:[%s4173 + $0x50] sm:$0xff]
    %v4185 = vld [vmem:[%s4173 + $0x58] sm:$0xff]
    %v4186 = vld [vmem:[%s4173 + $0x60] sm:$0xff]
    %v4187 = vld [vmem:[%s4173 + $0x68] sm:$0xff]
    %v4188 = vld [vmem:[%s4173 + $0x70] sm:$0xff]
    %v4189 = vld [vmem:[%s4173 + $0x78] sm:$0xff]
    %v4190 = vld [vmem:[%s4173 + $0x80] sm:$0xff]
    %v4191 = vld [vmem:[%s4173 + $0x88] sm:$0xff]
    %4192 = vmatprep.subr.mxu0 0.0
    %4193 = vmatpush1.msra.mxu0 %v4189
    %4194 = vmatprep.subr.mxu0 0.0
    %4195 = vmatpush1.msra.mxu0 %v4188
    %4196 = vmatprep.subr.mxu0 0.0
    %4197 = vmatpush1.msra.mxu0 %v4187
    %4198 = vmatprep.subr.mxu0 0.0
    %4199 = vmatpush1.msra.mxu0 %v4186
    %4200 = vmatprep.subr.mxu0 0.0
    %4201 = vmatpush1.msra.mxu0 %v4185
    %4202 = vmatprep.subr.mxu0 0.0
    %4203 = vmatpush1.msra.mxu0 %v4184
    %4204 = vmatprep.subr.mxu0 0.0
    %4205 = vmatpush1.msra.mxu0 %v4183
    %4206 = vmatprep.subr.mxu0 0.0
    %4207 = vmatpush1.msra.mxu0 %v4182
    %4208 = vmatprep.subr.mxu0 0.0
    %4209 = vmatpush1.msra.mxu0 %v4181
    %4210 = vmatprep.subr.mxu0 0.0
    %4211 = vmatpush1.msra.mxu0 %v4180
    %4212 = vmatprep.subr.mxu0 0.0
    %4213 = vmatpush1.msra.mxu0 %v4179
    %4214 = vmatprep.subr.mxu0 0.0
    %4215 = vmatpush1.msra.mxu0 %v4178
    %4216 = vmatprep.subr.mxu0 0.0
    %4217 = vmatpush1.msra.mxu0 %v4177
    %4218 = vmatprep.subr.mxu0 0.0
    %4219 = vmatpush1.msra.mxu0 %v4176
    %4220 = vmatprep.subr.mxu0 0.0
    %4221 = vmatpush1.msra.mxu0 %v4175
    %4222 = vmatprep.subr.mxu0 0.0
    %4223 = vmatpush1.msra.mxu0 %v4174
    %4224 = vmatprep.subr.mxu0 0.0
    %4225 = vmatpush2.msra.mxu0 0.0
    %4226 = vmatprep.subr.mxu0 0.0
    %4227 = vmatpush2.msra.mxu0 0.0
    %4228 = vmatprep.subr.mxu0 0.0
    %4229 = vmatpush2.msra.mxu0 0.0
    %4230 = vmatprep.subr.mxu0 0.0
    %4231 = vmatpush2.msra.mxu0 0.0
    %4232 = vmatprep.subr.mxu0 0.0
    %4233 = vmatpush2.msra.mxu0 0.0
    %4234 = vmatprep.subr.mxu0 0.0
    %4235 = vmatpush2.msra.mxu0 0.0
    %4236 = vmatprep.subr.mxu0 0.0
    %4237 = vmatpush2.msra.mxu0 0.0
    %4238 = vmatprep.subr.mxu0 0.0
    %4239 = vmatpush2.msra.mxu0 0.0
    %4240 = vmatprep.subr.mxu0 0.0
    %4241 = vmatpush2.msra.mxu0 0.0
    %4242 = vmatprep.subr.mxu0 0.0
    %4243 = vmatpush2.msra.mxu0 0.0
    %4244 = vmatprep.subr.mxu0 0.0
    %4245 = vmatpush2.msra.mxu0 0.0
    %4246 = vmatprep.subr.mxu0 0.0
    %4247 = vmatpush2.msra.mxu0 0.0
    %4248 = vmatprep.subr.mxu0 0.0
    %4249 = vmatpush2.msra.mxu0 0.0
    %4250 = vmatprep.subr.mxu0 0.0
    %4251 = vmatpush2.msra.mxu0 0.0
    %4252 = vmatprep.subr.mxu0 0.0
    %4253 = vmatpush2.msra.mxu0 %v4191
    %4254 = vmatprep.subr.mxu0 0.0
    %4255 = vmatpush2.msra.mxu0 %v4190
    %4256 = vmatprep.mubr.f32.mxu0 %v1744
    %4257 = vmatmul.mubr.f32.gmra.mxu0 %v1722
    %v4258 = vpop.f32.mrf.mxu0
    %v4259 = vadd.f32 0.0, %v4258
    %v4260 = vpop.f32.mrf.mxu0
    %4261 = vdwg.mxu0
    %s4262 = scalar_lea.vmem %s4, 224
    %v4263 = vld [vmem:[%s4262] sm:$0xff]
    %v4264 = vld [vmem:[%s4262 + $0x8] sm:$0xff]
    %v4266 = vsel %vm1910, %v4263, 0
    %v4269 = vsel %vm1910, %v4264, 0
    %4271 = vmatprep.subr.mxu0 0.0
    %4272 = vmatpush1.msra.mxu0 0.0
    %4273 = vmatprep.subr.mxu0 0.0
    %4274 = vmatpush1.msra.mxu0 0.0
    %4275 = vmatprep.subr.mxu0 0.0
    %4276 = vmatpush1.msra.mxu0 0.0
    %4277 = vmatprep.subr.mxu0 0.0
    %4278 = vmatpush1.msra.mxu0 0.0
    %4279 = vmatprep.subr.mxu0 0.0
    %4280 = vmatpush1.msra.mxu0 0.0
    %4281 = vmatprep.subr.mxu0 0.0
    %4282 = vmatpush1.msra.mxu0 0.0
    %4283 = vmatprep.subr.mxu0 0.0
    %4284 = vmatpush1.msra.mxu0 0.0
    %4285 = vmatprep.subr.mxu0 0.0
    %4286 = vmatpush1.msra.mxu0 0.0
    %4287 = vmatprep.subr.mxu0 0.0
    %4288 = vmatpush1.msra.mxu0 0.0
    %4289 = vmatprep.subr.mxu0 0.0
    %4290 = vmatpush1.msra.mxu0 0.0
    %4291 = vmatprep.subr.mxu0 0.0
    %4292 = vmatpush1.msra.mxu0 0.0
    %4293 = vmatprep.subr.mxu0 0.0
    %4294 = vmatpush1.msra.mxu0 0.0
    %4295 = vmatprep.subr.mxu0 0.0
    %4296 = vmatpush1.msra.mxu0 0.0
    %4297 = vmatprep.subr.mxu0 0.0
    %4298 = vmatpush1.msra.mxu0 0.0
    %4299 = vmatprep.subr.mxu0 0.0
    %4300 = vmatpush1.msra.mxu0 0.0
    %4301 = vmatprep.subr.mxu0 0.0
    %4302 = vmatpush1.msra.mxu0 %v4259
    %4303 = vmatprep.subr.mxu0 0.0
    %4304 = vmatpush2.msra.mxu0 0.0
    %4305 = vmatprep.subr.mxu0 0.0
    %4306 = vmatpush2.msra.mxu0 0.0
    %4307 = vmatprep.subr.mxu0 0.0
    %4308 = vmatpush2.msra.mxu0 0.0
    %4309 = vmatprep.subr.mxu0 0.0
    %4310 = vmatpush2.msra.mxu0 0.0
    %4311 = vmatprep.subr.mxu0 0.0
    %4312 = vmatpush2.msra.mxu0 0.0
    %4313 = vmatprep.subr.mxu0 0.0
    %4314 = vmatpush2.msra.mxu0 0.0
    %4315 = vmatprep.subr.mxu0 0.0
    %4316 = vmatpush2.msra.mxu0 0.0
    %4317 = vmatprep.subr.mxu0 0.0
    %4318 = vmatpush2.msra.mxu0 0.0
    %4319 = vmatprep.subr.mxu0 0.0
    %4320 = vmatpush2.msra.mxu0 0.0
    %4321 = vmatprep.subr.mxu0 0.0
    %4322 = vmatpush2.msra.mxu0 0.0
    %4323 = vmatprep.subr.mxu0 0.0
    %4324 = vmatpush2.msra.mxu0 0.0
    %4325 = vmatprep.subr.mxu0 0.0
    %4326 = vmatpush2.msra.mxu0 0.0
    %4327 = vmatprep.subr.mxu0 0.0
    %4328 = vmatpush2.msra.mxu0 0.0
    %4329 = vmatprep.subr.mxu0 0.0
    %4330 = vmatpush2.msra.mxu0 0.0
    %4331 = vmatprep.subr.mxu0 0.0
    %4332 = vmatpush2.msra.mxu0 0.0
    %4333 = vmatprep.subr.mxu0 0.0
    %4334 = vmatpush2.msra.mxu0 0.0
    %4335 = vmatprep.mubr.f32.mxu0 0.0
    %4336 = vmatmul.mubr.f32.gmra.mxu0 %v4266
    %v4337 = vpop.f32.mrf.mxu0
    %v4338 = vadd.f32 0.0, %v4337
    %v4339 = vpop.f32.mrf.mxu0
    %4340 = vmatprep.mubr.f32.mxu0 0.0
    %4341 = vmatmul.mubr.f32.gmra.mxu0 %v4269
    %v4342 = vpop.f32.mrf.mxu0
    %v4343 = vadd.f32 0.0, %v4342
    %v4344 = vpop.f32.mrf.mxu0
    %4345 = vdwg.mxu0
    %v4346 = vadd.f32 %v4171, %v4338
    %v4347 = vadd.f32 %v4172, %v4343
    %s4348 = scalar_lea.vmem %s3, 2160
    %v4349 = vld [vmem:[%s4348] sm:$0xff]
    %v4350 = vld [vmem:[%s4348 + $0x8] sm:$0xff]
    %v4351 = vld [vmem:[%s4348 + $0x10] sm:$0xff]
    %v4352 = vld [vmem:[%s4348 + $0x18] sm:$0xff]
    %v4353 = vld [vmem:[%s4348 + $0x20] sm:$0xff]
    %v4354 = vld [vmem:[%s4348 + $0x28] sm:$0xff]
    %v4355 = vld [vmem:[%s4348 + $0x30] sm:$0xff]
    %v4356 = vld [vmem:[%s4348 + $0x38] sm:$0xff]
    %v4357 = vld [vmem:[%s4348 + $0x40] sm:$0xff]
    %v4358 = vld [vmem:[%s4348 + $0x48] sm:$0xff]
    %v4359 = vld [vmem:[%s4348 + $0x50] sm:$0xff]
    %v4360 = vld [vmem:[%s4348 + $0x58] sm:$0xff]
    %v4361 = vld [vmem:[%s4348 + $0x60] sm:$0xff]
    %v4362 = vld [vmem:[%s4348 + $0x68] sm:$0xff]
    %v4363 = vld [vmem:[%s4348 + $0x70] sm:$0xff]
    %v4364 = vld [vmem:[%s4348 + $0x78] sm:$0xff]
    %v4365 = vld [vmem:[%s4348 + $0x80] sm:$0xff]
    %v4366 = vld [vmem:[%s4348 + $0x88] sm:$0xff]
    %4367 = vmatprep.subr.mxu0 0.0
    %4368 = vmatpush1.msra.mxu0 %v4364
    %4369 = vmatprep.subr.mxu0 0.0
    %4370 = vmatpush1.msra.mxu0 %v4363
    %4371 = vmatprep.subr.mxu0 0.0
    %4372 = vmatpush1.msra.mxu0 %v4362
    %4373 = vmatprep.subr.mxu0 0.0
    %4374 = vmatpush1.msra.mxu0 %v4361
    %4375 = vmatprep.subr.mxu0 0.0
    %4376 = vmatpush1.msra.mxu0 %v4360
    %4377 = vmatprep.subr.mxu0 0.0
    %4378 = vmatpush1.msra.mxu0 %v4359
    %4379 = vmatprep.subr.mxu0 0.0
    %4380 = vmatpush1.msra.mxu0 %v4358
    %4381 = vmatprep.subr.mxu0 0.0
    %4382 = vmatpush1.msra.mxu0 %v4357
    %4383 = vmatprep.subr.mxu0 0.0
    %4384 = vmatpush1.msra.mxu0 %v4356
    %4385 = vmatprep.subr.mxu0 0.0
    %4386 = vmatpush1.msra.mxu0 %v4355
    %4387 = vmatprep.subr.mxu0 0.0
    %4388 = vmatpush1.msra.mxu0 %v4354
    %4389 = vmatprep.subr.mxu0 0.0
    %4390 = vmatpush1.msra.mxu0 %v4353
    %4391 = vmatprep.subr.mxu0 0.0
    %4392 = vmatpush1.msra.mxu0 %v4352
    %4393 = vmatprep.subr.mxu0 0.0
    %4394 = vmatpush1.msra.mxu0 %v4351
    %4395 = vmatprep.subr.mxu0 0.0
    %4396 = vmatpush1.msra.mxu0 %v4350
    %4397 = vmatprep.subr.mxu0 0.0
    %4398 = vmatpush1.msra.mxu0 %v4349
    %4399 = vmatprep.subr.mxu0 0.0
    %4400 = vmatpush2.msra.mxu0 0.0
    %4401 = vmatprep.subr.mxu0 0.0
    %4402 = vmatpush2.msra.mxu0 0.0
    %4403 = vmatprep.subr.mxu0 0.0
    %4404 = vmatpush2.msra.mxu0 0.0
    %4405 = vmatprep.subr.mxu0 0.0
    %4406 = vmatpush2.msra.mxu0 0.0
    %4407 = vmatprep.subr.mxu0 0.0
    %4408 = vmatpush2.msra.mxu0 0.0
    %4409 = vmatprep.subr.mxu0 0.0
    %4410 = vmatpush2.msra.mxu0 0.0
    %4411 = vmatprep.subr.mxu0 0.0
    %4412 = vmatpush2.msra.mxu0 0.0
    %4413 = vmatprep.subr.mxu0 0.0
    %4414 = vmatpush2.msra.mxu0 0.0
    %4415 = vmatprep.subr.mxu0 0.0
    %4416 = vmatpush2.msra.mxu0 0.0
    %4417 = vmatprep.subr.mxu0 0.0
    %4418 = vmatpush2.msra.mxu0 0.0
    %4419 = vmatprep.subr.mxu0 0.0
    %4420 = vmatpush2.msra.mxu0 0.0
    %4421 = vmatprep.subr.mxu0 0.0
    %4422 = vmatpush2.msra.mxu0 0.0
    %4423 = vmatprep.subr.mxu0 0.0
    %4424 = vmatpush2.msra.mxu0 0.0
    %4425 = vmatprep.subr.mxu0 0.0
    %4426 = vmatpush2.msra.mxu0 0.0
    %4427 = vmatprep.subr.mxu0 0.0
    %4428 = vmatpush2.msra.mxu0 %v4366
    %4429 = vmatprep.subr.mxu0 0.0
    %4430 = vmatpush2.msra.mxu0 %v4365
    %4431 = vmatprep.mubr.f32.mxu0 %v1744
    %4432 = vmatmul.mubr.f32.gmra.mxu0 %v1722
    %v4433 = vpop.f32.mrf.mxu0
    %v4434 = vadd.f32 0.0, %v4433
    %v4435 = vpop.f32.mrf.mxu0
    %4436 = vdwg.mxu0
    %s4437 = scalar_lea.vmem %s4, 240
    %v4438 = vld [vmem:[%s4437] sm:$0xff]
    %v4439 = vld [vmem:[%s4437 + $0x8] sm:$0xff]
    %v4441 = vsel %vm1910, %v4438, 0
    %v4444 = vsel %vm1910, %v4439, 0
    %4446 = vmatprep.subr.mxu0 0.0
    %4447 = vmatpush1.msra.mxu0 0.0
    %4448 = vmatprep.subr.mxu0 0.0
    %4449 = vmatpush1.msra.mxu0 0.0
    %4450 = vmatprep.subr.mxu0 0.0
    %4451 = vmatpush1.msra.mxu0 0.0
    %4452 = vmatprep.subr.mxu0 0.0
    %4453 = vmatpush1.msra.mxu0 0.0
    %4454 = vmatprep.subr.mxu0 0.0
    %4455 = vmatpush1.msra.mxu0 0.0
    %4456 = vmatprep.subr.mxu0 0.0
    %4457 = vmatpush1.msra.mxu0 0.0
    %4458 = vmatprep.subr.mxu0 0.0
    %4459 = vmatpush1.msra.mxu0 0.0
    %4460 = vmatprep.subr.mxu0 0.0
    %4461 = vmatpush1.msra.mxu0 0.0
    %4462 = vmatprep.subr.mxu0 0.0
    %4463 = vmatpush1.msra.mxu0 0.0
    %4464 = vmatprep.subr.mxu0 0.0
    %4465 = vmatpush1.msra.mxu0 0.0
    %4466 = vmatprep.subr.mxu0 0.0
    %4467 = vmatpush1.msra.mxu0 0.0
    %4468 = vmatprep.subr.mxu0 0.0
    %4469 = vmatpush1.msra.mxu0 0.0
    %4470 = vmatprep.subr.mxu0 0.0
    %4471 = vmatpush1.msra.mxu0 0.0
    %4472 = vmatprep.subr.mxu0 0.0
    %4473 = vmatpush1.msra.mxu0 0.0
    %4474 = vmatprep.subr.mxu0 0.0
    %4475 = vmatpush1.msra.mxu0 0.0
    %4476 = vmatprep.subr.mxu0 0.0
    %4477 = vmatpush1.msra.mxu0 %v4434
    %4478 = vmatprep.subr.mxu0 0.0
    %4479 = vmatpush2.msra.mxu0 0.0
    %4480 = vmatprep.subr.mxu0 0.0
    %4481 = vmatpush2.msra.mxu0 0.0
    %4482 = vmatprep.subr.mxu0 0.0
    %4483 = vmatpush2.msra.mxu0 0.0
    %4484 = vmatprep.subr.mxu0 0.0
    %4485 = vmatpush2.msra.mxu0 0.0
    %4486 = vmatprep.subr.mxu0 0.0
    %4487 = vmatpush2.msra.mxu0 0.0
    %4488 = vmatprep.subr.mxu0 0.0
    %4489 = vmatpush2.msra.mxu0 0.0
    %4490 = vmatprep.subr.mxu0 0.0
    %4491 = vmatpush2.msra.mxu0 0.0
    %4492 = vmatprep.subr.mxu0 0.0
    %4493 = vmatpush2.msra.mxu0 0.0
    %4494 = vmatprep.subr.mxu0 0.0
    %4495 = vmatpush2.msra.mxu0 0.0
    %4496 = vmatprep.subr.mxu0 0.0
    %4497 = vmatpush2.msra.mxu0 0.0
    %4498 = vmatprep.subr.mxu0 0.0
    %4499 = vmatpush2.msra.mxu0 0.0
    %4500 = vmatprep.subr.mxu0 0.0
    %4501 = vmatpush2.msra.mxu0 0.0
    %4502 = vmatprep.subr.mxu0 0.0
    %4503 = vmatpush2.msra.mxu0 0.0
    %4504 = vmatprep.subr.mxu0 0.0
    %4505 = vmatpush2.msra.mxu0 0.0
    %4506 = vmatprep.subr.mxu0 0.0
    %4507 = vmatpush2.msra.mxu0 0.0
    %4508 = vmatprep.subr.mxu0 0.0
    %4509 = vmatpush2.msra.mxu0 0.0
    %4510 = vmatprep.mubr.f32.mxu0 0.0
    %4511 = vmatmul.mubr.f32.gmra.mxu0 %v4441
    %v4512 = vpop.f32.mrf.mxu0
    %v4513 = vadd.f32 0.0, %v4512
    %v4514 = vpop.f32.mrf.mxu0
    %4515 = vmatprep.mubr.f32.mxu0 0.0
    %4516 = vmatmul.mubr.f32.gmra.mxu0 %v4444
    %v4517 = vpop.f32.mrf.mxu0
    %v4518 = vadd.f32 0.0, %v4517
    %v4519 = vpop.f32.mrf.mxu0
    %4520 = vdwg.mxu0
    %v4521 = vadd.f32 %v4346, %v4513
    %v4522 = vadd.f32 %v4347, %v4518
    %s4523 = scalar_lea.vmem %s3, 2304
    %v4524 = vld [vmem:[%s4523] sm:$0xff]
    %v4525 = vld [vmem:[%s4523 + $0x8] sm:$0xff]
    %v4526 = vld [vmem:[%s4523 + $0x10] sm:$0xff]
    %v4527 = vld [vmem:[%s4523 + $0x18] sm:$0xff]
    %v4528 = vld [vmem:[%s4523 + $0x20] sm:$0xff]
    %v4529 = vld [vmem:[%s4523 + $0x28] sm:$0xff]
    %v4530 = vld [vmem:[%s4523 + $0x30] sm:$0xff]
    %v4531 = vld [vmem:[%s4523 + $0x38] sm:$0xff]
    %v4532 = vld [vmem:[%s4523 + $0x40] sm:$0xff]
    %v4533 = vld [vmem:[%s4523 + $0x48] sm:$0xff]
    %v4534 = vld [vmem:[%s4523 + $0x50] sm:$0xff]
    %v4535 = vld [vmem:[%s4523 + $0x58] sm:$0xff]
    %v4536 = vld [vmem:[%s4523 + $0x60] sm:$0xff]
    %v4537 = vld [vmem:[%s4523 + $0x68] sm:$0xff]
    %v4538 = vld [vmem:[%s4523 + $0x70] sm:$0xff]
    %v4539 = vld [vmem:[%s4523 + $0x78] sm:$0xff]
    %v4540 = vld [vmem:[%s4523 + $0x80] sm:$0xff]
    %v4541 = vld [vmem:[%s4523 + $0x88] sm:$0xff]
    %4542 = vmatprep.subr.mxu0 0.0
    %4543 = vmatpush1.msra.mxu0 %v4539
    %4544 = vmatprep.subr.mxu0 0.0
    %4545 = vmatpush1.msra.mxu0 %v4538
    %4546 = vmatprep.subr.mxu0 0.0
    %4547 = vmatpush1.msra.mxu0 %v4537
    %4548 = vmatprep.subr.mxu0 0.0
    %4549 = vmatpush1.msra.mxu0 %v4536
    %4550 = vmatprep.subr.mxu0 0.0
    %4551 = vmatpush1.msra.mxu0 %v4535
    %4552 = vmatprep.subr.mxu0 0.0
    %4553 = vmatpush1.msra.mxu0 %v4534
    %4554 = vmatprep.subr.mxu0 0.0
    %4555 = vmatpush1.msra.mxu0 %v4533
    %4556 = vmatprep.subr.mxu0 0.0
    %4557 = vmatpush1.msra.mxu0 %v4532
    %4558 = vmatprep.subr.mxu0 0.0
    %4559 = vmatpush1.msra.mxu0 %v4531
    %4560 = vmatprep.subr.mxu0 0.0
    %4561 = vmatpush1.msra.mxu0 %v4530
    %4562 = vmatprep.subr.mxu0 0.0
    %4563 = vmatpush1.msra.mxu0 %v4529
    %4564 = vmatprep.subr.mxu0 0.0
    %4565 = vmatpush1.msra.mxu0 %v4528
    %4566 = vmatprep.subr.mxu0 0.0
    %4567 = vmatpush1.msra.mxu0 %v4527
    %4568 = vmatprep.subr.mxu0 0.0
    %4569 = vmatpush1.msra.mxu0 %v4526
    %4570 = vmatprep.subr.mxu0 0.0
    %4571 = vmatpush1.msra.mxu0 %v4525
    %4572 = vmatprep.subr.mxu0 0.0
    %4573 = vmatpush1.msra.mxu0 %v4524
    %4574 = vmatprep.subr.mxu0 0.0
    %4575 = vmatpush2.msra.mxu0 0.0
    %4576 = vmatprep.subr.mxu0 0.0
    %4577 = vmatpush2.msra.mxu0 0.0
    %4578 = vmatprep.subr.mxu0 0.0
    %4579 = vmatpush2.msra.mxu0 0.0
    %4580 = vmatprep.subr.mxu0 0.0
    %4581 = vmatpush2.msra.mxu0 0.0
    %4582 = vmatprep.subr.mxu0 0.0
    %4583 = vmatpush2.msra.mxu0 0.0
    %4584 = vmatprep.subr.mxu0 0.0
    %4585 = vmatpush2.msra.mxu0 0.0
    %4586 = vmatprep.subr.mxu0 0.0
    %4587 = vmatpush2.msra.mxu0 0.0
    %4588 = vmatprep.subr.mxu0 0.0
    %4589 = vmatpush2.msra.mxu0 0.0
    %4590 = vmatprep.subr.mxu0 0.0
    %4591 = vmatpush2.msra.mxu0 0.0
    %4592 = vmatprep.subr.mxu0 0.0
    %4593 = vmatpush2.msra.mxu0 0.0
    %4594 = vmatprep.subr.mxu0 0.0
    %4595 = vmatpush2.msra.mxu0 0.0
    %4596 = vmatprep.subr.mxu0 0.0
    %4597 = vmatpush2.msra.mxu0 0.0
    %4598 = vmatprep.subr.mxu0 0.0
    %4599 = vmatpush2.msra.mxu0 0.0
    %4600 = vmatprep.subr.mxu0 0.0
    %4601 = vmatpush2.msra.mxu0 0.0
    %4602 = vmatprep.subr.mxu0 0.0
    %4603 = vmatpush2.msra.mxu0 %v4541
    %4604 = vmatprep.subr.mxu0 0.0
    %4605 = vmatpush2.msra.mxu0 %v4540
    %4606 = vmatprep.mubr.f32.mxu0 %v1744
    %4607 = vmatmul.mubr.f32.gmra.mxu0 %v1722
    %v4608 = vpop.f32.mrf.mxu0
    %v4609 = vadd.f32 0.0, %v4608
    %v4610 = vpop.f32.mrf.mxu0
    %4611 = vdwg.mxu0
    %s4612 = scalar_lea.vmem %s4, 256
    %v4613 = vld [vmem:[%s4612] sm:$0xff]
    %v4614 = vld [vmem:[%s4612 + $0x8] sm:$0xff]
    %v4616 = vsel %vm1910, %v4613, 0
    %v4619 = vsel %vm1910, %v4614, 0
    %4621 = vmatprep.subr.mxu0 0.0
    %4622 = vmatpush1.msra.mxu0 0.0
    %4623 = vmatprep.subr.mxu0 0.0
    %4624 = vmatpush1.msra.mxu0 0.0
    %4625 = vmatprep.subr.mxu0 0.0
    %4626 = vmatpush1.msra.mxu0 0.0
    %4627 = vmatprep.subr.mxu0 0.0
    %4628 = vmatpush1.msra.mxu0 0.0
    %4629 = vmatprep.subr.mxu0 0.0
    %4630 = vmatpush1.msra.mxu0 0.0
    %4631 = vmatprep.subr.mxu0 0.0
    %4632 = vmatpush1.msra.mxu0 0.0
    %4633 = vmatprep.subr.mxu0 0.0
    %4634 = vmatpush1.msra.mxu0 0.0
    %4635 = vmatprep.subr.mxu0 0.0
    %4636 = vmatpush1.msra.mxu0 0.0
    %4637 = vmatprep.subr.mxu0 0.0
    %4638 = vmatpush1.msra.mxu0 0.0
    %4639 = vmatprep.subr.mxu0 0.0
    %4640 = vmatpush1.msra.mxu0 0.0
    %4641 = vmatprep.subr.mxu0 0.0
    %4642 = vmatpush1.msra.mxu0 0.0
    %4643 = vmatprep.subr.mxu0 0.0
    %4644 = vmatpush1.msra.mxu0 0.0
    %4645 = vmatprep.subr.mxu0 0.0
    %4646 = vmatpush1.msra.mxu0 0.0
    %4647 = vmatprep.subr.mxu0 0.0
    %4648 = vmatpush1.msra.mxu0 0.0
    %4649 = vmatprep.subr.mxu0 0.0
    %4650 = vmatpush1.msra.mxu0 0.0
    %4651 = vmatprep.subr.mxu0 0.0
    %4652 = vmatpush1.msra.mxu0 %v4609
    %4653 = vmatprep.subr.mxu0 0.0
    %4654 = vmatpush2.msra.mxu0 0.0
    %4655 = vmatprep.subr.mxu0 0.0
    %4656 = vmatpush2.msra.mxu0 0.0
    %4657 = vmatprep.subr.mxu0 0.0
    %4658 = vmatpush2.msra.mxu0 0.0
    %4659 = vmatprep.subr.mxu0 0.0
    %4660 = vmatpush2.msra.mxu0 0.0
    %4661 = vmatprep.subr.mxu0 0.0
    %4662 = vmatpush2.msra.mxu0 0.0
    %4663 = vmatprep.subr.mxu0 0.0
    %4664 = vmatpush2.msra.mxu0 0.0
    %4665 = vmatprep.subr.mxu0 0.0
    %4666 = vmatpush2.msra.mxu0 0.0
    %4667 = vmatprep.subr.mxu0 0.0
    %4668 = vmatpush2.msra.mxu0 0.0
    %4669 = vmatprep.subr.mxu0 0.0
    %4670 = vmatpush2.msra.mxu0 0.0
    %4671 = vmatprep.subr.mxu0 0.0
    %4672 = vmatpush2.msra.mxu0 0.0
    %4673 = vmatprep.subr.mxu0 0.0
    %4674 = vmatpush2.msra.mxu0 0.0
    %4675 = vmatprep.subr.mxu0 0.0
    %4676 = vmatpush2.msra.mxu0 0.0
    %4677 = vmatprep.subr.mxu0 0.0
    %4678 = vmatpush2.msra.mxu0 0.0
    %4679 = vmatprep.subr.mxu0 0.0
    %4680 = vmatpush2.msra.mxu0 0.0
    %4681 = vmatprep.subr.mxu0 0.0
    %4682 = vmatpush2.msra.mxu0 0.0
    %4683 = vmatprep.subr.mxu0 0.0
    %4684 = vmatpush2.msra.mxu0 0.0
    %4685 = vmatprep.mubr.f32.mxu0 0.0
    %4686 = vmatmul.mubr.f32.gmra.mxu0 %v4616
    %v4687 = vpop.f32.mrf.mxu0
    %v4688 = vadd.f32 0.0, %v4687
    %v4689 = vpop.f32.mrf.mxu0
    %4690 = vmatprep.mubr.f32.mxu0 0.0
    %4691 = vmatmul.mubr.f32.gmra.mxu0 %v4619
    %v4692 = vpop.f32.mrf.mxu0
    %v4693 = vadd.f32 0.0, %v4692
    %v4694 = vpop.f32.mrf.mxu0
    %4695 = vdwg.mxu0
    %v4696 = vadd.f32 %v4521, %v4688
    %v4697 = vadd.f32 %v4522, %v4693
    %s4698 = scalar_lea.vmem %s3, 2448
    %v4699 = vld [vmem:[%s4698] sm:$0xff]
    %v4700 = vld [vmem:[%s4698 + $0x8] sm:$0xff]
    %v4701 = vld [vmem:[%s4698 + $0x10] sm:$0xff]
    %v4702 = vld [vmem:[%s4698 + $0x18] sm:$0xff]
    %v4703 = vld [vmem:[%s4698 + $0x20] sm:$0xff]
    %v4704 = vld [vmem:[%s4698 + $0x28] sm:$0xff]
    %v4705 = vld [vmem:[%s4698 + $0x30] sm:$0xff]
    %v4706 = vld [vmem:[%s4698 + $0x38] sm:$0xff]
    %v4707 = vld [vmem:[%s4698 + $0x40] sm:$0xff]
    %v4708 = vld [vmem:[%s4698 + $0x48] sm:$0xff]
    %v4709 = vld [vmem:[%s4698 + $0x50] sm:$0xff]
    %v4710 = vld [vmem:[%s4698 + $0x58] sm:$0xff]
    %v4711 = vld [vmem:[%s4698 + $0x60] sm:$0xff]
    %v4712 = vld [vmem:[%s4698 + $0x68] sm:$0xff]
    %v4713 = vld [vmem:[%s4698 + $0x70] sm:$0xff]
    %v4714 = vld [vmem:[%s4698 + $0x78] sm:$0xff]
    %v4715 = vld [vmem:[%s4698 + $0x80] sm:$0xff]
    %v4716 = vld [vmem:[%s4698 + $0x88] sm:$0xff]
    %4717 = vmatprep.subr.mxu0 0.0
    %4718 = vmatpush1.msra.mxu0 %v4714
    %4719 = vmatprep.subr.mxu0 0.0
    %4720 = vmatpush1.msra.mxu0 %v4713
    %4721 = vmatprep.subr.mxu0 0.0
    %4722 = vmatpush1.msra.mxu0 %v4712
    %4723 = vmatprep.subr.mxu0 0.0
    %4724 = vmatpush1.msra.mxu0 %v4711
    %4725 = vmatprep.subr.mxu0 0.0
    %4726 = vmatpush1.msra.mxu0 %v4710
    %4727 = vmatprep.subr.mxu0 0.0
    %4728 = vmatpush1.msra.mxu0 %v4709
    %4729 = vmatprep.subr.mxu0 0.0
    %4730 = vmatpush1.msra.mxu0 %v4708
    %4731 = vmatprep.subr.mxu0 0.0
    %4732 = vmatpush1.msra.mxu0 %v4707
    %4733 = vmatprep.subr.mxu0 0.0
    %4734 = vmatpush1.msra.mxu0 %v4706
    %4735 = vmatprep.subr.mxu0 0.0
    %4736 = vmatpush1.msra.mxu0 %v4705
    %4737 = vmatprep.subr.mxu0 0.0
    %4738 = vmatpush1.msra.mxu0 %v4704
    %4739 = vmatprep.subr.mxu0 0.0
    %4740 = vmatpush1.msra.mxu0 %v4703
    %4741 = vmatprep.subr.mxu0 0.0
    %4742 = vmatpush1.msra.mxu0 %v4702
    %4743 = vmatprep.subr.mxu0 0.0
    %4744 = vmatpush1.msra.mxu0 %v4701
    %4745 = vmatprep.subr.mxu0 0.0
    %4746 = vmatpush1.msra.mxu0 %v4700
    %4747 = vmatprep.subr.mxu0 0.0
    %4748 = vmatpush1.msra.mxu0 %v4699
    %4749 = vmatprep.subr.mxu0 0.0
    %4750 = vmatpush2.msra.mxu0 0.0
    %4751 = vmatprep.subr.mxu0 0.0
    %4752 = vmatpush2.msra.mxu0 0.0
    %4753 = vmatprep.subr.mxu0 0.0
    %4754 = vmatpush2.msra.mxu0 0.0
    %4755 = vmatprep.subr.mxu0 0.0
    %4756 = vmatpush2.msra.mxu0 0.0
    %4757 = vmatprep.subr.mxu0 0.0
    %4758 = vmatpush2.msra.mxu0 0.0
    %4759 = vmatprep.subr.mxu0 0.0
    %4760 = vmatpush2.msra.mxu0 0.0
    %4761 = vmatprep.subr.mxu0 0.0
    %4762 = vmatpush2.msra.mxu0 0.0
    %4763 = vmatprep.subr.mxu0 0.0
    %4764 = vmatpush2.msra.mxu0 0.0
    %4765 = vmatprep.subr.mxu0 0.0
    %4766 = vmatpush2.msra.mxu0 0.0
    %4767 = vmatprep.subr.mxu0 0.0
    %4768 = vmatpush2.msra.mxu0 0.0
    %4769 = vmatprep.subr.mxu0 0.0
    %4770 = vmatpush2.msra.mxu0 0.0
    %4771 = vmatprep.subr.mxu0 0.0
    %4772 = vmatpush2.msra.mxu0 0.0
    %4773 = vmatprep.subr.mxu0 0.0
    %4774 = vmatpush2.msra.mxu0 0.0
    %4775 = vmatprep.subr.mxu0 0.0
    %4776 = vmatpush2.msra.mxu0 0.0
    %4777 = vmatprep.subr.mxu0 0.0
    %4778 = vmatpush2.msra.mxu0 %v4716
    %4779 = vmatprep.subr.mxu0 0.0
    %4780 = vmatpush2.msra.mxu0 %v4715
    %4781 = vmatprep.mubr.f32.mxu0 %v1744
    %4782 = vmatmul.mubr.f32.gmra.mxu0 %v1722
    %v4783 = vpop.f32.mrf.mxu0
    %v4784 = vadd.f32 0.0, %v4783
    %v4785 = vpop.f32.mrf.mxu0
    %4786 = vdwg.mxu0
    %s4787 = scalar_lea.vmem %s4, 272
    %v4788 = vld [vmem:[%s4787] sm:$0xff]
    %v4789 = vld [vmem:[%s4787 + $0x8] sm:$0xff]
    %v4791 = vsel %vm1910, %v4788, 0
    %v4794 = vsel %vm1910, %v4789, 0
    %4796 = vmatprep.subr.mxu0 0.0
    %4797 = vmatpush1.msra.mxu0 0.0
    %4798 = vmatprep.subr.mxu0 0.0
    %4799 = vmatpush1.msra.mxu0 0.0
    %4800 = vmatprep.subr.mxu0 0.0
    %4801 = vmatpush1.msra.mxu0 0.0
    %4802 = vmatprep.subr.mxu0 0.0
    %4803 = vmatpush1.msra.mxu0 0.0
    %4804 = vmatprep.subr.mxu0 0.0
    %4805 = vmatpush1.msra.mxu0 0.0
    %4806 = vmatprep.subr.mxu0 0.0
    %4807 = vmatpush1.msra.mxu0 0.0
    %4808 = vmatprep.subr.mxu0 0.0
    %4809 = vmatpush1.msra.mxu0 0.0
    %4810 = vmatprep.subr.mxu0 0.0
    %4811 = vmatpush1.msra.mxu0 0.0
    %4812 = vmatprep.subr.mxu0 0.0
    %4813 = vmatpush1.msra.mxu0 0.0
    %4814 = vmatprep.subr.mxu0 0.0
    %4815 = vmatpush1.msra.mxu0 0.0
    %4816 = vmatprep.subr.mxu0 0.0
    %4817 = vmatpush1.msra.mxu0 0.0
    %4818 = vmatprep.subr.mxu0 0.0
    %4819 = vmatpush1.msra.mxu0 0.0
    %4820 = vmatprep.subr.mxu0 0.0
    %4821 = vmatpush1.msra.mxu0 0.0
    %4822 = vmatprep.subr.mxu0 0.0
    %4823 = vmatpush1.msra.mxu0 0.0
    %4824 = vmatprep.subr.mxu0 0.0
    %4825 = vmatpush1.msra.mxu0 0.0
    %4826 = vmatprep.subr.mxu0 0.0
    %4827 = vmatpush1.msra.mxu0 %v4784
    %4828 = vmatprep.subr.mxu0 0.0
    %4829 = vmatpush2.msra.mxu0 0.0
    %4830 = vmatprep.subr.mxu0 0.0
    %4831 = vmatpush2.msra.mxu0 0.0
    %4832 = vmatprep.subr.mxu0 0.0
    %4833 = vmatpush2.msra.mxu0 0.0
    %4834 = vmatprep.subr.mxu0 0.0
    %4835 = vmatpush2.msra.mxu0 0.0
    %4836 = vmatprep.subr.mxu0 0.0
    %4837 = vmatpush2.msra.mxu0 0.0
    %4838 = vmatprep.subr.mxu0 0.0
    %4839 = vmatpush2.msra.mxu0 0.0
    %4840 = vmatprep.subr.mxu0 0.0
    %4841 = vmatpush2.msra.mxu0 0.0
    %4842 = vmatprep.subr.mxu0 0.0
    %4843 = vmatpush2.msra.mxu0 0.0
    %4844 = vmatprep.subr.mxu0 0.0
    %4845 = vmatpush2.msra.mxu0 0.0
    %4846 = vmatprep.subr.mxu0 0.0
    %4847 = vmatpush2.msra.mxu0 0.0
    %4848 = vmatprep.subr.mxu0 0.0
    %4849 = vmatpush2.msra.mxu0 0.0
    %4850 = vmatprep.subr.mxu0 0.0
    %4851 = vmatpush2.msra.mxu0 0.0
    %4852 = vmatprep.subr.mxu0 0.0
    %4853 = vmatpush2.msra.mxu0 0.0
    %4854 = vmatprep.subr.mxu0 0.0
    %4855 = vmatpush2.msra.mxu0 0.0
    %4856 = vmatprep.subr.mxu0 0.0
    %4857 = vmatpush2.msra.mxu0 0.0
    %4858 = vmatprep.subr.mxu0 0.0
    %4859 = vmatpush2.msra.mxu0 0.0
    %4860 = vmatprep.mubr.f32.mxu0 0.0
    %4861 = vmatmul.mubr.f32.gmra.mxu0 %v4791
    %v4862 = vpop.f32.mrf.mxu0
    %v4863 = vadd.f32 0.0, %v4862
    %v4864 = vpop.f32.mrf.mxu0
    %4865 = vmatprep.mubr.f32.mxu0 0.0
    %4866 = vmatmul.mubr.f32.gmra.mxu0 %v4794
    %v4867 = vpop.f32.mrf.mxu0
    %v4868 = vadd.f32 0.0, %v4867
    %v4869 = vpop.f32.mrf.mxu0
    %4870 = vdwg.mxu0
    %v4871 = vadd.f32 %v4696, %v4863
    %v4872 = vadd.f32 %v4697, %v4868
    %s4873 = scalar_lea.vmem %s3, 2592
    %v4874 = vld [vmem:[%s4873] sm:$0xff]
    %v4875 = vld [vmem:[%s4873 + $0x8] sm:$0xff]
    %v4876 = vld [vmem:[%s4873 + $0x10] sm:$0xff]
    %v4877 = vld [vmem:[%s4873 + $0x18] sm:$0xff]
    %v4878 = vld [vmem:[%s4873 + $0x20] sm:$0xff]
    %v4879 = vld [vmem:[%s4873 + $0x28] sm:$0xff]
    %v4880 = vld [vmem:[%s4873 + $0x30] sm:$0xff]
    %v4881 = vld [vmem:[%s4873 + $0x38] sm:$0xff]
    %v4882 = vld [vmem:[%s4873 + $0x40] sm:$0xff]
    %v4883 = vld [vmem:[%s4873 + $0x48] sm:$0xff]
    %v4884 = vld [vmem:[%s4873 + $0x50] sm:$0xff]
    %v4885 = vld [vmem:[%s4873 + $0x58] sm:$0xff]
    %v4886 = vld [vmem:[%s4873 + $0x60] sm:$0xff]
    %v4887 = vld [vmem:[%s4873 + $0x68] sm:$0xff]
    %v4888 = vld [vmem:[%s4873 + $0x70] sm:$0xff]
    %v4889 = vld [vmem:[%s4873 + $0x78] sm:$0xff]
    %v4890 = vld [vmem:[%s4873 + $0x80] sm:$0xff]
    %v4891 = vld [vmem:[%s4873 + $0x88] sm:$0xff]
    %4892 = vmatprep.subr.mxu0 0.0
    %4893 = vmatpush1.msra.mxu0 %v4889
    %4894 = vmatprep.subr.mxu0 0.0
    %4895 = vmatpush1.msra.mxu0 %v4888
    %4896 = vmatprep.subr.mxu0 0.0
    %4897 = vmatpush1.msra.mxu0 %v4887
    %4898 = vmatprep.subr.mxu0 0.0
    %4899 = vmatpush1.msra.mxu0 %v4886
    %4900 = vmatprep.subr.mxu0 0.0
    %4901 = vmatpush1.msra.mxu0 %v4885
    %4902 = vmatprep.subr.mxu0 0.0
    %4903 = vmatpush1.msra.mxu0 %v4884
    %4904 = vmatprep.subr.mxu0 0.0
    %4905 = vmatpush1.msra.mxu0 %v4883
    %4906 = vmatprep.subr.mxu0 0.0
    %4907 = vmatpush1.msra.mxu0 %v4882
    %4908 = vmatprep.subr.mxu0 0.0
    %4909 = vmatpush1.msra.mxu0 %v4881
    %4910 = vmatprep.subr.mxu0 0.0
    %4911 = vmatpush1.msra.mxu0 %v4880
    %4912 = vmatprep.subr.mxu0 0.0
    %4913 = vmatpush1.msra.mxu0 %v4879
    %4914 = vmatprep.subr.mxu0 0.0
    %4915 = vmatpush1.msra.mxu0 %v4878
    %4916 = vmatprep.subr.mxu0 0.0
    %4917 = vmatpush1.msra.mxu0 %v4877
    %4918 = vmatprep.subr.mxu0 0.0
    %4919 = vmatpush1.msra.mxu0 %v4876
    %4920 = vmatprep.subr.mxu0 0.0
    %4921 = vmatpush1.msra.mxu0 %v4875
    %4922 = vmatprep.subr.mxu0 0.0
    %4923 = vmatpush1.msra.mxu0 %v4874
    %4924 = vmatprep.subr.mxu0 0.0
    %4925 = vmatpush2.msra.mxu0 0.0
    %4926 = vmatprep.subr.mxu0 0.0
    %4927 = vmatpush2.msra.mxu0 0.0
    %4928 = vmatprep.subr.mxu0 0.0
    %4929 = vmatpush2.msra.mxu0 0.0
    %4930 = vmatprep.subr.mxu0 0.0
    %4931 = vmatpush2.msra.mxu0 0.0
    %4932 = vmatprep.subr.mxu0 0.0
    %4933 = vmatpush2.msra.mxu0 0.0
    %4934 = vmatprep.subr.mxu0 0.0
    %4935 = vmatpush2.msra.mxu0 0.0
    %4936 = vmatprep.subr.mxu0 0.0
    %4937 = vmatpush2.msra.mxu0 0.0
    %4938 = vmatprep.subr.mxu0 0.0
    %4939 = vmatpush2.msra.mxu0 0.0
    %4940 = vmatprep.subr.mxu0 0.0
    %4941 = vmatpush2.msra.mxu0 0.0
    %4942 = vmatprep.subr.mxu0 0.0
    %4943 = vmatpush2.msra.mxu0 0.0
    %4944 = vmatprep.subr.mxu0 0.0
    %4945 = vmatpush2.msra.mxu0 0.0
    %4946 = vmatprep.subr.mxu0 0.0
    %4947 = vmatpush2.msra.mxu0 0.0
    %4948 = vmatprep.subr.mxu0 0.0
    %4949 = vmatpush2.msra.mxu0 0.0
    %4950 = vmatprep.subr.mxu0 0.0
    %4951 = vmatpush2.msra.mxu0 0.0
    %4952 = vmatprep.subr.mxu0 0.0
    %4953 = vmatpush2.msra.mxu0 %v4891
    %4954 = vmatprep.subr.mxu0 0.0
    %4955 = vmatpush2.msra.mxu0 %v4890
    %4956 = vmatprep.mubr.f32.mxu0 %v1744
    %4957 = vmatmul.mubr.f32.gmra.mxu0 %v1722
    %v4958 = vpop.f32.mrf.mxu0
    %v4959 = vadd.f32 0.0, %v4958
    %v4960 = vpop.f32.mrf.mxu0
    %4961 = vdwg.mxu0
    %s4962 = scalar_lea.vmem %s4, 288
    %v4963 = vld [vmem:[%s4962] sm:$0xff]
    %v4964 = vld [vmem:[%s4962 + $0x8] sm:$0xff]
    %v4966 = vsel %vm1910, %v4963, 0
    %v4969 = vsel %vm1910, %v4964, 0
    %4971 = vmatprep.subr.mxu0 0.0
    %4972 = vmatpush1.msra.mxu0 0.0
    %4973 = vmatprep.subr.mxu0 0.0
    %4974 = vmatpush1.msra.mxu0 0.0
    %4975 = vmatprep.subr.mxu0 0.0
    %4976 = vmatpush1.msra.mxu0 0.0
    %4977 = vmatprep.subr.mxu0 0.0
    %4978 = vmatpush1.msra.mxu0 0.0
    %4979 = vmatprep.subr.mxu0 0.0
    %4980 = vmatpush1.msra.mxu0 0.0
    %4981 = vmatprep.subr.mxu0 0.0
    %4982 = vmatpush1.msra.mxu0 0.0
    %4983 = vmatprep.subr.mxu0 0.0
    %4984 = vmatpush1.msra.mxu0 0.0
    %4985 = vmatprep.subr.mxu0 0.0
    %4986 = vmatpush1.msra.mxu0 0.0
    %4987 = vmatprep.subr.mxu0 0.0
    %4988 = vmatpush1.msra.mxu0 0.0
    %4989 = vmatprep.subr.mxu0 0.0
    %4990 = vmatpush1.msra.mxu0 0.0
    %4991 = vmatprep.subr.mxu0 0.0
    %4992 = vmatpush1.msra.mxu0 0.0
    %4993 = vmatprep.subr.mxu0 0.0
    %4994 = vmatpush1.msra.mxu0 0.0
    %4995 = vmatprep.subr.mxu0 0.0
    %4996 = vmatpush1.msra.mxu0 0.0
    %4997 = vmatprep.subr.mxu0 0.0
    %4998 = vmatpush1.msra.mxu0 0.0
    %4999 = vmatprep.subr.mxu0 0.0
    %5000 = vmatpush1.msra.mxu0 0.0
    %5001 = vmatprep.subr.mxu0 0.0
    %5002 = vmatpush1.msra.mxu0 %v4959
    %5003 = vmatprep.subr.mxu0 0.0
    %5004 = vmatpush2.msra.mxu0 0.0
    %5005 = vmatprep.subr.mxu0 0.0
    %5006 = vmatpush2.msra.mxu0 0.0
    %5007 = vmatprep.subr.mxu0 0.0
    %5008 = vmatpush2.msra.mxu0 0.0
    %5009 = vmatprep.subr.mxu0 0.0
    %5010 = vmatpush2.msra.mxu0 0.0
    %5011 = vmatprep.subr.mxu0 0.0
    %5012 = vmatpush2.msra.mxu0 0.0
    %5013 = vmatprep.subr.mxu0 0.0
    %5014 = vmatpush2.msra.mxu0 0.0
    %5015 = vmatprep.subr.mxu0 0.0
    %5016 = vmatpush2.msra.mxu0 0.0
    %5017 = vmatprep.subr.mxu0 0.0
    %5018 = vmatpush2.msra.mxu0 0.0
    %5019 = vmatprep.subr.mxu0 0.0
    %5020 = vmatpush2.msra.mxu0 0.0
    %5021 = vmatprep.subr.mxu0 0.0
    %5022 = vmatpush2.msra.mxu0 0.0
    %5023 = vmatprep.subr.mxu0 0.0
    %5024 = vmatpush2.msra.mxu0 0.0
    %5025 = vmatprep.subr.mxu0 0.0
    %5026 = vmatpush2.msra.mxu0 0.0
    %5027 = vmatprep.subr.mxu0 0.0
    %5028 = vmatpush2.msra.mxu0 0.0
    %5029 = vmatprep.subr.mxu0 0.0
    %5030 = vmatpush2.msra.mxu0 0.0
    %5031 = vmatprep.subr.mxu0 0.0
    %5032 = vmatpush2.msra.mxu0 0.0
    %5033 = vmatprep.subr.mxu0 0.0
    %5034 = vmatpush2.msra.mxu0 0.0
    %5035 = vmatprep.mubr.f32.mxu0 0.0
    %5036 = vmatmul.mubr.f32.gmra.mxu0 %v4966
    %v5037 = vpop.f32.mrf.mxu0
    %v5038 = vadd.f32 0.0, %v5037
    %v5039 = vpop.f32.mrf.mxu0
    %5040 = vmatprep.mubr.f32.mxu0 0.0
    %5041 = vmatmul.mubr.f32.gmra.mxu0 %v4969
    %v5042 = vpop.f32.mrf.mxu0
    %v5043 = vadd.f32 0.0, %v5042
    %v5044 = vpop.f32.mrf.mxu0
    %5045 = vdwg.mxu0
    %v5046 = vadd.f32 %v4871, %v5038
    %v5047 = vadd.f32 %v4872, %v5043
    %s5048 = scalar_lea.vmem %s3, 2736
    %v5049 = vld [vmem:[%s5048] sm:$0xff]
    %v5050 = vld [vmem:[%s5048 + $0x8] sm:$0xff]
    %v5051 = vld [vmem:[%s5048 + $0x10] sm:$0xff]
    %v5052 = vld [vmem:[%s5048 + $0x18] sm:$0xff]
    %v5053 = vld [vmem:[%s5048 + $0x20] sm:$0xff]
    %v5054 = vld [vmem:[%s5048 + $0x28] sm:$0xff]
    %v5055 = vld [vmem:[%s5048 + $0x30] sm:$0xff]
    %v5056 = vld [vmem:[%s5048 + $0x38] sm:$0xff]
    %v5057 = vld [vmem:[%s5048 + $0x40] sm:$0xff]
    %v5058 = vld [vmem:[%s5048 + $0x48] sm:$0xff]
    %v5059 = vld [vmem:[%s5048 + $0x50] sm:$0xff]
    %v5060 = vld [vmem:[%s5048 + $0x58] sm:$0xff]
    %v5061 = vld [vmem:[%s5048 + $0x60] sm:$0xff]
    %v5062 = vld [vmem:[%s5048 + $0x68] sm:$0xff]
    %v5063 = vld [vmem:[%s5048 + $0x70] sm:$0xff]
    %v5064 = vld [vmem:[%s5048 + $0x78] sm:$0xff]
    %v5065 = vld [vmem:[%s5048 + $0x80] sm:$0xff]
    %v5066 = vld [vmem:[%s5048 + $0x88] sm:$0xff]
    %5067 = vmatprep.subr.mxu0 0.0
    %5068 = vmatpush1.msra.mxu0 %v5064
    %5069 = vmatprep.subr.mxu0 0.0
    %5070 = vmatpush1.msra.mxu0 %v5063
    %5071 = vmatprep.subr.mxu0 0.0
    %5072 = vmatpush1.msra.mxu0 %v5062
    %5073 = vmatprep.subr.mxu0 0.0
    %5074 = vmatpush1.msra.mxu0 %v5061
    %5075 = vmatprep.subr.mxu0 0.0
    %5076 = vmatpush1.msra.mxu0 %v5060
    %5077 = vmatprep.subr.mxu0 0.0
    %5078 = vmatpush1.msra.mxu0 %v5059
    %5079 = vmatprep.subr.mxu0 0.0
    %5080 = vmatpush1.msra.mxu0 %v5058
    %5081 = vmatprep.subr.mxu0 0.0
    %5082 = vmatpush1.msra.mxu0 %v5057
    %5083 = vmatprep.subr.mxu0 0.0
    %5084 = vmatpush1.msra.mxu0 %v5056
    %5085 = vmatprep.subr.mxu0 0.0
    %5086 = vmatpush1.msra.mxu0 %v5055
    %5087 = vmatprep.subr.mxu0 0.0
    %5088 = vmatpush1.msra.mxu0 %v5054
    %5089 = vmatprep.subr.mxu0 0.0
    %5090 = vmatpush1.msra.mxu0 %v5053
    %5091 = vmatprep.subr.mxu0 0.0
    %5092 = vmatpush1.msra.mxu0 %v5052
    %5093 = vmatprep.subr.mxu0 0.0
    %5094 = vmatpush1.msra.mxu0 %v5051
    %5095 = vmatprep.subr.mxu0 0.0
    %5096 = vmatpush1.msra.mxu0 %v5050
    %5097 = vmatprep.subr.mxu0 0.0
    %5098 = vmatpush1.msra.mxu0 %v5049
    %5099 = vmatprep.subr.mxu0 0.0
    %5100 = vmatpush2.msra.mxu0 0.0
    %5101 = vmatprep.subr.mxu0 0.0
    %5102 = vmatpush2.msra.mxu0 0.0
    %5103 = vmatprep.subr.mxu0 0.0
    %5104 = vmatpush2.msra.mxu0 0.0
    %5105 = vmatprep.subr.mxu0 0.0
    %5106 = vmatpush2.msra.mxu0 0.0
    %5107 = vmatprep.subr.mxu0 0.0
    %5108 = vmatpush2.msra.mxu0 0.0
    %5109 = vmatprep.subr.mxu0 0.0
    %5110 = vmatpush2.msra.mxu0 0.0
    %5111 = vmatprep.subr.mxu0 0.0
    %5112 = vmatpush2.msra.mxu0 0.0
    %5113 = vmatprep.subr.mxu0 0.0
    %5114 = vmatpush2.msra.mxu0 0.0
    %5115 = vmatprep.subr.mxu0 0.0
    %5116 = vmatpush2.msra.mxu0 0.0
    %5117 = vmatprep.subr.mxu0 0.0
    %5118 = vmatpush2.msra.mxu0 0.0
    %5119 = vmatprep.subr.mxu0 0.0
    %5120 = vmatpush2.msra.mxu0 0.0
    %5121 = vmatprep.subr.mxu0 0.0
    %5122 = vmatpush2.msra.mxu0 0.0
    %5123 = vmatprep.subr.mxu0 0.0
    %5124 = vmatpush2.msra.mxu0 0.0
    %5125 = vmatprep.subr.mxu0 0.0
    %5126 = vmatpush2.msra.mxu0 0.0
    %5127 = vmatprep.subr.mxu0 0.0
    %5128 = vmatpush2.msra.mxu0 %v5066
    %5129 = vmatprep.subr.mxu0 0.0
    %5130 = vmatpush2.msra.mxu0 %v5065
    %5131 = vmatprep.mubr.f32.mxu0 %v1744
    %5132 = vmatmul.mubr.f32.gmra.mxu0 %v1722
    %v5133 = vpop.f32.mrf.mxu0
    %v5134 = vadd.f32 0.0, %v5133
    %v5135 = vpop.f32.mrf.mxu0
    %5136 = vdwg.mxu0
    %s5137 = scalar_lea.vmem %s4, 304
    %v5138 = vld [vmem:[%s5137] sm:$0xff]
    %v5139 = vld [vmem:[%s5137 + $0x8] sm:$0xff]
    %v5141 = vsel %vm1910, %v5138, 0
    %v5144 = vsel %vm1910, %v5139, 0
    %5146 = vmatprep.subr.mxu0 0.0
    %5147 = vmatpush1.msra.mxu0 0.0
    %5148 = vmatprep.subr.mxu0 0.0
    %5149 = vmatpush1.msra.mxu0 0.0
    %5150 = vmatprep.subr.mxu0 0.0
    %5151 = vmatpush1.msra.mxu0 0.0
    %5152 = vmatprep.subr.mxu0 0.0
    %5153 = vmatpush1.msra.mxu0 0.0
    %5154 = vmatprep.subr.mxu0 0.0
    %5155 = vmatpush1.msra.mxu0 0.0
    %5156 = vmatprep.subr.mxu0 0.0
    %5157 = vmatpush1.msra.mxu0 0.0
    %5158 = vmatprep.subr.mxu0 0.0
    %5159 = vmatpush1.msra.mxu0 0.0
    %5160 = vmatprep.subr.mxu0 0.0
    %5161 = vmatpush1.msra.mxu0 0.0
    %5162 = vmatprep.subr.mxu0 0.0
    %5163 = vmatpush1.msra.mxu0 0.0
    %5164 = vmatprep.subr.mxu0 0.0
    %5165 = vmatpush1.msra.mxu0 0.0
    %5166 = vmatprep.subr.mxu0 0.0
    %5167 = vmatpush1.msra.mxu0 0.0
    %5168 = vmatprep.subr.mxu0 0.0
    %5169 = vmatpush1.msra.mxu0 0.0
    %5170 = vmatprep.subr.mxu0 0.0
    %5171 = vmatpush1.msra.mxu0 0.0
    %5172 = vmatprep.subr.mxu0 0.0
    %5173 = vmatpush1.msra.mxu0 0.0
    %5174 = vmatprep.subr.mxu0 0.0
    %5175 = vmatpush1.msra.mxu0 0.0
    %5176 = vmatprep.subr.mxu0 0.0
    %5177 = vmatpush1.msra.mxu0 %v5134
    %5178 = vmatprep.subr.mxu0 0.0
    %5179 = vmatpush2.msra.mxu0 0.0
    %5180 = vmatprep.subr.mxu0 0.0
    %5181 = vmatpush2.msra.mxu0 0.0
    %5182 = vmatprep.subr.mxu0 0.0
    %5183 = vmatpush2.msra.mxu0 0.0
    %5184 = vmatprep.subr.mxu0 0.0
    %5185 = vmatpush2.msra.mxu0 0.0
    %5186 = vmatprep.subr.mxu0 0.0
    %5187 = vmatpush2.msra.mxu0 0.0
    %5188 = vmatprep.subr.mxu0 0.0
    %5189 = vmatpush2.msra.mxu0 0.0
    %5190 = vmatprep.subr.mxu0 0.0
    %5191 = vmatpush2.msra.mxu0 0.0
    %5192 = vmatprep.subr.mxu0 0.0
    %5193 = vmatpush2.msra.mxu0 0.0
    %5194 = vmatprep.subr.mxu0 0.0
    %5195 = vmatpush2.msra.mxu0 0.0
    %5196 = vmatprep.subr.mxu0 0.0
    %5197 = vmatpush2.msra.mxu0 0.0
    %5198 = vmatprep.subr.mxu0 0.0
    %5199 = vmatpush2.msra.mxu0 0.0
    %5200 = vmatprep.subr.mxu0 0.0
    %5201 = vmatpush2.msra.mxu0 0.0
    %5202 = vmatprep.subr.mxu0 0.0
    %5203 = vmatpush2.msra.mxu0 0.0
    %5204 = vmatprep.subr.mxu0 0.0
    %5205 = vmatpush2.msra.mxu0 0.0
    %5206 = vmatprep.subr.mxu0 0.0
    %5207 = vmatpush2.msra.mxu0 0.0
    %5208 = vmatprep.subr.mxu0 0.0
    %5209 = vmatpush2.msra.mxu0 0.0
    %5210 = vmatprep.mubr.f32.mxu0 0.0
    %5211 = vmatmul.mubr.f32.gmra.mxu0 %v5141
    %v5212 = vpop.f32.mrf.mxu0
    %v5213 = vadd.f32 0.0, %v5212
    %v5214 = vpop.f32.mrf.mxu0
    %5215 = vmatprep.mubr.f32.mxu0 0.0
    %5216 = vmatmul.mubr.f32.gmra.mxu0 %v5144
    %v5217 = vpop.f32.mrf.mxu0
    %v5218 = vadd.f32 0.0, %v5217
    %v5219 = vpop.f32.mrf.mxu0
    %5220 = vdwg.mxu0
    %v5221 = vadd.f32 %v5046, %v5213
    %v5222 = vadd.f32 %v5047, %v5218
    %s5223 = scalar_lea.vmem %s3, 2880
    %v5224 = vld [vmem:[%s5223] sm:$0xff]
    %v5225 = vld [vmem:[%s5223 + $0x8] sm:$0xff]
    %v5226 = vld [vmem:[%s5223 + $0x10] sm:$0xff]
    %v5227 = vld [vmem:[%s5223 + $0x18] sm:$0xff]
    %v5228 = vld [vmem:[%s5223 + $0x20] sm:$0xff]
    %v5229 = vld [vmem:[%s5223 + $0x28] sm:$0xff]
    %v5230 = vld [vmem:[%s5223 + $0x30] sm:$0xff]
    %v5231 = vld [vmem:[%s5223 + $0x38] sm:$0xff]
    %v5232 = vld [vmem:[%s5223 + $0x40] sm:$0xff]
    %v5233 = vld [vmem:[%s5223 + $0x48] sm:$0xff]
    %v5234 = vld [vmem:[%s5223 + $0x50] sm:$0xff]
    %v5235 = vld [vmem:[%s5223 + $0x58] sm:$0xff]
    %v5236 = vld [vmem:[%s5223 + $0x60] sm:$0xff]
    %v5237 = vld [vmem:[%s5223 + $0x68] sm:$0xff]
    %v5238 = vld [vmem:[%s5223 + $0x70] sm:$0xff]
    %v5239 = vld [vmem:[%s5223 + $0x78] sm:$0xff]
    %v5240 = vld [vmem:[%s5223 + $0x80] sm:$0xff]
    %v5241 = vld [vmem:[%s5223 + $0x88] sm:$0xff]
    %5242 = vmatprep.subr.mxu0 0.0
    %5243 = vmatpush1.msra.mxu0 %v5239
    %5244 = vmatprep.subr.mxu0 0.0
    %5245 = vmatpush1.msra.mxu0 %v5238
    %5246 = vmatprep.subr.mxu0 0.0
    %5247 = vmatpush1.msra.mxu0 %v5237
    %5248 = vmatprep.subr.mxu0 0.0
    %5249 = vmatpush1.msra.mxu0 %v5236
    %5250 = vmatprep.subr.mxu0 0.0
    %5251 = vmatpush1.msra.mxu0 %v5235
    %5252 = vmatprep.subr.mxu0 0.0
    %5253 = vmatpush1.msra.mxu0 %v5234
    %5254 = vmatprep.subr.mxu0 0.0
    %5255 = vmatpush1.msra.mxu0 %v5233
    %5256 = vmatprep.subr.mxu0 0.0
    %5257 = vmatpush1.msra.mxu0 %v5232
    %5258 = vmatprep.subr.mxu0 0.0
    %5259 = vmatpush1.msra.mxu0 %v5231
    %5260 = vmatprep.subr.mxu0 0.0
    %5261 = vmatpush1.msra.mxu0 %v5230
    %5262 = vmatprep.subr.mxu0 0.0
    %5263 = vmatpush1.msra.mxu0 %v5229
    %5264 = vmatprep.subr.mxu0 0.0
    %5265 = vmatpush1.msra.mxu0 %v5228
    %5266 = vmatprep.subr.mxu0 0.0
    %5267 = vmatpush1.msra.mxu0 %v5227
    %5268 = vmatprep.subr.mxu0 0.0
    %5269 = vmatpush1.msra.mxu0 %v5226
    %5270 = vmatprep.subr.mxu0 0.0
    %5271 = vmatpush1.msra.mxu0 %v5225
    %5272 = vmatprep.subr.mxu0 0.0
    %5273 = vmatpush1.msra.mxu0 %v5224
    %5274 = vmatprep.subr.mxu0 0.0
    %5275 = vmatpush2.msra.mxu0 0.0
    %5276 = vmatprep.subr.mxu0 0.0
    %5277 = vmatpush2.msra.mxu0 0.0
    %5278 = vmatprep.subr.mxu0 0.0
    %5279 = vmatpush2.msra.mxu0 0.0
    %5280 = vmatprep.subr.mxu0 0.0
    %5281 = vmatpush2.msra.mxu0 0.0
    %5282 = vmatprep.subr.mxu0 0.0
    %5283 = vmatpush2.msra.mxu0 0.0
    %5284 = vmatprep.subr.mxu0 0.0
    %5285 = vmatpush2.msra.mxu0 0.0
    %5286 = vmatprep.subr.mxu0 0.0
    %5287 = vmatpush2.msra.mxu0 0.0
    %5288 = vmatprep.subr.mxu0 0.0
    %5289 = vmatpush2.msra.mxu0 0.0
    %5290 = vmatprep.subr.mxu0 0.0
    %5291 = vmatpush2.msra.mxu0 0.0
    %5292 = vmatprep.subr.mxu0 0.0
    %5293 = vmatpush2.msra.mxu0 0.0
    %5294 = vmatprep.subr.mxu0 0.0
    %5295 = vmatpush2.msra.mxu0 0.0
    %5296 = vmatprep.subr.mxu0 0.0
    %5297 = vmatpush2.msra.mxu0 0.0
    %5298 = vmatprep.subr.mxu0 0.0
    %5299 = vmatpush2.msra.mxu0 0.0
    %5300 = vmatprep.subr.mxu0 0.0
    %5301 = vmatpush2.msra.mxu0 0.0
    %5302 = vmatprep.subr.mxu0 0.0
    %5303 = vmatpush2.msra.mxu0 %v5241
    %5304 = vmatprep.subr.mxu0 0.0
    %5305 = vmatpush2.msra.mxu0 %v5240
    %5306 = vmatprep.mubr.f32.mxu0 %v1744
    %5307 = vmatmul.mubr.f32.gmra.mxu0 %v1722
    %v5308 = vpop.f32.mrf.mxu0
    %v5309 = vadd.f32 0.0, %v5308
    %v5310 = vpop.f32.mrf.mxu0
    %5311 = vdwg.mxu0
    %s5312 = scalar_lea.vmem %s4, 320
    %v5313 = vld [vmem:[%s5312] sm:$0xff]
    %v5314 = vld [vmem:[%s5312 + $0x8] sm:$0xff]
    %v5316 = vsel %vm1910, %v5313, 0
    %v5319 = vsel %vm1910, %v5314, 0
    %5321 = vmatprep.subr.mxu0 0.0
    %5322 = vmatpush1.msra.mxu0 0.0
    %5323 = vmatprep.subr.mxu0 0.0
    %5324 = vmatpush1.msra.mxu0 0.0
    %5325 = vmatprep.subr.mxu0 0.0
    %5326 = vmatpush1.msra.mxu0 0.0
    %5327 = vmatprep.subr.mxu0 0.0
    %5328 = vmatpush1.msra.mxu0 0.0
    %5329 = vmatprep.subr.mxu0 0.0
    %5330 = vmatpush1.msra.mxu0 0.0
    %5331 = vmatprep.subr.mxu0 0.0
    %5332 = vmatpush1.msra.mxu0 0.0
    %5333 = vmatprep.subr.mxu0 0.0
    %5334 = vmatpush1.msra.mxu0 0.0
    %5335 = vmatprep.subr.mxu0 0.0
    %5336 = vmatpush1.msra.mxu0 0.0
    %5337 = vmatprep.subr.mxu0 0.0
    %5338 = vmatpush1.msra.mxu0 0.0
    %5339 = vmatprep.subr.mxu0 0.0
    %5340 = vmatpush1.msra.mxu0 0.0
    %5341 = vmatprep.subr.mxu0 0.0
    %5342 = vmatpush1.msra.mxu0 0.0
    %5343 = vmatprep.subr.mxu0 0.0
    %5344 = vmatpush1.msra.mxu0 0.0
    %5345 = vmatprep.subr.mxu0 0.0
    %5346 = vmatpush1.msra.mxu0 0.0
    %5347 = vmatprep.subr.mxu0 0.0
    %5348 = vmatpush1.msra.mxu0 0.0
    %5349 = vmatprep.subr.mxu0 0.0
    %5350 = vmatpush1.msra.mxu0 0.0
    %5351 = vmatprep.subr.mxu0 0.0
    %5352 = vmatpush1.msra.mxu0 %v5309
    %5353 = vmatprep.subr.mxu0 0.0
    %5354 = vmatpush2.msra.mxu0 0.0
    %5355 = vmatprep.subr.mxu0 0.0
    %5356 = vmatpush2.msra.mxu0 0.0
    %5357 = vmatprep.subr.mxu0 0.0
    %5358 = vmatpush2.msra.mxu0 0.0
    %5359 = vmatprep.subr.mxu0 0.0
    %5360 = vmatpush2.msra.mxu0 0.0
    %5361 = vmatprep.subr.mxu0 0.0
    %5362 = vmatpush2.msra.mxu0 0.0
    %5363 = vmatprep.subr.mxu0 0.0
    %5364 = vmatpush2.msra.mxu0 0.0
    %5365 = vmatprep.subr.mxu0 0.0
    %5366 = vmatpush2.msra.mxu0 0.0
    %5367 = vmatprep.subr.mxu0 0.0
    %5368 = vmatpush2.msra.mxu0 0.0
    %5369 = vmatprep.subr.mxu0 0.0
    %5370 = vmatpush2.msra.mxu0 0.0
    %5371 = vmatprep.subr.mxu0 0.0
    %5372 = vmatpush2.msra.mxu0 0.0
    %5373 = vmatprep.subr.mxu0 0.0
    %5374 = vmatpush2.msra.mxu0 0.0
    %5375 = vmatprep.subr.mxu0 0.0
    %5376 = vmatpush2.msra.mxu0 0.0
    %5377 = vmatprep.subr.mxu0 0.0
    %5378 = vmatpush2.msra.mxu0 0.0
    %5379 = vmatprep.subr.mxu0 0.0
    %5380 = vmatpush2.msra.mxu0 0.0
    %5381 = vmatprep.subr.mxu0 0.0
    %5382 = vmatpush2.msra.mxu0 0.0
    %5383 = vmatprep.subr.mxu0 0.0
    %5384 = vmatpush2.msra.mxu0 0.0
    %5385 = vmatprep.mubr.f32.mxu0 0.0
    %5386 = vmatmul.mubr.f32.gmra.mxu0 %v5316
    %v5387 = vpop.f32.mrf.mxu0
    %v5388 = vadd.f32 0.0, %v5387
    %v5389 = vpop.f32.mrf.mxu0
    %5390 = vmatprep.mubr.f32.mxu0 0.0
    %5391 = vmatmul.mubr.f32.gmra.mxu0 %v5319
    %v5392 = vpop.f32.mrf.mxu0
    %v5393 = vadd.f32 0.0, %v5392
    %v5394 = vpop.f32.mrf.mxu0
    %5395 = vdwg.mxu0
    %v5396 = vadd.f32 %v5221, %v5388
    %v5397 = vadd.f32 %v5222, %v5393
    %s5398 = scalar_lea.vmem %s3, 3024
    %v5399 = vld [vmem:[%s5398] sm:$0xff]
    %v5400 = vld [vmem:[%s5398 + $0x8] sm:$0xff]
    %v5401 = vld [vmem:[%s5398 + $0x10] sm:$0xff]
    %v5402 = vld [vmem:[%s5398 + $0x18] sm:$0xff]
    %v5403 = vld [vmem:[%s5398 + $0x20] sm:$0xff]
    %v5404 = vld [vmem:[%s5398 + $0x28] sm:$0xff]
    %v5405 = vld [vmem:[%s5398 + $0x30] sm:$0xff]
    %v5406 = vld [vmem:[%s5398 + $0x38] sm:$0xff]
    %v5407 = vld [vmem:[%s5398 + $0x40] sm:$0xff]
    %v5408 = vld [vmem:[%s5398 + $0x48] sm:$0xff]
    %v5409 = vld [vmem:[%s5398 + $0x50] sm:$0xff]
    %v5410 = vld [vmem:[%s5398 + $0x58] sm:$0xff]
    %v5411 = vld [vmem:[%s5398 + $0x60] sm:$0xff]
    %v5412 = vld [vmem:[%s5398 + $0x68] sm:$0xff]
    %v5413 = vld [vmem:[%s5398 + $0x70] sm:$0xff]
    %v5414 = vld [vmem:[%s5398 + $0x78] sm:$0xff]
    %v5415 = vld [vmem:[%s5398 + $0x80] sm:$0xff]
    %v5416 = vld [vmem:[%s5398 + $0x88] sm:$0xff]
    %5417 = vmatprep.subr.mxu0 0.0
    %5418 = vmatpush1.msra.mxu0 %v5414
    %5419 = vmatprep.subr.mxu0 0.0
    %5420 = vmatpush1.msra.mxu0 %v5413
    %5421 = vmatprep.subr.mxu0 0.0
    %5422 = vmatpush1.msra.mxu0 %v5412
    %5423 = vmatprep.subr.mxu0 0.0
    %5424 = vmatpush1.msra.mxu0 %v5411
    %5425 = vmatprep.subr.mxu0 0.0
    %5426 = vmatpush1.msra.mxu0 %v5410
    %5427 = vmatprep.subr.mxu0 0.0
    %5428 = vmatpush1.msra.mxu0 %v5409
    %5429 = vmatprep.subr.mxu0 0.0
    %5430 = vmatpush1.msra.mxu0 %v5408
    %5431 = vmatprep.subr.mxu0 0.0
    %5432 = vmatpush1.msra.mxu0 %v5407
    %5433 = vmatprep.subr.mxu0 0.0
    %5434 = vmatpush1.msra.mxu0 %v5406
    %5435 = vmatprep.subr.mxu0 0.0
    %5436 = vmatpush1.msra.mxu0 %v5405
    %5437 = vmatprep.subr.mxu0 0.0
    %5438 = vmatpush1.msra.mxu0 %v5404
    %5439 = vmatprep.subr.mxu0 0.0
    %5440 = vmatpush1.msra.mxu0 %v5403
    %5441 = vmatprep.subr.mxu0 0.0
    %5442 = vmatpush1.msra.mxu0 %v5402
    %5443 = vmatprep.subr.mxu0 0.0
    %5444 = vmatpush1.msra.mxu0 %v5401
    %5445 = vmatprep.subr.mxu0 0.0
    %5446 = vmatpush1.msra.mxu0 %v5400
    %5447 = vmatprep.subr.mxu0 0.0
    %5448 = vmatpush1.msra.mxu0 %v5399
    %5449 = vmatprep.subr.mxu0 0.0
    %5450 = vmatpush2.msra.mxu0 0.0
    %5451 = vmatprep.subr.mxu0 0.0
    %5452 = vmatpush2.msra.mxu0 0.0
    %5453 = vmatprep.subr.mxu0 0.0
    %5454 = vmatpush2.msra.mxu0 0.0
    %5455 = vmatprep.subr.mxu0 0.0
    %5456 = vmatpush2.msra.mxu0 0.0
    %5457 = vmatprep.subr.mxu0 0.0
    %5458 = vmatpush2.msra.mxu0 0.0
    %5459 = vmatprep.subr.mxu0 0.0
    %5460 = vmatpush2.msra.mxu0 0.0
    %5461 = vmatprep.subr.mxu0 0.0
    %5462 = vmatpush2.msra.mxu0 0.0
    %5463 = vmatprep.subr.mxu0 0.0
    %5464 = vmatpush2.msra.mxu0 0.0
    %5465 = vmatprep.subr.mxu0 0.0
    %5466 = vmatpush2.msra.mxu0 0.0
    %5467 = vmatprep.subr.mxu0 0.0
    %5468 = vmatpush2.msra.mxu0 0.0
    %5469 = vmatprep.subr.mxu0 0.0
    %5470 = vmatpush2.msra.mxu0 0.0
    %5471 = vmatprep.subr.mxu0 0.0
    %5472 = vmatpush2.msra.mxu0 0.0
    %5473 = vmatprep.subr.mxu0 0.0
    %5474 = vmatpush2.msra.mxu0 0.0
    %5475 = vmatprep.subr.mxu0 0.0
    %5476 = vmatpush2.msra.mxu0 0.0
    %5477 = vmatprep.subr.mxu0 0.0
    %5478 = vmatpush2.msra.mxu0 %v5416
    %5479 = vmatprep.subr.mxu0 0.0
    %5480 = vmatpush2.msra.mxu0 %v5415
    %5481 = vmatprep.mubr.f32.mxu0 %v1744
    %5482 = vmatmul.mubr.f32.gmra.mxu0 %v1722
    %v5483 = vpop.f32.mrf.mxu0
    %v5484 = vadd.f32 0.0, %v5483
    %v5485 = vpop.f32.mrf.mxu0
    %5486 = vdwg.mxu0
    %s5487 = scalar_lea.vmem %s4, 336
    %v5488 = vld [vmem:[%s5487] sm:$0xff]
    %v5489 = vld [vmem:[%s5487 + $0x8] sm:$0xff]
    %v5491 = vsel %vm1910, %v5488, 0
    %v5494 = vsel %vm1910, %v5489, 0
    %5496 = vmatprep.subr.mxu0 0.0
    %5497 = vmatpush1.msra.mxu0 0.0
    %5498 = vmatprep.subr.mxu0 0.0
    %5499 = vmatpush1.msra.mxu0 0.0
    %5500 = vmatprep.subr.mxu0 0.0
    %5501 = vmatpush1.msra.mxu0 0.0
    %5502 = vmatprep.subr.mxu0 0.0
    %5503 = vmatpush1.msra.mxu0 0.0
    %5504 = vmatprep.subr.mxu0 0.0
    %5505 = vmatpush1.msra.mxu0 0.0
    %5506 = vmatprep.subr.mxu0 0.0
    %5507 = vmatpush1.msra.mxu0 0.0
    %5508 = vmatprep.subr.mxu0 0.0
    %5509 = vmatpush1.msra.mxu0 0.0
    %5510 = vmatprep.subr.mxu0 0.0
    %5511 = vmatpush1.msra.mxu0 0.0
    %5512 = vmatprep.subr.mxu0 0.0
    %5513 = vmatpush1.msra.mxu0 0.0
    %5514 = vmatprep.subr.mxu0 0.0
    %5515 = vmatpush1.msra.mxu0 0.0
    %5516 = vmatprep.subr.mxu0 0.0
    %5517 = vmatpush1.msra.mxu0 0.0
    %5518 = vmatprep.subr.mxu0 0.0
    %5519 = vmatpush1.msra.mxu0 0.0
    %5520 = vmatprep.subr.mxu0 0.0
    %5521 = vmatpush1.msra.mxu0 0.0
    %5522 = vmatprep.subr.mxu0 0.0
    %5523 = vmatpush1.msra.mxu0 0.0
    %5524 = vmatprep.subr.mxu0 0.0
    %5525 = vmatpush1.msra.mxu0 0.0
    %5526 = vmatprep.subr.mxu0 0.0
    %5527 = vmatpush1.msra.mxu0 %v5484
    %5528 = vmatprep.subr.mxu0 0.0
    %5529 = vmatpush2.msra.mxu0 0.0
    %5530 = vmatprep.subr.mxu0 0.0
    %5531 = vmatpush2.msra.mxu0 0.0
    %5532 = vmatprep.subr.mxu0 0.0
    %5533 = vmatpush2.msra.mxu0 0.0
    %5534 = vmatprep.subr.mxu0 0.0
    %5535 = vmatpush2.msra.mxu0 0.0
    %5536 = vmatprep.subr.mxu0 0.0
    %5537 = vmatpush2.msra.mxu0 0.0
    %5538 = vmatprep.subr.mxu0 0.0
    %5539 = vmatpush2.msra.mxu0 0.0
    %5540 = vmatprep.subr.mxu0 0.0
    %5541 = vmatpush2.msra.mxu0 0.0
    %5542 = vmatprep.subr.mxu0 0.0
    %5543 = vmatpush2.msra.mxu0 0.0
    %5544 = vmatprep.subr.mxu0 0.0
    %5545 = vmatpush2.msra.mxu0 0.0
    %5546 = vmatprep.subr.mxu0 0.0
    %5547 = vmatpush2.msra.mxu0 0.0
    %5548 = vmatprep.subr.mxu0 0.0
    %5549 = vmatpush2.msra.mxu0 0.0
    %5550 = vmatprep.subr.mxu0 0.0
    %5551 = vmatpush2.msra.mxu0 0.0
    %5552 = vmatprep.subr.mxu0 0.0
    %5553 = vmatpush2.msra.mxu0 0.0
    %5554 = vmatprep.subr.mxu0 0.0
    %5555 = vmatpush2.msra.mxu0 0.0
    %5556 = vmatprep.subr.mxu0 0.0
    %5557 = vmatpush2.msra.mxu0 0.0
    %5558 = vmatprep.subr.mxu0 0.0
    %5559 = vmatpush2.msra.mxu0 0.0
    %5560 = vmatprep.mubr.f32.mxu0 0.0
    %5561 = vmatmul.mubr.f32.gmra.mxu0 %v5491
    %v5562 = vpop.f32.mrf.mxu0
    %v5563 = vadd.f32 0.0, %v5562
    %v5564 = vpop.f32.mrf.mxu0
    %5565 = vmatprep.mubr.f32.mxu0 0.0
    %5566 = vmatmul.mubr.f32.gmra.mxu0 %v5494
    %v5567 = vpop.f32.mrf.mxu0
    %v5568 = vadd.f32 0.0, %v5567
    %v5569 = vpop.f32.mrf.mxu0
    %5570 = vdwg.mxu0
    %v5571 = vadd.f32 %v5396, %v5563
    %v5572 = vadd.f32 %v5397, %v5568
    %s5573 = scalar_lea.vmem %s3, 3168
    %v5574 = vld [vmem:[%s5573] sm:$0xff]
    %v5575 = vld [vmem:[%s5573 + $0x8] sm:$0xff]
    %v5576 = vld [vmem:[%s5573 + $0x10] sm:$0xff]
    %v5577 = vld [vmem:[%s5573 + $0x18] sm:$0xff]
    %v5578 = vld [vmem:[%s5573 + $0x20] sm:$0xff]
    %v5579 = vld [vmem:[%s5573 + $0x28] sm:$0xff]
    %v5580 = vld [vmem:[%s5573 + $0x30] sm:$0xff]
    %v5581 = vld [vmem:[%s5573 + $0x38] sm:$0xff]
    %v5582 = vld [vmem:[%s5573 + $0x40] sm:$0xff]
    %v5583 = vld [vmem:[%s5573 + $0x48] sm:$0xff]
    %v5584 = vld [vmem:[%s5573 + $0x50] sm:$0xff]
    %v5585 = vld [vmem:[%s5573 + $0x58] sm:$0xff]
    %v5586 = vld [vmem:[%s5573 + $0x60] sm:$0xff]
    %v5587 = vld [vmem:[%s5573 + $0x68] sm:$0xff]
    %v5588 = vld [vmem:[%s5573 + $0x70] sm:$0xff]
    %v5589 = vld [vmem:[%s5573 + $0x78] sm:$0xff]
    %v5590 = vld [vmem:[%s5573 + $0x80] sm:$0xff]
    %v5591 = vld [vmem:[%s5573 + $0x88] sm:$0xff]
    %5592 = vmatprep.subr.mxu0 0.0
    %5593 = vmatpush1.msra.mxu0 %v5589
    %5594 = vmatprep.subr.mxu0 0.0
    %5595 = vmatpush1.msra.mxu0 %v5588
    %5596 = vmatprep.subr.mxu0 0.0
    %5597 = vmatpush1.msra.mxu0 %v5587
    %5598 = vmatprep.subr.mxu0 0.0
    %5599 = vmatpush1.msra.mxu0 %v5586
    %5600 = vmatprep.subr.mxu0 0.0
    %5601 = vmatpush1.msra.mxu0 %v5585
    %5602 = vmatprep.subr.mxu0 0.0
    %5603 = vmatpush1.msra.mxu0 %v5584
    %5604 = vmatprep.subr.mxu0 0.0
    %5605 = vmatpush1.msra.mxu0 %v5583
    %5606 = vmatprep.subr.mxu0 0.0
    %5607 = vmatpush1.msra.mxu0 %v5582
    %5608 = vmatprep.subr.mxu0 0.0
    %5609 = vmatpush1.msra.mxu0 %v5581
    %5610 = vmatprep.subr.mxu0 0.0
    %5611 = vmatpush1.msra.mxu0 %v5580
    %5612 = vmatprep.subr.mxu0 0.0
    %5613 = vmatpush1.msra.mxu0 %v5579
    %5614 = vmatprep.subr.mxu0 0.0
    %5615 = vmatpush1.msra.mxu0 %v5578
    %5616 = vmatprep.subr.mxu0 0.0
    %5617 = vmatpush1.msra.mxu0 %v5577
    %5618 = vmatprep.subr.mxu0 0.0
    %5619 = vmatpush1.msra.mxu0 %v5576
    %5620 = vmatprep.subr.mxu0 0.0
    %5621 = vmatpush1.msra.mxu0 %v5575
    %5622 = vmatprep.subr.mxu0 0.0
    %5623 = vmatpush1.msra.mxu0 %v5574
    %5624 = vmatprep.subr.mxu0 0.0
    %5625 = vmatpush2.msra.mxu0 0.0
    %5626 = vmatprep.subr.mxu0 0.0
    %5627 = vmatpush2.msra.mxu0 0.0
    %5628 = vmatprep.subr.mxu0 0.0
    %5629 = vmatpush2.msra.mxu0 0.0
    %5630 = vmatprep.subr.mxu0 0.0
    %5631 = vmatpush2.msra.mxu0 0.0
    %5632 = vmatprep.subr.mxu0 0.0
    %5633 = vmatpush2.msra.mxu0 0.0
    %5634 = vmatprep.subr.mxu0 0.0
    %5635 = vmatpush2.msra.mxu0 0.0
    %5636 = vmatprep.subr.mxu0 0.0
    %5637 = vmatpush2.msra.mxu0 0.0
    %5638 = vmatprep.subr.mxu0 0.0
    %5639 = vmatpush2.msra.mxu0 0.0
    %5640 = vmatprep.subr.mxu0 0.0
    %5641 = vmatpush2.msra.mxu0 0.0
    %5642 = vmatprep.subr.mxu0 0.0
    %5643 = vmatpush2.msra.mxu0 0.0
    %5644 = vmatprep.subr.mxu0 0.0
    %5645 = vmatpush2.msra.mxu0 0.0
    %5646 = vmatprep.subr.mxu0 0.0
    %5647 = vmatpush2.msra.mxu0 0.0
    %5648 = vmatprep.subr.mxu0 0.0
    %5649 = vmatpush2.msra.mxu0 0.0
    %5650 = vmatprep.subr.mxu0 0.0
    %5651 = vmatpush2.msra.mxu0 0.0
    %5652 = vmatprep.subr.mxu0 0.0
    %5653 = vmatpush2.msra.mxu0 %v5591
    %5654 = vmatprep.subr.mxu0 0.0
    %5655 = vmatpush2.msra.mxu0 %v5590
    %5656 = vmatprep.mubr.f32.mxu0 %v1744
    %5657 = vmatmul.mubr.f32.gmra.mxu0 %v1722
    %v5658 = vpop.f32.mrf.mxu0
    %v5659 = vadd.f32 0.0, %v5658
    %v5660 = vpop.f32.mrf.mxu0
    %5661 = vdwg.mxu0
    %s5662 = scalar_lea.vmem %s4, 352
    %v5663 = vld [vmem:[%s5662] sm:$0xff]
    %v5664 = vld [vmem:[%s5662 + $0x8] sm:$0xff]
    %v5666 = vsel %vm1910, %v5663, 0
    %v5669 = vsel %vm1910, %v5664, 0
    %5671 = vmatprep.subr.mxu0 0.0
    %5672 = vmatpush1.msra.mxu0 0.0
    %5673 = vmatprep.subr.mxu0 0.0
    %5674 = vmatpush1.msra.mxu0 0.0
    %5675 = vmatprep.subr.mxu0 0.0
    %5676 = vmatpush1.msra.mxu0 0.0
    %5677 = vmatprep.subr.mxu0 0.0
    %5678 = vmatpush1.msra.mxu0 0.0
    %5679 = vmatprep.subr.mxu0 0.0
    %5680 = vmatpush1.msra.mxu0 0.0
    %5681 = vmatprep.subr.mxu0 0.0
    %5682 = vmatpush1.msra.mxu0 0.0
    %5683 = vmatprep.subr.mxu0 0.0
    %5684 = vmatpush1.msra.mxu0 0.0
    %5685 = vmatprep.subr.mxu0 0.0
    %5686 = vmatpush1.msra.mxu0 0.0
    %5687 = vmatprep.subr.mxu0 0.0
    %5688 = vmatpush1.msra.mxu0 0.0
    %5689 = vmatprep.subr.mxu0 0.0
    %5690 = vmatpush1.msra.mxu0 0.0
    %5691 = vmatprep.subr.mxu0 0.0
    %5692 = vmatpush1.msra.mxu0 0.0
    %5693 = vmatprep.subr.mxu0 0.0
    %5694 = vmatpush1.msra.mxu0 0.0
    %5695 = vmatprep.subr.mxu0 0.0
    %5696 = vmatpush1.msra.mxu0 0.0
    %5697 = vmatprep.subr.mxu0 0.0
    %5698 = vmatpush1.msra.mxu0 0.0
    %5699 = vmatprep.subr.mxu0 0.0
    %5700 = vmatpush1.msra.mxu0 0.0
    %5701 = vmatprep.subr.mxu0 0.0
    %5702 = vmatpush1.msra.mxu0 %v5659
    %5703 = vmatprep.subr.mxu0 0.0
    %5704 = vmatpush2.msra.mxu0 0.0
    %5705 = vmatprep.subr.mxu0 0.0
    %5706 = vmatpush2.msra.mxu0 0.0
    %5707 = vmatprep.subr.mxu0 0.0
    %5708 = vmatpush2.msra.mxu0 0.0
    %5709 = vmatprep.subr.mxu0 0.0
    %5710 = vmatpush2.msra.mxu0 0.0
    %5711 = vmatprep.subr.mxu0 0.0
    %5712 = vmatpush2.msra.mxu0 0.0
    %5713 = vmatprep.subr.mxu0 0.0
    %5714 = vmatpush2.msra.mxu0 0.0
    %5715 = vmatprep.subr.mxu0 0.0
    %5716 = vmatpush2.msra.mxu0 0.0
    %5717 = vmatprep.subr.mxu0 0.0
    %5718 = vmatpush2.msra.mxu0 0.0
    %5719 = vmatprep.subr.mxu0 0.0
    %5720 = vmatpush2.msra.mxu0 0.0
    %5721 = vmatprep.subr.mxu0 0.0
    %5722 = vmatpush2.msra.mxu0 0.0
    %5723 = vmatprep.subr.mxu0 0.0
    %5724 = vmatpush2.msra.mxu0 0.0
    %5725 = vmatprep.subr.mxu0 0.0
    %5726 = vmatpush2.msra.mxu0 0.0
    %5727 = vmatprep.subr.mxu0 0.0
    %5728 = vmatpush2.msra.mxu0 0.0
    %5729 = vmatprep.subr.mxu0 0.0
    %5730 = vmatpush2.msra.mxu0 0.0
    %5731 = vmatprep.subr.mxu0 0.0
    %5732 = vmatpush2.msra.mxu0 0.0
    %5733 = vmatprep.subr.mxu0 0.0
    %5734 = vmatpush2.msra.mxu0 0.0
    %5735 = vmatprep.mubr.f32.mxu0 0.0
    %5736 = vmatmul.mubr.f32.gmra.mxu0 %v5666
    %v5737 = vpop.f32.mrf.mxu0
    %v5738 = vadd.f32 0.0, %v5737
    %v5739 = vpop.f32.mrf.mxu0
    %5740 = vmatprep.mubr.f32.mxu0 0.0
    %5741 = vmatmul.mubr.f32.gmra.mxu0 %v5669
    %v5742 = vpop.f32.mrf.mxu0
    %v5743 = vadd.f32 0.0, %v5742
    %v5744 = vpop.f32.mrf.mxu0
    %5745 = vdwg.mxu0
    %v5746 = vadd.f32 %v5571, %v5738
    %v5747 = vadd.f32 %v5572, %v5743
    %s5748 = scalar_lea.vmem %s3, 3312
    %v5749 = vld [vmem:[%s5748] sm:$0xff]
    %v5750 = vld [vmem:[%s5748 + $0x8] sm:$0xff]
    %v5751 = vld [vmem:[%s5748 + $0x10] sm:$0xff]
    %v5752 = vld [vmem:[%s5748 + $0x18] sm:$0xff]
    %v5753 = vld [vmem:[%s5748 + $0x20] sm:$0xff]
    %v5754 = vld [vmem:[%s5748 + $0x28] sm:$0xff]
    %v5755 = vld [vmem:[%s5748 + $0x30] sm:$0xff]
    %v5756 = vld [vmem:[%s5748 + $0x38] sm:$0xff]
    %v5757 = vld [vmem:[%s5748 + $0x40] sm:$0xff]
    %v5758 = vld [vmem:[%s5748 + $0x48] sm:$0xff]
    %v5759 = vld [vmem:[%s5748 + $0x50] sm:$0xff]
    %v5760 = vld [vmem:[%s5748 + $0x58] sm:$0xff]
    %v5761 = vld [vmem:[%s5748 + $0x60] sm:$0xff]
    %v5762 = vld [vmem:[%s5748 + $0x68] sm:$0xff]
    %v5763 = vld [vmem:[%s5748 + $0x70] sm:$0xff]
    %v5764 = vld [vmem:[%s5748 + $0x78] sm:$0xff]
    %v5765 = vld [vmem:[%s5748 + $0x80] sm:$0xff]
    %v5766 = vld [vmem:[%s5748 + $0x88] sm:$0xff]
    %5767 = vmatprep.subr.mxu0 0.0
    %5768 = vmatpush1.msra.mxu0 %v5764
    %5769 = vmatprep.subr.mxu0 0.0
    %5770 = vmatpush1.msra.mxu0 %v5763
    %5771 = vmatprep.subr.mxu0 0.0
    %5772 = vmatpush1.msra.mxu0 %v5762
    %5773 = vmatprep.subr.mxu0 0.0
    %5774 = vmatpush1.msra.mxu0 %v5761
    %5775 = vmatprep.subr.mxu0 0.0
    %5776 = vmatpush1.msra.mxu0 %v5760
    %5777 = vmatprep.subr.mxu0 0.0
    %5778 = vmatpush1.msra.mxu0 %v5759
    %5779 = vmatprep.subr.mxu0 0.0
    %5780 = vmatpush1.msra.mxu0 %v5758
    %5781 = vmatprep.subr.mxu0 0.0
    %5782 = vmatpush1.msra.mxu0 %v5757
    %5783 = vmatprep.subr.mxu0 0.0
    %5784 = vmatpush1.msra.mxu0 %v5756
    %5785 = vmatprep.subr.mxu0 0.0
    %5786 = vmatpush1.msra.mxu0 %v5755
    %5787 = vmatprep.subr.mxu0 0.0
    %5788 = vmatpush1.msra.mxu0 %v5754
    %5789 = vmatprep.subr.mxu0 0.0
    %5790 = vmatpush1.msra.mxu0 %v5753
    %5791 = vmatprep.subr.mxu0 0.0
    %5792 = vmatpush1.msra.mxu0 %v5752
    %5793 = vmatprep.subr.mxu0 0.0
    %5794 = vmatpush1.msra.mxu0 %v5751
    %5795 = vmatprep.subr.mxu0 0.0
    %5796 = vmatpush1.msra.mxu0 %v5750
    %5797 = vmatprep.subr.mxu0 0.0
    %5798 = vmatpush1.msra.mxu0 %v5749
    %5799 = vmatprep.subr.mxu0 0.0
    %5800 = vmatpush2.msra.mxu0 0.0
    %5801 = vmatprep.subr.mxu0 0.0
    %5802 = vmatpush2.msra.mxu0 0.0
    %5803 = vmatprep.subr.mxu0 0.0
    %5804 = vmatpush2.msra.mxu0 0.0
    %5805 = vmatprep.subr.mxu0 0.0
    %5806 = vmatpush2.msra.mxu0 0.0
    %5807 = vmatprep.subr.mxu0 0.0
    %5808 = vmatpush2.msra.mxu0 0.0
    %5809 = vmatprep.subr.mxu0 0.0
    %5810 = vmatpush2.msra.mxu0 0.0
    %5811 = vmatprep.subr.mxu0 0.0
    %5812 = vmatpush2.msra.mxu0 0.0
    %5813 = vmatprep.subr.mxu0 0.0
    %5814 = vmatpush2.msra.mxu0 0.0
    %5815 = vmatprep.subr.mxu0 0.0
    %5816 = vmatpush2.msra.mxu0 0.0
    %5817 = vmatprep.subr.mxu0 0.0
    %5818 = vmatpush2.msra.mxu0 0.0
    %5819 = vmatprep.subr.mxu0 0.0
    %5820 = vmatpush2.msra.mxu0 0.0
    %5821 = vmatprep.subr.mxu0 0.0
    %5822 = vmatpush2.msra.mxu0 0.0
    %5823 = vmatprep.subr.mxu0 0.0
    %5824 = vmatpush2.msra.mxu0 0.0
    %5825 = vmatprep.subr.mxu0 0.0
    %5826 = vmatpush2.msra.mxu0 0.0
    %5827 = vmatprep.subr.mxu0 0.0
    %5828 = vmatpush2.msra.mxu0 %v5766
    %5829 = vmatprep.subr.mxu0 0.0
    %5830 = vmatpush2.msra.mxu0 %v5765
    %5831 = vmatprep.mubr.f32.mxu0 %v1744
    %5832 = vmatmul.mubr.f32.gmra.mxu0 %v1722
    %v5833 = vpop.f32.mrf.mxu0
    %v5834 = vadd.f32 0.0, %v5833
    %v5835 = vpop.f32.mrf.mxu0
    %5836 = vdwg.mxu0
    %s5837 = scalar_lea.vmem %s4, 368
    %v5838 = vld [vmem:[%s5837] sm:$0xff]
    %v5839 = vld [vmem:[%s5837 + $0x8] sm:$0xff]
    %v5841 = vsel %vm1910, %v5838, 0
    %v5844 = vsel %vm1910, %v5839, 0
    %5846 = vmatprep.subr.mxu0 0.0
    %5847 = vmatpush1.msra.mxu0 0.0
    %5848 = vmatprep.subr.mxu0 0.0
    %5849 = vmatpush1.msra.mxu0 0.0
    %5850 = vmatprep.subr.mxu0 0.0
    %5851 = vmatpush1.msra.mxu0 0.0
    %5852 = vmatprep.subr.mxu0 0.0
    %5853 = vmatpush1.msra.mxu0 0.0
    %5854 = vmatprep.subr.mxu0 0.0
    %5855 = vmatpush1.msra.mxu0 0.0
    %5856 = vmatprep.subr.mxu0 0.0
    %5857 = vmatpush1.msra.mxu0 0.0
    %5858 = vmatprep.subr.mxu0 0.0
    %5859 = vmatpush1.msra.mxu0 0.0
    %5860 = vmatprep.subr.mxu0 0.0
    %5861 = vmatpush1.msra.mxu0 0.0
    %5862 = vmatprep.subr.mxu0 0.0
    %5863 = vmatpush1.msra.mxu0 0.0
    %5864 = vmatprep.subr.mxu0 0.0
    %5865 = vmatpush1.msra.mxu0 0.0
    %5866 = vmatprep.subr.mxu0 0.0
    %5867 = vmatpush1.msra.mxu0 0.0
    %5868 = vmatprep.subr.mxu0 0.0
    %5869 = vmatpush1.msra.mxu0 0.0
    %5870 = vmatprep.subr.mxu0 0.0
    %5871 = vmatpush1.msra.mxu0 0.0
    %5872 = vmatprep.subr.mxu0 0.0
    %5873 = vmatpush1.msra.mxu0 0.0
    %5874 = vmatprep.subr.mxu0 0.0
    %5875 = vmatpush1.msra.mxu0 0.0
    %5876 = vmatprep.subr.mxu0 0.0
    %5877 = vmatpush1.msra.mxu0 %v5834
    %5878 = vmatprep.subr.mxu0 0.0
    %5879 = vmatpush2.msra.mxu0 0.0
    %5880 = vmatprep.subr.mxu0 0.0
    %5881 = vmatpush2.msra.mxu0 0.0
    %5882 = vmatprep.subr.mxu0 0.0
    %5883 = vmatpush2.msra.mxu0 0.0
    %5884 = vmatprep.subr.mxu0 0.0
    %5885 = vmatpush2.msra.mxu0 0.0
    %5886 = vmatprep.subr.mxu0 0.0
    %5887 = vmatpush2.msra.mxu0 0.0
    %5888 = vmatprep.subr.mxu0 0.0
    %5889 = vmatpush2.msra.mxu0 0.0
    %5890 = vmatprep.subr.mxu0 0.0
    %5891 = vmatpush2.msra.mxu0 0.0
    %5892 = vmatprep.subr.mxu0 0.0
    %5893 = vmatpush2.msra.mxu0 0.0
    %5894 = vmatprep.subr.mxu0 0.0
    %5895 = vmatpush2.msra.mxu0 0.0
    %5896 = vmatprep.subr.mxu0 0.0
    %5897 = vmatpush2.msra.mxu0 0.0
    %5898 = vmatprep.subr.mxu0 0.0
    %5899 = vmatpush2.msra.mxu0 0.0
    %5900 = vmatprep.subr.mxu0 0.0
    %5901 = vmatpush2.msra.mxu0 0.0
    %5902 = vmatprep.subr.mxu0 0.0
    %5903 = vmatpush2.msra.mxu0 0.0
    %5904 = vmatprep.subr.mxu0 0.0
    %5905 = vmatpush2.msra.mxu0 0.0
    %5906 = vmatprep.subr.mxu0 0.0
    %5907 = vmatpush2.msra.mxu0 0.0
    %5908 = vmatprep.subr.mxu0 0.0
    %5909 = vmatpush2.msra.mxu0 0.0
    %5910 = vmatprep.mubr.f32.mxu0 0.0
    %5911 = vmatmul.mubr.f32.gmra.mxu0 %v5841
    %v5912 = vpop.f32.mrf.mxu0
    %v5913 = vadd.f32 0.0, %v5912
    %v5914 = vpop.f32.mrf.mxu0
    %5915 = vmatprep.mubr.f32.mxu0 0.0
    %5916 = vmatmul.mubr.f32.gmra.mxu0 %v5844
    %v5917 = vpop.f32.mrf.mxu0
    %v5918 = vadd.f32 0.0, %v5917
    %v5919 = vpop.f32.mrf.mxu0
    %5920 = vdwg.mxu0
    %v5921 = vadd.f32 %v5746, %v5913
    %v5922 = vadd.f32 %v5747, %v5918
    %s5923 = scalar_lea.vmem %s3, 3456
    %v5924 = vld [vmem:[%s5923] sm:$0xff]
    %v5925 = vld [vmem:[%s5923 + $0x8] sm:$0xff]
    %v5926 = vld [vmem:[%s5923 + $0x10] sm:$0xff]
    %v5927 = vld [vmem:[%s5923 + $0x18] sm:$0xff]
    %v5928 = vld [vmem:[%s5923 + $0x20] sm:$0xff]
    %v5929 = vld [vmem:[%s5923 + $0x28] sm:$0xff]
    %v5930 = vld [vmem:[%s5923 + $0x30] sm:$0xff]
    %v5931 = vld [vmem:[%s5923 + $0x38] sm:$0xff]
    %v5932 = vld [vmem:[%s5923 + $0x40] sm:$0xff]
    %v5933 = vld [vmem:[%s5923 + $0x48] sm:$0xff]
    %v5934 = vld [vmem:[%s5923 + $0x50] sm:$0xff]
    %v5935 = vld [vmem:[%s5923 + $0x58] sm:$0xff]
    %v5936 = vld [vmem:[%s5923 + $0x60] sm:$0xff]
    %v5937 = vld [vmem:[%s5923 + $0x68] sm:$0xff]
    %v5938 = vld [vmem:[%s5923 + $0x70] sm:$0xff]
    %v5939 = vld [vmem:[%s5923 + $0x78] sm:$0xff]
    %v5940 = vld [vmem:[%s5923 + $0x80] sm:$0xff]
    %v5941 = vld [vmem:[%s5923 + $0x88] sm:$0xff]
    %5942 = vmatprep.subr.mxu0 0.0
    %5943 = vmatpush1.msra.mxu0 %v5939
    %5944 = vmatprep.subr.mxu0 0.0
    %5945 = vmatpush1.msra.mxu0 %v5938
    %5946 = vmatprep.subr.mxu0 0.0
    %5947 = vmatpush1.msra.mxu0 %v5937
    %5948 = vmatprep.subr.mxu0 0.0
    %5949 = vmatpush1.msra.mxu0 %v5936
    %5950 = vmatprep.subr.mxu0 0.0
    %5951 = vmatpush1.msra.mxu0 %v5935
    %5952 = vmatprep.subr.mxu0 0.0
    %5953 = vmatpush1.msra.mxu0 %v5934
    %5954 = vmatprep.subr.mxu0 0.0
    %5955 = vmatpush1.msra.mxu0 %v5933
    %5956 = vmatprep.subr.mxu0 0.0
    %5957 = vmatpush1.msra.mxu0 %v5932
    %5958 = vmatprep.subr.mxu0 0.0
    %5959 = vmatpush1.msra.mxu0 %v5931
    %5960 = vmatprep.subr.mxu0 0.0
    %5961 = vmatpush1.msra.mxu0 %v5930
    %5962 = vmatprep.subr.mxu0 0.0
    %5963 = vmatpush1.msra.mxu0 %v5929
    %5964 = vmatprep.subr.mxu0 0.0
    %5965 = vmatpush1.msra.mxu0 %v5928
    %5966 = vmatprep.subr.mxu0 0.0
    %5967 = vmatpush1.msra.mxu0 %v5927
    %5968 = vmatprep.subr.mxu0 0.0
    %5969 = vmatpush1.msra.mxu0 %v5926
    %5970 = vmatprep.subr.mxu0 0.0
    %5971 = vmatpush1.msra.mxu0 %v5925
    %5972 = vmatprep.subr.mxu0 0.0
    %5973 = vmatpush1.msra.mxu0 %v5924
    %5974 = vmatprep.subr.mxu0 0.0
    %5975 = vmatpush2.msra.mxu0 0.0
    %5976 = vmatprep.subr.mxu0 0.0
    %5977 = vmatpush2.msra.mxu0 0.0
    %5978 = vmatprep.subr.mxu0 0.0
    %5979 = vmatpush2.msra.mxu0 0.0
    %5980 = vmatprep.subr.mxu0 0.0
    %5981 = vmatpush2.msra.mxu0 0.0
    %5982 = vmatprep.subr.mxu0 0.0
    %5983 = vmatpush2.msra.mxu0 0.0
    %5984 = vmatprep.subr.mxu0 0.0
    %5985 = vmatpush2.msra.mxu0 0.0
    %5986 = vmatprep.subr.mxu0 0.0
    %5987 = vmatpush2.msra.mxu0 0.0
    %5988 = vmatprep.subr.mxu0 0.0
    %5989 = vmatpush2.msra.mxu0 0.0
    %5990 = vmatprep.subr.mxu0 0.0
    %5991 = vmatpush2.msra.mxu0 0.0
    %5992 = vmatprep.subr.mxu0 0.0
    %5993 = vmatpush2.msra.mxu0 0.0
    %5994 = vmatprep.subr.mxu0 0.0
    %5995 = vmatpush2.msra.mxu0 0.0
    %5996 = vmatprep.subr.mxu0 0.0
    %5997 = vmatpush2.msra.mxu0 0.0
    %5998 = vmatprep.subr.mxu0 0.0
    %5999 = vmatpush2.msra.mxu0 0.0
    %6000 = vmatprep.subr.mxu0 0.0
    %6001 = vmatpush2.msra.mxu0 0.0
    %6002 = vmatprep.subr.mxu0 0.0
    %6003 = vmatpush2.msra.mxu0 %v5941
    %6004 = vmatprep.subr.mxu0 0.0
    %6005 = vmatpush2.msra.mxu0 %v5940
    %6006 = vmatprep.mubr.f32.mxu0 %v1744
    %6007 = vmatmul.mubr.f32.gmra.mxu0 %v1722
    %v6008 = vpop.f32.mrf.mxu0
    %v6009 = vadd.f32 0.0, %v6008
    %v6010 = vpop.f32.mrf.mxu0
    %6011 = vdwg.mxu0
    %s6012 = scalar_lea.vmem %s4, 384
    %v6013 = vld [vmem:[%s6012] sm:$0xff]
    %v6014 = vld [vmem:[%s6012 + $0x8] sm:$0xff]
    %v6016 = vsel %vm1910, %v6013, 0
    %v6019 = vsel %vm1910, %v6014, 0
    %6021 = vmatprep.subr.mxu0 0.0
    %6022 = vmatpush1.msra.mxu0 0.0
    %6023 = vmatprep.subr.mxu0 0.0
    %6024 = vmatpush1.msra.mxu0 0.0
    %6025 = vmatprep.subr.mxu0 0.0
    %6026 = vmatpush1.msra.mxu0 0.0
    %6027 = vmatprep.subr.mxu0 0.0
    %6028 = vmatpush1.msra.mxu0 0.0
    %6029 = vmatprep.subr.mxu0 0.0
    %6030 = vmatpush1.msra.mxu0 0.0
    %6031 = vmatprep.subr.mxu0 0.0
    %6032 = vmatpush1.msra.mxu0 0.0
    %6033 = vmatprep.subr.mxu0 0.0
    %6034 = vmatpush1.msra.mxu0 0.0
    %6035 = vmatprep.subr.mxu0 0.0
    %6036 = vmatpush1.msra.mxu0 0.0
    %6037 = vmatprep.subr.mxu0 0.0
    %6038 = vmatpush1.msra.mxu0 0.0
    %6039 = vmatprep.subr.mxu0 0.0
    %6040 = vmatpush1.msra.mxu0 0.0
    %6041 = vmatprep.subr.mxu0 0.0
    %6042 = vmatpush1.msra.mxu0 0.0
    %6043 = vmatprep.subr.mxu0 0.0
    %6044 = vmatpush1.msra.mxu0 0.0
    %6045 = vmatprep.subr.mxu0 0.0
    %6046 = vmatpush1.msra.mxu0 0.0
    %6047 = vmatprep.subr.mxu0 0.0
    %6048 = vmatpush1.msra.mxu0 0.0
    %6049 = vmatprep.subr.mxu0 0.0
    %6050 = vmatpush1.msra.mxu0 0.0
    %6051 = vmatprep.subr.mxu0 0.0
    %6052 = vmatpush1.msra.mxu0 %v6009
    %6053 = vmatprep.subr.mxu0 0.0
    %6054 = vmatpush2.msra.mxu0 0.0
    %6055 = vmatprep.subr.mxu0 0.0
    %6056 = vmatpush2.msra.mxu0 0.0
    %6057 = vmatprep.subr.mxu0 0.0
    %6058 = vmatpush2.msra.mxu0 0.0
    %6059 = vmatprep.subr.mxu0 0.0
    %6060 = vmatpush2.msra.mxu0 0.0
    %6061 = vmatprep.subr.mxu0 0.0
    %6062 = vmatpush2.msra.mxu0 0.0
    %6063 = vmatprep.subr.mxu0 0.0
    %6064 = vmatpush2.msra.mxu0 0.0
    %6065 = vmatprep.subr.mxu0 0.0
    %6066 = vmatpush2.msra.mxu0 0.0
    %6067 = vmatprep.subr.mxu0 0.0
    %6068 = vmatpush2.msra.mxu0 0.0
    %6069 = vmatprep.subr.mxu0 0.0
    %6070 = vmatpush2.msra.mxu0 0.0
    %6071 = vmatprep.subr.mxu0 0.0
    %6072 = vmatpush2.msra.mxu0 0.0
    %6073 = vmatprep.subr.mxu0 0.0
    %6074 = vmatpush2.msra.mxu0 0.0
    %6075 = vmatprep.subr.mxu0 0.0
    %6076 = vmatpush2.msra.mxu0 0.0
    %6077 = vmatprep.subr.mxu0 0.0
    %6078 = vmatpush2.msra.mxu0 0.0
    %6079 = vmatprep.subr.mxu0 0.0
    %6080 = vmatpush2.msra.mxu0 0.0
    %6081 = vmatprep.subr.mxu0 0.0
    %6082 = vmatpush2.msra.mxu0 0.0
    %6083 = vmatprep.subr.mxu0 0.0
    %6084 = vmatpush2.msra.mxu0 0.0
    %6085 = vmatprep.mubr.f32.mxu0 0.0
    %6086 = vmatmul.mubr.f32.gmra.mxu0 %v6016
    %v6087 = vpop.f32.mrf.mxu0
    %v6088 = vadd.f32 0.0, %v6087
    %v6089 = vpop.f32.mrf.mxu0
    %6090 = vmatprep.mubr.f32.mxu0 0.0
    %6091 = vmatmul.mubr.f32.gmra.mxu0 %v6019
    %v6092 = vpop.f32.mrf.mxu0
    %v6093 = vadd.f32 0.0, %v6092
    %v6094 = vpop.f32.mrf.mxu0
    %6095 = vdwg.mxu0
    %v6096 = vadd.f32 %v5921, %v6088
    %v6097 = vadd.f32 %v5922, %v6093
    %v6098 = vld [vmem:[%s5] sm:$0xff]
    %v6099 = vld [vmem:[%s5 + $0x8] sm:$0xff]
    %6101 = vset.pattern.permute.xlu0 0
    %6102 = vperm.xlu0 %6101, %v6098
    %v6103 = vpop.permute.xlu0 %6102
    %6106 = vset.pattern.permute.xlu0 0
    %6107 = vperm.xlu0 %6106, %v6099
    %v6108 = vpop.permute.xlu0 %6107
    %v6110 = vadd.f32 %v6096, %v6103
    %v6111 = vadd.f32 %v6097, %v6108
    %v6112 = vmax.f32 %v6110, 0.0
    %v6113 = vmax.f32 %v6111, 0.0
    %v6114 = vld [vmem:[%s6] sm:$0xff]
    %v6115 = vld [vmem:[%s6 + $0x8] sm:$0xff]
    %v6116 = vld [vmem:[%s6 + $0x10] sm:$0xff]
    %v6117 = vld [vmem:[%s6 + $0x18] sm:$0xff]
    %v6118 = vld [vmem:[%s6 + $0x20] sm:$0xff]
    %v6119 = vld [vmem:[%s6 + $0x28] sm:$0xff]
    %v6120 = vld [vmem:[%s6 + $0x30] sm:$0xff]
    %v6121 = vld [vmem:[%s6 + $0x38] sm:$0xff]
    %v6123 = vsel %vm427, %v6112, 0
    %v6126 = vsel %vm427, %v6113, 0
    %6128 = vmatprep.subr.mxu0 0.0
    %6129 = vmatpush1.msra.mxu0 0.0
    %6130 = vmatprep.subr.mxu0 0.0
    %6131 = vmatpush1.msra.mxu0 0.0
    %6132 = vmatprep.subr.mxu0 0.0
    %6133 = vmatpush1.msra.mxu0 0.0
    %6134 = vmatprep.subr.mxu0 0.0
    %6135 = vmatpush1.msra.mxu0 0.0
    %6136 = vmatprep.subr.mxu0 0.0
    %6137 = vmatpush1.msra.mxu0 0.0
    %6138 = vmatprep.subr.mxu0 0.0
    %6139 = vmatpush1.msra.mxu0 0.0
    %6140 = vmatprep.subr.mxu0 0.0
    %6141 = vmatpush1.msra.mxu0 0.0
    %6142 = vmatprep.subr.mxu0 0.0
    %6143 = vmatpush1.msra.mxu0 0.0
    %6144 = vmatprep.subr.mxu0 0.0
    %6145 = vmatpush1.msra.mxu0 %v6121
    %6146 = vmatprep.subr.mxu0 0.0
    %6147 = vmatpush1.msra.mxu0 %v6120
    %6148 = vmatprep.subr.mxu0 0.0
    %6149 = vmatpush1.msra.mxu0 %v6119
    %6150 = vmatprep.subr.mxu0 0.0
    %6151 = vmatpush1.msra.mxu0 %v6118
    %6152 = vmatprep.subr.mxu0 0.0
    %6153 = vmatpush1.msra.mxu0 %v6117
    %6154 = vmatprep.subr.mxu0 0.0
    %6155 = vmatpush1.msra.mxu0 %v6116
    %6156 = vmatprep.subr.mxu0 0.0
    %6157 = vmatpush1.msra.mxu0 %v6115
    %6158 = vmatprep.subr.mxu0 0.0
    %6159 = vmatpush1.msra.mxu0 %v6114
    %6160 = vmatprep.subr.mxu0 0.0
    %6161 = vmatpush2.msra.mxu0 0.0
    %6162 = vmatprep.subr.mxu0 0.0
    %6163 = vmatpush2.msra.mxu0 0.0
    %6164 = vmatprep.subr.mxu0 0.0
    %6165 = vmatpush2.msra.mxu0 0.0
    %6166 = vmatprep.subr.mxu0 0.0
    %6167 = vmatpush2.msra.mxu0 0.0
    %6168 = vmatprep.subr.mxu0 0.0
    %6169 = vmatpush2.msra.mxu0 0.0
    %6170 = vmatprep.subr.mxu0 0.0
    %6171 = vmatpush2.msra.mxu0 0.0
    %6172 = vmatprep.subr.mxu0 0.0
    %6173 = vmatpush2.msra.mxu0 0.0
    %6174 = vmatprep.subr.mxu0 0.0
    %6175 = vmatpush2.msra.mxu0 0.0
    %6176 = vmatprep.subr.mxu0 0.0
    %6177 = vmatpush2.msra.mxu0 0.0
    %6178 = vmatprep.subr.mxu0 0.0
    %6179 = vmatpush2.msra.mxu0 0.0
    %6180 = vmatprep.subr.mxu0 0.0
    %6181 = vmatpush2.msra.mxu0 0.0
    %6182 = vmatprep.subr.mxu0 0.0
    %6183 = vmatpush2.msra.mxu0 0.0
    %6184 = vmatprep.subr.mxu0 0.0
    %6185 = vmatpush2.msra.mxu0 0.0
    %6186 = vmatprep.subr.mxu0 0.0
    %6187 = vmatpush2.msra.mxu0 0.0
    %6188 = vmatprep.subr.mxu0 0.0
    %6189 = vmatpush2.msra.mxu0 0.0
    %6190 = vmatprep.subr.mxu0 0.0
    %6191 = vmatpush2.msra.mxu0 0.0
    %6192 = vmatprep.mubr.f32.mxu0 0.0
    %6193 = vmatmul.mubr.f32.gmra.mxu0 %v6123
    %v6194 = vpop.f32.mrf.mxu0
    %v6195 = vadd.f32 0.0, %v6194
    %v6196 = vpop.f32.mrf.mxu0
    %6197 = vmatprep.mubr.f32.mxu0 0.0
    %6198 = vmatmul.mubr.f32.gmra.mxu0 %v6126
    %v6199 = vpop.f32.mrf.mxu0
    %v6200 = vadd.f32 0.0, %v6199
    %v6201 = vpop.f32.mrf.mxu0
    %6202 = vdwg.mxu0
    %s6203 = scalar_lea.vmem %s6, 64
    %v6204 = vld [vmem:[%s6203] sm:$0xff]
    %v6205 = vld [vmem:[%s6203 + $0x8] sm:$0xff]
    %v6206 = vld [vmem:[%s6203 + $0x10] sm:$0xff]
    %v6207 = vld [vmem:[%s6203 + $0x18] sm:$0xff]
    %v6208 = vld [vmem:[%s6203 + $0x20] sm:$0xff]
    %v6209 = vld [vmem:[%s6203 + $0x28] sm:$0xff]
    %v6210 = vld [vmem:[%s6203 + $0x30] sm:$0xff]
    %v6211 = vld [vmem:[%s6203 + $0x38] sm:$0xff]
    %6212 = vmatprep.subr.mxu0 0.0
    %6213 = vmatpush1.msra.mxu0 0.0
    %6214 = vmatprep.subr.mxu0 0.0
    %6215 = vmatpush1.msra.mxu0 0.0
    %6216 = vmatprep.subr.mxu0 0.0
    %6217 = vmatpush1.msra.mxu0 0.0
    %6218 = vmatprep.subr.mxu0 0.0
    %6219 = vmatpush1.msra.mxu0 0.0
    %6220 = vmatprep.subr.mxu0 0.0
    %6221 = vmatpush1.msra.mxu0 0.0
    %6222 = vmatprep.subr.mxu0 0.0
    %6223 = vmatpush1.msra.mxu0 0.0
    %6224 = vmatprep.subr.mxu0 0.0
    %6225 = vmatpush1.msra.mxu0 0.0
    %6226 = vmatprep.subr.mxu0 0.0
    %6227 = vmatpush1.msra.mxu0 0.0
    %6228 = vmatprep.subr.mxu0 0.0
    %6229 = vmatpush1.msra.mxu0 %v6211
    %6230 = vmatprep.subr.mxu0 0.0
    %6231 = vmatpush1.msra.mxu0 %v6210
    %6232 = vmatprep.subr.mxu0 0.0
    %6233 = vmatpush1.msra.mxu0 %v6209
    %6234 = vmatprep.subr.mxu0 0.0
    %6235 = vmatpush1.msra.mxu0 %v6208
    %6236 = vmatprep.subr.mxu0 0.0
    %6237 = vmatpush1.msra.mxu0 %v6207
    %6238 = vmatprep.subr.mxu0 0.0
    %6239 = vmatpush1.msra.mxu0 %v6206
    %6240 = vmatprep.subr.mxu0 0.0
    %6241 = vmatpush1.msra.mxu0 %v6205
    %6242 = vmatprep.subr.mxu0 0.0
    %6243 = vmatpush1.msra.mxu0 %v6204
    %6244 = vmatprep.subr.mxu0 0.0
    %6245 = vmatpush2.msra.mxu0 0.0
    %6246 = vmatprep.subr.mxu0 0.0
    %6247 = vmatpush2.msra.mxu0 0.0
    %6248 = vmatprep.subr.mxu0 0.0
    %6249 = vmatpush2.msra.mxu0 0.0
    %6250 = vmatprep.subr.mxu0 0.0
    %6251 = vmatpush2.msra.mxu0 0.0
    %6252 = vmatprep.subr.mxu0 0.0
    %6253 = vmatpush2.msra.mxu0 0.0
    %6254 = vmatprep.subr.mxu0 0.0
    %6255 = vmatpush2.msra.mxu0 0.0
    %6256 = vmatprep.subr.mxu0 0.0
    %6257 = vmatpush2.msra.mxu0 0.0
    %6258 = vmatprep.subr.mxu0 0.0
    %6259 = vmatpush2.msra.mxu0 0.0
    %6260 = vmatprep.subr.mxu0 0.0
    %6261 = vmatpush2.msra.mxu0 0.0
    %6262 = vmatprep.subr.mxu0 0.0
    %6263 = vmatpush2.msra.mxu0 0.0
    %6264 = vmatprep.subr.mxu0 0.0
    %6265 = vmatpush2.msra.mxu0 0.0
    %6266 = vmatprep.subr.mxu0 0.0
    %6267 = vmatpush2.msra.mxu0 0.0
    %6268 = vmatprep.subr.mxu0 0.0
    %6269 = vmatpush2.msra.mxu0 0.0
    %6270 = vmatprep.subr.mxu0 0.0
    %6271 = vmatpush2.msra.mxu0 0.0
    %6272 = vmatprep.subr.mxu0 0.0
    %6273 = vmatpush2.msra.mxu0 0.0
    %6274 = vmatprep.subr.mxu0 0.0
    %6275 = vmatpush2.msra.mxu0 0.0
    %6276 = vmatprep.mubr.f32.mxu0 0.0
    %6277 = vmatmul.mubr.f32.gmra.mxu0 %v6123
    %v6278 = vpop.f32.mrf.mxu0
    %v6279 = vadd.f32 0.0, %v6278
    %v6280 = vpop.f32.mrf.mxu0
    %6281 = vmatprep.mubr.f32.mxu0 0.0
    %6282 = vmatmul.mubr.f32.gmra.mxu0 %v6126
    %v6283 = vpop.f32.mrf.mxu0
    %v6284 = vadd.f32 0.0, %v6283
    %v6285 = vpop.f32.mrf.mxu0
    %6286 = vdwg.mxu0
    %v6287 = vmax.f32 %v6195, %v6279
    %v6288 = vmax.f32 %v6200, %v6284
    %s6289 = scalar_lea.vmem %s6, 128
    %v6290 = vld [vmem:[%s6289] sm:$0xff]
    %v6291 = vld [vmem:[%s6289 + $0x8] sm:$0xff]
    %v6292 = vld [vmem:[%s6289 + $0x10] sm:$0xff]
    %v6293 = vld [vmem:[%s6289 + $0x18] sm:$0xff]
    %v6294 = vld [vmem:[%s6289 + $0x20] sm:$0xff]
    %v6295 = vld [vmem:[%s6289 + $0x28] sm:$0xff]
    %v6296 = vld [vmem:[%s6289 + $0x30] sm:$0xff]
    %v6297 = vld [vmem:[%s6289 + $0x38] sm:$0xff]
    %6298 = vmatprep.subr.mxu0 0.0
    %6299 = vmatpush1.msra.mxu0 0.0
    %6300 = vmatprep.subr.mxu0 0.0
    %6301 = vmatpush1.msra.mxu0 0.0
    %6302 = vmatprep.subr.mxu0 0.0
    %6303 = vmatpush1.msra.mxu0 0.0
    %6304 = vmatprep.subr.mxu0 0.0
    %6305 = vmatpush1.msra.mxu0 0.0
    %6306 = vmatprep.subr.mxu0 0.0
    %6307 = vmatpush1.msra.mxu0 0.0
    %6308 = vmatprep.subr.mxu0 0.0
    %6309 = vmatpush1.msra.mxu0 0.0
    %6310 = vmatprep.subr.mxu0 0.0
    %6311 = vmatpush1.msra.mxu0 0.0
    %6312 = vmatprep.subr.mxu0 0.0
    %6313 = vmatpush1.msra.mxu0 0.0
    %6314 = vmatprep.subr.mxu0 0.0
    %6315 = vmatpush1.msra.mxu0 %v6297
    %6316 = vmatprep.subr.mxu0 0.0
    %6317 = vmatpush1.msra.mxu0 %v6296
    %6318 = vmatprep.subr.mxu0 0.0
    %6319 = vmatpush1.msra.mxu0 %v6295
    %6320 = vmatprep.subr.mxu0 0.0
    %6321 = vmatpush1.msra.mxu0 %v6294
    %6322 = vmatprep.subr.mxu0 0.0
    %6323 = vmatpush1.msra.mxu0 %v6293
    %6324 = vmatprep.subr.mxu0 0.0
    %6325 = vmatpush1.msra.mxu0 %v6292
    %6326 = vmatprep.subr.mxu0 0.0
    %6327 = vmatpush1.msra.mxu0 %v6291
    %6328 = vmatprep.subr.mxu0 0.0
    %6329 = vmatpush1.msra.mxu0 %v6290
    %6330 = vmatprep.subr.mxu0 0.0
    %6331 = vmatpush2.msra.mxu0 0.0
    %6332 = vmatprep.subr.mxu0 0.0
    %6333 = vmatpush2.msra.mxu0 0.0
    %6334 = vmatprep.subr.mxu0 0.0
    %6335 = vmatpush2.msra.mxu0 0.0
    %6336 = vmatprep.subr.mxu0 0.0
    %6337 = vmatpush2.msra.mxu0 0.0
    %6338 = vmatprep.subr.mxu0 0.0
    %6339 = vmatpush2.msra.mxu0 0.0
    %6340 = vmatprep.subr.mxu0 0.0
    %6341 = vmatpush2.msra.mxu0 0.0
    %6342 = vmatprep.subr.mxu0 0.0
    %6343 = vmatpush2.msra.mxu0 0.0
    %6344 = vmatprep.subr.mxu0 0.0
    %6345 = vmatpush2.msra.mxu0 0.0
    %6346 = vmatprep.subr.mxu0 0.0
    %6347 = vmatpush2.msra.mxu0 0.0
    %6348 = vmatprep.subr.mxu0 0.0
    %6349 = vmatpush2.msra.mxu0 0.0
    %6350 = vmatprep.subr.mxu0 0.0
    %6351 = vmatpush2.msra.mxu0 0.0
    %6352 = vmatprep.subr.mxu0 0.0
    %6353 = vmatpush2.msra.mxu0 0.0
    %6354 = vmatprep.subr.mxu0 0.0
    %6355 = vmatpush2.msra.mxu0 0.0
    %6356 = vmatprep.subr.mxu0 0.0
    %6357 = vmatpush2.msra.mxu0 0.0
    %6358 = vmatprep.subr.mxu0 0.0
    %6359 = vmatpush2.msra.mxu0 0.0
    %6360 = vmatprep.subr.mxu0 0.0
    %6361 = vmatpush2.msra.mxu0 0.0
    %6362 = vmatprep.mubr.f32.mxu0 0.0
    %6363 = vmatmul.mubr.f32.gmra.mxu0 %v6123
    %v6364 = vpop.f32.mrf.mxu0
    %v6365 = vadd.f32 0.0, %v6364
    %v6366 = vpop.f32.mrf.mxu0
    %6367 = vmatprep.mubr.f32.mxu0 0.0
    %6368 = vmatmul.mubr.f32.gmra.mxu0 %v6126
    %v6369 = vpop.f32.mrf.mxu0
    %v6370 = vadd.f32 0.0, %v6369
    %v6371 = vpop.f32.mrf.mxu0
    %6372 = vdwg.mxu0
    %v6373 = vmax.f32 %v6287, %v6365
    %v6374 = vmax.f32 %v6288, %v6370
    %s6375 = scalar_lea.vmem %s6, 192
    %v6376 = vld [vmem:[%s6375] sm:$0xff]
    %v6377 = vld [vmem:[%s6375 + $0x8] sm:$0xff]
    %v6378 = vld [vmem:[%s6375 + $0x10] sm:$0xff]
    %v6379 = vld [vmem:[%s6375 + $0x18] sm:$0xff]
    %v6380 = vld [vmem:[%s6375 + $0x20] sm:$0xff]
    %v6381 = vld [vmem:[%s6375 + $0x28] sm:$0xff]
    %v6382 = vld [vmem:[%s6375 + $0x30] sm:$0xff]
    %v6383 = vld [vmem:[%s6375 + $0x38] sm:$0xff]
    %6384 = vmatprep.subr.mxu0 0.0
    %6385 = vmatpush1.msra.mxu0 0.0
    %6386 = vmatprep.subr.mxu0 0.0
    %6387 = vmatpush1.msra.mxu0 0.0
    %6388 = vmatprep.subr.mxu0 0.0
    %6389 = vmatpush1.msra.mxu0 0.0
    %6390 = vmatprep.subr.mxu0 0.0
    %6391 = vmatpush1.msra.mxu0 0.0
    %6392 = vmatprep.subr.mxu0 0.0
    %6393 = vmatpush1.msra.mxu0 0.0
    %6394 = vmatprep.subr.mxu0 0.0
    %6395 = vmatpush1.msra.mxu0 0.0
    %6396 = vmatprep.subr.mxu0 0.0
    %6397 = vmatpush1.msra.mxu0 0.0
    %6398 = vmatprep.subr.mxu0 0.0
    %6399 = vmatpush1.msra.mxu0 0.0
    %6400 = vmatprep.subr.mxu0 0.0
    %6401 = vmatpush1.msra.mxu0 %v6383
    %6402 = vmatprep.subr.mxu0 0.0
    %6403 = vmatpush1.msra.mxu0 %v6382
    %6404 = vmatprep.subr.mxu0 0.0
    %6405 = vmatpush1.msra.mxu0 %v6381
    %6406 = vmatprep.subr.mxu0 0.0
    %6407 = vmatpush1.msra.mxu0 %v6380
    %6408 = vmatprep.subr.mxu0 0.0
    %6409 = vmatpush1.msra.mxu0 %v6379
    %6410 = vmatprep.subr.mxu0 0.0
    %6411 = vmatpush1.msra.mxu0 %v6378
    %6412 = vmatprep.subr.mxu0 0.0
    %6413 = vmatpush1.msra.mxu0 %v6377
    %6414 = vmatprep.subr.mxu0 0.0
    %6415 = vmatpush1.msra.mxu0 %v6376
    %6416 = vmatprep.subr.mxu0 0.0
    %6417 = vmatpush2.msra.mxu0 0.0
    %6418 = vmatprep.subr.mxu0 0.0
    %6419 = vmatpush2.msra.mxu0 0.0
    %6420 = vmatprep.subr.mxu0 0.0
    %6421 = vmatpush2.msra.mxu0 0.0
    %6422 = vmatprep.subr.mxu0 0.0
    %6423 = vmatpush2.msra.mxu0 0.0
    %6424 = vmatprep.subr.mxu0 0.0
    %6425 = vmatpush2.msra.mxu0 0.0
    %6426 = vmatprep.subr.mxu0 0.0
    %6427 = vmatpush2.msra.mxu0 0.0
    %6428 = vmatprep.subr.mxu0 0.0
    %6429 = vmatpush2.msra.mxu0 0.0
    %6430 = vmatprep.subr.mxu0 0.0
    %6431 = vmatpush2.msra.mxu0 0.0
    %6432 = vmatprep.subr.mxu0 0.0
    %6433 = vmatpush2.msra.mxu0 0.0
    %6434 = vmatprep.subr.mxu0 0.0
    %6435 = vmatpush2.msra.mxu0 0.0
    %6436 = vmatprep.subr.mxu0 0.0
    %6437 = vmatpush2.msra.mxu0 0.0
    %6438 = vmatprep.subr.mxu0 0.0
    %6439 = vmatpush2.msra.mxu0 0.0
    %6440 = vmatprep.subr.mxu0 0.0
    %6441 = vmatpush2.msra.mxu0 0.0
    %6442 = vmatprep.subr.mxu0 0.0
    %6443 = vmatpush2.msra.mxu0 0.0
    %6444 = vmatprep.subr.mxu0 0.0
    %6445 = vmatpush2.msra.mxu0 0.0
    %6446 = vmatprep.subr.mxu0 0.0
    %6447 = vmatpush2.msra.mxu0 0.0
    %6448 = vmatprep.mubr.f32.mxu0 0.0
    %6449 = vmatmul.mubr.f32.gmra.mxu0 %v6123
    %v6450 = vpop.f32.mrf.mxu0
    %v6451 = vadd.f32 0.0, %v6450
    %v6452 = vpop.f32.mrf.mxu0
    %6453 = vmatprep.mubr.f32.mxu0 0.0
    %6454 = vmatmul.mubr.f32.gmra.mxu0 %v6126
    %v6455 = vpop.f32.mrf.mxu0
    %v6456 = vadd.f32 0.0, %v6455
    %v6457 = vpop.f32.mrf.mxu0
    %6458 = vdwg.mxu0
    %v6459 = vmax.f32 %v6373, %v6451
    %v6460 = vmax.f32 %v6374, %v6456
    %v6461 = vld [vmem:[%s8] sm:$0x1]
    %v6462 = vld [vmem:[%s7] sm:$0xff]
    %v6463 = vld [vmem:[%s7 + $0x8] sm:$0xff]
    %v6465 = vsel %vm1742, %v6459, 0
    %6467 = vmatprep.subr.mxu0 0.0
    %6468 = vmatpush1.msra.mxu0 0.0
    %6469 = vmatprep.subr.mxu0 0.0
    %6470 = vmatpush1.msra.mxu0 0.0
    %6471 = vmatprep.subr.mxu0 0.0
    %6472 = vmatpush1.msra.mxu0 0.0
    %6473 = vmatprep.subr.mxu0 0.0
    %6474 = vmatpush1.msra.mxu0 0.0
    %6475 = vmatprep.subr.mxu0 0.0
    %6476 = vmatpush1.msra.mxu0 0.0
    %6477 = vmatprep.subr.mxu0 0.0
    %6478 = vmatpush1.msra.mxu0 0.0
    %6479 = vmatprep.subr.mxu0 0.0
    %6480 = vmatpush1.msra.mxu0 0.0
    %6481 = vmatprep.subr.mxu0 0.0
    %6482 = vmatpush1.msra.mxu0 0.0
    %6483 = vmatprep.subr.mxu0 0.0
    %6484 = vmatpush1.msra.mxu0 0.0
    %6485 = vmatprep.subr.mxu0 0.0
    %6486 = vmatpush1.msra.mxu0 0.0
    %6487 = vmatprep.subr.mxu0 0.0
    %6488 = vmatpush1.msra.mxu0 0.0
    %6489 = vmatprep.subr.mxu0 0.0
    %6490 = vmatpush1.msra.mxu0 0.0
    %6491 = vmatprep.subr.mxu0 0.0
    %6492 = vmatpush1.msra.mxu0 0.0
    %6493 = vmatprep.subr.mxu0 0.0
    %6494 = vmatpush1.msra.mxu0 0.0
    %6495 = vmatprep.subr.mxu0 0.0
    %6496 = vmatpush1.msra.mxu0 %v6463
    %6497 = vmatprep.subr.mxu0 0.0
    %6498 = vmatpush1.msra.mxu0 %v6462
    %6499 = vmatprep.subr.mxu0 0.0
    %6500 = vmatpush2.msra.mxu0 0.0
    %6501 = vmatprep.subr.mxu0 0.0
    %6502 = vmatpush2.msra.mxu0 0.0
    %6503 = vmatprep.subr.mxu0 0.0
    %6504 = vmatpush2.msra.mxu0 0.0
    %6505 = vmatprep.subr.mxu0 0.0
    %6506 = vmatpush2.msra.mxu0 0.0
    %6507 = vmatprep.subr.mxu0 0.0
    %6508 = vmatpush2.msra.mxu0 0.0
    %6509 = vmatprep.subr.mxu0 0.0
    %6510 = vmatpush2.msra.mxu0 0.0
    %6511 = vmatprep.subr.mxu0 0.0
    %6512 = vmatpush2.msra.mxu0 0.0
    %6513 = vmatprep.subr.mxu0 0.0
    %6514 = vmatpush2.msra.mxu0 0.0
    %6515 = vmatprep.subr.mxu0 0.0
    %6516 = vmatpush2.msra.mxu0 0.0
    %6517 = vmatprep.subr.mxu0 0.0
    %6518 = vmatpush2.msra.mxu0 0.0
    %6519 = vmatprep.subr.mxu0 0.0
    %6520 = vmatpush2.msra.mxu0 0.0
    %6521 = vmatprep.subr.mxu0 0.0
    %6522 = vmatpush2.msra.mxu0 0.0
    %6523 = vmatprep.subr.mxu0 0.0
    %6524 = vmatpush2.msra.mxu0 0.0
    %6525 = vmatprep.subr.mxu0 0.0
    %6526 = vmatpush2.msra.mxu0 0.0
    %6527 = vmatprep.subr.mxu0 0.0
    %6528 = vmatpush2.msra.mxu0 0.0
    %6529 = vmatprep.subr.mxu0 0.0
    %6530 = vmatpush2.msra.mxu0 0.0
    %6531 = vmatprep.mubr.f32.mxu0 0.0
    %6532 = vmatmul.mubr.f32.gmra.mxu0 %v6465
    %v6533 = vpop.f32.mrf.mxu0
    %v6534 = vadd.f32 0.0, %v6533
    %v6535 = vpop.f32.mrf.mxu0
    %6536 = vdwg.mxu0
    %v6537 = vadd.f32 %v6461, %v6534
    %s6538 = scalar_lea.vmem %s7, 16
    %v6539 = vld [vmem:[%s6538] sm:$0xff]
    %v6540 = vld [vmem:[%s6538 + $0x8] sm:$0xff]
    %v6541 = vrot.slane %v6459, 1
    %v6542 = vsel %vm1742, %v6541, 0
    %6544 = vmatprep.subr.mxu0 0.0
    %6545 = vmatpush1.msra.mxu0 0.0
    %6546 = vmatprep.subr.mxu0 0.0
    %6547 = vmatpush1.msra.mxu0 0.0
    %6548 = vmatprep.subr.mxu0 0.0
    %6549 = vmatpush1.msra.mxu0 0.0
    %6550 = vmatprep.subr.mxu0 0.0
    %6551 = vmatpush1.msra.mxu0 0.0
    %6552 = vmatprep.subr.mxu0 0.0
    %6553 = vmatpush1.msra.mxu0 0.0
    %6554 = vmatprep.subr.mxu0 0.0
    %6555 = vmatpush1.msra.mxu0 0.0
    %6556 = vmatprep.subr.mxu0 0.0
    %6557 = vmatpush1.msra.mxu0 0.0
    %6558 = vmatprep.subr.mxu0 0.0
    %6559 = vmatpush1.msra.mxu0 0.0
    %6560 = vmatprep.subr.mxu0 0.0
    %6561 = vmatpush1.msra.mxu0 0.0
    %6562 = vmatprep.subr.mxu0 0.0
    %6563 = vmatpush1.msra.mxu0 0.0
    %6564 = vmatprep.subr.mxu0 0.0
    %6565 = vmatpush1.msra.mxu0 0.0
    %6566 = vmatprep.subr.mxu0 0.0
    %6567 = vmatpush1.msra.mxu0 0.0
    %6568 = vmatprep.subr.mxu0 0.0
    %6569 = vmatpush1.msra.mxu0 0.0
    %6570 = vmatprep.subr.mxu0 0.0
    %6571 = vmatpush1.msra.mxu0 0.0
    %6572 = vmatprep.subr.mxu0 0.0
    %6573 = vmatpush1.msra.mxu0 %v6540
    %6574 = vmatprep.subr.mxu0 0.0
    %6575 = vmatpush1.msra.mxu0 %v6539
    %6576 = vmatprep.subr.mxu0 0.0
    %6577 = vmatpush2.msra.mxu0 0.0
    %6578 = vmatprep.subr.mxu0 0.0
    %6579 = vmatpush2.msra.mxu0 0.0
    %6580 = vmatprep.subr.mxu0 0.0
    %6581 = vmatpush2.msra.mxu0 0.0
    %6582 = vmatprep.subr.mxu0 0.0
    %6583 = vmatpush2.msra.mxu0 0.0
    %6584 = vmatprep.subr.mxu0 0.0
    %6585 = vmatpush2.msra.mxu0 0.0
    %6586 = vmatprep.subr.mxu0 0.0
    %6587 = vmatpush2.msra.mxu0 0.0
    %6588 = vmatprep.subr.mxu0 0.0
    %6589 = vmatpush2.msra.mxu0 0.0
    %6590 = vmatprep.subr.mxu0 0.0
    %6591 = vmatpush2.msra.mxu0 0.0
    %6592 = vmatprep.subr.mxu0 0.0
    %6593 = vmatpush2.msra.mxu0 0.0
    %6594 = vmatprep.subr.mxu0 0.0
    %6595 = vmatpush2.msra.mxu0 0.0
    %6596 = vmatprep.subr.mxu0 0.0
    %6597 = vmatpush2.msra.mxu0 0.0
    %6598 = vmatprep.subr.mxu0 0.0
    %6599 = vmatpush2.msra.mxu0 0.0
    %6600 = vmatprep.subr.mxu0 0.0
    %6601 = vmatpush2.msra.mxu0 0.0
    %6602 = vmatprep.subr.mxu0 0.0
    %6603 = vmatpush2.msra.mxu0 0.0
    %6604 = vmatprep.subr.mxu0 0.0
    %6605 = vmatpush2.msra.mxu0 0.0
    %6606 = vmatprep.subr.mxu0 0.0
    %6607 = vmatpush2.msra.mxu0 0.0
    %6608 = vmatprep.mubr.f32.mxu0 0.0
    %6609 = vmatmul.mubr.f32.gmra.mxu0 %v6542
    %v6610 = vpop.f32.mrf.mxu0
    %v6611 = vadd.f32 0.0, %v6610
    %v6612 = vpop.f32.mrf.mxu0
    %6613 = vdwg.mxu0
    %v6614 = vadd.f32 %v6537, %v6611
    %s6615 = scalar_lea.vmem %s7, 32
    %v6616 = vld [vmem:[%s6615] sm:$0xff]
    %v6617 = vld [vmem:[%s6615 + $0x8] sm:$0xff]
    %v6618 = vrot.slane %v6459, 2
    %v6619 = vsel %vm1742, %v6618, 0
    %6621 = vmatprep.subr.mxu0 0.0
    %6622 = vmatpush1.msra.mxu0 0.0
    %6623 = vmatprep.subr.mxu0 0.0
    %6624 = vmatpush1.msra.mxu0 0.0
    %6625 = vmatprep.subr.mxu0 0.0
    %6626 = vmatpush1.msra.mxu0 0.0
    %6627 = vmatprep.subr.mxu0 0.0
    %6628 = vmatpush1.msra.mxu0 0.0
    %6629 = vmatprep.subr.mxu0 0.0
    %6630 = vmatpush1.msra.mxu0 0.0
    %6631 = vmatprep.subr.mxu0 0.0
    %6632 = vmatpush1.msra.mxu0 0.0
    %6633 = vmatprep.subr.mxu0 0.0
    %6634 = vmatpush1.msra.mxu0 0.0
    %6635 = vmatprep.subr.mxu0 0.0
    %6636 = vmatpush1.msra.mxu0 0.0
    %6637 = vmatprep.subr.mxu0 0.0
    %6638 = vmatpush1.msra.mxu0 0.0
    %6639 = vmatprep.subr.mxu0 0.0
    %6640 = vmatpush1.msra.mxu0 0.0
    %6641 = vmatprep.subr.mxu0 0.0
    %6642 = vmatpush1.msra.mxu0 0.0
    %6643 = vmatprep.subr.mxu0 0.0
    %6644 = vmatpush1.msra.mxu0 0.0
    %6645 = vmatprep.subr.mxu0 0.0
    %6646 = vmatpush1.msra.mxu0 0.0
    %6647 = vmatprep.subr.mxu0 0.0
    %6648 = vmatpush1.msra.mxu0 0.0
    %6649 = vmatprep.subr.mxu0 0.0
    %6650 = vmatpush1.msra.mxu0 %v6617
    %6651 = vmatprep.subr.mxu0 0.0
    %6652 = vmatpush1.msra.mxu0 %v6616
    %6653 = vmatprep.subr.mxu0 0.0
    %6654 = vmatpush2.msra.mxu0 0.0
    %6655 = vmatprep.subr.mxu0 0.0
    %6656 = vmatpush2.msra.mxu0 0.0
    %6657 = vmatprep.subr.mxu0 0.0
    %6658 = vmatpush2.msra.mxu0 0.0
    %6659 = vmatprep.subr.mxu0 0.0
    %6660 = vmatpush2.msra.mxu0 0.0
    %6661 = vmatprep.subr.mxu0 0.0
    %6662 = vmatpush2.msra.mxu0 0.0
    %6663 = vmatprep.subr.mxu0 0.0
    %6664 = vmatpush2.msra.mxu0 0.0
    %6665 = vmatprep.subr.mxu0 0.0
    %6666 = vmatpush2.msra.mxu0 0.0
    %6667 = vmatprep.subr.mxu0 0.0
    %6668 = vmatpush2.msra.mxu0 0.0
    %6669 = vmatprep.subr.mxu0 0.0
    %6670 = vmatpush2.msra.mxu0 0.0
    %6671 = vmatprep.subr.mxu0 0.0
    %6672 = vmatpush2.msra.mxu0 0.0
    %6673 = vmatprep.subr.mxu0 0.0
    %6674 = vmatpush2.msra.mxu0 0.0
    %6675 = vmatprep.subr.mxu0 0.0
    %6676 = vmatpush2.msra.mxu0 0.0
    %6677 = vmatprep.subr.mxu0 0.0
    %6678 = vmatpush2.msra.mxu0 0.0
    %6679 = vmatprep.subr.mxu0 0.0
    %6680 = vmatpush2.msra.mxu0 0.0
    %6681 = vmatprep.subr.mxu0 0.0
    %6682 = vmatpush2.msra.mxu0 0.0
    %6683 = vmatprep.subr.mxu0 0.0
    %6684 = vmatpush2.msra.mxu0 0.0
    %6685 = vmatprep.mubr.f32.mxu0 0.0
    %6686 = vmatmul.mubr.f32.gmra.mxu0 %v6619
    %v6687 = vpop.f32.mrf.mxu0
    %v6688 = vadd.f32 0.0, %v6687
    %v6689 = vpop.f32.mrf.mxu0
    %6690 = vdwg.mxu0
    %v6691 = vadd.f32 %v6614, %v6688
    %s6692 = scalar_lea.vmem %s7, 48
    %v6693 = vld [vmem:[%s6692] sm:$0xff]
    %v6694 = vld [vmem:[%s6692 + $0x8] sm:$0xff]
    %v6695 = vrot.slane %v6459, 3
    %v6696 = vsel %vm1742, %v6695, 0
    %6698 = vmatprep.subr.mxu0 0.0
    %6699 = vmatpush1.msra.mxu0 0.0
    %6700 = vmatprep.subr.mxu0 0.0
    %6701 = vmatpush1.msra.mxu0 0.0
    %6702 = vmatprep.subr.mxu0 0.0
    %6703 = vmatpush1.msra.mxu0 0.0
    %6704 = vmatprep.subr.mxu0 0.0
    %6705 = vmatpush1.msra.mxu0 0.0
    %6706 = vmatprep.subr.mxu0 0.0
    %6707 = vmatpush1.msra.mxu0 0.0
    %6708 = vmatprep.subr.mxu0 0.0
    %6709 = vmatpush1.msra.mxu0 0.0
    %6710 = vmatprep.subr.mxu0 0.0
    %6711 = vmatpush1.msra.mxu0 0.0
    %6712 = vmatprep.subr.mxu0 0.0
    %6713 = vmatpush1.msra.mxu0 0.0
    %6714 = vmatprep.subr.mxu0 0.0
    %6715 = vmatpush1.msra.mxu0 0.0
    %6716 = vmatprep.subr.mxu0 0.0
    %6717 = vmatpush1.msra.mxu0 0.0
    %6718 = vmatprep.subr.mxu0 0.0
    %6719 = vmatpush1.msra.mxu0 0.0
    %6720 = vmatprep.subr.mxu0 0.0
    %6721 = vmatpush1.msra.mxu0 0.0
    %6722 = vmatprep.subr.mxu0 0.0
    %6723 = vmatpush1.msra.mxu0 0.0
    %6724 = vmatprep.subr.mxu0 0.0
    %6725 = vmatpush1.msra.mxu0 0.0
    %6726 = vmatprep.subr.mxu0 0.0
    %6727 = vmatpush1.msra.mxu0 %v6694
    %6728 = vmatprep.subr.mxu0 0.0
    %6729 = vmatpush1.msra.mxu0 %v6693
    %6730 = vmatprep.subr.mxu0 0.0
    %6731 = vmatpush2.msra.mxu0 0.0
    %6732 = vmatprep.subr.mxu0 0.0
    %6733 = vmatpush2.msra.mxu0 0.0
    %6734 = vmatprep.subr.mxu0 0.0
    %6735 = vmatpush2.msra.mxu0 0.0
    %6736 = vmatprep.subr.mxu0 0.0
    %6737 = vmatpush2.msra.mxu0 0.0
    %6738 = vmatprep.subr.mxu0 0.0
    %6739 = vmatpush2.msra.mxu0 0.0
    %6740 = vmatprep.subr.mxu0 0.0
    %6741 = vmatpush2.msra.mxu0 0.0
    %6742 = vmatprep.subr.mxu0 0.0
    %6743 = vmatpush2.msra.mxu0 0.0
    %6744 = vmatprep.subr.mxu0 0.0
    %6745 = vmatpush2.msra.mxu0 0.0
    %6746 = vmatprep.subr.mxu0 0.0
    %6747 = vmatpush2.msra.mxu0 0.0
    %6748 = vmatprep.subr.mxu0 0.0
    %6749 = vmatpush2.msra.mxu0 0.0
    %6750 = vmatprep.subr.mxu0 0.0
    %6751 = vmatpush2.msra.mxu0 0.0
    %6752 = vmatprep.subr.mxu0 0.0
    %6753 = vmatpush2.msra.mxu0 0.0
    %6754 = vmatprep.subr.mxu0 0.0
    %6755 = vmatpush2.msra.mxu0 0.0
    %6756 = vmatprep.subr.mxu0 0.0
    %6757 = vmatpush2.msra.mxu0 0.0
    %6758 = vmatprep.subr.mxu0 0.0
    %6759 = vmatpush2.msra.mxu0 0.0
    %6760 = vmatprep.subr.mxu0 0.0
    %6761 = vmatpush2.msra.mxu0 0.0
    %6762 = vmatprep.mubr.f32.mxu0 0.0
    %6763 = vmatmul.mubr.f32.gmra.mxu0 %v6696
    %v6764 = vpop.f32.mrf.mxu0
    %v6765 = vadd.f32 0.0, %v6764
    %v6766 = vpop.f32.mrf.mxu0
    %6767 = vdwg.mxu0
    %v6768 = vadd.f32 %v6691, %v6765
    %s6769 = scalar_lea.vmem %s7, 64
    %v6770 = vld [vmem:[%s6769] sm:$0xff]
    %v6771 = vld [vmem:[%s6769 + $0x8] sm:$0xff]
    %v6772 = vrot.slane %v6459, 4
    %v6773 = vsel %vm1742, %v6772, 0
    %6775 = vmatprep.subr.mxu0 0.0
    %6776 = vmatpush1.msra.mxu0 0.0
    %6777 = vmatprep.subr.mxu0 0.0
    %6778 = vmatpush1.msra.mxu0 0.0
    %6779 = vmatprep.subr.mxu0 0.0
    %6780 = vmatpush1.msra.mxu0 0.0
    %6781 = vmatprep.subr.mxu0 0.0
    %6782 = vmatpush1.msra.mxu0 0.0
    %6783 = vmatprep.subr.mxu0 0.0
    %6784 = vmatpush1.msra.mxu0 0.0
    %6785 = vmatprep.subr.mxu0 0.0
    %6786 = vmatpush1.msra.mxu0 0.0
    %6787 = vmatprep.subr.mxu0 0.0
    %6788 = vmatpush1.msra.mxu0 0.0
    %6789 = vmatprep.subr.mxu0 0.0
    %6790 = vmatpush1.msra.mxu0 0.0
    %6791 = vmatprep.subr.mxu0 0.0
    %6792 = vmatpush1.msra.mxu0 0.0
    %6793 = vmatprep.subr.mxu0 0.0
    %6794 = vmatpush1.msra.mxu0 0.0
    %6795 = vmatprep.subr.mxu0 0.0
    %6796 = vmatpush1.msra.mxu0 0.0
    %6797 = vmatprep.subr.mxu0 0.0
    %6798 = vmatpush1.msra.mxu0 0.0
    %6799 = vmatprep.subr.mxu0 0.0
    %6800 = vmatpush1.msra.mxu0 0.0
    %6801 = vmatprep.subr.mxu0 0.0
    %6802 = vmatpush1.msra.mxu0 0.0
    %6803 = vmatprep.subr.mxu0 0.0
    %6804 = vmatpush1.msra.mxu0 %v6771
    %6805 = vmatprep.subr.mxu0 0.0
    %6806 = vmatpush1.msra.mxu0 %v6770
    %6807 = vmatprep.subr.mxu0 0.0
    %6808 = vmatpush2.msra.mxu0 0.0
    %6809 = vmatprep.subr.mxu0 0.0
    %6810 = vmatpush2.msra.mxu0 0.0
    %6811 = vmatprep.subr.mxu0 0.0
    %6812 = vmatpush2.msra.mxu0 0.0
    %6813 = vmatprep.subr.mxu0 0.0
    %6814 = vmatpush2.msra.mxu0 0.0
    %6815 = vmatprep.subr.mxu0 0.0
    %6816 = vmatpush2.msra.mxu0 0.0
    %6817 = vmatprep.subr.mxu0 0.0
    %6818 = vmatpush2.msra.mxu0 0.0
    %6819 = vmatprep.subr.mxu0 0.0
    %6820 = vmatpush2.msra.mxu0 0.0
    %6821 = vmatprep.subr.mxu0 0.0
    %6822 = vmatpush2.msra.mxu0 0.0
    %6823 = vmatprep.subr.mxu0 0.0
    %6824 = vmatpush2.msra.mxu0 0.0
    %6825 = vmatprep.subr.mxu0 0.0
    %6826 = vmatpush2.msra.mxu0 0.0
    %6827 = vmatprep.subr.mxu0 0.0
    %6828 = vmatpush2.msra.mxu0 0.0
    %6829 = vmatprep.subr.mxu0 0.0
    %6830 = vmatpush2.msra.mxu0 0.0
    %6831 = vmatprep.subr.mxu0 0.0
    %6832 = vmatpush2.msra.mxu0 0.0
    %6833 = vmatprep.subr.mxu0 0.0
    %6834 = vmatpush2.msra.mxu0 0.0
    %6835 = vmatprep.subr.mxu0 0.0
    %6836 = vmatpush2.msra.mxu0 0.0
    %6837 = vmatprep.subr.mxu0 0.0
    %6838 = vmatpush2.msra.mxu0 0.0
    %6839 = vmatprep.mubr.f32.mxu0 0.0
    %6840 = vmatmul.mubr.f32.gmra.mxu0 %v6773
    %v6841 = vpop.f32.mrf.mxu0
    %v6842 = vadd.f32 0.0, %v6841
    %v6843 = vpop.f32.mrf.mxu0
    %6844 = vdwg.mxu0
    %v6845 = vadd.f32 %v6768, %v6842
    %s6846 = scalar_lea.vmem %s7, 80
    %v6847 = vld [vmem:[%s6846] sm:$0xff]
    %v6848 = vld [vmem:[%s6846 + $0x8] sm:$0xff]
    %v6849 = vrot.slane %v6459, 5
    %v6850 = vsel %vm1742, %v6849, 0
    %6852 = vmatprep.subr.mxu0 0.0
    %6853 = vmatpush1.msra.mxu0 0.0
    %6854 = vmatprep.subr.mxu0 0.0
    %6855 = vmatpush1.msra.mxu0 0.0
    %6856 = vmatprep.subr.mxu0 0.0
    %6857 = vmatpush1.msra.mxu0 0.0
    %6858 = vmatprep.subr.mxu0 0.0
    %6859 = vmatpush1.msra.mxu0 0.0
    %6860 = vmatprep.subr.mxu0 0.0
    %6861 = vmatpush1.msra.mxu0 0.0
    %6862 = vmatprep.subr.mxu0 0.0
    %6863 = vmatpush1.msra.mxu0 0.0
    %6864 = vmatprep.subr.mxu0 0.0
    %6865 = vmatpush1.msra.mxu0 0.0
    %6866 = vmatprep.subr.mxu0 0.0
    %6867 = vmatpush1.msra.mxu0 0.0
    %6868 = vmatprep.subr.mxu0 0.0
    %6869 = vmatpush1.msra.mxu0 0.0
    %6870 = vmatprep.subr.mxu0 0.0
    %6871 = vmatpush1.msra.mxu0 0.0
    %6872 = vmatprep.subr.mxu0 0.0
    %6873 = vmatpush1.msra.mxu0 0.0
    %6874 = vmatprep.subr.mxu0 0.0
    %6875 = vmatpush1.msra.mxu0 0.0
    %6876 = vmatprep.subr.mxu0 0.0
    %6877 = vmatpush1.msra.mxu0 0.0
    %6878 = vmatprep.subr.mxu0 0.0
    %6879 = vmatpush1.msra.mxu0 0.0
    %6880 = vmatprep.subr.mxu0 0.0
    %6881 = vmatpush1.msra.mxu0 %v6848
    %6882 = vmatprep.subr.mxu0 0.0
    %6883 = vmatpush1.msra.mxu0 %v6847
    %6884 = vmatprep.subr.mxu0 0.0
    %6885 = vmatpush2.msra.mxu0 0.0
    %6886 = vmatprep.subr.mxu0 0.0
    %6887 = vmatpush2.msra.mxu0 0.0
    %6888 = vmatprep.subr.mxu0 0.0
    %6889 = vmatpush2.msra.mxu0 0.0
    %6890 = vmatprep.subr.mxu0 0.0
    %6891 = vmatpush2.msra.mxu0 0.0
    %6892 = vmatprep.subr.mxu0 0.0
    %6893 = vmatpush2.msra.mxu0 0.0
    %6894 = vmatprep.subr.mxu0 0.0
    %6895 = vmatpush2.msra.mxu0 0.0
    %6896 = vmatprep.subr.mxu0 0.0
    %6897 = vmatpush2.msra.mxu0 0.0
    %6898 = vmatprep.subr.mxu0 0.0
    %6899 = vmatpush2.msra.mxu0 0.0
    %6900 = vmatprep.subr.mxu0 0.0
    %6901 = vmatpush2.msra.mxu0 0.0
    %6902 = vmatprep.subr.mxu0 0.0
    %6903 = vmatpush2.msra.mxu0 0.0
    %6904 = vmatprep.subr.mxu0 0.0
    %6905 = vmatpush2.msra.mxu0 0.0
    %6906 = vmatprep.subr.mxu0 0.0
    %6907 = vmatpush2.msra.mxu0 0.0
    %6908 = vmatprep.subr.mxu0 0.0
    %6909 = vmatpush2.msra.mxu0 0.0
    %6910 = vmatprep.subr.mxu0 0.0
    %6911 = vmatpush2.msra.mxu0 0.0
    %6912 = vmatprep.subr.mxu0 0.0
    %6913 = vmatpush2.msra.mxu0 0.0
    %6914 = vmatprep.subr.mxu0 0.0
    %6915 = vmatpush2.msra.mxu0 0.0
    %6916 = vmatprep.mubr.f32.mxu0 0.0
    %6917 = vmatmul.mubr.f32.gmra.mxu0 %v6850
    %v6918 = vpop.f32.mrf.mxu0
    %v6919 = vadd.f32 0.0, %v6918
    %v6920 = vpop.f32.mrf.mxu0
    %6921 = vdwg.mxu0
    %v6922 = vadd.f32 %v6845, %v6919
    %s6923 = scalar_lea.vmem %s7, 96
    %v6924 = vld [vmem:[%s6923] sm:$0xff]
    %v6925 = vld [vmem:[%s6923 + $0x8] sm:$0xff]
    %v6926 = vrot.slane %v6459, 6
    %v6927 = vsel %vm1742, %v6926, 0
    %6929 = vmatprep.subr.mxu0 0.0
    %6930 = vmatpush1.msra.mxu0 0.0
    %6931 = vmatprep.subr.mxu0 0.0
    %6932 = vmatpush1.msra.mxu0 0.0
    %6933 = vmatprep.subr.mxu0 0.0
    %6934 = vmatpush1.msra.mxu0 0.0
    %6935 = vmatprep.subr.mxu0 0.0
    %6936 = vmatpush1.msra.mxu0 0.0
    %6937 = vmatprep.subr.mxu0 0.0
    %6938 = vmatpush1.msra.mxu0 0.0
    %6939 = vmatprep.subr.mxu0 0.0
    %6940 = vmatpush1.msra.mxu0 0.0
    %6941 = vmatprep.subr.mxu0 0.0
    %6942 = vmatpush1.msra.mxu0 0.0
    %6943 = vmatprep.subr.mxu0 0.0
    %6944 = vmatpush1.msra.mxu0 0.0
    %6945 = vmatprep.subr.mxu0 0.0
    %6946 = vmatpush1.msra.mxu0 0.0
    %6947 = vmatprep.subr.mxu0 0.0
    %6948 = vmatpush1.msra.mxu0 0.0
    %6949 = vmatprep.subr.mxu0 0.0
    %6950 = vmatpush1.msra.mxu0 0.0
    %6951 = vmatprep.subr.mxu0 0.0
    %6952 = vmatpush1.msra.mxu0 0.0
    %6953 = vmatprep.subr.mxu0 0.0
    %6954 = vmatpush1.msra.mxu0 0.0
    %6955 = vmatprep.subr.mxu0 0.0
    %6956 = vmatpush1.msra.mxu0 0.0
    %6957 = vmatprep.subr.mxu0 0.0
    %6958 = vmatpush1.msra.mxu0 %v6925
    %6959 = vmatprep.subr.mxu0 0.0
    %6960 = vmatpush1.msra.mxu0 %v6924
    %6961 = vmatprep.subr.mxu0 0.0
    %6962 = vmatpush2.msra.mxu0 0.0
    %6963 = vmatprep.subr.mxu0 0.0
    %6964 = vmatpush2.msra.mxu0 0.0
    %6965 = vmatprep.subr.mxu0 0.0
    %6966 = vmatpush2.msra.mxu0 0.0
    %6967 = vmatprep.subr.mxu0 0.0
    %6968 = vmatpush2.msra.mxu0 0.0
    %6969 = vmatprep.subr.mxu0 0.0
    %6970 = vmatpush2.msra.mxu0 0.0
    %6971 = vmatprep.subr.mxu0 0.0
    %6972 = vmatpush2.msra.mxu0 0.0
    %6973 = vmatprep.subr.mxu0 0.0
    %6974 = vmatpush2.msra.mxu0 0.0
    %6975 = vmatprep.subr.mxu0 0.0
    %6976 = vmatpush2.msra.mxu0 0.0
    %6977 = vmatprep.subr.mxu0 0.0
    %6978 = vmatpush2.msra.mxu0 0.0
    %6979 = vmatprep.subr.mxu0 0.0
    %6980 = vmatpush2.msra.mxu0 0.0
    %6981 = vmatprep.subr.mxu0 0.0
    %6982 = vmatpush2.msra.mxu0 0.0
    %6983 = vmatprep.subr.mxu0 0.0
    %6984 = vmatpush2.msra.mxu0 0.0
    %6985 = vmatprep.subr.mxu0 0.0
    %6986 = vmatpush2.msra.mxu0 0.0
    %6987 = vmatprep.subr.mxu0 0.0
    %6988 = vmatpush2.msra.mxu0 0.0
    %6989 = vmatprep.subr.mxu0 0.0
    %6990 = vmatpush2.msra.mxu0 0.0
    %6991 = vmatprep.subr.mxu0 0.0
    %6992 = vmatpush2.msra.mxu0 0.0
    %6993 = vmatprep.mubr.f32.mxu0 0.0
    %6994 = vmatmul.mubr.f32.gmra.mxu0 %v6927
    %v6995 = vpop.f32.mrf.mxu0
    %v6996 = vadd.f32 0.0, %v6995
    %v6997 = vpop.f32.mrf.mxu0
    %6998 = vdwg.mxu0
    %v6999 = vadd.f32 %v6922, %v6996
    %s7000 = scalar_lea.vmem %s7, 112
    %v7001 = vld [vmem:[%s7000] sm:$0xff]
    %v7002 = vld [vmem:[%s7000 + $0x8] sm:$0xff]
    %v7003 = vrot.slane %v6459, 7
    %v7004 = vsel %vm1742, %v7003, 0
    %7006 = vmatprep.subr.mxu0 0.0
    %7007 = vmatpush1.msra.mxu0 0.0
    %7008 = vmatprep.subr.mxu0 0.0
    %7009 = vmatpush1.msra.mxu0 0.0
    %7010 = vmatprep.subr.mxu0 0.0
    %7011 = vmatpush1.msra.mxu0 0.0
    %7012 = vmatprep.subr.mxu0 0.0
    %7013 = vmatpush1.msra.mxu0 0.0
    %7014 = vmatprep.subr.mxu0 0.0
    %7015 = vmatpush1.msra.mxu0 0.0
    %7016 = vmatprep.subr.mxu0 0.0
    %7017 = vmatpush1.msra.mxu0 0.0
    %7018 = vmatprep.subr.mxu0 0.0
    %7019 = vmatpush1.msra.mxu0 0.0
    %7020 = vmatprep.subr.mxu0 0.0
    %7021 = vmatpush1.msra.mxu0 0.0
    %7022 = vmatprep.subr.mxu0 0.0
    %7023 = vmatpush1.msra.mxu0 0.0
    %7024 = vmatprep.subr.mxu0 0.0
    %7025 = vmatpush1.msra.mxu0 0.0
    %7026 = vmatprep.subr.mxu0 0.0
    %7027 = vmatpush1.msra.mxu0 0.0
    %7028 = vmatprep.subr.mxu0 0.0
    %7029 = vmatpush1.msra.mxu0 0.0
    %7030 = vmatprep.subr.mxu0 0.0
    %7031 = vmatpush1.msra.mxu0 0.0
    %7032 = vmatprep.subr.mxu0 0.0
    %7033 = vmatpush1.msra.mxu0 0.0
    %7034 = vmatprep.subr.mxu0 0.0
    %7035 = vmatpush1.msra.mxu0 %v7002
    %7036 = vmatprep.subr.mxu0 0.0
    %7037 = vmatpush1.msra.mxu0 %v7001
    %7038 = vmatprep.subr.mxu0 0.0
    %7039 = vmatpush2.msra.mxu0 0.0
    %7040 = vmatprep.subr.mxu0 0.0
    %7041 = vmatpush2.msra.mxu0 0.0
    %7042 = vmatprep.subr.mxu0 0.0
    %7043 = vmatpush2.msra.mxu0 0.0
    %7044 = vmatprep.subr.mxu0 0.0
    %7045 = vmatpush2.msra.mxu0 0.0
    %7046 = vmatprep.subr.mxu0 0.0
    %7047 = vmatpush2.msra.mxu0 0.0
    %7048 = vmatprep.subr.mxu0 0.0
    %7049 = vmatpush2.msra.mxu0 0.0
    %7050 = vmatprep.subr.mxu0 0.0
    %7051 = vmatpush2.msra.mxu0 0.0
    %7052 = vmatprep.subr.mxu0 0.0
    %7053 = vmatpush2.msra.mxu0 0.0
    %7054 = vmatprep.subr.mxu0 0.0
    %7055 = vmatpush2.msra.mxu0 0.0
    %7056 = vmatprep.subr.mxu0 0.0
    %7057 = vmatpush2.msra.mxu0 0.0
    %7058 = vmatprep.subr.mxu0 0.0
    %7059 = vmatpush2.msra.mxu0 0.0
    %7060 = vmatprep.subr.mxu0 0.0
    %7061 = vmatpush2.msra.mxu0 0.0
    %7062 = vmatprep.subr.mxu0 0.0
    %7063 = vmatpush2.msra.mxu0 0.0
    %7064 = vmatprep.subr.mxu0 0.0
    %7065 = vmatpush2.msra.mxu0 0.0
    %7066 = vmatprep.subr.mxu0 0.0
    %7067 = vmatpush2.msra.mxu0 0.0
    %7068 = vmatprep.subr.mxu0 0.0
    %7069 = vmatpush2.msra.mxu0 0.0
    %7070 = vmatprep.mubr.f32.mxu0 0.0
    %7071 = vmatmul.mubr.f32.gmra.mxu0 %v7004
    %v7072 = vpop.f32.mrf.mxu0
    %v7073 = vadd.f32 0.0, %v7072
    %v7074 = vpop.f32.mrf.mxu0
    %7075 = vdwg.mxu0
    %v7076 = vadd.f32 %v6999, %v7073
    %s7077 = scalar_lea.vmem %s7, 128
    %v7078 = vld [vmem:[%s7077] sm:$0xff]
    %v7079 = vld [vmem:[%s7077 + $0x8] sm:$0xff]
    %v7081 = vsel %vm1742, %v6460, 0
    %7083 = vmatprep.subr.mxu0 0.0
    %7084 = vmatpush1.msra.mxu0 0.0
    %7085 = vmatprep.subr.mxu0 0.0
    %7086 = vmatpush1.msra.mxu0 0.0
    %7087 = vmatprep.subr.mxu0 0.0
    %7088 = vmatpush1.msra.mxu0 0.0
    %7089 = vmatprep.subr.mxu0 0.0
    %7090 = vmatpush1.msra.mxu0 0.0
    %7091 = vmatprep.subr.mxu0 0.0
    %7092 = vmatpush1.msra.mxu0 0.0
    %7093 = vmatprep.subr.mxu0 0.0
    %7094 = vmatpush1.msra.mxu0 0.0
    %7095 = vmatprep.subr.mxu0 0.0
    %7096 = vmatpush1.msra.mxu0 0.0
    %7097 = vmatprep.subr.mxu0 0.0
    %7098 = vmatpush1.msra.mxu0 0.0
    %7099 = vmatprep.subr.mxu0 0.0
    %7100 = vmatpush1.msra.mxu0 0.0
    %7101 = vmatprep.subr.mxu0 0.0
    %7102 = vmatpush1.msra.mxu0 0.0
    %7103 = vmatprep.subr.mxu0 0.0
    %7104 = vmatpush1.msra.mxu0 0.0
    %7105 = vmatprep.subr.mxu0 0.0
    %7106 = vmatpush1.msra.mxu0 0.0
    %7107 = vmatprep.subr.mxu0 0.0
    %7108 = vmatpush1.msra.mxu0 0.0
    %7109 = vmatprep.subr.mxu0 0.0
    %7110 = vmatpush1.msra.mxu0 0.0
    %7111 = vmatprep.subr.mxu0 0.0
    %7112 = vmatpush1.msra.mxu0 %v7079
    %7113 = vmatprep.subr.mxu0 0.0
    %7114 = vmatpush1.msra.mxu0 %v7078
    %7115 = vmatprep.subr.mxu0 0.0
    %7116 = vmatpush2.msra.mxu0 0.0
    %7117 = vmatprep.subr.mxu0 0.0
    %7118 = vmatpush2.msra.mxu0 0.0
    %7119 = vmatprep.subr.mxu0 0.0
    %7120 = vmatpush2.msra.mxu0 0.0
    %7121 = vmatprep.subr.mxu0 0.0
    %7122 = vmatpush2.msra.mxu0 0.0
    %7123 = vmatprep.subr.mxu0 0.0
    %7124 = vmatpush2.msra.mxu0 0.0
    %7125 = vmatprep.subr.mxu0 0.0
    %7126 = vmatpush2.msra.mxu0 0.0
    %7127 = vmatprep.subr.mxu0 0.0
    %7128 = vmatpush2.msra.mxu0 0.0
    %7129 = vmatprep.subr.mxu0 0.0
    %7130 = vmatpush2.msra.mxu0 0.0
    %7131 = vmatprep.subr.mxu0 0.0
    %7132 = vmatpush2.msra.mxu0 0.0
    %7133 = vmatprep.subr.mxu0 0.0
    %7134 = vmatpush2.msra.mxu0 0.0
    %7135 = vmatprep.subr.mxu0 0.0
    %7136 = vmatpush2.msra.mxu0 0.0
    %7137 = vmatprep.subr.mxu0 0.0
    %7138 = vmatpush2.msra.mxu0 0.0
    %7139 = vmatprep.subr.mxu0 0.0
    %7140 = vmatpush2.msra.mxu0 0.0
    %7141 = vmatprep.subr.mxu0 0.0
    %7142 = vmatpush2.msra.mxu0 0.0
    %7143 = vmatprep.subr.mxu0 0.0
    %7144 = vmatpush2.msra.mxu0 0.0
    %7145 = vmatprep.subr.mxu0 0.0
    %7146 = vmatpush2.msra.mxu0 0.0
    %7147 = vmatprep.mubr.f32.mxu0 0.0
    %7148 = vmatmul.mubr.f32.gmra.mxu0 %v7081
    %v7149 = vpop.f32.mrf.mxu0
    %v7150 = vadd.f32 0.0, %v7149
    %v7151 = vpop.f32.mrf.mxu0
    %7152 = vdwg.mxu0
    %v7153 = vadd.f32 %v7076, %v7150
    %s7154 = scalar_lea.vmem %s7, 144
    %v7155 = vld [vmem:[%s7154] sm:$0xff]
    %v7156 = vld [vmem:[%s7154 + $0x8] sm:$0xff]
    %v7157 = vrot.slane %v6460, 1
    %v7158 = vsel %vm1742, %v7157, 0
    %7160 = vmatprep.subr.mxu0 0.0
    %7161 = vmatpush1.msra.mxu0 0.0
    %7162 = vmatprep.subr.mxu0 0.0
    %7163 = vmatpush1.msra.mxu0 0.0
    %7164 = vmatprep.subr.mxu0 0.0
    %7165 = vmatpush1.msra.mxu0 0.0
    %7166 = vmatprep.subr.mxu0 0.0
    %7167 = vmatpush1.msra.mxu0 0.0
    %7168 = vmatprep.subr.mxu0 0.0
    %7169 = vmatpush1.msra.mxu0 0.0
    %7170 = vmatprep.subr.mxu0 0.0
    %7171 = vmatpush1.msra.mxu0 0.0
    %7172 = vmatprep.subr.mxu0 0.0
    %7173 = vmatpush1.msra.mxu0 0.0
    %7174 = vmatprep.subr.mxu0 0.0
    %7175 = vmatpush1.msra.mxu0 0.0
    %7176 = vmatprep.subr.mxu0 0.0
    %7177 = vmatpush1.msra.mxu0 0.0
    %7178 = vmatprep.subr.mxu0 0.0
    %7179 = vmatpush1.msra.mxu0 0.0
    %7180 = vmatprep.subr.mxu0 0.0
    %7181 = vmatpush1.msra.mxu0 0.0
    %7182 = vmatprep.subr.mxu0 0.0
    %7183 = vmatpush1.msra.mxu0 0.0
    %7184 = vmatprep.subr.mxu0 0.0
    %7185 = vmatpush1.msra.mxu0 0.0
    %7186 = vmatprep.subr.mxu0 0.0
    %7187 = vmatpush1.msra.mxu0 0.0
    %7188 = vmatprep.subr.mxu0 0.0
    %7189 = vmatpush1.msra.mxu0 %v7156
    %7190 = vmatprep.subr.mxu0 0.0
    %7191 = vmatpush1.msra.mxu0 %v7155
    %7192 = vmatprep.subr.mxu0 0.0
    %7193 = vmatpush2.msra.mxu0 0.0
    %7194 = vmatprep.subr.mxu0 0.0
    %7195 = vmatpush2.msra.mxu0 0.0
    %7196 = vmatprep.subr.mxu0 0.0
    %7197 = vmatpush2.msra.mxu0 0.0
    %7198 = vmatprep.subr.mxu0 0.0
    %7199 = vmatpush2.msra.mxu0 0.0
    %7200 = vmatprep.subr.mxu0 0.0
    %7201 = vmatpush2.msra.mxu0 0.0
    %7202 = vmatprep.subr.mxu0 0.0
    %7203 = vmatpush2.msra.mxu0 0.0
    %7204 = vmatprep.subr.mxu0 0.0
    %7205 = vmatpush2.msra.mxu0 0.0
    %7206 = vmatprep.subr.mxu0 0.0
    %7207 = vmatpush2.msra.mxu0 0.0
    %7208 = vmatprep.subr.mxu0 0.0
    %7209 = vmatpush2.msra.mxu0 0.0
    %7210 = vmatprep.subr.mxu0 0.0
    %7211 = vmatpush2.msra.mxu0 0.0
    %7212 = vmatprep.subr.mxu0 0.0
    %7213 = vmatpush2.msra.mxu0 0.0
    %7214 = vmatprep.subr.mxu0 0.0
    %7215 = vmatpush2.msra.mxu0 0.0
    %7216 = vmatprep.subr.mxu0 0.0
    %7217 = vmatpush2.msra.mxu0 0.0
    %7218 = vmatprep.subr.mxu0 0.0
    %7219 = vmatpush2.msra.mxu0 0.0
    %7220 = vmatprep.subr.mxu0 0.0
    %7221 = vmatpush2.msra.mxu0 0.0
    %7222 = vmatprep.subr.mxu0 0.0
    %7223 = vmatpush2.msra.mxu0 0.0
    %7224 = vmatprep.mubr.f32.mxu0 0.0
    %7225 = vmatmul.mubr.f32.gmra.mxu0 %v7158
    %v7226 = vpop.f32.mrf.mxu0
    %v7227 = vadd.f32 0.0, %v7226
    %v7228 = vpop.f32.mrf.mxu0
    %7229 = vdwg.mxu0
    %v7230 = vadd.f32 %v7153, %v7227
    %s7231 = scalar_lea.vmem %s7, 160
    %v7232 = vld [vmem:[%s7231] sm:$0xff]
    %v7233 = vld [vmem:[%s7231 + $0x8] sm:$0xff]
    %v7234 = vrot.slane %v6460, 2
    %v7235 = vsel %vm1742, %v7234, 0
    %7237 = vmatprep.subr.mxu0 0.0
    %7238 = vmatpush1.msra.mxu0 0.0
    %7239 = vmatprep.subr.mxu0 0.0
    %7240 = vmatpush1.msra.mxu0 0.0
    %7241 = vmatprep.subr.mxu0 0.0
    %7242 = vmatpush1.msra.mxu0 0.0
    %7243 = vmatprep.subr.mxu0 0.0
    %7244 = vmatpush1.msra.mxu0 0.0
    %7245 = vmatprep.subr.mxu0 0.0
    %7246 = vmatpush1.msra.mxu0 0.0
    %7247 = vmatprep.subr.mxu0 0.0
    %7248 = vmatpush1.msra.mxu0 0.0
    %7249 = vmatprep.subr.mxu0 0.0
    %7250 = vmatpush1.msra.mxu0 0.0
    %7251 = vmatprep.subr.mxu0 0.0
    %7252 = vmatpush1.msra.mxu0 0.0
    %7253 = vmatprep.subr.mxu0 0.0
    %7254 = vmatpush1.msra.mxu0 0.0
    %7255 = vmatprep.subr.mxu0 0.0
    %7256 = vmatpush1.msra.mxu0 0.0
    %7257 = vmatprep.subr.mxu0 0.0
    %7258 = vmatpush1.msra.mxu0 0.0
    %7259 = vmatprep.subr.mxu0 0.0
    %7260 = vmatpush1.msra.mxu0 0.0
    %7261 = vmatprep.subr.mxu0 0.0
    %7262 = vmatpush1.msra.mxu0 0.0
    %7263 = vmatprep.subr.mxu0 0.0
    %7264 = vmatpush1.msra.mxu0 0.0
    %7265 = vmatprep.subr.mxu0 0.0
    %7266 = vmatpush1.msra.mxu0 %v7233
    %7267 = vmatprep.subr.mxu0 0.0
    %7268 = vmatpush1.msra.mxu0 %v7232
    %7269 = vmatprep.subr.mxu0 0.0
    %7270 = vmatpush2.msra.mxu0 0.0
    %7271 = vmatprep.subr.mxu0 0.0
    %7272 = vmatpush2.msra.mxu0 0.0
    %7273 = vmatprep.subr.mxu0 0.0
    %7274 = vmatpush2.msra.mxu0 0.0
    %7275 = vmatprep.subr.mxu0 0.0
    %7276 = vmatpush2.msra.mxu0 0.0
    %7277 = vmatprep.subr.mxu0 0.0
    %7278 = vmatpush2.msra.mxu0 0.0
    %7279 = vmatprep.subr.mxu0 0.0
    %7280 = vmatpush2.msra.mxu0 0.0
    %7281 = vmatprep.subr.mxu0 0.0
    %7282 = vmatpush2.msra.mxu0 0.0
    %7283 = vmatprep.subr.mxu0 0.0
    %7284 = vmatpush2.msra.mxu0 0.0
    %7285 = vmatprep.subr.mxu0 0.0
    %7286 = vmatpush2.msra.mxu0 0.0
    %7287 = vmatprep.subr.mxu0 0.0
    %7288 = vmatpush2.msra.mxu0 0.0
    %7289 = vmatprep.subr.mxu0 0.0
    %7290 = vmatpush2.msra.mxu0 0.0
    %7291 = vmatprep.subr.mxu0 0.0
    %7292 = vmatpush2.msra.mxu0 0.0
    %7293 = vmatprep.subr.mxu0 0.0
    %7294 = vmatpush2.msra.mxu0 0.0
    %7295 = vmatprep.subr.mxu0 0.0
    %7296 = vmatpush2.msra.mxu0 0.0
    %7297 = vmatprep.subr.mxu0 0.0
    %7298 = vmatpush2.msra.mxu0 0.0
    %7299 = vmatprep.subr.mxu0 0.0
    %7300 = vmatpush2.msra.mxu0 0.0
    %7301 = vmatprep.mubr.f32.mxu0 0.0
    %7302 = vmatmul.mubr.f32.gmra.mxu0 %v7235
    %v7303 = vpop.f32.mrf.mxu0
    %v7304 = vadd.f32 0.0, %v7303
    %v7305 = vpop.f32.mrf.mxu0
    %7306 = vdwg.mxu0
    %v7307 = vadd.f32 %v7230, %v7304
    %s7308 = scalar_lea.vmem %s7, 176
    %v7309 = vld [vmem:[%s7308] sm:$0xff]
    %v7310 = vld [vmem:[%s7308 + $0x8] sm:$0xff]
    %v7311 = vrot.slane %v6460, 3
    %v7312 = vsel %vm1742, %v7311, 0
    %7314 = vmatprep.subr.mxu0 0.0
    %7315 = vmatpush1.msra.mxu0 0.0
    %7316 = vmatprep.subr.mxu0 0.0
    %7317 = vmatpush1.msra.mxu0 0.0
    %7318 = vmatprep.subr.mxu0 0.0
    %7319 = vmatpush1.msra.mxu0 0.0
    %7320 = vmatprep.subr.mxu0 0.0
    %7321 = vmatpush1.msra.mxu0 0.0
    %7322 = vmatprep.subr.mxu0 0.0
    %7323 = vmatpush1.msra.mxu0 0.0
    %7324 = vmatprep.subr.mxu0 0.0
    %7325 = vmatpush1.msra.mxu0 0.0
    %7326 = vmatprep.subr.mxu0 0.0
    %7327 = vmatpush1.msra.mxu0 0.0
    %7328 = vmatprep.subr.mxu0 0.0
    %7329 = vmatpush1.msra.mxu0 0.0
    %7330 = vmatprep.subr.mxu0 0.0
    %7331 = vmatpush1.msra.mxu0 0.0
    %7332 = vmatprep.subr.mxu0 0.0
    %7333 = vmatpush1.msra.mxu0 0.0
    %7334 = vmatprep.subr.mxu0 0.0
    %7335 = vmatpush1.msra.mxu0 0.0
    %7336 = vmatprep.subr.mxu0 0.0
    %7337 = vmatpush1.msra.mxu0 0.0
    %7338 = vmatprep.subr.mxu0 0.0
    %7339 = vmatpush1.msra.mxu0 0.0
    %7340 = vmatprep.subr.mxu0 0.0
    %7341 = vmatpush1.msra.mxu0 0.0
    %7342 = vmatprep.subr.mxu0 0.0
    %7343 = vmatpush1.msra.mxu0 %v7310
    %7344 = vmatprep.subr.mxu0 0.0
    %7345 = vmatpush1.msra.mxu0 %v7309
    %7346 = vmatprep.subr.mxu0 0.0
    %7347 = vmatpush2.msra.mxu0 0.0
    %7348 = vmatprep.subr.mxu0 0.0
    %7349 = vmatpush2.msra.mxu0 0.0
    %7350 = vmatprep.subr.mxu0 0.0
    %7351 = vmatpush2.msra.mxu0 0.0
    %7352 = vmatprep.subr.mxu0 0.0
    %7353 = vmatpush2.msra.mxu0 0.0
    %7354 = vmatprep.subr.mxu0 0.0
    %7355 = vmatpush2.msra.mxu0 0.0
    %7356 = vmatprep.subr.mxu0 0.0
    %7357 = vmatpush2.msra.mxu0 0.0
    %7358 = vmatprep.subr.mxu0 0.0
    %7359 = vmatpush2.msra.mxu0 0.0
    %7360 = vmatprep.subr.mxu0 0.0
    %7361 = vmatpush2.msra.mxu0 0.0
    %7362 = vmatprep.subr.mxu0 0.0
    %7363 = vmatpush2.msra.mxu0 0.0
    %7364 = vmatprep.subr.mxu0 0.0
    %7365 = vmatpush2.msra.mxu0 0.0
    %7366 = vmatprep.subr.mxu0 0.0
    %7367 = vmatpush2.msra.mxu0 0.0
    %7368 = vmatprep.subr.mxu0 0.0
    %7369 = vmatpush2.msra.mxu0 0.0
    %7370 = vmatprep.subr.mxu0 0.0
    %7371 = vmatpush2.msra.mxu0 0.0
    %7372 = vmatprep.subr.mxu0 0.0
    %7373 = vmatpush2.msra.mxu0 0.0
    %7374 = vmatprep.subr.mxu0 0.0
    %7375 = vmatpush2.msra.mxu0 0.0
    %7376 = vmatprep.subr.mxu0 0.0
    %7377 = vmatpush2.msra.mxu0 0.0
    %7378 = vmatprep.mubr.f32.mxu0 0.0
    %7379 = vmatmul.mubr.f32.gmra.mxu0 %v7312
    %v7380 = vpop.f32.mrf.mxu0
    %v7381 = vadd.f32 0.0, %v7380
    %v7382 = vpop.f32.mrf.mxu0
    %7383 = vdwg.mxu0
    %v7384 = vadd.f32 %v7307, %v7381
    %s7385 = scalar_lea.vmem %s7, 192
    %v7386 = vld [vmem:[%s7385] sm:$0xff]
    %v7387 = vld [vmem:[%s7385 + $0x8] sm:$0xff]
    %v7388 = vrot.slane %v6460, 4
    %v7389 = vsel %vm1742, %v7388, 0
    %7391 = vmatprep.subr.mxu0 0.0
    %7392 = vmatpush1.msra.mxu0 0.0
    %7393 = vmatprep.subr.mxu0 0.0
    %7394 = vmatpush1.msra.mxu0 0.0
    %7395 = vmatprep.subr.mxu0 0.0
    %7396 = vmatpush1.msra.mxu0 0.0
    %7397 = vmatprep.subr.mxu0 0.0
    %7398 = vmatpush1.msra.mxu0 0.0
    %7399 = vmatprep.subr.mxu0 0.0
    %7400 = vmatpush1.msra.mxu0 0.0
    %7401 = vmatprep.subr.mxu0 0.0
    %7402 = vmatpush1.msra.mxu0 0.0
    %7403 = vmatprep.subr.mxu0 0.0
    %7404 = vmatpush1.msra.mxu0 0.0
    %7405 = vmatprep.subr.mxu0 0.0
    %7406 = vmatpush1.msra.mxu0 0.0
    %7407 = vmatprep.subr.mxu0 0.0
    %7408 = vmatpush1.msra.mxu0 0.0
    %7409 = vmatprep.subr.mxu0 0.0
    %7410 = vmatpush1.msra.mxu0 0.0
    %7411 = vmatprep.subr.mxu0 0.0
    %7412 = vmatpush1.msra.mxu0 0.0
    %7413 = vmatprep.subr.mxu0 0.0
    %7414 = vmatpush1.msra.mxu0 0.0
    %7415 = vmatprep.subr.mxu0 0.0
    %7416 = vmatpush1.msra.mxu0 0.0
    %7417 = vmatprep.subr.mxu0 0.0
    %7418 = vmatpush1.msra.mxu0 0.0
    %7419 = vmatprep.subr.mxu0 0.0
    %7420 = vmatpush1.msra.mxu0 %v7387
    %7421 = vmatprep.subr.mxu0 0.0
    %7422 = vmatpush1.msra.mxu0 %v7386
    %7423 = vmatprep.subr.mxu0 0.0
    %7424 = vmatpush2.msra.mxu0 0.0
    %7425 = vmatprep.subr.mxu0 0.0
    %7426 = vmatpush2.msra.mxu0 0.0
    %7427 = vmatprep.subr.mxu0 0.0
    %7428 = vmatpush2.msra.mxu0 0.0
    %7429 = vmatprep.subr.mxu0 0.0
    %7430 = vmatpush2.msra.mxu0 0.0
    %7431 = vmatprep.subr.mxu0 0.0
    %7432 = vmatpush2.msra.mxu0 0.0
    %7433 = vmatprep.subr.mxu0 0.0
    %7434 = vmatpush2.msra.mxu0 0.0
    %7435 = vmatprep.subr.mxu0 0.0
    %7436 = vmatpush2.msra.mxu0 0.0
    %7437 = vmatprep.subr.mxu0 0.0
    %7438 = vmatpush2.msra.mxu0 0.0
    %7439 = vmatprep.subr.mxu0 0.0
    %7440 = vmatpush2.msra.mxu0 0.0
    %7441 = vmatprep.subr.mxu0 0.0
    %7442 = vmatpush2.msra.mxu0 0.0
    %7443 = vmatprep.subr.mxu0 0.0
    %7444 = vmatpush2.msra.mxu0 0.0
    %7445 = vmatprep.subr.mxu0 0.0
    %7446 = vmatpush2.msra.mxu0 0.0
    %7447 = vmatprep.subr.mxu0 0.0
    %7448 = vmatpush2.msra.mxu0 0.0
    %7449 = vmatprep.subr.mxu0 0.0
    %7450 = vmatpush2.msra.mxu0 0.0
    %7451 = vmatprep.subr.mxu0 0.0
    %7452 = vmatpush2.msra.mxu0 0.0
    %7453 = vmatprep.subr.mxu0 0.0
    %7454 = vmatpush2.msra.mxu0 0.0
    %7455 = vmatprep.mubr.f32.mxu0 0.0
    %7456 = vmatmul.mubr.f32.gmra.mxu0 %v7389
    %v7457 = vpop.f32.mrf.mxu0
    %v7458 = vadd.f32 0.0, %v7457
    %v7459 = vpop.f32.mrf.mxu0
    %7460 = vdwg.mxu0
    %v7461 = vadd.f32 %v7384, %v7458
    %s7462 = scalar_lea.vmem %s7, 208
    %v7463 = vld [vmem:[%s7462] sm:$0xff]
    %v7464 = vld [vmem:[%s7462 + $0x8] sm:$0xff]
    %v7465 = vrot.slane %v6460, 5
    %v7466 = vsel %vm1742, %v7465, 0
    %7468 = vmatprep.subr.mxu0 0.0
    %7469 = vmatpush1.msra.mxu0 0.0
    %7470 = vmatprep.subr.mxu0 0.0
    %7471 = vmatpush1.msra.mxu0 0.0
    %7472 = vmatprep.subr.mxu0 0.0
    %7473 = vmatpush1.msra.mxu0 0.0
    %7474 = vmatprep.subr.mxu0 0.0
    %7475 = vmatpush1.msra.mxu0 0.0
    %7476 = vmatprep.subr.mxu0 0.0
    %7477 = vmatpush1.msra.mxu0 0.0
    %7478 = vmatprep.subr.mxu0 0.0
    %7479 = vmatpush1.msra.mxu0 0.0
    %7480 = vmatprep.subr.mxu0 0.0
    %7481 = vmatpush1.msra.mxu0 0.0
    %7482 = vmatprep.subr.mxu0 0.0
    %7483 = vmatpush1.msra.mxu0 0.0
    %7484 = vmatprep.subr.mxu0 0.0
    %7485 = vmatpush1.msra.mxu0 0.0
    %7486 = vmatprep.subr.mxu0 0.0
    %7487 = vmatpush1.msra.mxu0 0.0
    %7488 = vmatprep.subr.mxu0 0.0
    %7489 = vmatpush1.msra.mxu0 0.0
    %7490 = vmatprep.subr.mxu0 0.0
    %7491 = vmatpush1.msra.mxu0 0.0
    %7492 = vmatprep.subr.mxu0 0.0
    %7493 = vmatpush1.msra.mxu0 0.0
    %7494 = vmatprep.subr.mxu0 0.0
    %7495 = vmatpush1.msra.mxu0 0.0
    %7496 = vmatprep.subr.mxu0 0.0
    %7497 = vmatpush1.msra.mxu0 %v7464
    %7498 = vmatprep.subr.mxu0 0.0
    %7499 = vmatpush1.msra.mxu0 %v7463
    %7500 = vmatprep.subr.mxu0 0.0
    %7501 = vmatpush2.msra.mxu0 0.0
    %7502 = vmatprep.subr.mxu0 0.0
    %7503 = vmatpush2.msra.mxu0 0.0
    %7504 = vmatprep.subr.mxu0 0.0
    %7505 = vmatpush2.msra.mxu0 0.0
    %7506 = vmatprep.subr.mxu0 0.0
    %7507 = vmatpush2.msra.mxu0 0.0
    %7508 = vmatprep.subr.mxu0 0.0
    %7509 = vmatpush2.msra.mxu0 0.0
    %7510 = vmatprep.subr.mxu0 0.0
    %7511 = vmatpush2.msra.mxu0 0.0
    %7512 = vmatprep.subr.mxu0 0.0
    %7513 = vmatpush2.msra.mxu0 0.0
    %7514 = vmatprep.subr.mxu0 0.0
    %7515 = vmatpush2.msra.mxu0 0.0
    %7516 = vmatprep.subr.mxu0 0.0
    %7517 = vmatpush2.msra.mxu0 0.0
    %7518 = vmatprep.subr.mxu0 0.0
    %7519 = vmatpush2.msra.mxu0 0.0
    %7520 = vmatprep.subr.mxu0 0.0
    %7521 = vmatpush2.msra.mxu0 0.0
    %7522 = vmatprep.subr.mxu0 0.0
    %7523 = vmatpush2.msra.mxu0 0.0
    %7524 = vmatprep.subr.mxu0 0.0
    %7525 = vmatpush2.msra.mxu0 0.0
    %7526 = vmatprep.subr.mxu0 0.0
    %7527 = vmatpush2.msra.mxu0 0.0
    %7528 = vmatprep.subr.mxu0 0.0
    %7529 = vmatpush2.msra.mxu0 0.0
    %7530 = vmatprep.subr.mxu0 0.0
    %7531 = vmatpush2.msra.mxu0 0.0
    %7532 = vmatprep.mubr.f32.mxu0 0.0
    %7533 = vmatmul.mubr.f32.gmra.mxu0 %v7466
    %v7534 = vpop.f32.mrf.mxu0
    %v7535 = vadd.f32 0.0, %v7534
    %v7536 = vpop.f32.mrf.mxu0
    %7537 = vdwg.mxu0
    %v7538 = vadd.f32 %v7461, %v7535
    %s7539 = scalar_lea.vmem %s7, 224
    %v7540 = vld [vmem:[%s7539] sm:$0xff]
    %v7541 = vld [vmem:[%s7539 + $0x8] sm:$0xff]
    %v7542 = vrot.slane %v6460, 6
    %v7543 = vsel %vm1742, %v7542, 0
    %7545 = vmatprep.subr.mxu0 0.0
    %7546 = vmatpush1.msra.mxu0 0.0
    %7547 = vmatprep.subr.mxu0 0.0
    %7548 = vmatpush1.msra.mxu0 0.0
    %7549 = vmatprep.subr.mxu0 0.0
    %7550 = vmatpush1.msra.mxu0 0.0
    %7551 = vmatprep.subr.mxu0 0.0
    %7552 = vmatpush1.msra.mxu0 0.0
    %7553 = vmatprep.subr.mxu0 0.0
    %7554 = vmatpush1.msra.mxu0 0.0
    %7555 = vmatprep.subr.mxu0 0.0
    %7556 = vmatpush1.msra.mxu0 0.0
    %7557 = vmatprep.subr.mxu0 0.0
    %7558 = vmatpush1.msra.mxu0 0.0
    %7559 = vmatprep.subr.mxu0 0.0
    %7560 = vmatpush1.msra.mxu0 0.0
    %7561 = vmatprep.subr.mxu0 0.0
    %7562 = vmatpush1.msra.mxu0 0.0
    %7563 = vmatprep.subr.mxu0 0.0
    %7564 = vmatpush1.msra.mxu0 0.0
    %7565 = vmatprep.subr.mxu0 0.0
    %7566 = vmatpush1.msra.mxu0 0.0
    %7567 = vmatprep.subr.mxu0 0.0
    %7568 = vmatpush1.msra.mxu0 0.0
    %7569 = vmatprep.subr.mxu0 0.0
    %7570 = vmatpush1.msra.mxu0 0.0
    %7571 = vmatprep.subr.mxu0 0.0
    %7572 = vmatpush1.msra.mxu0 0.0
    %7573 = vmatprep.subr.mxu0 0.0
    %7574 = vmatpush1.msra.mxu0 %v7541
    %7575 = vmatprep.subr.mxu0 0.0
    %7576 = vmatpush1.msra.mxu0 %v7540
    %7577 = vmatprep.subr.mxu0 0.0
    %7578 = vmatpush2.msra.mxu0 0.0
    %7579 = vmatprep.subr.mxu0 0.0
    %7580 = vmatpush2.msra.mxu0 0.0
    %7581 = vmatprep.subr.mxu0 0.0
    %7582 = vmatpush2.msra.mxu0 0.0
    %7583 = vmatprep.subr.mxu0 0.0
    %7584 = vmatpush2.msra.mxu0 0.0
    %7585 = vmatprep.subr.mxu0 0.0
    %7586 = vmatpush2.msra.mxu0 0.0
    %7587 = vmatprep.subr.mxu0 0.0
    %7588 = vmatpush2.msra.mxu0 0.0
    %7589 = vmatprep.subr.mxu0 0.0
    %7590 = vmatpush2.msra.mxu0 0.0
    %7591 = vmatprep.subr.mxu0 0.0
    %7592 = vmatpush2.msra.mxu0 0.0
    %7593 = vmatprep.subr.mxu0 0.0
    %7594 = vmatpush2.msra.mxu0 0.0
    %7595 = vmatprep.subr.mxu0 0.0
    %7596 = vmatpush2.msra.mxu0 0.0
    %7597 = vmatprep.subr.mxu0 0.0
    %7598 = vmatpush2.msra.mxu0 0.0
    %7599 = vmatprep.subr.mxu0 0.0
    %7600 = vmatpush2.msra.mxu0 0.0
    %7601 = vmatprep.subr.mxu0 0.0
    %7602 = vmatpush2.msra.mxu0 0.0
    %7603 = vmatprep.subr.mxu0 0.0
    %7604 = vmatpush2.msra.mxu0 0.0
    %7605 = vmatprep.subr.mxu0 0.0
    %7606 = vmatpush2.msra.mxu0 0.0
    %7607 = vmatprep.subr.mxu0 0.0
    %7608 = vmatpush2.msra.mxu0 0.0
    %7609 = vmatprep.mubr.f32.mxu0 0.0
    %7610 = vmatmul.mubr.f32.gmra.mxu0 %v7543
    %v7611 = vpop.f32.mrf.mxu0
    %v7612 = vadd.f32 0.0, %v7611
    %v7613 = vpop.f32.mrf.mxu0
    %7614 = vdwg.mxu0
    %v7615 = vadd.f32 %v7538, %v7612
    %s7616 = scalar_lea.vmem %s7, 240
    %v7617 = vld [vmem:[%s7616] sm:$0xff]
    %v7618 = vld [vmem:[%s7616 + $0x8] sm:$0xff]
    %v7619 = vrot.slane %v6460, 7
    %v7620 = vsel %vm1742, %v7619, 0
    %7622 = vmatprep.subr.mxu0 0.0
    %7623 = vmatpush1.msra.mxu0 0.0
    %7624 = vmatprep.subr.mxu0 0.0
    %7625 = vmatpush1.msra.mxu0 0.0
    %7626 = vmatprep.subr.mxu0 0.0
    %7627 = vmatpush1.msra.mxu0 0.0
    %7628 = vmatprep.subr.mxu0 0.0
    %7629 = vmatpush1.msra.mxu0 0.0
    %7630 = vmatprep.subr.mxu0 0.0
    %7631 = vmatpush1.msra.mxu0 0.0
    %7632 = vmatprep.subr.mxu0 0.0
    %7633 = vmatpush1.msra.mxu0 0.0
    %7634 = vmatprep.subr.mxu0 0.0
    %7635 = vmatpush1.msra.mxu0 0.0
    %7636 = vmatprep.subr.mxu0 0.0
    %7637 = vmatpush1.msra.mxu0 0.0
    %7638 = vmatprep.subr.mxu0 0.0
    %7639 = vmatpush1.msra.mxu0 0.0
    %7640 = vmatprep.subr.mxu0 0.0
    %7641 = vmatpush1.msra.mxu0 0.0
    %7642 = vmatprep.subr.mxu0 0.0
    %7643 = vmatpush1.msra.mxu0 0.0
    %7644 = vmatprep.subr.mxu0 0.0
    %7645 = vmatpush1.msra.mxu0 0.0
    %7646 = vmatprep.subr.mxu0 0.0
    %7647 = vmatpush1.msra.mxu0 0.0
    %7648 = vmatprep.subr.mxu0 0.0
    %7649 = vmatpush1.msra.mxu0 0.0
    %7650 = vmatprep.subr.mxu0 0.0
    %7651 = vmatpush1.msra.mxu0 %v7618
    %7652 = vmatprep.subr.mxu0 0.0
    %7653 = vmatpush1.msra.mxu0 %v7617
    %7654 = vmatprep.subr.mxu0 0.0
    %7655 = vmatpush2.msra.mxu0 0.0
    %7656 = vmatprep.subr.mxu0 0.0
    %7657 = vmatpush2.msra.mxu0 0.0
    %7658 = vmatprep.subr.mxu0 0.0
    %7659 = vmatpush2.msra.mxu0 0.0
    %7660 = vmatprep.subr.mxu0 0.0
    %7661 = vmatpush2.msra.mxu0 0.0
    %7662 = vmatprep.subr.mxu0 0.0
    %7663 = vmatpush2.msra.mxu0 0.0
    %7664 = vmatprep.subr.mxu0 0.0
    %7665 = vmatpush2.msra.mxu0 0.0
    %7666 = vmatprep.subr.mxu0 0.0
    %7667 = vmatpush2.msra.mxu0 0.0
    %7668 = vmatprep.subr.mxu0 0.0
    %7669 = vmatpush2.msra.mxu0 0.0
    %7670 = vmatprep.subr.mxu0 0.0
    %7671 = vmatpush2.msra.mxu0 0.0
    %7672 = vmatprep.subr.mxu0 0.0
    %7673 = vmatpush2.msra.mxu0 0.0
    %7674 = vmatprep.subr.mxu0 0.0
    %7675 = vmatpush2.msra.mxu0 0.0
    %7676 = vmatprep.subr.mxu0 0.0
    %7677 = vmatpush2.msra.mxu0 0.0
    %7678 = vmatprep.subr.mxu0 0.0
    %7679 = vmatpush2.msra.mxu0 0.0
    %7680 = vmatprep.subr.mxu0 0.0
    %7681 = vmatpush2.msra.mxu0 0.0
    %7682 = vmatprep.subr.mxu0 0.0
    %7683 = vmatpush2.msra.mxu0 0.0
    %7684 = vmatprep.subr.mxu0 0.0
    %7685 = vmatpush2.msra.mxu0 0.0
    %7686 = vmatprep.mubr.f32.mxu0 0.0
    %7687 = vmatmul.mubr.f32.gmra.mxu0 %v7620
    %v7688 = vpop.f32.mrf.mxu0
    %v7689 = vadd.f32 0.0, %v7688
    %v7690 = vpop.f32.mrf.mxu0
    %7691 = vdwg.mxu0
    %v7692 = vadd.f32 %v7615, %v7689
    %v7693 = vmax.f32 %v7692, 0.0
    %v7694 = vld [vmem:[%s9] sm:$0x1]
    %v7695 = vmul.f32 %v7693, %v7694
    %vm7696 = vcmask 516096
    %v7697 = vsel %vm7696, %v7695, 0.0
    %7698 = vadd.xlane.f32.xlu0 %v7697
    %v7699 = vpop.xlane.xlu0 %7698
    %v7700 = vld [vmem:[#allocation2] sm:$0x1]
    %v7701 = vadd.f32 %v7699, %v7700
    %v7702 = vand.u32 2147483647, %v7701
    %vm7703 = vcmp.le.f32.partialorder %v7702, 0.7853982
    %vm7704 = vcmp.lt.s32.totalorder %v7701, 0
    %v7705 = vand.u32 %v7701, 2139095040
    %v7706 = vshrl.u32 %v7705, 23
    %v7707 = vsub.s32 %v7706, 127
    %v7708 = vand.u32 2147483647, %v7701
    %v7709 = vand.u32 %v7708, 8388607
    %v7710 = vor.u32 %v7709, 8388608
    %v7711 = vsub.s32 0, %v7710
    %v7712 = vadd.s32 %v7707, 1
    %vm7713 = vcmp.gt.s32.totalorder %v7712, 0
    %v7714 = vsel %vm7713, %v7712, 0
    %v7715 = vshrl.u32 %v7714, 5
    %v7716 = vand.u32 %v7714, 31
    %v7717 = vsub.s32 32, %v7716
    %v7718 = vshrl.u32 683565275, %v7717
    %v7719 = vshll.u32 683565275, %v7716
    %v7720 = vshrl.u32 2475754826, %v7717
    %v7721 = vor.u32 %v7719, %v7720
    %v7722 = vshll.u32 2475754826, %v7716
    %v7723 = vshrl.u32 2131351028, %v7717
    %v7724 = vor.u32 %v7722, %v7723
    %v7725 = vshll.u32 2131351028, %v7716
    %v7726 = vshrl.u32 2102212464, %v7717
    %v7727 = vor.u32 %v7725, %v7726
    %v7728 = vshll.u32 2102212464, %v7716
    %v7729 = vshrl.u32 920167782, %v7717
    %v7730 = vor.u32 %v7728, %v7729
    %v7731 = vshll.u32 920167782, %v7716
    %v7732 = vshrl.u32 1326507024, %v7717
    %v7733 = vor.u32 %v7731, %v7732
    %vm7734 = vcmp.lt.s32.totalorder %v7715, 1
    %vm7735 = vcmp.lt.s32.totalorder %v7715, 2
    %vm7736 = vcmp.lt.s32.totalorder %v7715, 3
    %vm7737 = vcmp.lt.s32.totalorder %v7715, 4
    %v7738 = vsel %vm7734, %v7718, %v7721
    %v7739 = vsel %vm7737, %v7727, 2102212464
    %v7740 = vsel %vm7736, %v7724, %v7739
    %v7741 = vsel %vm7735, %v7738, %v7740
    %v7742 = vsel %vm7734, %v7721, %v7724
    %v7743 = vsel %vm7737, %v7730, 920167782
    %v7744 = vsel %vm7736, %v7727, %v7743
    %v7745 = vsel %vm7735, %v7742, %v7744
    %v7746 = vsel %vm7734, %v7724, %v7727
    %v7747 = vsel %vm7737, %v7733, 1326507024
    %v7748 = vsel %vm7736, %v7730, %v7747
    %v7749 = vsel %vm7735, %v7746, %v7748
    %v7750 = vshll.u32 %v7710, 8
    %v7751 = vmul.u32.u64.compose %v7750, %v7749
    %v7752 = vextract.low.u32 %v7751
    %v7753 = vextract.high.u32 %v7751
    %v7754 = vmul.u32.u64.compose %v7750, %v7745
    %v7755 = vextract.low.u32 %v7754
    %v7756 = vextract.high.u32 %v7754
    %v7757 = vmul.u32 %v7750, %v7741
    %v7758 = vadd.s32 %v7753, %v7755
    %vm7759 = vc.u32 %v7753, %v7755
    %v7760 = vadd.s32 %v7756, 1
    %v7761 = vsel %vm7759, %v7760, %v7756
    %v7762 = vadd.s32 %v7757, %v7761
    %v7763 = vadd.s32 %v7762, 536870912
    %v7764 = vshrl.u32 %v7763, 30
    %v7765 = vshll.u32 %v7764, 30
    %v7766 = vsub.s32 %v7762, %v7765
    %vm7767 = vcmp.lt.s32.totalorder %v7766, 0
    %v7768 = vsub.s32 0, %v7766
    %v7769 = vsel %vm7767, %v7768, %v7766
    %v7770 = vclz %v7769
    %v7771 = vsub.s32 %v7770, 2
    %vm7772 = vcmp.gt.s32.totalorder 0, %v7771
    %v7773 = vsel %vm7772, 0, %v7771
    %v7774 = vsub.s32 32, %v7773
    %v7775 = vshll.u32 %v7766, %v7773
    %v7776 = vshrl.u32 %v7758, %v7774
    %v7777 = vor.u32 %v7775, %v7776
    %v7778 = vsub.s32 4294967266, %v7773
    %v7779 = vadd.s32 %v7778, 127
    %v7780 = vshll.u32 %v7779, 23
    %v7781 = vor.u32 4788187, %v7780
    %v7782 = vand.u32 2147483647, %v7781
    %v7784 = vcvt.s32.f32 %v7777
    %v7785 = vmul.f32 %v7784, %v7782
    %v7786 = vxor.u32 %v7785, 2147483648
    %v7787 = vsel %vm7704, %v7786, %v7785
    %v7788 = vsub.s32 4, %v7764
    %v7789 = vsel %vm7704, %v7788, %v7764
    %v7790 = vsel %vm7703, %v7701, %v7787
    %v7791 = vsel %vm7703, 0, %v7789
    %v7792 = vcosq.f32.pop %v7790
    %v7793 = vsinq.f32.pop %v7790
    %vm7794 = vweird.f32 %v7701
    %v7795 = vadd.s32 %v7791, 3
    %v7796 = vand.u32 %v7795, 3
    %vm7797 = vcmp.lt.s32.totalorder %v7796, 2
    %vm7798 = vcmp.eq.s32.totalorder %v7796, 0
    %v7799 = vxor.u32 %v7793, 2147483648
    %v7800 = vsel %vm7798, %v7792, %v7799
    %vm7801 = vcmp.eq.s32.totalorder %v7796, 2
    %v7802 = vxor.u32 %v7792, 2147483648
    %v7803 = vsel %vm7801, %v7802, %v7793
    %v7804 = vsel %vm7797, %v7800, %v7803
    %v7805 = vsel %vm7794, nan, %v7804
    %v7806 = vadd.f32 %v7805, 1.0
    %v7807 = vmul.f32 %v7806, 0.5
    %v7808 = vlaneseq
    %v7809 = vand.u32 %v7808, 127
    %vm7810 = vcmp.eq.s32.totalorder %v7809, 0
    %v7811 = vsub.f32 1.0, %v7807
    %7813 = vset.pattern.permute.xlu0 0
    %7814 = vperm.xlu0 %7813, %v7807
    %v7815 = vpop.permute.xlu0 %7814
    %7818 = vset.pattern.permute.xlu0 0
    %7819 = vperm.xlu0 %7818, %v7811
    %v7820 = vpop.permute.xlu0 %7819
    %v7822 = vsel %vm7810, %v7815, %v7820
    %vm7823 = vcmask 8192
    %7824 = vst.msk [vmem:[#allocation3] sm:$0x1] %vm7823, %v7822
    // Predicated region
    $region46: #{net_forward.1} parent=1 // pred_check
      _
    $region47: #{net_forward.1} parent=1 // pred_check_branch
      %7826 = sbr.rel (0) target = $region49
    $region48: #{net_forward.1} parent=1 // pred_region
      %s7828 = ssub.s32 16, 16
      %7829 = vsyncadd [#allocation4], %s7828
      %s7831 = sshll.u32 [#allocation3], 4
      %s7832 = int_to_ptr.vmem [resolvable:$true] %s7831
      %7834 = dma.vmem_to_hbm [thread:$0]  %s7832, 16, %s11, [#allocation4]
    $region49: #{net_forward.1} parent=1 // pred_fallthru
      _
    // Predicated region
    $region50: #{net_forward.1} parent=1 // pred_check
      _
    $region51: #{net_forward.1} parent=1 // pred_check_branch
      %7836 = sbr.rel (0) target = $region53
    $region52: #{net_forward.1} parent=1 // pred_region
      %7837 = dma.done [#allocation4], 16
    $region53: #{net_forward.1} parent=1 // pred_fallthru
      _
    %7838 = vsyncpa [#allocation4], 1

</llo_original>
